<compile_context>
chip_gen: v7x
topology: tpu7x:2x2x1
jax: 0.10.0
libtpu: 0.0.40
codegen_flags: <defaults>
</compile_context>

<pallas_src>
import jax
import jax.numpy as jnp
from jax.experimental import pallas as pl
from jax.experimental.pallas import tpu as pltpu

D_IN = 2        # (x, t) coordinates
HIDDEN = 32
D_OUT = 1

LANE_ALIGN = 512    # tile granularity (multiple of 128 -> lane-dense stores)
MAX_TILE_N = 8192   # per-step batch tile cap (VMEM-safe on v5e/v6e/v7x)

# Packed-parameter column layout (HIDDEN rows x P_COLS cols):
#   [ w2.T | w1.T | w3.T-as-row(row 0) | b1 | b2 | b3(row 0) ]
COL_W2 = 0
COL_W1 = COL_W2 + HIDDEN
COL_W3 = COL_W1 + D_IN
COL_B1 = COL_W3 + HIDDEN
COL_B2 = COL_B1 + 1
COL_B3 = COL_B2 + 1
P_COLS = COL_B3 + 1

_HI = jax.lax.Precision.HIGHEST


def pinn_mlp_kernel(x_ref, p_ref, o_ref):
    """Fused 3-layer tanh MLP on one batch tile (feature-major layout).

    x_ref: (D_IN, TILE)     coordinates, batch on lanes
    p_ref: (HIDDEN, P_COLS) packed weights/biases (replicated across grid)
    o_ref: (D_OUT, TILE)    output, batch on lanes
    """
    xc = x_ref[0:1, :]                                   # (1, TILE) x-coord
    tc = x_ref[1:2, :]                                   # (1, TILE) t-coord

    w2t = p_ref[:, COL_W2:COL_W2 + HIDDEN]               # (H, H) = w2.T
    w1x = p_ref[:, COL_W1:COL_W1 + 1]                    # (H, 1)
    w1t = p_ref[:, COL_W1 + 1:COL_W1 + 2]                # (H, 1)
    w3r = p_ref[0:1, COL_W3:COL_W3 + HIDDEN]             # (1, H) = w3.T
    b1 = p_ref[:, COL_B1:COL_B1 + 1]                     # (H, 1)
    b2 = p_ref[:, COL_B2:COL_B2 + 1]                     # (H, 1)
    b3 = p_ref[0:1, COL_B3:COL_B3 + 1]                   # (1, 1)

    # Layer 1: K=2 contraction as two VPU broadcast-FMAs (skip the MXU).
    h1 = jnp.tanh(w1x * xc + w1t * tc + b1)              # (H, TILE)

    # Layer 2: 32x32 contraction on the MXU (HIGHEST precision is free here).
    h2 = jnp.tanh(
        jnp.dot(w2t, h1, precision=_HI,
                preferred_element_type=jnp.float32) + b2)

    # Layer 3: (1,32)@(32,TILE) on the otherwise-idle MXU; output lane-dense.
    out = jnp.dot(w3r, h2, precision=_HI,
                  preferred_element_type=jnp.float32) + b3
    o_ref[...] = out.astype(o_ref.dtype)


def _round_up(a, b):
    return ((a + b - 1) // b) * b


def _choose_tile(n):
    """Largest lane-aligned tile <= MAX_TILE_N giving >= 2 steps when possible.

    grid >= 2 lets the "parallel" axis shard across v7x's two TensorCores;
    on 1-TC chips (v5e/v6e) bigger tiles / fewer steps just amortize the
    per-grid-step overhead, so the same choice is right everywhere.
    """
    half = _round_up(pl.cdiv(n, 2), LANE_ALIGN)
    return max(LANE_ALIGN, min(MAX_TILE_N, half))


def _pack_params(params):
    """Pack all weights/biases into a single (HIDDEN, P_COLS) f32 operand."""
    w1, b1, w2, b2, w3, b3 = params
    w3_block = jnp.zeros((HIDDEN, HIDDEN), jnp.float32).at[0, :].set(
        jnp.reshape(w3, (HIDDEN,)))                       # w3.T in row 0
    b3_col = jnp.zeros((HIDDEN, 1), jnp.float32).at[0, 0].set(
        jnp.reshape(b3, ()))                              # b3 scalar in row 0
    return jnp.concatenate(
        [
            w2.T,                                 # (H, H)
            w1.T,                                 # (H, 2)
            w3_block,                             # (H, H) (only row 0 read)
            jnp.reshape(b1, (HIDDEN, 1)),         # (H, 1)
            jnp.reshape(b2, (HIDDEN, 1)),         # (H, 1)
            b3_col,                               # (H, 1) (only row 0 read)
        ],
        axis=1,
    ).astype(jnp.float32)


@jax.jit
def pinn_forward(x, params):
    """x: (N, 2) float32 collocation points. Returns (N, 1) float32."""
    n = x.shape[0]
    tile = _choose_tile(n)
    grid = pl.cdiv(n, tile)
    n_pad = grid * tile

    # Single fused pad into the feature-major, lane-dense input slab.
    x_fm = jnp.pad(x.T.astype(jnp.float32), ((0, 0), (0, n_pad - n)))
    p = _pack_params(params)

    out_fm = pl.pallas_call(
        pinn_mlp_kernel,
        out_shape=jax.ShapeDtypeStruct((D_OUT, n_pad), jnp.float32),
        grid_spec=pltpu.PrefetchScalarGridSpec(
            num_scalar_prefetch=0,
            grid=(grid,),
            in_specs=[
                pl.BlockSpec((D_IN, tile), lambda i: (0, i)),      # x tile
                pl.BlockSpec((HIDDEN, P_COLS), lambda i: (0, 0)),  # params
            ],
            out_specs=pl.BlockSpec((D_OUT, tile), lambda i: (0, i)),
        ),
        compiler_params=pltpu.CompilerParams(
            dimension_semantics=("parallel",)),
    )(x_fm, p)

    # Back to the PyTorch-facing (N, 1) layout: one slice + reshape.
    return jnp.reshape(out_fm[:, :n], (n, D_OUT))


def init_params(key):
    """Deterministic PyTorch-Linear-style init (uniform(-1/sqrt(fan_in), ...))."""
    ks = jax.random.split(key, 6)

    def linear(kw, kb, fan_in, fan_out):
        bound = 1.0 / jnp.sqrt(jnp.float32(fan_in))
        w = jax.random.uniform(kw, (fan_in, fan_out), jnp.float32,
                               minval=-bound, maxval=bound)
        b = jax.random.uniform(kb, (1, fan_out), jnp.float32,
                               minval=-bound, maxval=bound)
        return w, b

    w1, b1 = linear(ks[0], ks[1], D_IN, HIDDEN)
    w2, b2 = linear(ks[2], ks[3], HIDDEN, HIDDEN)
    w3, b3 = linear(ks[4], ks[5], HIDDEN, D_OUT)
    return (w1, b1, w2, b2, w3, b3)


def reference_forward(x, params):
    w1, b1, w2, b2, w3, b3 = params
    h1 = jnp.tanh(jnp.dot(x, w1, precision=_HI) + b1)
    h2 = jnp.tanh(jnp.dot(h1, w2, precision=_HI) + b2)
    return jnp.dot(h2, w3, precision=_HI) + b3


if __name__ == "__main__":
    key = jax.random.PRNGKey(0)
    k_params, k_x = jax.random.split(key)

    params = init_params(k_params)
    # Collocation points (x, t) in [-1, 1] x [0, 1]; N = 4000 points (not a
    # multiple of the tile -> exercises padding; tile resolves to 2048 ->
    # grid = 2, so both v7x TensorCores get work).
    n = 4000
    xs = jax.random.uniform(k_x, (n, 1), jnp.float32, minval=-1.0, maxval=1.0)
    ts = jax.random.uniform(jax.random.fold_in(k_x, 1), (n, 1), jnp.float32,
                            minval=0.0, maxval=1.0)
    x = jnp.concatenate([xs, ts], axis=-1)  # (N, 2)

    out = jax.block_until_ready(pinn_forward(x, params))

    ref = reference_forward(x, params)
    assert out.shape == (n, D_OUT)
    assert jnp.allclose(out, ref, atol=1e-4, rtol=1e-4), "mismatch vs reference"

    print("KERNEL_OK")
</pallas_src>

<mosaic_0001>
module attributes {stable_mosaic.version = 11 : i64} {
  func.func @pinn_mlp_kernel(%arg0: i32, %arg1: memref<2x2048xf32, #tpu.memory_space<vmem>>, %arg2: memref<32x69xf32, #tpu.memory_space<vmem>>, %arg3: memref<1x2048xf32, #tpu.memory_space<vmem>>) attributes {dimension_semantics = [#tpu.dimension_semantics<parallel>], iteration_bounds = array<i64: 2>, scalar_prefetch = 0 : i64, scratch_operands = 0 : i64, tpu.core_type = #tpu.core_type<tc>, window_params = [{transform_indices = @transform_0, window_bounds = array<i64: 2, 2048>}, {pipeline_mode = #tpu.pipeline_mode<synchronous>, transform_indices = @transform_1, window_bounds = array<i64: 32, 69>}, {transform_indices = @transform_2, window_bounds = array<i64: 1, 2048>}]} {
    %c0 = arith.constant 0 : index
    %c0_0 = arith.constant 0 : index
    %0 = vector.load %arg1[%c0, %c0_0] : memref<2x2048xf32, #tpu.memory_space<vmem>>, vector<1x2048xf32>
    %c1 = arith.constant 1 : index
    %c0_1 = arith.constant 0 : index
    %1 = vector.load %arg1[%c1, %c0_1] : memref<2x2048xf32, #tpu.memory_space<vmem>>, vector<1x2048xf32>
    %c0_2 = arith.constant 0 : index
    %c0_3 = arith.constant 0 : index
    %2 = vector.load %arg2[%c0_2, %c0_3] : memref<32x69xf32, #tpu.memory_space<vmem>>, vector<32x32xf32>
    %c0_4 = arith.constant 0 : index
    %c32 = arith.constant 32 : index
    %3 = vector.load %arg2[%c0_4, %c32] : memref<32x69xf32, #tpu.memory_space<vmem>>, vector<32x1xf32>
    %c0_5 = arith.constant 0 : index
    %c33 = arith.constant 33 : index
    %4 = vector.load %arg2[%c0_5, %c33] : memref<32x69xf32, #tpu.memory_space<vmem>>, vector<32x1xf32>
    %c0_6 = arith.constant 0 : index
    %c34 = arith.constant 34 : index
    %5 = vector.load %arg2[%c0_6, %c34] : memref<32x69xf32, #tpu.memory_space<vmem>>, vector<1x32xf32>
    %c0_7 = arith.constant 0 : index
    %c66 = arith.constant 66 : index
    %6 = vector.load %arg2[%c0_7, %c66] : memref<32x69xf32, #tpu.memory_space<vmem>>, vector<32x1xf32>
    %c0_8 = arith.constant 0 : index
    %c67 = arith.constant 67 : index
    %7 = vector.load %arg2[%c0_8, %c67] : memref<32x69xf32, #tpu.memory_space<vmem>>, vector<32x1xf32>
    %c0_9 = arith.constant 0 : index
    %c68 = arith.constant 68 : index
    %8 = vector.load %arg2[%c0_9, %c68] : memref<32x69xf32, #tpu.memory_space<vmem>>, vector<1x1xf32>
    %9 = vector.broadcast %3 : vector<32x1xf32> to vector<32x2048xf32>
    %10 = vector.broadcast %0 : vector<1x2048xf32> to vector<32x2048xf32>
    %11 = arith.mulf %9, %10 : vector<32x2048xf32>
    %12 = vector.broadcast %4 : vector<32x1xf32> to vector<32x2048xf32>
    %13 = vector.broadcast %1 : vector<1x2048xf32> to vector<32x2048xf32>
    %14 = arith.mulf %12, %13 : vector<32x2048xf32>
    %15 = arith.addf %11, %14 : vector<32x2048xf32>
    %16 = vector.broadcast %6 : vector<32x1xf32> to vector<32x2048xf32>
    %17 = arith.addf %15, %16 : vector<32x2048xf32>
    %18 = math.tanh %17 : vector<32x2048xf32>
    %cst = arith.constant dense<0.000000e+00> : vector<32x2048xf32>
    %19 = tpu.matmul %2, %18, %cst {dimension_numbers = #tpu.dot_dimension_numbers<[1], [0], [0], [1], [0, 0, 1, 1], [], []>, precision = #tpu.contract_precision<fp32>} : vector<32x32xf32>, vector<32x2048xf32>, vector<32x2048xf32> -> vector<32x2048xf32>
    %20 = vector.broadcast %7 : vector<32x1xf32> to vector<32x2048xf32>
    %21 = arith.addf %19, %20 : vector<32x2048xf32>
    %22 = math.tanh %21 : vector<32x2048xf32>
    %cst_10 = arith.constant dense<0.000000e+00> : vector<1x2048xf32>
    %23 = tpu.matmul %5, %22, %cst_10 {dimension_numbers = #tpu.dot_dimension_numbers<[1], [0], [0], [1], [0, 0, 1, 1], [], []>, precision = #tpu.contract_precision<fp32>} : vector<1x32xf32>, vector<32x2048xf32>, vector<1x2048xf32> -> vector<1x2048xf32>
    %24 = vector.broadcast %8 : vector<1x1xf32> to vector<1x2048xf32>
    %25 = arith.addf %23, %24 : vector<1x2048xf32>
    %c0_11 = arith.constant 0 : index
    %c0_12 = arith.constant 0 : index
    %26 = vector.load %arg3[%c0_11, %c0_12] : memref<1x2048xf32, #tpu.memory_space<vmem>>, vector<1x2048xf32>
    tpu.vector_store %arg3[%c0_11, %c0_12], %25 {strides = array<i32>} : memref<1x2048xf32, #tpu.memory_space<vmem>>, vector<1x2048xf32>,
    return
  }
  func.func @transform_0(%arg0: i32) -> (i32, i32) {
    %c0_i32 = arith.constant 0 : i32
    %c0_i32_0 = arith.constant 0 : i32
    return %c0_i32, %arg0 : i32, i32
  }
  func.func @transform_1(%arg0: i32) -> (i32, i32) {
    %c0_i32 = arith.constant 0 : i32
    %c0_i32_0 = arith.constant 0 : i32
    %c0_i32_1 = arith.constant 0 : i32
    return %c0_i32, %c0_i32_0 : i32, i32
  }
  func.func @transform_2(%arg0: i32) -> (i32, i32) {
    %c0_i32 = arith.constant 0 : i32
    %c0_i32_0 = arith.constant 0 : i32
    return %c0_i32, %arg0 : i32, i32
  }
}

</mosaic_0001>

<llo_original>
// kernel: pinn_forward.1
$region0: #{pinn_forward.1}
  #allocation0 [shape = 'u32[]', space=smem, size = 0x4, offset = 0x4, fixed_abs, tag = 'smem constant byte address 0x4 - core index']
  #allocation1 [shape = 'u32[144,128]{1,0:T(1,128)}', space=vmem, size = 0x12000, scoped, tag = 'internal scratch']
  %s0 = inlined_call_operand.vmem [shape: f32[2,4096], index: 0, kind: input, shape index: {}]
  %s1 = inlined_call_operand.vmem [shape: f32[32,69], index: 1, kind: input, shape index: {}]
  %s2 = inlined_call_operand.vmem [shape: f32[1,4096], index: 2, kind: output, shape index: {}]
  %s3 = sld [smem:[#allocation0]]
  $region41: #{pinn_forward.1} parent=0
    _
  %s5 = ssub.s32 1, %s3
  %s6 = scalar_select 0, %s5, %s3
  loop: start=0, step=1, limit=4
  $region2: #{pinn_forward.1} parent=0 // loop_pre_header
    _
  $region3: #{pinn_forward.1} parent=0 // loop_header
    %s8 = sphi 0, %s12
    %p9 = scmp.ge.s32.totalorder %s8, 4
    %s18 = sphi 0, %s20
    %s21 = sphi 0, %s18
    %s22 = sphi 0, %s21
    %s38 = sphi 0, %s22
    %s42 = sphi 0, %s42
    %s44 = sphi 0, %s42
    %s45 = sphi 0, %s44
    %s59 = sphi 0, %s45
    %s65 = sphi 0, %s67
    %s68 = sphi 0, %s65
    %s69 = sphi 0, %s68
    %s85 = sphi 0, %s69
  $region4: #{pinn_forward.1} parent=0 // loop_header_branch
    %11 = sbr.rel (%p9) target = $region8
  $region5: #{pinn_forward.1} parent=0 // loop_body
    %s13 = ssub.s32 %s8, 1
    %s14 = ssub.s32 %s8, 2
    %s15 = sadd.s32 %s8, 1
    %s16 = ssub.s32 %s8, %s15
    %p17 = scmp.eq.s32.totalorder %s16, 0
    %s19 = sadd.s32 %s18, 1
    %s20 = scalar_select %p17, %s18, %s19
    %p23 = pneg %p17
    %p24 = scmp.eq.s32.totalorder %s8, 1
    %p25 = por %p23, %p24
    %p26 = scmp.ne.s32.totalorder %s18, %s21
    %p27 = scmp.eq.s32.totalorder %s8, 0
    %p28 = por %p26, %p27
    %p29 = scmp.ne.s32.totalorder %s18, %s21
    %p30 = scmp.eq.s32.totalorder %s13, 1
    %p31 = por %p29, %p30
    %p32 = scmp.ne.s32.totalorder %s21, %s22
    %p33 = scmp.eq.s32.totalorder %s13, 0
    %p34 = por %p32, %p33
    %p35 = scmp.ne.s32.totalorder %s21, %s22
    %p36 = scmp.eq.s32.totalorder %s14, 1
    %p37 = por %p35, %p36
    %p39 = scmp.ne.s32.totalorder %s22, %s38
    %p40 = scmp.eq.s32.totalorder %s14, 0
    %p41 = por %p39, %p40
    %s43 = sadd.s32 %s42, 1
    %p46 = scmp.eq.s32.totalorder %s8, 1
    %p47 = scmp.ne.s32.totalorder %s42, %s44
    %p48 = scmp.eq.s32.totalorder %s8, 0
    %p49 = por %p47, %p48
    %p50 = scmp.ne.s32.totalorder %s42, %s44
    %p51 = scmp.eq.s32.totalorder %s13, 1
    %p52 = por %p50, %p51
    %p53 = scmp.ne.s32.totalorder %s44, %s45
    %p54 = scmp.eq.s32.totalorder %s13, 0
    %p55 = por %p53, %p54
    %p56 = scmp.ne.s32.totalorder %s44, %s45
    %p57 = scmp.eq.s32.totalorder %s14, 1
    %p58 = por %p56, %p57
    %p60 = scmp.ne.s32.totalorder %s45, %s59
    %p61 = scmp.eq.s32.totalorder %s14, 0
    %p62 = por %p60, %p61
    %s63 = ssub.s32 %s8, %s15
    %p64 = scmp.eq.s32.totalorder %s63, 0
    %s66 = sadd.s32 %s65, 1
    %s67 = scalar_select %p64, %s65, %s66
    %p70 = pneg %p64
    %p71 = scmp.eq.s32.totalorder %s8, 1
    %p72 = por %p70, %p71
    %p73 = scmp.ne.s32.totalorder %s65, %s68
    %p74 = scmp.eq.s32.totalorder %s8, 0
    %p75 = por %p73, %p74
    %p76 = scmp.ne.s32.totalorder %s65, %s68
    %p77 = scmp.eq.s32.totalorder %s13, 1
    %p78 = por %p76, %p77
    %p79 = scmp.ne.s32.totalorder %s68, %s69
    %p80 = scmp.eq.s32.totalorder %s13, 0
    %p81 = por %p79, %p80
    %p82 = scmp.ne.s32.totalorder %s68, %s69
    %p83 = scmp.eq.s32.totalorder %s14, 1
    %p84 = por %p82, %p83
    %p86 = scmp.ne.s32.totalorder %s69, %s85
    %p87 = scmp.eq.s32.totalorder %s14, 0
    %p88 = por %p86, %p87
    %p89 = scmp.le.s32.totalorder 1, %s8
    %p90 = scmp.lt.s32.totalorder %s8, 3
    %p91 = pnand %p89, %p90
    %p92 = pneg %p91
    // Predicated region
    $region9: #{pinn_forward.1} parent=5 // pred_check
      _
    $region10: #{pinn_forward.1} parent=5 // pred_check_branch
      %94 = sbr.rel (%p91) target = $region12
    $region11: #{pinn_forward.1} parent=5 // pred_region
      %s95 = ssub.s32 %s8, 1
      // Predicated region
      $region13: #{pinn_forward.1} parent=11 // pred_check
        %p96 = pneg %p55
      $region14: #{pinn_forward.1} parent=11 // pred_check_branch
        %98 = sbr.rel (%p96) target = $region16
      $region15: #{pinn_forward.1} parent=11 // pred_region
        _
      $region16: #{pinn_forward.1} parent=11 // pred_fallthru
        _
    $region12: #{pinn_forward.1} parent=5 // pred_fallthru
      _
    %p99 = scmp.lt.s32.totalorder %s8, 2
    // Predicated region
    $region17: #{pinn_forward.1} parent=5 // pred_check
      %p100 = pneg %p99
    $region18: #{pinn_forward.1} parent=5 // pred_check_branch
      %102 = sbr.rel (%p100) target = $region20
    $region19: #{pinn_forward.1} parent=5 // pred_region
      // Predicated region
      $region21: #{pinn_forward.1} parent=19 // pred_check
        %p103 = pneg %p28
      $region22: #{pinn_forward.1} parent=19 // pred_check_branch
        %105 = sbr.rel (%p103) target = $region24
      $region23: #{pinn_forward.1} parent=19 // pred_region
        %s106 = smul.u32 16, %s8
        %p107 = scmp.lt.s32.totalorder %s106, 31
        %s108 = scalar_select %p107, %s106, 31
        %s109 = smul.addr %s108, 2
        %s110 = scalar_lea.vmem %s0, %s109
        %s111 = smul.u32 16, %s8
      $region24: #{pinn_forward.1} parent=19 // pred_fallthru
        _
    $region20: #{pinn_forward.1} parent=5 // pred_fallthru
      _
    %p112 = scmp.le.s32.totalorder 1, %s8
    %p113 = scmp.lt.s32.totalorder %s8, 3
    %p114 = pnand %p112, %p113
    %p115 = pneg %p114
    // Predicated region
    $region25: #{pinn_forward.1} parent=5 // pred_check
      _
    $region26: #{pinn_forward.1} parent=5 // pred_check_branch
      %117 = sbr.rel (%p114) target = $region28
    $region27: #{pinn_forward.1} parent=5 // pred_region
      %s118 = ssub.s32 %s8, 1
      %s119 = smul.u32 16, %s13
      %p120 = scmp.lt.s32.totalorder %s119, 31
      %s121 = scalar_select %p120, %s119, 31
      %s122 = smul.addr %s121, 2
      %s123 = scalar_lea.vmem %s0, %s122
      %p124 = pneg %p34
      %p125 = pneg %p31
      %p126 = pneg %p55
      %p127 = pneg %p52
      %p128 = pneg %p81
      %p129 = pneg %p78
      %s130 = smul.u32 16, %s13
      %p131 = scmp.lt.s32.totalorder %s130, 31
      %s132 = scalar_select %p131, %s130, 31
      %s133 = scalar_lea.vmem %s2, %s132
      %s134 = smul.u32 16, %s13
      %p135 = scmp.lt.s32.totalorder %s134, 31
      %s136 = scalar_select %p135, %s134, 31
      %s137 = smul.addr %s136, 2
      %s138 = scalar_lea.vmem %s0, %s137
      %s139 = smul.u32 16, %s13
      %s140 = smul.u32 16, %s13
      %p141 = scmp.lt.s32.totalorder %s140, 31
      %s142 = scalar_select %p141, %s140, 31
      %s143 = scalar_lea.vmem %s2, %s142
      %s144 = smul.u32 16, %s13
      %v145 = vld [vmem:[%s138] ss:$2 sm:$0xff]
      %s146 = scalar_lea.vmem %s138, 16
      %v147 = vld [vmem:[%s146] ss:$2 sm:$0xff]
      %s148 = scalar_lea.vmem %s138, 1
      %v149 = vld [vmem:[%s148] ss:$2 sm:$0xff]
      %s150 = scalar_lea.vmem %s138, 17
      %v151 = vld [vmem:[%s150] ss:$2 sm:$0xff]
      %v152 = vld [vmem:[%s1] sm:$0xff]
      %v153 = vld [vmem:[%s1 + $0x8] sm:$0xff]
      %v154 = vld [vmem:[%s1 + $0x10] sm:$0xff]
      %v155 = vld [vmem:[%s1 + $0x18] sm:$0xff]
      %v156 = vld [vmem:[%s1] sm:$0x1]
      %158 = vset.pattern.permute.xlu0 32
      %159 = vperm.xlu0 %158, %v152
      %v160 = vpop.permute.xlu0 %159
      %163 = vset.pattern.permute.xlu0 32
      %164 = vperm.xlu0 %163, %v153
      %v165 = vpop.permute.xlu0 %164
      %168 = vset.pattern.permute.xlu0 32
      %169 = vperm.xlu0 %168, %v154
      %v170 = vpop.permute.xlu0 %169
      %173 = vset.pattern.permute.xlu0 32
      %174 = vperm.xlu0 %173, %v155
      %v175 = vpop.permute.xlu0 %174
      %v179 = vlaneseq
      %v180 = vshrl.u32 %v179, 7
      %v181 = vsub.s32 0, %v180
      %v182 = vrot.slane %v145, %v181
      %v183 = vlaneseq
      %v184 = vshrl.u32 %v183, 7
      %v185 = vsub.s32 1, %v184
      %v186 = vrot.slane %v145, %v185
      %v187 = vlaneseq
      %v188 = vshrl.u32 %v187, 7
      %v189 = vsub.s32 2, %v188
      %v190 = vrot.slane %v145, %v189
      %v191 = vlaneseq
      %v192 = vshrl.u32 %v191, 7
      %v193 = vsub.s32 3, %v192
      %v194 = vrot.slane %v145, %v193
      %v195 = vlaneseq
      %v196 = vshrl.u32 %v195, 7
      %v197 = vsub.s32 4, %v196
      %v198 = vrot.slane %v145, %v197
      %v199 = vlaneseq
      %v200 = vshrl.u32 %v199, 7
      %v201 = vsub.s32 5, %v200
      %v202 = vrot.slane %v145, %v201
      %v203 = vlaneseq
      %v204 = vshrl.u32 %v203, 7
      %v205 = vsub.s32 6, %v204
      %v206 = vrot.slane %v145, %v205
      %v207 = vlaneseq
      %v208 = vshrl.u32 %v207, 7
      %v209 = vsub.s32 7, %v208
      %v210 = vrot.slane %v145, %v209
      %v211 = vlaneseq
      %v212 = vshrl.u32 %v211, 7
      %v213 = vsub.s32 0, %v212
      %v214 = vrot.slane %v147, %v213
      %v215 = vlaneseq
      %v216 = vshrl.u32 %v215, 7
      %v217 = vsub.s32 1, %v216
      %v218 = vrot.slane %v147, %v217
      %v219 = vlaneseq
      %v220 = vshrl.u32 %v219, 7
      %v221 = vsub.s32 2, %v220
      %v222 = vrot.slane %v147, %v221
      %v223 = vlaneseq
      %v224 = vshrl.u32 %v223, 7
      %v225 = vsub.s32 3, %v224
      %v226 = vrot.slane %v147, %v225
      %v227 = vlaneseq
      %v228 = vshrl.u32 %v227, 7
      %v229 = vsub.s32 4, %v228
      %v230 = vrot.slane %v147, %v229
      %v231 = vlaneseq
      %v232 = vshrl.u32 %v231, 7
      %v233 = vsub.s32 5, %v232
      %v234 = vrot.slane %v147, %v233
      %v235 = vlaneseq
      %v236 = vshrl.u32 %v235, 7
      %v237 = vsub.s32 6, %v236
      %v238 = vrot.slane %v147, %v237
      %v239 = vlaneseq
      %v240 = vshrl.u32 %v239, 7
      %v241 = vsub.s32 7, %v240
      %v242 = vrot.slane %v147, %v241
      %v259 = vmul.f32 %v160, %v182
      %v260 = vmul.f32 %v160, %v186
      %v261 = vmul.f32 %v160, %v190
      %v262 = vmul.f32 %v160, %v194
      %v263 = vmul.f32 %v160, %v198
      %v264 = vmul.f32 %v160, %v202
      %v265 = vmul.f32 %v160, %v206
      %v266 = vmul.f32 %v160, %v210
      %v267 = vmul.f32 %v160, %v214
      %v268 = vmul.f32 %v160, %v218
      %v269 = vmul.f32 %v160, %v222
      %v270 = vmul.f32 %v160, %v226
      %v271 = vmul.f32 %v160, %v230
      %v272 = vmul.f32 %v160, %v234
      %v273 = vmul.f32 %v160, %v238
      %v274 = vmul.f32 %v160, %v242
      %v275 = vmul.f32 %v165, %v182
      %v276 = vmul.f32 %v165, %v186
      %v277 = vmul.f32 %v165, %v190
      %v278 = vmul.f32 %v165, %v194
      %v279 = vmul.f32 %v165, %v198
      %v280 = vmul.f32 %v165, %v202
      %v281 = vmul.f32 %v165, %v206
      %v282 = vmul.f32 %v165, %v210
      %v283 = vmul.f32 %v165, %v214
      %v284 = vmul.f32 %v165, %v218
      %v285 = vmul.f32 %v165, %v222
      %v286 = vmul.f32 %v165, %v226
      %v287 = vmul.f32 %v165, %v230
      %v288 = vmul.f32 %v165, %v234
      %v289 = vmul.f32 %v165, %v238
      %v290 = vmul.f32 %v165, %v242
      %v291 = vmul.f32 %v170, %v182
      %v292 = vmul.f32 %v170, %v186
      %v293 = vmul.f32 %v170, %v190
      %v294 = vmul.f32 %v170, %v194
      %v295 = vmul.f32 %v170, %v198
      %v296 = vmul.f32 %v170, %v202
      %v297 = vmul.f32 %v170, %v206
      %v298 = vmul.f32 %v170, %v210
      %v299 = vmul.f32 %v170, %v214
      %v300 = vmul.f32 %v170, %v218
      %v301 = vmul.f32 %v170, %v222
      %v302 = vmul.f32 %v170, %v226
      %v303 = vmul.f32 %v170, %v230
      %v304 = vmul.f32 %v170, %v234
      %v305 = vmul.f32 %v170, %v238
      %v306 = vmul.f32 %v170, %v242
      %v307 = vmul.f32 %v175, %v182
      %v308 = vmul.f32 %v175, %v186
      %v309 = vmul.f32 %v175, %v190
      %v310 = vmul.f32 %v175, %v194
      %v311 = vmul.f32 %v175, %v198
      %v312 = vmul.f32 %v175, %v202
      %v313 = vmul.f32 %v175, %v206
      %v314 = vmul.f32 %v175, %v210
      %v315 = vmul.f32 %v175, %v214
      %v316 = vmul.f32 %v175, %v218
      %v317 = vmul.f32 %v175, %v222
      %v318 = vmul.f32 %v175, %v226
      %v319 = vmul.f32 %v175, %v230
      %v320 = vmul.f32 %v175, %v234
      %v321 = vmul.f32 %v175, %v238
      %v322 = vmul.f32 %v175, %v242
      %323 = vset.pattern.permute.xlu0 33
      %324 = vperm.xlu0 %323, %v152
      %v325 = vpop.permute.xlu0 %324
      %327 = vset.pattern.permute.xlu0 33
      %328 = vperm.xlu0 %327, %v153
      %v329 = vpop.permute.xlu0 %328
      %331 = vset.pattern.permute.xlu0 33
      %332 = vperm.xlu0 %331, %v154
      %v333 = vpop.permute.xlu0 %332
      %335 = vset.pattern.permute.xlu0 33
      %336 = vperm.xlu0 %335, %v155
      %v337 = vpop.permute.xlu0 %336
      %v341 = vlaneseq
      %v342 = vshrl.u32 %v341, 7
      %v343 = vsub.s32 0, %v342
      %v344 = vrot.slane %v149, %v343
      %v345 = vlaneseq
      %v346 = vshrl.u32 %v345, 7
      %v347 = vsub.s32 1, %v346
      %v348 = vrot.slane %v149, %v347
      %v349 = vlaneseq
      %v350 = vshrl.u32 %v349, 7
      %v351 = vsub.s32 2, %v350
      %v352 = vrot.slane %v149, %v351
      %v353 = vlaneseq
      %v354 = vshrl.u32 %v353, 7
      %v355 = vsub.s32 3, %v354
      %v356 = vrot.slane %v149, %v355
      %v357 = vlaneseq
      %v358 = vshrl.u32 %v357, 7
      %v359 = vsub.s32 4, %v358
      %v360 = vrot.slane %v149, %v359
      %v361 = vlaneseq
      %v362 = vshrl.u32 %v361, 7
      %v363 = vsub.s32 5, %v362
      %v364 = vrot.slane %v149, %v363
      %v365 = vlaneseq
      %v366 = vshrl.u32 %v365, 7
      %v367 = vsub.s32 6, %v366
      %v368 = vrot.slane %v149, %v367
      %v369 = vlaneseq
      %v370 = vshrl.u32 %v369, 7
      %v371 = vsub.s32 7, %v370
      %v372 = vrot.slane %v149, %v371
      %v373 = vlaneseq
      %v374 = vshrl.u32 %v373, 7
      %v375 = vsub.s32 0, %v374
      %v376 = vrot.slane %v151, %v375
      %v377 = vlaneseq
      %v378 = vshrl.u32 %v377, 7
      %v379 = vsub.s32 1, %v378
      %v380 = vrot.slane %v151, %v379
      %v381 = vlaneseq
      %v382 = vshrl.u32 %v381, 7
      %v383 = vsub.s32 2, %v382
      %v384 = vrot.slane %v151, %v383
      %v385 = vlaneseq
      %v386 = vshrl.u32 %v385, 7
      %v387 = vsub.s32 3, %v386
      %v388 = vrot.slane %v151, %v387
      %v389 = vlaneseq
      %v390 = vshrl.u32 %v389, 7
      %v391 = vsub.s32 4, %v390
      %v392 = vrot.slane %v151, %v391
      %v393 = vlaneseq
      %v394 = vshrl.u32 %v393, 7
      %v395 = vsub.s32 5, %v394
      %v396 = vrot.slane %v151, %v395
      %v397 = vlaneseq
      %v398 = vshrl.u32 %v397, 7
      %v399 = vsub.s32 6, %v398
      %v400 = vrot.slane %v151, %v399
      %v401 = vlaneseq
      %v402 = vshrl.u32 %v401, 7
      %v403 = vsub.s32 7, %v402
      %v404 = vrot.slane %v151, %v403
      %v421 = vmul.f32 %v325, %v344
      %v422 = vmul.f32 %v325, %v348
      %v423 = vmul.f32 %v325, %v352
      %v424 = vmul.f32 %v325, %v356
      %v425 = vmul.f32 %v325, %v360
      %v426 = vmul.f32 %v325, %v364
      %v427 = vmul.f32 %v325, %v368
      %v428 = vmul.f32 %v325, %v372
      %v429 = vmul.f32 %v325, %v376
      %v430 = vmul.f32 %v325, %v380
      %v431 = vmul.f32 %v325, %v384
      %v432 = vmul.f32 %v325, %v388
      %v433 = vmul.f32 %v325, %v392
      %v434 = vmul.f32 %v325, %v396
      %v435 = vmul.f32 %v325, %v400
      %v436 = vmul.f32 %v325, %v404
      %v437 = vmul.f32 %v329, %v344
      %v438 = vmul.f32 %v329, %v348
      %v439 = vmul.f32 %v329, %v352
      %v440 = vmul.f32 %v329, %v356
      %v441 = vmul.f32 %v329, %v360
      %v442 = vmul.f32 %v329, %v364
      %v443 = vmul.f32 %v329, %v368
      %v444 = vmul.f32 %v329, %v372
      %v445 = vmul.f32 %v329, %v376
      %v446 = vmul.f32 %v329, %v380
      %v447 = vmul.f32 %v329, %v384
      %v448 = vmul.f32 %v329, %v388
      %v449 = vmul.f32 %v329, %v392
      %v450 = vmul.f32 %v329, %v396
      %v451 = vmul.f32 %v329, %v400
      %v452 = vmul.f32 %v329, %v404
      %v453 = vmul.f32 %v333, %v344
      %v454 = vmul.f32 %v333, %v348
      %v455 = vmul.f32 %v333, %v352
      %v456 = vmul.f32 %v333, %v356
      %v457 = vmul.f32 %v333, %v360
      %v458 = vmul.f32 %v333, %v364
      %v459 = vmul.f32 %v333, %v368
      %v460 = vmul.f32 %v333, %v372
      %v461 = vmul.f32 %v333, %v376
      %v462 = vmul.f32 %v333, %v380
      %v463 = vmul.f32 %v333, %v384
      %v464 = vmul.f32 %v333, %v388
      %v465 = vmul.f32 %v333, %v392
      %v466 = vmul.f32 %v333, %v396
      %v467 = vmul.f32 %v333, %v400
      %v468 = vmul.f32 %v333, %v404
      %v469 = vmul.f32 %v337, %v344
      %v470 = vmul.f32 %v337, %v348
      %v471 = vmul.f32 %v337, %v352
      %v472 = vmul.f32 %v337, %v356
      %v473 = vmul.f32 %v337, %v360
      %v474 = vmul.f32 %v337, %v364
      %v475 = vmul.f32 %v337, %v368
      %v476 = vmul.f32 %v337, %v372
      %v477 = vmul.f32 %v337, %v376
      %v478 = vmul.f32 %v337, %v380
      %v479 = vmul.f32 %v337, %v384
      %v480 = vmul.f32 %v337, %v388
      %v481 = vmul.f32 %v337, %v392
      %v482 = vmul.f32 %v337, %v396
      %v483 = vmul.f32 %v337, %v400
      %v484 = vmul.f32 %v337, %v404
      %v485 = vadd.f32 %v259, %v421
      %v486 = vadd.f32 %v260, %v422
      %v487 = vadd.f32 %v261, %v423
      %v488 = vadd.f32 %v262, %v424
      %v489 = vadd.f32 %v263, %v425
      %v490 = vadd.f32 %v264, %v426
      %v491 = vadd.f32 %v265, %v427
      %v492 = vadd.f32 %v266, %v428
      %v493 = vadd.f32 %v267, %v429
      %v494 = vadd.f32 %v268, %v430
      %v495 = vadd.f32 %v269, %v431
      %v496 = vadd.f32 %v270, %v432
      %v497 = vadd.f32 %v271, %v433
      %v498 = vadd.f32 %v272, %v434
      %v499 = vadd.f32 %v273, %v435
      %v500 = vadd.f32 %v274, %v436
      %v501 = vadd.f32 %v275, %v437
      %v502 = vadd.f32 %v276, %v438
      %v503 = vadd.f32 %v277, %v439
      %v504 = vadd.f32 %v278, %v440
      %v505 = vadd.f32 %v279, %v441
      %v506 = vadd.f32 %v280, %v442
      %v507 = vadd.f32 %v281, %v443
      %v508 = vadd.f32 %v282, %v444
      %v509 = vadd.f32 %v283, %v445
      %v510 = vadd.f32 %v284, %v446
      %v511 = vadd.f32 %v285, %v447
      %v512 = vadd.f32 %v286, %v448
      %v513 = vadd.f32 %v287, %v449
      %v514 = vadd.f32 %v288, %v450
      %v515 = vadd.f32 %v289, %v451
      %v516 = vadd.f32 %v290, %v452
      %v517 = vadd.f32 %v291, %v453
      %v518 = vadd.f32 %v292, %v454
      %v519 = vadd.f32 %v293, %v455
      %v520 = vadd.f32 %v294, %v456
      %v521 = vadd.f32 %v295, %v457
      %v522 = vadd.f32 %v296, %v458
      %v523 = vadd.f32 %v297, %v459
      %v524 = vadd.f32 %v298, %v460
      %v525 = vadd.f32 %v299, %v461
      %v526 = vadd.f32 %v300, %v462
      %v527 = vadd.f32 %v301, %v463
      %v528 = vadd.f32 %v302, %v464
      %v529 = vadd.f32 %v303, %v465
      %v530 = vadd.f32 %v304, %v466
      %v531 = vadd.f32 %v305, %v467
      %v532 = vadd.f32 %v306, %v468
      %v533 = vadd.f32 %v307, %v469
      %v534 = vadd.f32 %v308, %v470
      %v535 = vadd.f32 %v309, %v471
      %v536 = vadd.f32 %v310, %v472
      %v537 = vadd.f32 %v311, %v473
      %v538 = vadd.f32 %v312, %v474
      %v539 = vadd.f32 %v313, %v475
      %v540 = vadd.f32 %v314, %v476
      %v541 = vadd.f32 %v315, %v477
      %v542 = vadd.f32 %v316, %v478
      %v543 = vadd.f32 %v317, %v479
      %v544 = vadd.f32 %v318, %v480
      %v545 = vadd.f32 %v319, %v481
      %v546 = vadd.f32 %v320, %v482
      %v547 = vadd.f32 %v321, %v483
      %v548 = vadd.f32 %v322, %v484
      %549 = vset.pattern.permute.xlu0 66
      %550 = vperm.xlu0 %549, %v152
      %v551 = vpop.permute.xlu0 %550
      %553 = vset.pattern.permute.xlu0 66
      %554 = vperm.xlu0 %553, %v153
      %v555 = vpop.permute.xlu0 %554
      %557 = vset.pattern.permute.xlu0 66
      %558 = vperm.xlu0 %557, %v154
      %v559 = vpop.permute.xlu0 %558
      %561 = vset.pattern.permute.xlu0 66
      %562 = vperm.xlu0 %561, %v155
      %v563 = vpop.permute.xlu0 %562
      %v565 = vadd.f32 %v485, %v551
      %v566 = vadd.f32 %v486, %v551
      %v567 = vadd.f32 %v487, %v551
      %v568 = vadd.f32 %v488, %v551
      %v569 = vadd.f32 %v489, %v551
      %v570 = vadd.f32 %v490, %v551
      %v571 = vadd.f32 %v491, %v551
      %v572 = vadd.f32 %v492, %v551
      %v573 = vadd.f32 %v493, %v551
      %v574 = vadd.f32 %v494, %v551
      %v575 = vadd.f32 %v495, %v551
      %v576 = vadd.f32 %v496, %v551
      %v577 = vadd.f32 %v497, %v551
      %v578 = vadd.f32 %v498, %v551
      %v579 = vadd.f32 %v499, %v551
      %v580 = vadd.f32 %v500, %v551
      %v581 = vadd.f32 %v501, %v555
      %v582 = vadd.f32 %v502, %v555
      %v583 = vadd.f32 %v503, %v555
      %v584 = vadd.f32 %v504, %v555
      %v585 = vadd.f32 %v505, %v555
      %v586 = vadd.f32 %v506, %v555
      %v587 = vadd.f32 %v507, %v555
      %v588 = vadd.f32 %v508, %v555
      %v589 = vadd.f32 %v509, %v555
      %v590 = vadd.f32 %v510, %v555
      %v591 = vadd.f32 %v511, %v555
      %v592 = vadd.f32 %v512, %v555
      %v593 = vadd.f32 %v513, %v555
      %v594 = vadd.f32 %v514, %v555
      %v595 = vadd.f32 %v515, %v555
      %v596 = vadd.f32 %v516, %v555
      %v597 = vadd.f32 %v517, %v559
      %v598 = vadd.f32 %v518, %v559
      %v599 = vadd.f32 %v519, %v559
      %v600 = vadd.f32 %v520, %v559
      %v601 = vadd.f32 %v521, %v559
      %v602 = vadd.f32 %v522, %v559
      %v603 = vadd.f32 %v523, %v559
      %v604 = vadd.f32 %v524, %v559
      %v605 = vadd.f32 %v525, %v559
      %v606 = vadd.f32 %v526, %v559
      %v607 = vadd.f32 %v527, %v559
      %v608 = vadd.f32 %v528, %v559
      %v609 = vadd.f32 %v529, %v559
      %v610 = vadd.f32 %v530, %v559
      %v611 = vadd.f32 %v531, %v559
      %v612 = vadd.f32 %v532, %v559
      %v613 = vadd.f32 %v533, %v563
      %v614 = vadd.f32 %v534, %v563
      %v615 = vadd.f32 %v535, %v563
      %v616 = vadd.f32 %v536, %v563
      %v617 = vadd.f32 %v537, %v563
      %v618 = vadd.f32 %v538, %v563
      %v619 = vadd.f32 %v539, %v563
      %v620 = vadd.f32 %v540, %v563
      %v621 = vadd.f32 %v541, %v563
      %v622 = vadd.f32 %v542, %v563
      %v623 = vadd.f32 %v543, %v563
      %v624 = vadd.f32 %v544, %v563
      %v625 = vadd.f32 %v545, %v563
      %v626 = vadd.f32 %v546, %v563
      %v627 = vadd.f32 %v547, %v563
      %v628 = vadd.f32 %v548, %v563
      %v629 = vtanh.pop %v565
      %v630 = vtanh.pop %v566
      %v631 = vtanh.pop %v567
      %v632 = vtanh.pop %v568
      %v633 = vtanh.pop %v569
      %v634 = vtanh.pop %v570
      %v635 = vtanh.pop %v571
      %v636 = vtanh.pop %v572
      %v637 = vtanh.pop %v573
      %v638 = vtanh.pop %v574
      %v639 = vtanh.pop %v575
      %v640 = vtanh.pop %v576
      %v641 = vtanh.pop %v577
      %v642 = vtanh.pop %v578
      %v643 = vtanh.pop %v579
      %v644 = vtanh.pop %v580
      %v645 = vtanh.pop %v581
      %v646 = vtanh.pop %v582
      %v647 = vtanh.pop %v583
      %v648 = vtanh.pop %v584
      %v649 = vtanh.pop %v585
      %v650 = vtanh.pop %v586
      %v651 = vtanh.pop %v587
      %v652 = vtanh.pop %v588
      %v653 = vtanh.pop %v589
      %v654 = vtanh.pop %v590
      %v655 = vtanh.pop %v591
      %v656 = vtanh.pop %v592
      %v657 = vtanh.pop %v593
      %v658 = vtanh.pop %v594
      %v659 = vtanh.pop %v595
      %v660 = vtanh.pop %v596
      %v661 = vtanh.pop %v597
      %v662 = vtanh.pop %v598
      %v663 = vtanh.pop %v599
      %v664 = vtanh.pop %v600
      %v665 = vtanh.pop %v601
      %v666 = vtanh.pop %v602
      %v667 = vtanh.pop %v603
      %v668 = vtanh.pop %v604
      %v669 = vtanh.pop %v605
      %v670 = vtanh.pop %v606
      %v671 = vtanh.pop %v607
      %v672 = vtanh.pop %v608
      %v673 = vtanh.pop %v609
      %v674 = vtanh.pop %v610
      %v675 = vtanh.pop %v611
      %v676 = vtanh.pop %v612
      %v677 = vtanh.pop %v613
      %v678 = vtanh.pop %v614
      %v679 = vtanh.pop %v615
      %v680 = vtanh.pop %v616
      %v681 = vtanh.pop %v617
      %v682 = vtanh.pop %v618
      %v683 = vtanh.pop %v619
      %v684 = vtanh.pop %v620
      %v685 = vtanh.pop %v621
      %v686 = vtanh.pop %v622
      %v687 = vtanh.pop %v623
      %v688 = vtanh.pop %v624
      %v689 = vtanh.pop %v625
      %v690 = vtanh.pop %v626
      %v691 = vtanh.pop %v627
      %v692 = vtanh.pop %v628
      %693 = vset.pattern.permute.xlu0 67
      %694 = vperm.xlu0 %693, %v152
      %v695 = vpop.permute.xlu0 %694
      %697 = vset.pattern.permute.xlu0 67
      %698 = vperm.xlu0 %697, %v153
      %v699 = vpop.permute.xlu0 %698
      %701 = vset.pattern.permute.xlu0 67
      %702 = vperm.xlu0 %701, %v154
      %v703 = vpop.permute.xlu0 %702
      %705 = vset.pattern.permute.xlu0 67
      %706 = vperm.xlu0 %705, %v155
      %v707 = vpop.permute.xlu0 %706
      %vm709 = vcmask 261120
      %v710 = vsel %vm709, %v152, 0
      %v712 = vsel %vm709, %v153, 0
      %v714 = vsel %vm709, %v154, 0
      %v716 = vsel %vm709, %v155, 0
      %v718 = vand.u32 %v630, 4294901760
      %719 = vmatprep.subr.mxu0 %v718
      %v720 = vand.u32 %v629, 4294901760
      %721 = vmatpush1.msra.mxu0 %v720
      %v722 = vand.u32 %v646, 4294901760
      %723 = vmatprep.subr.mxu0 %v722
      %v724 = vand.u32 %v645, 4294901760
      %725 = vmatpush1.msra.mxu0 %v724
      %v726 = vand.u32 %v662, 4294901760
      %727 = vmatprep.subr.mxu0 %v726
      %v728 = vand.u32 %v661, 4294901760
      %729 = vmatpush1.msra.mxu0 %v728
      %v730 = vand.u32 %v678, 4294901760
      %731 = vmatprep.subr.mxu0 %v730
      %v732 = vand.u32 %v677, 4294901760
      %733 = vmatpush1.msra.mxu0 %v732
      %734 = vmatprep.subr.mxu0 0.0
      %735 = vmatpush1.msra.mxu0 0.0
      %736 = vmatprep.subr.mxu0 0.0
      %737 = vmatpush1.msra.mxu0 0.0
      %738 = vmatprep.subr.mxu0 0.0
      %739 = vmatpush1.msra.mxu0 0.0
      %740 = vmatprep.subr.mxu0 0.0
      %741 = vmatpush1.msra.mxu0 0.0
      %742 = vmatprep.subr.mxu0 0.0
      %743 = vmatpush1.msra.mxu0 0.0
      %744 = vmatprep.subr.mxu0 0.0
      %745 = vmatpush1.msra.mxu0 0.0
      %746 = vmatprep.subr.mxu0 0.0
      %747 = vmatpush1.msra.mxu0 0.0
      %748 = vmatprep.subr.mxu0 0.0
      %749 = vmatpush1.msra.mxu0 0.0
      %750 = vmatprep.subr.mxu0 0.0
      %751 = vmatpush1.msra.mxu0 0.0
      %752 = vmatprep.subr.mxu0 0.0
      %753 = vmatpush1.msra.mxu0 0.0
      %754 = vmatprep.subr.mxu0 0.0
      %755 = vmatpush1.msra.mxu0 0.0
      %756 = vmatprep.subr.mxu0 0.0
      %757 = vmatpush1.msra.mxu0 0.0
      %758 = vmatprep.subr.mxu0 0.0
      %759 = vmatpush1.msra.mxu0 0.0
      %760 = vmatprep.subr.mxu0 0.0
      %761 = vmatpush1.msra.mxu0 0.0
      %762 = vmatprep.subr.mxu0 0.0
      %763 = vmatpush1.msra.mxu0 0.0
      %764 = vmatprep.subr.mxu0 0.0
      %765 = vmatpush1.msra.mxu0 0.0
      %766 = vmatprep.subr.mxu0 0.0
      %767 = vmatpush1.msra.mxu0 0.0
      %768 = vmatprep.subr.mxu0 0.0
      %769 = vmatpush1.msra.mxu0 0.0
      %770 = vmatprep.subr.mxu0 0.0
      %771 = vmatpush1.msra.mxu0 0.0
      %772 = vmatprep.subr.mxu0 0.0
      %773 = vmatpush1.msra.mxu0 0.0
      %774 = vmatprep.subr.mxu0 0.0
      %775 = vmatpush1.msra.mxu0 0.0
      %776 = vmatprep.subr.mxu0 0.0
      %777 = vmatpush1.msra.mxu0 0.0
      %778 = vmatprep.subr.mxu0 0.0
      %779 = vmatpush1.msra.mxu0 0.0
      %780 = vmatprep.subr.mxu0 0.0
      %781 = vmatpush1.msra.mxu0 0.0
      %782 = vmatprep.subr.mxu0 0.0
      %783 = vmatpush1.msra.mxu0 0.0
      %784 = vmatprep.subr.mxu0 0.0
      %785 = vmatpush1.msra.mxu0 0.0
      %786 = vmatprep.subr.mxu0 0.0
      %787 = vmatpush1.msra.mxu0 0.0
      %788 = vmatprep.subr.mxu0 0.0
      %789 = vmatpush1.msra.mxu0 0.0
      %790 = vmatprep.mubr.f32.mxu0 0.0
      %v791 = vand.u32 %v710, 4294901760
      %v792 = vsub.f32 %v710, %v791
      %v793 = vand.u32 %v792, 4294901760
      %v794 = vsub.f32 %v792, %v793
      %v795 = vand.u32 %v794, 4294901760
      %796 = vmatmul.mubr.f32.gmra.mrb[0].mxu0 %v795
      %v797 = vpop.f32.mrb[0].mxu0
      %v798 = vadd.f32 %v695, %v797
      %v799 = vpop.f32.mrb[0].mxu0
      %v800 = vadd.f32 %v695, %v799
      %801 = vmatprep.mubr.f32.mxu0 0.0
      %v802 = vand.u32 %v712, 4294901760
      %v803 = vsub.f32 %v712, %v802
      %v804 = vand.u32 %v803, 4294901760
      %v805 = vsub.f32 %v803, %v804
      %v806 = vand.u32 %v805, 4294901760
      %807 = vmatmul.mubr.f32.gmra.mrb[0].mxu0 %v806
      %v808 = vpop.f32.mrb[0].mxu0
      %v809 = vadd.f32 %v699, %v808
      %v810 = vpop.f32.mrb[0].mxu0
      %v811 = vadd.f32 %v699, %v810
      %812 = vmatprep.mubr.f32.mxu0 0.0
      %v813 = vand.u32 %v714, 4294901760
      %v814 = vsub.f32 %v714, %v813
      %v815 = vand.u32 %v814, 4294901760
      %v816 = vsub.f32 %v814, %v815
      %v817 = vand.u32 %v816, 4294901760
      %818 = vmatmul.mubr.f32.gmra.mrb[0].mxu0 %v817
      %v819 = vpop.f32.mrb[0].mxu0
      %v820 = vadd.f32 %v703, %v819
      %v821 = vpop.f32.mrb[0].mxu0
      %v822 = vadd.f32 %v703, %v821
      %823 = vmatprep.mubr.f32.mxu0 0.0
      %v824 = vand.u32 %v716, 4294901760
      %v825 = vsub.f32 %v716, %v824
      %v826 = vand.u32 %v825, 4294901760
      %v827 = vsub.f32 %v825, %v826
      %v828 = vand.u32 %v827, 4294901760
      %829 = vmatmul.mubr.f32.gmra.mrb[0].mxu0 %v828
      %v830 = vpop.f32.mrb[0].mxu0
      %v831 = vadd.f32 %v707, %v830
      %v832 = vpop.f32.mrb[0].mxu0
      %v833 = vadd.f32 %v707, %v832
      %834 = vdwg.mxu0
      %v835 = vand.u32 %v630, 4294901760
      %v836 = vsub.f32 %v630, %v835
      %v837 = vand.u32 %v836, 4294901760
      %v838 = vsub.f32 %v836, %v837
      %v839 = vand.u32 %v838, 4294901760
      %840 = vmatprep.subr.mxu0 %v839
      %v841 = vand.u32 %v629, 4294901760
      %v842 = vsub.f32 %v629, %v841
      %v843 = vand.u32 %v842, 4294901760
      %v844 = vsub.f32 %v842, %v843
      %v845 = vand.u32 %v844, 4294901760
      %846 = vmatpush1.msra.mxu0 %v845
      %v847 = vand.u32 %v646, 4294901760
      %v848 = vsub.f32 %v646, %v847
      %v849 = vand.u32 %v848, 4294901760
      %v850 = vsub.f32 %v848, %v849
      %v851 = vand.u32 %v850, 4294901760
      %852 = vmatprep.subr.mxu0 %v851
      %v853 = vand.u32 %v645, 4294901760
      %v854 = vsub.f32 %v645, %v853
      %v855 = vand.u32 %v854, 4294901760
      %v856 = vsub.f32 %v854, %v855
      %v857 = vand.u32 %v856, 4294901760
      %858 = vmatpush1.msra.mxu0 %v857
      %v859 = vand.u32 %v662, 4294901760
      %v860 = vsub.f32 %v662, %v859
      %v861 = vand.u32 %v860, 4294901760
      %v862 = vsub.f32 %v860, %v861
      %v863 = vand.u32 %v862, 4294901760
      %864 = vmatprep.subr.mxu0 %v863
      %v865 = vand.u32 %v661, 4294901760
      %v866 = vsub.f32 %v661, %v865
      %v867 = vand.u32 %v866, 4294901760
      %v868 = vsub.f32 %v866, %v867
      %v869 = vand.u32 %v868, 4294901760
      %870 = vmatpush1.msra.mxu0 %v869
      %v871 = vand.u32 %v678, 4294901760
      %v872 = vsub.f32 %v678, %v871
      %v873 = vand.u32 %v872, 4294901760
      %v874 = vsub.f32 %v872, %v873
      %v875 = vand.u32 %v874, 4294901760
      %876 = vmatprep.subr.mxu0 %v875
      %v877 = vand.u32 %v677, 4294901760
      %v878 = vsub.f32 %v677, %v877
      %v879 = vand.u32 %v878, 4294901760
      %v880 = vsub.f32 %v878, %v879
      %v881 = vand.u32 %v880, 4294901760
      %882 = vmatpush1.msra.mxu0 %v881
      %883 = vmatprep.subr.mxu0 0.0
      %884 = vmatpush1.msra.mxu0 0.0
      %885 = vmatprep.subr.mxu0 0.0
      %886 = vmatpush1.msra.mxu0 0.0
      %887 = vmatprep.subr.mxu0 0.0
      %888 = vmatpush1.msra.mxu0 0.0
      %889 = vmatprep.subr.mxu0 0.0
      %890 = vmatpush1.msra.mxu0 0.0
      %891 = vmatprep.subr.mxu0 0.0
      %892 = vmatpush1.msra.mxu0 0.0
      %893 = vmatprep.subr.mxu0 0.0
      %894 = vmatpush1.msra.mxu0 0.0
      %895 = vmatprep.subr.mxu0 0.0
      %896 = vmatpush1.msra.mxu0 0.0
      %897 = vmatprep.subr.mxu0 0.0
      %898 = vmatpush1.msra.mxu0 0.0
      %899 = vmatprep.subr.mxu0 0.0
      %900 = vmatpush1.msra.mxu0 0.0
      %901 = vmatprep.subr.mxu0 0.0
      %902 = vmatpush1.msra.mxu0 0.0
      %903 = vmatprep.subr.mxu0 0.0
      %904 = vmatpush1.msra.mxu0 0.0
      %905 = vmatprep.subr.mxu0 0.0
      %906 = vmatpush1.msra.mxu0 0.0
      %907 = vmatprep.subr.mxu0 0.0
      %908 = vmatpush1.msra.mxu0 0.0
      %909 = vmatprep.subr.mxu0 0.0
      %910 = vmatpush1.msra.mxu0 0.0
      %911 = vmatprep.subr.mxu0 0.0
      %912 = vmatpush1.msra.mxu0 0.0
      %913 = vmatprep.subr.mxu0 0.0
      %914 = vmatpush1.msra.mxu0 0.0
      %915 = vmatprep.subr.mxu0 0.0
      %916 = vmatpush1.msra.mxu0 0.0
      %917 = vmatprep.subr.mxu0 0.0
      %918 = vmatpush1.msra.mxu0 0.0
      %919 = vmatprep.subr.mxu0 0.0
      %920 = vmatpush1.msra.mxu0 0.0
      %921 = vmatprep.subr.mxu0 0.0
      %922 = vmatpush1.msra.mxu0 0.0
      %923 = vmatprep.subr.mxu0 0.0
      %924 = vmatpush1.msra.mxu0 0.0
      %925 = vmatprep.subr.mxu0 0.0
      %926 = vmatpush1.msra.mxu0 0.0
      %927 = vmatprep.subr.mxu0 0.0
      %928 = vmatpush1.msra.mxu0 0.0
      %929 = vmatprep.subr.mxu0 0.0
      %930 = vmatpush1.msra.mxu0 0.0
      %931 = vmatprep.subr.mxu0 0.0
      %932 = vmatpush1.msra.mxu0 0.0
      %933 = vmatprep.subr.mxu0 0.0
      %934 = vmatpush1.msra.mxu0 0.0
      %935 = vmatprep.subr.mxu0 0.0
      %936 = vmatpush1.msra.mxu0 0.0
      %937 = vmatprep.subr.mxu0 0.0
      %938 = vmatpush1.msra.mxu0 0.0
      %939 = vmatprep.mubr.f32.mxu0 0.0
      %v940 = vand.u32 %v710, 4294901760
      %941 = vmatmul.mubr.f32.gmra.mrb[0].mxu0 %v940
      %v942 = vpop.f32.mrb[0].mxu0
      %v943 = vadd.f32 %v798, %v942
      %v944 = vpop.f32.mrb[0].mxu0
      %v945 = vadd.f32 %v800, %v944
      %946 = vmatprep.mubr.f32.mxu0 0.0
      %v947 = vand.u32 %v712, 4294901760
      %948 = vmatmul.mubr.f32.gmra.mrb[0].mxu0 %v947
      %v949 = vpop.f32.mrb[0].mxu0
      %v950 = vadd.f32 %v809, %v949
      %v951 = vpop.f32.mrb[0].mxu0
      %v952 = vadd.f32 %v811, %v951
      %953 = vmatprep.mubr.f32.mxu0 0.0
      %v954 = vand.u32 %v714, 4294901760
      %955 = vmatmul.mubr.f32.gmra.mrb[0].mxu0 %v954
      %v956 = vpop.f32.mrb[0].mxu0
      %v957 = vadd.f32 %v820, %v956
      %v958 = vpop.f32.mrb[0].mxu0
      %v959 = vadd.f32 %v822, %v958
      %960 = vmatprep.mubr.f32.mxu0 0.0
      %v961 = vand.u32 %v716, 4294901760
      %962 = vmatmul.mubr.f32.gmra.mrb[0].mxu0 %v961
      %v963 = vpop.f32.mrb[0].mxu0
      %v964 = vadd.f32 %v831, %v963
      %v965 = vpop.f32.mrb[0].mxu0
      %v966 = vadd.f32 %v833, %v965
      %967 = vdwg.mxu0
      %v968 = vand.u32 %v630, 4294901760
      %v969 = vsub.f32 %v630, %v968
      %970 = vmatprep.subr.mxu0 %v969
      %v971 = vand.u32 %v629, 4294901760
      %v972 = vsub.f32 %v629, %v971
      %973 = vmatpush1.msra.mxu0 %v972
      %v974 = vand.u32 %v646, 4294901760
      %v975 = vsub.f32 %v646, %v974
      %976 = vmatprep.subr.mxu0 %v975
      %v977 = vand.u32 %v645, 4294901760
      %v978 = vsub.f32 %v645, %v977
      %979 = vmatpush1.msra.mxu0 %v978
      %v980 = vand.u32 %v662, 4294901760
      %v981 = vsub.f32 %v662, %v980
      %982 = vmatprep.subr.mxu0 %v981
      %v983 = vand.u32 %v661, 4294901760
      %v984 = vsub.f32 %v661, %v983
      %985 = vmatpush1.msra.mxu0 %v984
      %v986 = vand.u32 %v678, 4294901760
      %v987 = vsub.f32 %v678, %v986
      %988 = vmatprep.subr.mxu0 %v987
      %v989 = vand.u32 %v677, 4294901760
      %v990 = vsub.f32 %v677, %v989
      %991 = vmatpush1.msra.mxu0 %v990
      %992 = vmatprep.subr.mxu0 0.0
      %993 = vmatpush1.msra.mxu0 0.0
      %994 = vmatprep.subr.mxu0 0.0
      %995 = vmatpush1.msra.mxu0 0.0
      %996 = vmatprep.subr.mxu0 0.0
      %997 = vmatpush1.msra.mxu0 0.0
      %998 = vmatprep.subr.mxu0 0.0
      %999 = vmatpush1.msra.mxu0 0.0
      %1000 = vmatprep.subr.mxu0 0.0
      %1001 = vmatpush1.msra.mxu0 0.0
      %1002 = vmatprep.subr.mxu0 0.0
      %1003 = vmatpush1.msra.mxu0 0.0
      %1004 = vmatprep.subr.mxu0 0.0
      %1005 = vmatpush1.msra.mxu0 0.0
      %1006 = vmatprep.subr.mxu0 0.0
      %1007 = vmatpush1.msra.mxu0 0.0
      %1008 = vmatprep.subr.mxu0 0.0
      %1009 = vmatpush1.msra.mxu0 0.0
      %1010 = vmatprep.subr.mxu0 0.0
      %1011 = vmatpush1.msra.mxu0 0.0
      %1012 = vmatprep.subr.mxu0 0.0
      %1013 = vmatpush1.msra.mxu0 0.0
      %1014 = vmatprep.subr.mxu0 0.0
      %1015 = vmatpush1.msra.mxu0 0.0
      %1016 = vmatprep.subr.mxu0 0.0
      %1017 = vmatpush1.msra.mxu0 0.0
      %1018 = vmatprep.subr.mxu0 0.0
      %1019 = vmatpush1.msra.mxu0 0.0
      %1020 = vmatprep.subr.mxu0 0.0
      %1021 = vmatpush1.msra.mxu0 0.0
      %1022 = vmatprep.subr.mxu0 0.0
      %1023 = vmatpush1.msra.mxu0 0.0
      %1024 = vmatprep.subr.mxu0 0.0
      %1025 = vmatpush1.msra.mxu0 0.0
      %1026 = vmatprep.subr.mxu0 0.0
      %1027 = vmatpush1.msra.mxu0 0.0
      %1028 = vmatprep.subr.mxu0 0.0
      %1029 = vmatpush1.msra.mxu0 0.0
      %1030 = vmatprep.subr.mxu0 0.0
      %1031 = vmatpush1.msra.mxu0 0.0
      %1032 = vmatprep.subr.mxu0 0.0
      %1033 = vmatpush1.msra.mxu0 0.0
      %1034 = vmatprep.subr.mxu0 0.0
      %1035 = vmatpush1.msra.mxu0 0.0
      %1036 = vmatprep.subr.mxu0 0.0
      %1037 = vmatpush1.msra.mxu0 0.0
      %1038 = vmatprep.subr.mxu0 0.0
      %1039 = vmatpush1.msra.mxu0 0.0
      %1040 = vmatprep.subr.mxu0 0.0
      %1041 = vmatpush1.msra.mxu0 0.0
      %1042 = vmatprep.subr.mxu0 0.0
      %1043 = vmatpush1.msra.mxu0 0.0
      %1044 = vmatprep.subr.mxu0 0.0
      %1045 = vmatpush1.msra.mxu0 0.0
      %1046 = vmatprep.subr.mxu0 0.0
      %1047 = vmatpush1.msra.mxu0 0.0
      %1048 = vmatprep.mubr.f32.mxu0 0.0
      %v1049 = vand.u32 %v710, 4294901760
      %v1050 = vsub.f32 %v710, %v1049
      %1051 = vmatmul.mubr.f32.gmra.mrb[0].mxu0 %v1050
      %v1052 = vpop.f32.mrb[0].mxu0
      %v1053 = vadd.f32 %v943, %v1052
      %v1054 = vpop.f32.mrb[0].mxu0
      %v1055 = vadd.f32 %v945, %v1054
      %1056 = vmatprep.mubr.f32.mxu0 0.0
      %v1057 = vand.u32 %v712, 4294901760
      %v1058 = vsub.f32 %v712, %v1057
      %1059 = vmatmul.mubr.f32.gmra.mrb[0].mxu0 %v1058
      %v1060 = vpop.f32.mrb[0].mxu0
      %v1061 = vadd.f32 %v950, %v1060
      %v1062 = vpop.f32.mrb[0].mxu0
      %v1063 = vadd.f32 %v952, %v1062
      %1064 = vmatprep.mubr.f32.mxu0 0.0
      %v1065 = vand.u32 %v714, 4294901760
      %v1066 = vsub.f32 %v714, %v1065
      %1067 = vmatmul.mubr.f32.gmra.mrb[0].mxu0 %v1066
      %v1068 = vpop.f32.mrb[0].mxu0
      %v1069 = vadd.f32 %v957, %v1068
      %v1070 = vpop.f32.mrb[0].mxu0
      %v1071 = vadd.f32 %v959, %v1070
      %1072 = vmatprep.mubr.f32.mxu0 0.0
      %v1073 = vand.u32 %v716, 4294901760
      %v1074 = vsub.f32 %v716, %v1073
      %1075 = vmatmul.mubr.f32.gmra.mrb[0].mxu0 %v1074
      %v1076 = vpop.f32.mrb[0].mxu0
      %v1077 = vadd.f32 %v964, %v1076
      %v1078 = vpop.f32.mrb[0].mxu0
      %v1079 = vadd.f32 %v966, %v1078
      %1080 = vdwg.mxu0
      %v1081 = vand.u32 %v630, 4294901760
      %1082 = vmatprep.subr.mxu0 %v1081
      %v1083 = vand.u32 %v629, 4294901760
      %1084 = vmatpush1.msra.mxu0 %v1083
      %v1085 = vand.u32 %v646, 4294901760
      %1086 = vmatprep.subr.mxu0 %v1085
      %v1087 = vand.u32 %v645, 4294901760
      %1088 = vmatpush1.msra.mxu0 %v1087
      %v1089 = vand.u32 %v662, 4294901760
      %1090 = vmatprep.subr.mxu0 %v1089
      %v1091 = vand.u32 %v661, 4294901760
      %1092 = vmatpush1.msra.mxu0 %v1091
      %v1093 = vand.u32 %v678, 4294901760
      %1094 = vmatprep.subr.mxu0 %v1093
      %v1095 = vand.u32 %v677, 4294901760
      %1096 = vmatpush1.msra.mxu0 %v1095
      %1097 = vmatprep.subr.mxu0 0.0
      %1098 = vmatpush1.msra.mxu0 0.0
      %1099 = vmatprep.subr.mxu0 0.0
      %1100 = vmatpush1.msra.mxu0 0.0
      %1101 = vmatprep.subr.mxu0 0.0
      %1102 = vmatpush1.msra.mxu0 0.0
      %1103 = vmatprep.subr.mxu0 0.0
      %1104 = vmatpush1.msra.mxu0 0.0
      %1105 = vmatprep.subr.mxu0 0.0
      %1106 = vmatpush1.msra.mxu0 0.0
      %1107 = vmatprep.subr.mxu0 0.0
      %1108 = vmatpush1.msra.mxu0 0.0
      %1109 = vmatprep.subr.mxu0 0.0
      %1110 = vmatpush1.msra.mxu0 0.0
      %1111 = vmatprep.subr.mxu0 0.0
      %1112 = vmatpush1.msra.mxu0 0.0
      %1113 = vmatprep.subr.mxu0 0.0
      %1114 = vmatpush1.msra.mxu0 0.0
      %1115 = vmatprep.subr.mxu0 0.0
      %1116 = vmatpush1.msra.mxu0 0.0
      %1117 = vmatprep.subr.mxu0 0.0
      %1118 = vmatpush1.msra.mxu0 0.0
      %1119 = vmatprep.subr.mxu0 0.0
      %1120 = vmatpush1.msra.mxu0 0.0
      %1121 = vmatprep.subr.mxu0 0.0
      %1122 = vmatpush1.msra.mxu0 0.0
      %1123 = vmatprep.subr.mxu0 0.0
      %1124 = vmatpush1.msra.mxu0 0.0
      %1125 = vmatprep.subr.mxu0 0.0
      %1126 = vmatpush1.msra.mxu0 0.0
      %1127 = vmatprep.subr.mxu0 0.0
      %1128 = vmatpush1.msra.mxu0 0.0
      %1129 = vmatprep.subr.mxu0 0.0
      %1130 = vmatpush1.msra.mxu0 0.0
      %1131 = vmatprep.subr.mxu0 0.0
      %1132 = vmatpush1.msra.mxu0 0.0
      %1133 = vmatprep.subr.mxu0 0.0
      %1134 = vmatpush1.msra.mxu0 0.0
      %1135 = vmatprep.subr.mxu0 0.0
      %1136 = vmatpush1.msra.mxu0 0.0
      %1137 = vmatprep.subr.mxu0 0.0
      %1138 = vmatpush1.msra.mxu0 0.0
      %1139 = vmatprep.subr.mxu0 0.0
      %1140 = vmatpush1.msra.mxu0 0.0
      %1141 = vmatprep.subr.mxu0 0.0
      %1142 = vmatpush1.msra.mxu0 0.0
      %1143 = vmatprep.subr.mxu0 0.0
      %1144 = vmatpush1.msra.mxu0 0.0
      %1145 = vmatprep.subr.mxu0 0.0
      %1146 = vmatpush1.msra.mxu0 0.0
      %1147 = vmatprep.subr.mxu0 0.0
      %1148 = vmatpush1.msra.mxu0 0.0
      %1149 = vmatprep.subr.mxu0 0.0
      %1150 = vmatpush1.msra.mxu0 0.0
      %1151 = vmatprep.subr.mxu0 0.0
      %1152 = vmatpush1.msra.mxu0 0.0
      %1153 = vmatprep.mubr.f32.mxu0 0.0
      %v1154 = vand.u32 %v710, 4294901760
      %v1155 = vsub.f32 %v710, %v1154
      %v1156 = vand.u32 %v1155, 4294901760
      %1157 = vmatmul.mubr.f32.gmra.mrb[0].mxu0 %v1156
      %v1158 = vpop.f32.mrb[0].mxu0
      %v1159 = vadd.f32 %v1053, %v1158
      %v1160 = vpop.f32.mrb[0].mxu0
      %v1161 = vadd.f32 %v1055, %v1160
      %1162 = vmatprep.mubr.f32.mxu0 0.0
      %v1163 = vand.u32 %v712, 4294901760
      %v1164 = vsub.f32 %v712, %v1163
      %v1165 = vand.u32 %v1164, 4294901760
      %1166 = vmatmul.mubr.f32.gmra.mrb[0].mxu0 %v1165
      %v1167 = vpop.f32.mrb[0].mxu0
      %v1168 = vadd.f32 %v1061, %v1167
      %v1169 = vpop.f32.mrb[0].mxu0
      %v1170 = vadd.f32 %v1063, %v1169
      %1171 = vmatprep.mubr.f32.mxu0 0.0
      %v1172 = vand.u32 %v714, 4294901760
      %v1173 = vsub.f32 %v714, %v1172
      %v1174 = vand.u32 %v1173, 4294901760
      %1175 = vmatmul.mubr.f32.gmra.mrb[0].mxu0 %v1174
      %v1176 = vpop.f32.mrb[0].mxu0
      %v1177 = vadd.f32 %v1069, %v1176
      %v1178 = vpop.f32.mrb[0].mxu0
      %v1179 = vadd.f32 %v1071, %v1178
      %1180 = vmatprep.mubr.f32.mxu0 0.0
      %v1181 = vand.u32 %v716, 4294901760
      %v1182 = vsub.f32 %v716, %v1181
      %v1183 = vand.u32 %v1182, 4294901760
      %1184 = vmatmul.mubr.f32.gmra.mrb[0].mxu0 %v1183
      %v1185 = vpop.f32.mrb[0].mxu0
      %v1186 = vadd.f32 %v1077, %v1185
      %v1187 = vpop.f32.mrb[0].mxu0
      %v1188 = vadd.f32 %v1079, %v1187
      %1189 = vdwg.mxu0
      %v1190 = vand.u32 %v630, 4294901760
      %v1191 = vsub.f32 %v630, %v1190
      %v1192 = vand.u32 %v1191, 4294901760
      %1193 = vmatprep.subr.mxu0 %v1192
      %v1194 = vand.u32 %v629, 4294901760
      %v1195 = vsub.f32 %v629, %v1194
      %v1196 = vand.u32 %v1195, 4294901760
      %1197 = vmatpush1.msra.mxu0 %v1196
      %v1198 = vand.u32 %v646, 4294901760
      %v1199 = vsub.f32 %v646, %v1198
      %v1200 = vand.u32 %v1199, 4294901760
      %1201 = vmatprep.subr.mxu0 %v1200
      %v1202 = vand.u32 %v645, 4294901760
      %v1203 = vsub.f32 %v645, %v1202
      %v1204 = vand.u32 %v1203, 4294901760
      %1205 = vmatpush1.msra.mxu0 %v1204
      %v1206 = vand.u32 %v662, 4294901760
      %v1207 = vsub.f32 %v662, %v1206
      %v1208 = vand.u32 %v1207, 4294901760
      %1209 = vmatprep.subr.mxu0 %v1208
      %v1210 = vand.u32 %v661, 4294901760
      %v1211 = vsub.f32 %v661, %v1210
      %v1212 = vand.u32 %v1211, 4294901760
      %1213 = vmatpush1.msra.mxu0 %v1212
      %v1214 = vand.u32 %v678, 4294901760
      %v1215 = vsub.f32 %v678, %v1214
      %v1216 = vand.u32 %v1215, 4294901760
      %1217 = vmatprep.subr.mxu0 %v1216
      %v1218 = vand.u32 %v677, 4294901760
      %v1219 = vsub.f32 %v677, %v1218
      %v1220 = vand.u32 %v1219, 4294901760
      %1221 = vmatpush1.msra.mxu0 %v1220
      %1222 = vmatprep.subr.mxu0 0.0
      %1223 = vmatpush1.msra.mxu0 0.0
      %1224 = vmatprep.subr.mxu0 0.0
      %1225 = vmatpush1.msra.mxu0 0.0
      %1226 = vmatprep.subr.mxu0 0.0
      %1227 = vmatpush1.msra.mxu0 0.0
      %1228 = vmatprep.subr.mxu0 0.0
      %1229 = vmatpush1.msra.mxu0 0.0
      %1230 = vmatprep.subr.mxu0 0.0
      %1231 = vmatpush1.msra.mxu0 0.0
      %1232 = vmatprep.subr.mxu0 0.0
      %1233 = vmatpush1.msra.mxu0 0.0
      %1234 = vmatprep.subr.mxu0 0.0
      %1235 = vmatpush1.msra.mxu0 0.0
      %1236 = vmatprep.subr.mxu0 0.0
      %1237 = vmatpush1.msra.mxu0 0.0
      %1238 = vmatprep.subr.mxu0 0.0
      %1239 = vmatpush1.msra.mxu0 0.0
      %1240 = vmatprep.subr.mxu0 0.0
      %1241 = vmatpush1.msra.mxu0 0.0
      %1242 = vmatprep.subr.mxu0 0.0
      %1243 = vmatpush1.msra.mxu0 0.0
      %1244 = vmatprep.subr.mxu0 0.0
      %1245 = vmatpush1.msra.mxu0 0.0
      %1246 = vmatprep.subr.mxu0 0.0
      %1247 = vmatpush1.msra.mxu0 0.0
      %1248 = vmatprep.subr.mxu0 0.0
      %1249 = vmatpush1.msra.mxu0 0.0
      %1250 = vmatprep.subr.mxu0 0.0
      %1251 = vmatpush1.msra.mxu0 0.0
      %1252 = vmatprep.subr.mxu0 0.0
      %1253 = vmatpush1.msra.mxu0 0.0
      %1254 = vmatprep.subr.mxu0 0.0
      %1255 = vmatpush1.msra.mxu0 0.0
      %1256 = vmatprep.subr.mxu0 0.0
      %1257 = vmatpush1.msra.mxu0 0.0
      %1258 = vmatprep.subr.mxu0 0.0
      %1259 = vmatpush1.msra.mxu0 0.0
      %1260 = vmatprep.subr.mxu0 0.0
      %1261 = vmatpush1.msra.mxu0 0.0
      %1262 = vmatprep.subr.mxu0 0.0
      %1263 = vmatpush1.msra.mxu0 0.0
      %1264 = vmatprep.subr.mxu0 0.0
      %1265 = vmatpush1.msra.mxu0 0.0
      %1266 = vmatprep.subr.mxu0 0.0
      %1267 = vmatpush1.msra.mxu0 0.0
      %1268 = vmatprep.subr.mxu0 0.0
      %1269 = vmatpush1.msra.mxu0 0.0
      %1270 = vmatprep.subr.mxu0 0.0
      %1271 = vmatpush1.msra.mxu0 0.0
      %1272 = vmatprep.subr.mxu0 0.0
      %1273 = vmatpush1.msra.mxu0 0.0
      %1274 = vmatprep.subr.mxu0 0.0
      %1275 = vmatpush1.msra.mxu0 0.0
      %1276 = vmatprep.subr.mxu0 0.0
      %1277 = vmatpush1.msra.mxu0 0.0
      %1278 = vmatprep.mubr.f32.mxu0 0.0
      %v1279 = vand.u32 %v710, 4294901760
      %1280 = vmatmul.mubr.f32.gmra.mrb[0].mxu0 %v1279
      %v1281 = vpop.f32.mrb[0].mxu0
      %v1282 = vadd.f32 %v1159, %v1281
      %v1283 = vpop.f32.mrb[0].mxu0
      %v1284 = vadd.f32 %v1161, %v1283
      %1285 = vmatprep.mubr.f32.mxu0 0.0
      %v1286 = vand.u32 %v712, 4294901760
      %1287 = vmatmul.mubr.f32.gmra.mrb[0].mxu0 %v1286
      %v1288 = vpop.f32.mrb[0].mxu0
      %v1289 = vadd.f32 %v1168, %v1288
      %v1290 = vpop.f32.mrb[0].mxu0
      %v1291 = vadd.f32 %v1170, %v1290
      %1292 = vmatprep.mubr.f32.mxu0 0.0
      %v1293 = vand.u32 %v714, 4294901760
      %1294 = vmatmul.mubr.f32.gmra.mrb[0].mxu0 %v1293
      %v1295 = vpop.f32.mrb[0].mxu0
      %v1296 = vadd.f32 %v1177, %v1295
      %v1297 = vpop.f32.mrb[0].mxu0
      %v1298 = vadd.f32 %v1179, %v1297
      %1299 = vmatprep.mubr.f32.mxu0 0.0
      %v1300 = vand.u32 %v716, 4294901760
      %1301 = vmatmul.mubr.f32.gmra.mrb[0].mxu0 %v1300
      %v1302 = vpop.f32.mrb[0].mxu0
      %v1303 = vadd.f32 %v1186, %v1302
      %v1304 = vpop.f32.mrb[0].mxu0
      %v1305 = vadd.f32 %v1188, %v1304
      %1306 = vdwg.mxu0
      %v1307 = vand.u32 %v630, 4294901760
      %1308 = vmatprep.subr.mxu0 %v1307
      %v1309 = vand.u32 %v629, 4294901760
      %1310 = vmatpush1.msra.mxu0 %v1309
      %v1311 = vand.u32 %v646, 4294901760
      %1312 = vmatprep.subr.mxu0 %v1311
      %v1313 = vand.u32 %v645, 4294901760
      %1314 = vmatpush1.msra.mxu0 %v1313
      %v1315 = vand.u32 %v662, 4294901760
      %1316 = vmatprep.subr.mxu0 %v1315
      %v1317 = vand.u32 %v661, 4294901760
      %1318 = vmatpush1.msra.mxu0 %v1317
      %v1319 = vand.u32 %v678, 4294901760
      %1320 = vmatprep.subr.mxu0 %v1319
      %v1321 = vand.u32 %v677, 4294901760
      %1322 = vmatpush1.msra.mxu0 %v1321
      %1323 = vmatprep.subr.mxu0 0.0
      %1324 = vmatpush1.msra.mxu0 0.0
      %1325 = vmatprep.subr.mxu0 0.0
      %1326 = vmatpush1.msra.mxu0 0.0
      %1327 = vmatprep.subr.mxu0 0.0
      %1328 = vmatpush1.msra.mxu0 0.0
      %1329 = vmatprep.subr.mxu0 0.0
      %1330 = vmatpush1.msra.mxu0 0.0
      %1331 = vmatprep.subr.mxu0 0.0
      %1332 = vmatpush1.msra.mxu0 0.0
      %1333 = vmatprep.subr.mxu0 0.0
      %1334 = vmatpush1.msra.mxu0 0.0
      %1335 = vmatprep.subr.mxu0 0.0
      %1336 = vmatpush1.msra.mxu0 0.0
      %1337 = vmatprep.subr.mxu0 0.0
      %1338 = vmatpush1.msra.mxu0 0.0
      %1339 = vmatprep.subr.mxu0 0.0
      %1340 = vmatpush1.msra.mxu0 0.0
      %1341 = vmatprep.subr.mxu0 0.0
      %1342 = vmatpush1.msra.mxu0 0.0
      %1343 = vmatprep.subr.mxu0 0.0
      %1344 = vmatpush1.msra.mxu0 0.0
      %1345 = vmatprep.subr.mxu0 0.0
      %1346 = vmatpush1.msra.mxu0 0.0
      %1347 = vmatprep.subr.mxu0 0.0
      %1348 = vmatpush1.msra.mxu0 0.0
      %1349 = vmatprep.subr.mxu0 0.0
      %1350 = vmatpush1.msra.mxu0 0.0
      %1351 = vmatprep.subr.mxu0 0.0
      %1352 = vmatpush1.msra.mxu0 0.0
      %1353 = vmatprep.subr.mxu0 0.0
      %1354 = vmatpush1.msra.mxu0 0.0
      %1355 = vmatprep.subr.mxu0 0.0
      %1356 = vmatpush1.msra.mxu0 0.0
      %1357 = vmatprep.subr.mxu0 0.0
      %1358 = vmatpush1.msra.mxu0 0.0
      %1359 = vmatprep.subr.mxu0 0.0
      %1360 = vmatpush1.msra.mxu0 0.0
      %1361 = vmatprep.subr.mxu0 0.0
      %1362 = vmatpush1.msra.mxu0 0.0
      %1363 = vmatprep.subr.mxu0 0.0
      %1364 = vmatpush1.msra.mxu0 0.0
      %1365 = vmatprep.subr.mxu0 0.0
      %1366 = vmatpush1.msra.mxu0 0.0
      %1367 = vmatprep.subr.mxu0 0.0
      %1368 = vmatpush1.msra.mxu0 0.0
      %1369 = vmatprep.subr.mxu0 0.0
      %1370 = vmatpush1.msra.mxu0 0.0
      %1371 = vmatprep.subr.mxu0 0.0
      %1372 = vmatpush1.msra.mxu0 0.0
      %1373 = vmatprep.subr.mxu0 0.0
      %1374 = vmatpush1.msra.mxu0 0.0
      %1375 = vmatprep.subr.mxu0 0.0
      %1376 = vmatpush1.msra.mxu0 0.0
      %1377 = vmatprep.subr.mxu0 0.0
      %1378 = vmatpush1.msra.mxu0 0.0
      %1379 = vmatprep.mubr.f32.mxu0 0.0
      %v1380 = vand.u32 %v710, 4294901760
      %1381 = vmatmul.mubr.f32.gmra.mrb[0].mxu0 %v1380
      %v1382 = vpop.f32.mrb[0].mxu0
      %v1383 = vadd.f32 %v1282, %v1382
      %v1384 = vpop.f32.mrb[0].mxu0
      %v1385 = vadd.f32 %v1284, %v1384
      %1386 = vmatprep.mubr.f32.mxu0 0.0
      %v1387 = vand.u32 %v712, 4294901760
      %1388 = vmatmul.mubr.f32.gmra.mrb[0].mxu0 %v1387
      %v1389 = vpop.f32.mrb[0].mxu0
      %v1390 = vadd.f32 %v1289, %v1389
      %v1391 = vpop.f32.mrb[0].mxu0
      %v1392 = vadd.f32 %v1291, %v1391
      %1393 = vmatprep.mubr.f32.mxu0 0.0
      %v1394 = vand.u32 %v714, 4294901760
      %1395 = vmatmul.mubr.f32.gmra.mrb[0].mxu0 %v1394
      %v1396 = vpop.f32.mrb[0].mxu0
      %v1397 = vadd.f32 %v1296, %v1396
      %v1398 = vpop.f32.mrb[0].mxu0
      %v1399 = vadd.f32 %v1298, %v1398
      %1400 = vmatprep.mubr.f32.mxu0 0.0
      %v1401 = vand.u32 %v716, 4294901760
      %1402 = vmatmul.mubr.f32.gmra.mrb[0].mxu0 %v1401
      %v1403 = vpop.f32.mrb[0].mxu0
      %v1404 = vadd.f32 %v1303, %v1403
      %v1405 = vpop.f32.mrb[0].mxu0
      %v1406 = vadd.f32 %v1305, %v1405
      %1407 = vdwg.mxu0
      %v1408 = vand.u32 %v632, 4294901760
      %1409 = vmatprep.subr.mxu0 %v1408
      %v1410 = vand.u32 %v631, 4294901760
      %1411 = vmatpush1.msra.mxu0 %v1410
      %v1412 = vand.u32 %v648, 4294901760
      %1413 = vmatprep.subr.mxu0 %v1412
      %v1414 = vand.u32 %v647, 4294901760
      %1415 = vmatpush1.msra.mxu0 %v1414
      %v1416 = vand.u32 %v664, 4294901760
      %1417 = vmatprep.subr.mxu0 %v1416
      %v1418 = vand.u32 %v663, 4294901760
      %1419 = vmatpush1.msra.mxu0 %v1418
      %v1420 = vand.u32 %v680, 4294901760
      %1421 = vmatprep.subr.mxu0 %v1420
      %v1422 = vand.u32 %v679, 4294901760
      %1423 = vmatpush1.msra.mxu0 %v1422
      %1424 = vmatprep.subr.mxu0 0.0
      %1425 = vmatpush1.msra.mxu0 0.0
      %1426 = vmatprep.subr.mxu0 0.0
      %1427 = vmatpush1.msra.mxu0 0.0
      %1428 = vmatprep.subr.mxu0 0.0
      %1429 = vmatpush1.msra.mxu0 0.0
      %1430 = vmatprep.subr.mxu0 0.0
      %1431 = vmatpush1.msra.mxu0 0.0
      %1432 = vmatprep.subr.mxu0 0.0
      %1433 = vmatpush1.msra.mxu0 0.0
      %1434 = vmatprep.subr.mxu0 0.0
      %1435 = vmatpush1.msra.mxu0 0.0
      %1436 = vmatprep.subr.mxu0 0.0
      %1437 = vmatpush1.msra.mxu0 0.0
      %1438 = vmatprep.subr.mxu0 0.0
      %1439 = vmatpush1.msra.mxu0 0.0
      %1440 = vmatprep.subr.mxu0 0.0
      %1441 = vmatpush1.msra.mxu0 0.0
      %1442 = vmatprep.subr.mxu0 0.0
      %1443 = vmatpush1.msra.mxu0 0.0
      %1444 = vmatprep.subr.mxu0 0.0
      %1445 = vmatpush1.msra.mxu0 0.0
      %1446 = vmatprep.subr.mxu0 0.0
      %1447 = vmatpush1.msra.mxu0 0.0
      %1448 = vmatprep.subr.mxu0 0.0
      %1449 = vmatpush1.msra.mxu0 0.0
      %1450 = vmatprep.subr.mxu0 0.0
      %1451 = vmatpush1.msra.mxu0 0.0
      %1452 = vmatprep.subr.mxu0 0.0
      %1453 = vmatpush1.msra.mxu0 0.0
      %1454 = vmatprep.subr.mxu0 0.0
      %1455 = vmatpush1.msra.mxu0 0.0
      %1456 = vmatprep.subr.mxu0 0.0
      %1457 = vmatpush1.msra.mxu0 0.0
      %1458 = vmatprep.subr.mxu0 0.0
      %1459 = vmatpush1.msra.mxu0 0.0
      %1460 = vmatprep.subr.mxu0 0.0
      %1461 = vmatpush1.msra.mxu0 0.0
      %1462 = vmatprep.subr.mxu0 0.0
      %1463 = vmatpush1.msra.mxu0 0.0
      %1464 = vmatprep.subr.mxu0 0.0
      %1465 = vmatpush1.msra.mxu0 0.0
      %1466 = vmatprep.subr.mxu0 0.0
      %1467 = vmatpush1.msra.mxu0 0.0
      %1468 = vmatprep.subr.mxu0 0.0
      %1469 = vmatpush1.msra.mxu0 0.0
      %1470 = vmatprep.subr.mxu0 0.0
      %1471 = vmatpush1.msra.mxu0 0.0
      %1472 = vmatprep.subr.mxu0 0.0
      %1473 = vmatpush1.msra.mxu0 0.0
      %1474 = vmatprep.subr.mxu0 0.0
      %1475 = vmatpush1.msra.mxu0 0.0
      %1476 = vmatprep.subr.mxu0 0.0
      %1477 = vmatpush1.msra.mxu0 0.0
      %1478 = vmatprep.subr.mxu0 0.0
      %1479 = vmatpush1.msra.mxu0 0.0
      %1480 = vmatprep.mubr.f32.mxu0 0.0
      %v1481 = vand.u32 %v710, 4294901760
      %v1482 = vsub.f32 %v710, %v1481
      %v1483 = vand.u32 %v1482, 4294901760
      %v1484 = vsub.f32 %v1482, %v1483
      %v1485 = vand.u32 %v1484, 4294901760
      %1486 = vmatmul.mubr.f32.gmra.mrb[0].mxu0 %v1485
      %v1487 = vpop.f32.mrb[0].mxu0
      %v1488 = vadd.f32 %v695, %v1487
      %v1489 = vpop.f32.mrb[0].mxu0
      %v1490 = vadd.f32 %v695, %v1489
      %1491 = vmatprep.mubr.f32.mxu0 0.0
      %v1492 = vand.u32 %v712, 4294901760
      %v1493 = vsub.f32 %v712, %v1492
      %v1494 = vand.u32 %v1493, 4294901760
      %v1495 = vsub.f32 %v1493, %v1494
      %v1496 = vand.u32 %v1495, 4294901760
      %1497 = vmatmul.mubr.f32.gmra.mrb[0].mxu0 %v1496
      %v1498 = vpop.f32.mrb[0].mxu0
      %v1499 = vadd.f32 %v699, %v1498
      %v1500 = vpop.f32.mrb[0].mxu0
      %v1501 = vadd.f32 %v699, %v1500
      %1502 = vmatprep.mubr.f32.mxu0 0.0
      %v1503 = vand.u32 %v714, 4294901760
      %v1504 = vsub.f32 %v714, %v1503
      %v1505 = vand.u32 %v1504, 4294901760
      %v1506 = vsub.f32 %v1504, %v1505
      %v1507 = vand.u32 %v1506, 4294901760
      %1508 = vmatmul.mubr.f32.gmra.mrb[0].mxu0 %v1507
      %v1509 = vpop.f32.mrb[0].mxu0
      %v1510 = vadd.f32 %v703, %v1509
      %v1511 = vpop.f32.mrb[0].mxu0
      %v1512 = vadd.f32 %v703, %v1511
      %1513 = vmatprep.mubr.f32.mxu0 0.0
      %v1514 = vand.u32 %v716, 4294901760
      %v1515 = vsub.f32 %v716, %v1514
      %v1516 = vand.u32 %v1515, 4294901760
      %v1517 = vsub.f32 %v1515, %v1516
      %v1518 = vand.u32 %v1517, 4294901760
      %1519 = vmatmul.mubr.f32.gmra.mrb[0].mxu0 %v1518
      %v1520 = vpop.f32.mrb[0].mxu0
      %v1521 = vadd.f32 %v707, %v1520
      %v1522 = vpop.f32.mrb[0].mxu0
      %v1523 = vadd.f32 %v707, %v1522
      %1524 = vdwg.mxu0
      %v1525 = vand.u32 %v632, 4294901760
      %v1526 = vsub.f32 %v632, %v1525
      %v1527 = vand.u32 %v1526, 4294901760
      %v1528 = vsub.f32 %v1526, %v1527
      %v1529 = vand.u32 %v1528, 4294901760
      %1530 = vmatprep.subr.mxu0 %v1529
      %v1531 = vand.u32 %v631, 4294901760
      %v1532 = vsub.f32 %v631, %v1531
      %v1533 = vand.u32 %v1532, 4294901760
      %v1534 = vsub.f32 %v1532, %v1533
      %v1535 = vand.u32 %v1534, 4294901760
      %1536 = vmatpush1.msra.mxu0 %v1535
      %v1537 = vand.u32 %v648, 4294901760
      %v1538 = vsub.f32 %v648, %v1537
      %v1539 = vand.u32 %v1538, 4294901760
      %v1540 = vsub.f32 %v1538, %v1539
      %v1541 = vand.u32 %v1540, 4294901760
      %1542 = vmatprep.subr.mxu0 %v1541
      %v1543 = vand.u32 %v647, 4294901760
      %v1544 = vsub.f32 %v647, %v1543
      %v1545 = vand.u32 %v1544, 4294901760
      %v1546 = vsub.f32 %v1544, %v1545
      %v1547 = vand.u32 %v1546, 4294901760
      %1548 = vmatpush1.msra.mxu0 %v1547
      %v1549 = vand.u32 %v664, 4294901760
      %v1550 = vsub.f32 %v664, %v1549
      %v1551 = vand.u32 %v1550, 4294901760
      %v1552 = vsub.f32 %v1550, %v1551
      %v1553 = vand.u32 %v1552, 4294901760
      %1554 = vmatprep.subr.mxu0 %v1553
      %v1555 = vand.u32 %v663, 4294901760
      %v1556 = vsub.f32 %v663, %v1555
      %v1557 = vand.u32 %v1556, 4294901760
      %v1558 = vsub.f32 %v1556, %v1557
      %v1559 = vand.u32 %v1558, 4294901760
      %1560 = vmatpush1.msra.mxu0 %v1559
      %v1561 = vand.u32 %v680, 4294901760
      %v1562 = vsub.f32 %v680, %v1561
      %v1563 = vand.u32 %v1562, 4294901760
      %v1564 = vsub.f32 %v1562, %v1563
      %v1565 = vand.u32 %v1564, 4294901760
      %1566 = vmatprep.subr.mxu0 %v1565
      %v1567 = vand.u32 %v679, 4294901760
      %v1568 = vsub.f32 %v679, %v1567
      %v1569 = vand.u32 %v1568, 4294901760
      %v1570 = vsub.f32 %v1568, %v1569
      %v1571 = vand.u32 %v1570, 4294901760
      %1572 = vmatpush1.msra.mxu0 %v1571
      %1573 = vmatprep.subr.mxu0 0.0
      %1574 = vmatpush1.msra.mxu0 0.0
      %1575 = vmatprep.subr.mxu0 0.0
      %1576 = vmatpush1.msra.mxu0 0.0
      %1577 = vmatprep.subr.mxu0 0.0
      %1578 = vmatpush1.msra.mxu0 0.0
      %1579 = vmatprep.subr.mxu0 0.0
      %1580 = vmatpush1.msra.mxu0 0.0
      %1581 = vmatprep.subr.mxu0 0.0
      %1582 = vmatpush1.msra.mxu0 0.0
      %1583 = vmatprep.subr.mxu0 0.0
      %1584 = vmatpush1.msra.mxu0 0.0
      %1585 = vmatprep.subr.mxu0 0.0
      %1586 = vmatpush1.msra.mxu0 0.0
      %1587 = vmatprep.subr.mxu0 0.0
      %1588 = vmatpush1.msra.mxu0 0.0
      %1589 = vmatprep.subr.mxu0 0.0
      %1590 = vmatpush1.msra.mxu0 0.0
      %1591 = vmatprep.subr.mxu0 0.0
      %1592 = vmatpush1.msra.mxu0 0.0
      %1593 = vmatprep.subr.mxu0 0.0
      %1594 = vmatpush1.msra.mxu0 0.0
      %1595 = vmatprep.subr.mxu0 0.0
      %1596 = vmatpush1.msra.mxu0 0.0
      %1597 = vmatprep.subr.mxu0 0.0
      %1598 = vmatpush1.msra.mxu0 0.0
      %1599 = vmatprep.subr.mxu0 0.0
      %1600 = vmatpush1.msra.mxu0 0.0
      %1601 = vmatprep.subr.mxu0 0.0
      %1602 = vmatpush1.msra.mxu0 0.0
      %1603 = vmatprep.subr.mxu0 0.0
      %1604 = vmatpush1.msra.mxu0 0.0
      %1605 = vmatprep.subr.mxu0 0.0
      %1606 = vmatpush1.msra.mxu0 0.0
      %1607 = vmatprep.subr.mxu0 0.0
      %1608 = vmatpush1.msra.mxu0 0.0
      %1609 = vmatprep.subr.mxu0 0.0
      %1610 = vmatpush1.msra.mxu0 0.0
      %1611 = vmatprep.subr.mxu0 0.0
      %1612 = vmatpush1.msra.mxu0 0.0
      %1613 = vmatprep.subr.mxu0 0.0
      %1614 = vmatpush1.msra.mxu0 0.0
      %1615 = vmatprep.subr.mxu0 0.0
      %1616 = vmatpush1.msra.mxu0 0.0
      %1617 = vmatprep.subr.mxu0 0.0
      %1618 = vmatpush1.msra.mxu0 0.0
      %1619 = vmatprep.subr.mxu0 0.0
      %1620 = vmatpush1.msra.mxu0 0.0
      %1621 = vmatprep.subr.mxu0 0.0
      %1622 = vmatpush1.msra.mxu0 0.0
      %1623 = vmatprep.subr.mxu0 0.0
      %1624 = vmatpush1.msra.mxu0 0.0
      %1625 = vmatprep.subr.mxu0 0.0
      %1626 = vmatpush1.msra.mxu0 0.0
      %1627 = vmatprep.subr.mxu0 0.0
      %1628 = vmatpush1.msra.mxu0 0.0
      %1629 = vmatprep.mubr.f32.mxu0 0.0
      %v1630 = vand.u32 %v710, 4294901760
      %1631 = vmatmul.mubr.f32.gmra.mrb[0].mxu0 %v1630
      %v1632 = vpop.f32.mrb[0].mxu0
      %v1633 = vadd.f32 %v1488, %v1632
      %v1634 = vpop.f32.mrb[0].mxu0
      %v1635 = vadd.f32 %v1490, %v1634
      %1636 = vmatprep.mubr.f32.mxu0 0.0
      %v1637 = vand.u32 %v712, 4294901760
      %1638 = vmatmul.mubr.f32.gmra.mrb[0].mxu0 %v1637
      %v1639 = vpop.f32.mrb[0].mxu0
      %v1640 = vadd.f32 %v1499, %v1639
      %v1641 = vpop.f32.mrb[0].mxu0
      %v1642 = vadd.f32 %v1501, %v1641
      %1643 = vmatprep.mubr.f32.mxu0 0.0
      %v1644 = vand.u32 %v714, 4294901760
      %1645 = vmatmul.mubr.f32.gmra.mrb[0].mxu0 %v1644
      %v1646 = vpop.f32.mrb[0].mxu0
      %v1647 = vadd.f32 %v1510, %v1646
      %v1648 = vpop.f32.mrb[0].mxu0
      %v1649 = vadd.f32 %v1512, %v1648
      %1650 = vmatprep.mubr.f32.mxu0 0.0
      %v1651 = vand.u32 %v716, 4294901760
      %1652 = vmatmul.mubr.f32.gmra.mrb[0].mxu0 %v1651
      %v1653 = vpop.f32.mrb[0].mxu0
      %v1654 = vadd.f32 %v1521, %v1653
      %v1655 = vpop.f32.mrb[0].mxu0
      %v1656 = vadd.f32 %v1523, %v1655
      %1657 = vdwg.mxu0
      %v1658 = vand.u32 %v632, 4294901760
      %v1659 = vsub.f32 %v632, %v1658
      %1660 = vmatprep.subr.mxu0 %v1659
      %v1661 = vand.u32 %v631, 4294901760
      %v1662 = vsub.f32 %v631, %v1661
      %1663 = vmatpush1.msra.mxu0 %v1662
      %v1664 = vand.u32 %v648, 4294901760
      %v1665 = vsub.f32 %v648, %v1664
      %1666 = vmatprep.subr.mxu0 %v1665
      %v1667 = vand.u32 %v647, 4294901760
      %v1668 = vsub.f32 %v647, %v1667
      %1669 = vmatpush1.msra.mxu0 %v1668
      %v1670 = vand.u32 %v664, 4294901760
      %v1671 = vsub.f32 %v664, %v1670
      %1672 = vmatprep.subr.mxu0 %v1671
      %v1673 = vand.u32 %v663, 4294901760
      %v1674 = vsub.f32 %v663, %v1673
      %1675 = vmatpush1.msra.mxu0 %v1674
      %v1676 = vand.u32 %v680, 4294901760
      %v1677 = vsub.f32 %v680, %v1676
      %1678 = vmatprep.subr.mxu0 %v1677
      %v1679 = vand.u32 %v679, 4294901760
      %v1680 = vsub.f32 %v679, %v1679
      %1681 = vmatpush1.msra.mxu0 %v1680
      %1682 = vmatprep.subr.mxu0 0.0
      %1683 = vmatpush1.msra.mxu0 0.0
      %1684 = vmatprep.subr.mxu0 0.0
      %1685 = vmatpush1.msra.mxu0 0.0
      %1686 = vmatprep.subr.mxu0 0.0
      %1687 = vmatpush1.msra.mxu0 0.0
      %1688 = vmatprep.subr.mxu0 0.0
      %1689 = vmatpush1.msra.mxu0 0.0
      %1690 = vmatprep.subr.mxu0 0.0
      %1691 = vmatpush1.msra.mxu0 0.0
      %1692 = vmatprep.subr.mxu0 0.0
      %1693 = vmatpush1.msra.mxu0 0.0
      %1694 = vmatprep.subr.mxu0 0.0
      %1695 = vmatpush1.msra.mxu0 0.0
      %1696 = vmatprep.subr.mxu0 0.0
      %1697 = vmatpush1.msra.mxu0 0.0
      %1698 = vmatprep.subr.mxu0 0.0
      %1699 = vmatpush1.msra.mxu0 0.0
      %1700 = vmatprep.subr.mxu0 0.0
      %1701 = vmatpush1.msra.mxu0 0.0
      %1702 = vmatprep.subr.mxu0 0.0
      %1703 = vmatpush1.msra.mxu0 0.0
      %1704 = vmatprep.subr.mxu0 0.0
      %1705 = vmatpush1.msra.mxu0 0.0
      %1706 = vmatprep.subr.mxu0 0.0
      %1707 = vmatpush1.msra.mxu0 0.0
      %1708 = vmatprep.subr.mxu0 0.0
      %1709 = vmatpush1.msra.mxu0 0.0
      %1710 = vmatprep.subr.mxu0 0.0
      %1711 = vmatpush1.msra.mxu0 0.0
      %1712 = vmatprep.subr.mxu0 0.0
      %1713 = vmatpush1.msra.mxu0 0.0
      %1714 = vmatprep.subr.mxu0 0.0
      %1715 = vmatpush1.msra.mxu0 0.0
      %1716 = vmatprep.subr.mxu0 0.0
      %1717 = vmatpush1.msra.mxu0 0.0
      %1718 = vmatprep.subr.mxu0 0.0
      %1719 = vmatpush1.msra.mxu0 0.0
      %1720 = vmatprep.subr.mxu0 0.0
      %1721 = vmatpush1.msra.mxu0 0.0
      %1722 = vmatprep.subr.mxu0 0.0
      %1723 = vmatpush1.msra.mxu0 0.0
      %1724 = vmatprep.subr.mxu0 0.0
      %1725 = vmatpush1.msra.mxu0 0.0
      %1726 = vmatprep.subr.mxu0 0.0
      %1727 = vmatpush1.msra.mxu0 0.0
      %1728 = vmatprep.subr.mxu0 0.0
      %1729 = vmatpush1.msra.mxu0 0.0
      %1730 = vmatprep.subr.mxu0 0.0
      %1731 = vmatpush1.msra.mxu0 0.0
      %1732 = vmatprep.subr.mxu0 0.0
      %1733 = vmatpush1.msra.mxu0 0.0
      %1734 = vmatprep.subr.mxu0 0.0
      %1735 = vmatpush1.msra.mxu0 0.0
      %1736 = vmatprep.subr.mxu0 0.0
      %1737 = vmatpush1.msra.mxu0 0.0
      %1738 = vmatprep.mubr.f32.mxu0 0.0
      %v1739 = vand.u32 %v710, 4294901760
      %v1740 = vsub.f32 %v710, %v1739
      %1741 = vmatmul.mubr.f32.gmra.mrb[0].mxu0 %v1740
      %v1742 = vpop.f32.mrb[0].mxu0
      %v1743 = vadd.f32 %v1633, %v1742
      %v1744 = vpop.f32.mrb[0].mxu0
      %v1745 = vadd.f32 %v1635, %v1744
      %1746 = vmatprep.mubr.f32.mxu0 0.0
      %v1747 = vand.u32 %v712, 4294901760
      %v1748 = vsub.f32 %v712, %v1747
      %1749 = vmatmul.mubr.f32.gmra.mrb[0].mxu0 %v1748
      %v1750 = vpop.f32.mrb[0].mxu0
      %v1751 = vadd.f32 %v1640, %v1750
      %v1752 = vpop.f32.mrb[0].mxu0
      %v1753 = vadd.f32 %v1642, %v1752
      %1754 = vmatprep.mubr.f32.mxu0 0.0
      %v1755 = vand.u32 %v714, 4294901760
      %v1756 = vsub.f32 %v714, %v1755
      %1757 = vmatmul.mubr.f32.gmra.mrb[0].mxu0 %v1756
      %v1758 = vpop.f32.mrb[0].mxu0
      %v1759 = vadd.f32 %v1647, %v1758
      %v1760 = vpop.f32.mrb[0].mxu0
      %v1761 = vadd.f32 %v1649, %v1760
      %1762 = vmatprep.mubr.f32.mxu0 0.0
      %v1763 = vand.u32 %v716, 4294901760
      %v1764 = vsub.f32 %v716, %v1763
      %1765 = vmatmul.mubr.f32.gmra.mrb[0].mxu0 %v1764
      %v1766 = vpop.f32.mrb[0].mxu0
      %v1767 = vadd.f32 %v1654, %v1766
      %v1768 = vpop.f32.mrb[0].mxu0
      %v1769 = vadd.f32 %v1656, %v1768
      %1770 = vdwg.mxu0
      %v1771 = vand.u32 %v632, 4294901760
      %1772 = vmatprep.subr.mxu0 %v1771
      %v1773 = vand.u32 %v631, 4294901760
      %1774 = vmatpush1.msra.mxu0 %v1773
      %v1775 = vand.u32 %v648, 4294901760
      %1776 = vmatprep.subr.mxu0 %v1775
      %v1777 = vand.u32 %v647, 4294901760
      %1778 = vmatpush1.msra.mxu0 %v1777
      %v1779 = vand.u32 %v664, 4294901760
      %1780 = vmatprep.subr.mxu0 %v1779
      %v1781 = vand.u32 %v663, 4294901760
      %1782 = vmatpush1.msra.mxu0 %v1781
      %v1783 = vand.u32 %v680, 4294901760
      %1784 = vmatprep.subr.mxu0 %v1783
      %v1785 = vand.u32 %v679, 4294901760
      %1786 = vmatpush1.msra.mxu0 %v1785
      %1787 = vmatprep.subr.mxu0 0.0
      %1788 = vmatpush1.msra.mxu0 0.0
      %1789 = vmatprep.subr.mxu0 0.0
      %1790 = vmatpush1.msra.mxu0 0.0
      %1791 = vmatprep.subr.mxu0 0.0
      %1792 = vmatpush1.msra.mxu0 0.0
      %1793 = vmatprep.subr.mxu0 0.0
      %1794 = vmatpush1.msra.mxu0 0.0
      %1795 = vmatprep.subr.mxu0 0.0
      %1796 = vmatpush1.msra.mxu0 0.0
      %1797 = vmatprep.subr.mxu0 0.0
      %1798 = vmatpush1.msra.mxu0 0.0
      %1799 = vmatprep.subr.mxu0 0.0
      %1800 = vmatpush1.msra.mxu0 0.0
      %1801 = vmatprep.subr.mxu0 0.0
      %1802 = vmatpush1.msra.mxu0 0.0
      %1803 = vmatprep.subr.mxu0 0.0
      %1804 = vmatpush1.msra.mxu0 0.0
      %1805 = vmatprep.subr.mxu0 0.0
      %1806 = vmatpush1.msra.mxu0 0.0
      %1807 = vmatprep.subr.mxu0 0.0
      %1808 = vmatpush1.msra.mxu0 0.0
      %1809 = vmatprep.subr.mxu0 0.0
      %1810 = vmatpush1.msra.mxu0 0.0
      %1811 = vmatprep.subr.mxu0 0.0
      %1812 = vmatpush1.msra.mxu0 0.0
      %1813 = vmatprep.subr.mxu0 0.0
      %1814 = vmatpush1.msra.mxu0 0.0
      %1815 = vmatprep.subr.mxu0 0.0
      %1816 = vmatpush1.msra.mxu0 0.0
      %1817 = vmatprep.subr.mxu0 0.0
      %1818 = vmatpush1.msra.mxu0 0.0
      %1819 = vmatprep.subr.mxu0 0.0
      %1820 = vmatpush1.msra.mxu0 0.0
      %1821 = vmatprep.subr.mxu0 0.0
      %1822 = vmatpush1.msra.mxu0 0.0
      %1823 = vmatprep.subr.mxu0 0.0
      %1824 = vmatpush1.msra.mxu0 0.0
      %1825 = vmatprep.subr.mxu0 0.0
      %1826 = vmatpush1.msra.mxu0 0.0
      %1827 = vmatprep.subr.mxu0 0.0
      %1828 = vmatpush1.msra.mxu0 0.0
      %1829 = vmatprep.subr.mxu0 0.0
      %1830 = vmatpush1.msra.mxu0 0.0
      %1831 = vmatprep.subr.mxu0 0.0
      %1832 = vmatpush1.msra.mxu0 0.0
      %1833 = vmatprep.subr.mxu0 0.0
      %1834 = vmatpush1.msra.mxu0 0.0
      %1835 = vmatprep.subr.mxu0 0.0
      %1836 = vmatpush1.msra.mxu0 0.0
      %1837 = vmatprep.subr.mxu0 0.0
      %1838 = vmatpush1.msra.mxu0 0.0
      %1839 = vmatprep.subr.mxu0 0.0
      %1840 = vmatpush1.msra.mxu0 0.0
      %1841 = vmatprep.subr.mxu0 0.0
      %1842 = vmatpush1.msra.mxu0 0.0
      %1843 = vmatprep.mubr.f32.mxu0 0.0
      %v1844 = vand.u32 %v710, 4294901760
      %v1845 = vsub.f32 %v710, %v1844
      %v1846 = vand.u32 %v1845, 4294901760
      %1847 = vmatmul.mubr.f32.gmra.mrb[0].mxu0 %v1846
      %v1848 = vpop.f32.mrb[0].mxu0
      %v1849 = vadd.f32 %v1743, %v1848
      %v1850 = vpop.f32.mrb[0].mxu0
      %v1851 = vadd.f32 %v1745, %v1850
      %1852 = vmatprep.mubr.f32.mxu0 0.0
      %v1853 = vand.u32 %v712, 4294901760
      %v1854 = vsub.f32 %v712, %v1853
      %v1855 = vand.u32 %v1854, 4294901760
      %1856 = vmatmul.mubr.f32.gmra.mrb[0].mxu0 %v1855
      %v1857 = vpop.f32.mrb[0].mxu0
      %v1858 = vadd.f32 %v1751, %v1857
      %v1859 = vpop.f32.mrb[0].mxu0
      %v1860 = vadd.f32 %v1753, %v1859
      %1861 = vmatprep.mubr.f32.mxu0 0.0
      %v1862 = vand.u32 %v714, 4294901760
      %v1863 = vsub.f32 %v714, %v1862
      %v1864 = vand.u32 %v1863, 4294901760
      %1865 = vmatmul.mubr.f32.gmra.mrb[0].mxu0 %v1864
      %v1866 = vpop.f32.mrb[0].mxu0
      %v1867 = vadd.f32 %v1759, %v1866
      %v1868 = vpop.f32.mrb[0].mxu0
      %v1869 = vadd.f32 %v1761, %v1868
      %1870 = vmatprep.mubr.f32.mxu0 0.0
      %v1871 = vand.u32 %v716, 4294901760
      %v1872 = vsub.f32 %v716, %v1871
      %v1873 = vand.u32 %v1872, 4294901760
      %1874 = vmatmul.mubr.f32.gmra.mrb[0].mxu0 %v1873
      %v1875 = vpop.f32.mrb[0].mxu0
      %v1876 = vadd.f32 %v1767, %v1875
      %v1877 = vpop.f32.mrb[0].mxu0
      %v1878 = vadd.f32 %v1769, %v1877
      %1879 = vdwg.mxu0
      %v1880 = vand.u32 %v632, 4294901760
      %v1881 = vsub.f32 %v632, %v1880
      %v1882 = vand.u32 %v1881, 4294901760
      %1883 = vmatprep.subr.mxu0 %v1882
      %v1884 = vand.u32 %v631, 4294901760
      %v1885 = vsub.f32 %v631, %v1884
      %v1886 = vand.u32 %v1885, 4294901760
      %1887 = vmatpush1.msra.mxu0 %v1886
      %v1888 = vand.u32 %v648, 4294901760
      %v1889 = vsub.f32 %v648, %v1888
      %v1890 = vand.u32 %v1889, 4294901760
      %1891 = vmatprep.subr.mxu0 %v1890
      %v1892 = vand.u32 %v647, 4294901760
      %v1893 = vsub.f32 %v647, %v1892
      %v1894 = vand.u32 %v1893, 4294901760
      %1895 = vmatpush1.msra.mxu0 %v1894
      %v1896 = vand.u32 %v664, 4294901760
      %v1897 = vsub.f32 %v664, %v1896
      %v1898 = vand.u32 %v1897, 4294901760
      %1899 = vmatprep.subr.mxu0 %v1898
      %v1900 = vand.u32 %v663, 4294901760
      %v1901 = vsub.f32 %v663, %v1900
      %v1902 = vand.u32 %v1901, 4294901760
      %1903 = vmatpush1.msra.mxu0 %v1902
      %v1904 = vand.u32 %v680, 4294901760
      %v1905 = vsub.f32 %v680, %v1904
      %v1906 = vand.u32 %v1905, 4294901760
      %1907 = vmatprep.subr.mxu0 %v1906
      %v1908 = vand.u32 %v679, 4294901760
      %v1909 = vsub.f32 %v679, %v1908
      %v1910 = vand.u32 %v1909, 4294901760
      %1911 = vmatpush1.msra.mxu0 %v1910
      %1912 = vmatprep.subr.mxu0 0.0
      %1913 = vmatpush1.msra.mxu0 0.0
      %1914 = vmatprep.subr.mxu0 0.0
      %1915 = vmatpush1.msra.mxu0 0.0
      %1916 = vmatprep.subr.mxu0 0.0
      %1917 = vmatpush1.msra.mxu0 0.0
      %1918 = vmatprep.subr.mxu0 0.0
      %1919 = vmatpush1.msra.mxu0 0.0
      %1920 = vmatprep.subr.mxu0 0.0
      %1921 = vmatpush1.msra.mxu0 0.0
      %1922 = vmatprep.subr.mxu0 0.0
      %1923 = vmatpush1.msra.mxu0 0.0
      %1924 = vmatprep.subr.mxu0 0.0
      %1925 = vmatpush1.msra.mxu0 0.0
      %1926 = vmatprep.subr.mxu0 0.0
      %1927 = vmatpush1.msra.mxu0 0.0
      %1928 = vmatprep.subr.mxu0 0.0
      %1929 = vmatpush1.msra.mxu0 0.0
      %1930 = vmatprep.subr.mxu0 0.0
      %1931 = vmatpush1.msra.mxu0 0.0
      %1932 = vmatprep.subr.mxu0 0.0
      %1933 = vmatpush1.msra.mxu0 0.0
      %1934 = vmatprep.subr.mxu0 0.0
      %1935 = vmatpush1.msra.mxu0 0.0
      %1936 = vmatprep.subr.mxu0 0.0
      %1937 = vmatpush1.msra.mxu0 0.0
      %1938 = vmatprep.subr.mxu0 0.0
      %1939 = vmatpush1.msra.mxu0 0.0
      %1940 = vmatprep.subr.mxu0 0.0
      %1941 = vmatpush1.msra.mxu0 0.0
      %1942 = vmatprep.subr.mxu0 0.0
      %1943 = vmatpush1.msra.mxu0 0.0
      %1944 = vmatprep.subr.mxu0 0.0
      %1945 = vmatpush1.msra.mxu0 0.0
      %1946 = vmatprep.subr.mxu0 0.0
      %1947 = vmatpush1.msra.mxu0 0.0
      %1948 = vmatprep.subr.mxu0 0.0
      %1949 = vmatpush1.msra.mxu0 0.0
      %1950 = vmatprep.subr.mxu0 0.0
      %1951 = vmatpush1.msra.mxu0 0.0
      %1952 = vmatprep.subr.mxu0 0.0
      %1953 = vmatpush1.msra.mxu0 0.0
      %1954 = vmatprep.subr.mxu0 0.0
      %1955 = vmatpush1.msra.mxu0 0.0
      %1956 = vmatprep.subr.mxu0 0.0
      %1957 = vmatpush1.msra.mxu0 0.0
      %1958 = vmatprep.subr.mxu0 0.0
      %1959 = vmatpush1.msra.mxu0 0.0
      %1960 = vmatprep.subr.mxu0 0.0
      %1961 = vmatpush1.msra.mxu0 0.0
      %1962 = vmatprep.subr.mxu0 0.0
      %1963 = vmatpush1.msra.mxu0 0.0
      %1964 = vmatprep.subr.mxu0 0.0
      %1965 = vmatpush1.msra.mxu0 0.0
      %1966 = vmatprep.subr.mxu0 0.0
      %1967 = vmatpush1.msra.mxu0 0.0
      %1968 = vmatprep.mubr.f32.mxu0 0.0
      %v1969 = vand.u32 %v710, 4294901760
      %1970 = vmatmul.mubr.f32.gmra.mrb[0].mxu0 %v1969
      %v1971 = vpop.f32.mrb[0].mxu0
      %v1972 = vadd.f32 %v1849, %v1971
      %v1973 = vpop.f32.mrb[0].mxu0
      %v1974 = vadd.f32 %v1851, %v1973
      %1975 = vmatprep.mubr.f32.mxu0 0.0
      %v1976 = vand.u32 %v712, 4294901760
      %1977 = vmatmul.mubr.f32.gmra.mrb[0].mxu0 %v1976
      %v1978 = vpop.f32.mrb[0].mxu0
      %v1979 = vadd.f32 %v1858, %v1978
      %v1980 = vpop.f32.mrb[0].mxu0
      %v1981 = vadd.f32 %v1860, %v1980
      %1982 = vmatprep.mubr.f32.mxu0 0.0
      %v1983 = vand.u32 %v714, 4294901760
      %1984 = vmatmul.mubr.f32.gmra.mrb[0].mxu0 %v1983
      %v1985 = vpop.f32.mrb[0].mxu0
      %v1986 = vadd.f32 %v1867, %v1985
      %v1987 = vpop.f32.mrb[0].mxu0
      %v1988 = vadd.f32 %v1869, %v1987
      %1989 = vmatprep.mubr.f32.mxu0 0.0
      %v1990 = vand.u32 %v716, 4294901760
      %1991 = vmatmul.mubr.f32.gmra.mrb[0].mxu0 %v1990
      %v1992 = vpop.f32.mrb[0].mxu0
      %v1993 = vadd.f32 %v1876, %v1992
      %v1994 = vpop.f32.mrb[0].mxu0
      %v1995 = vadd.f32 %v1878, %v1994
      %1996 = vdwg.mxu0
      %v1997 = vand.u32 %v632, 4294901760
      %1998 = vmatprep.subr.mxu0 %v1997
      %v1999 = vand.u32 %v631, 4294901760
      %2000 = vmatpush1.msra.mxu0 %v1999
      %v2001 = vand.u32 %v648, 4294901760
      %2002 = vmatprep.subr.mxu0 %v2001
      %v2003 = vand.u32 %v647, 4294901760
      %2004 = vmatpush1.msra.mxu0 %v2003
      %v2005 = vand.u32 %v664, 4294901760
      %2006 = vmatprep.subr.mxu0 %v2005
      %v2007 = vand.u32 %v663, 4294901760
      %2008 = vmatpush1.msra.mxu0 %v2007
      %v2009 = vand.u32 %v680, 4294901760
      %2010 = vmatprep.subr.mxu0 %v2009
      %v2011 = vand.u32 %v679, 4294901760
      %2012 = vmatpush1.msra.mxu0 %v2011
      %2013 = vmatprep.subr.mxu0 0.0
      %2014 = vmatpush1.msra.mxu0 0.0
      %2015 = vmatprep.subr.mxu0 0.0
      %2016 = vmatpush1.msra.mxu0 0.0
      %2017 = vmatprep.subr.mxu0 0.0
      %2018 = vmatpush1.msra.mxu0 0.0
      %2019 = vmatprep.subr.mxu0 0.0
      %2020 = vmatpush1.msra.mxu0 0.0
      %2021 = vmatprep.subr.mxu0 0.0
      %2022 = vmatpush1.msra.mxu0 0.0
      %2023 = vmatprep.subr.mxu0 0.0
      %2024 = vmatpush1.msra.mxu0 0.0
      %2025 = vmatprep.subr.mxu0 0.0
      %2026 = vmatpush1.msra.mxu0 0.0
      %2027 = vmatprep.subr.mxu0 0.0
      %2028 = vmatpush1.msra.mxu0 0.0
      %2029 = vmatprep.subr.mxu0 0.0
      %2030 = vmatpush1.msra.mxu0 0.0
      %2031 = vmatprep.subr.mxu0 0.0
      %2032 = vmatpush1.msra.mxu0 0.0
      %2033 = vmatprep.subr.mxu0 0.0
      %2034 = vmatpush1.msra.mxu0 0.0
      %2035 = vmatprep.subr.mxu0 0.0
      %2036 = vmatpush1.msra.mxu0 0.0
      %2037 = vmatprep.subr.mxu0 0.0
      %2038 = vmatpush1.msra.mxu0 0.0
      %2039 = vmatprep.subr.mxu0 0.0
      %2040 = vmatpush1.msra.mxu0 0.0
      %2041 = vmatprep.subr.mxu0 0.0
      %2042 = vmatpush1.msra.mxu0 0.0
      %2043 = vmatprep.subr.mxu0 0.0
      %2044 = vmatpush1.msra.mxu0 0.0
      %2045 = vmatprep.subr.mxu0 0.0
      %2046 = vmatpush1.msra.mxu0 0.0
      %2047 = vmatprep.subr.mxu0 0.0
      %2048 = vmatpush1.msra.mxu0 0.0
      %2049 = vmatprep.subr.mxu0 0.0
      %2050 = vmatpush1.msra.mxu0 0.0
      %2051 = vmatprep.subr.mxu0 0.0
      %2052 = vmatpush1.msra.mxu0 0.0
      %2053 = vmatprep.subr.mxu0 0.0
      %2054 = vmatpush1.msra.mxu0 0.0
      %2055 = vmatprep.subr.mxu0 0.0
      %2056 = vmatpush1.msra.mxu0 0.0
      %2057 = vmatprep.subr.mxu0 0.0
      %2058 = vmatpush1.msra.mxu0 0.0
      %2059 = vmatprep.subr.mxu0 0.0
      %2060 = vmatpush1.msra.mxu0 0.0
      %2061 = vmatprep.subr.mxu0 0.0
      %2062 = vmatpush1.msra.mxu0 0.0
      %2063 = vmatprep.subr.mxu0 0.0
      %2064 = vmatpush1.msra.mxu0 0.0
      %2065 = vmatprep.subr.mxu0 0.0
      %2066 = vmatpush1.msra.mxu0 0.0
      %2067 = vmatprep.subr.mxu0 0.0
      %2068 = vmatpush1.msra.mxu0 0.0
      %2069 = vmatprep.mubr.f32.mxu0 0.0
      %v2070 = vand.u32 %v710, 4294901760
      %2071 = vmatmul.mubr.f32.gmra.mrb[0].mxu0 %v2070
      %v2072 = vpop.f32.mrb[0].mxu0
      %v2073 = vadd.f32 %v1972, %v2072
      %v2074 = vpop.f32.mrb[0].mxu0
      %v2075 = vadd.f32 %v1974, %v2074
      %2076 = vmatprep.mubr.f32.mxu0 0.0
      %v2077 = vand.u32 %v712, 4294901760
      %2078 = vmatmul.mubr.f32.gmra.mrb[0].mxu0 %v2077
      %v2079 = vpop.f32.mrb[0].mxu0
      %v2080 = vadd.f32 %v1979, %v2079
      %v2081 = vpop.f32.mrb[0].mxu0
      %v2082 = vadd.f32 %v1981, %v2081
      %2083 = vmatprep.mubr.f32.mxu0 0.0
      %v2084 = vand.u32 %v714, 4294901760
      %2085 = vmatmul.mubr.f32.gmra.mrb[0].mxu0 %v2084
      %v2086 = vpop.f32.mrb[0].mxu0
      %v2087 = vadd.f32 %v1986, %v2086
      %v2088 = vpop.f32.mrb[0].mxu0
      %v2089 = vadd.f32 %v1988, %v2088
      %2090 = vmatprep.mubr.f32.mxu0 0.0
      %v2091 = vand.u32 %v716, 4294901760
      %2092 = vmatmul.mubr.f32.gmra.mrb[0].mxu0 %v2091
      %v2093 = vpop.f32.mrb[0].mxu0
      %v2094 = vadd.f32 %v1993, %v2093
      %v2095 = vpop.f32.mrb[0].mxu0
      %v2096 = vadd.f32 %v1995, %v2095
      %2097 = vdwg.mxu0
      %v2098 = vand.u32 %v634, 4294901760
      %2099 = vmatprep.subr.mxu0 %v2098
      %v2100 = vand.u32 %v633, 4294901760
      %2101 = vmatpush1.msra.mxu0 %v2100
      %v2102 = vand.u32 %v650, 4294901760
      %2103 = vmatprep.subr.mxu0 %v2102
      %v2104 = vand.u32 %v649, 4294901760
      %2105 = vmatpush1.msra.mxu0 %v2104
      %v2106 = vand.u32 %v666, 4294901760
      %2107 = vmatprep.subr.mxu0 %v2106
      %v2108 = vand.u32 %v665, 4294901760
      %2109 = vmatpush1.msra.mxu0 %v2108
      %v2110 = vand.u32 %v682, 4294901760
      %2111 = vmatprep.subr.mxu0 %v2110
      %v2112 = vand.u32 %v681, 4294901760
      %2113 = vmatpush1.msra.mxu0 %v2112
      %2114 = vmatprep.subr.mxu0 0.0
      %2115 = vmatpush1.msra.mxu0 0.0
      %2116 = vmatprep.subr.mxu0 0.0
      %2117 = vmatpush1.msra.mxu0 0.0
      %2118 = vmatprep.subr.mxu0 0.0
      %2119 = vmatpush1.msra.mxu0 0.0
      %2120 = vmatprep.subr.mxu0 0.0
      %2121 = vmatpush1.msra.mxu0 0.0
      %2122 = vmatprep.subr.mxu0 0.0
      %2123 = vmatpush1.msra.mxu0 0.0
      %2124 = vmatprep.subr.mxu0 0.0
      %2125 = vmatpush1.msra.mxu0 0.0
      %2126 = vmatprep.subr.mxu0 0.0
      %2127 = vmatpush1.msra.mxu0 0.0
      %2128 = vmatprep.subr.mxu0 0.0
      %2129 = vmatpush1.msra.mxu0 0.0
      %2130 = vmatprep.subr.mxu0 0.0
      %2131 = vmatpush1.msra.mxu0 0.0
      %2132 = vmatprep.subr.mxu0 0.0
      %2133 = vmatpush1.msra.mxu0 0.0
      %2134 = vmatprep.subr.mxu0 0.0
      %2135 = vmatpush1.msra.mxu0 0.0
      %2136 = vmatprep.subr.mxu0 0.0
      %2137 = vmatpush1.msra.mxu0 0.0
      %2138 = vmatprep.subr.mxu0 0.0
      %2139 = vmatpush1.msra.mxu0 0.0
      %2140 = vmatprep.subr.mxu0 0.0
      %2141 = vmatpush1.msra.mxu0 0.0
      %2142 = vmatprep.subr.mxu0 0.0
      %2143 = vmatpush1.msra.mxu0 0.0
      %2144 = vmatprep.subr.mxu0 0.0
      %2145 = vmatpush1.msra.mxu0 0.0
      %2146 = vmatprep.subr.mxu0 0.0
      %2147 = vmatpush1.msra.mxu0 0.0
      %2148 = vmatprep.subr.mxu0 0.0
      %2149 = vmatpush1.msra.mxu0 0.0
      %2150 = vmatprep.subr.mxu0 0.0
      %2151 = vmatpush1.msra.mxu0 0.0
      %2152 = vmatprep.subr.mxu0 0.0
      %2153 = vmatpush1.msra.mxu0 0.0
      %2154 = vmatprep.subr.mxu0 0.0
      %2155 = vmatpush1.msra.mxu0 0.0
      %2156 = vmatprep.subr.mxu0 0.0
      %2157 = vmatpush1.msra.mxu0 0.0
      %2158 = vmatprep.subr.mxu0 0.0
      %2159 = vmatpush1.msra.mxu0 0.0
      %2160 = vmatprep.subr.mxu0 0.0
      %2161 = vmatpush1.msra.mxu0 0.0
      %2162 = vmatprep.subr.mxu0 0.0
      %2163 = vmatpush1.msra.mxu0 0.0
      %2164 = vmatprep.subr.mxu0 0.0
      %2165 = vmatpush1.msra.mxu0 0.0
      %2166 = vmatprep.subr.mxu0 0.0
      %2167 = vmatpush1.msra.mxu0 0.0
      %2168 = vmatprep.subr.mxu0 0.0
      %2169 = vmatpush1.msra.mxu0 0.0
      %2170 = vmatprep.mubr.f32.mxu0 0.0
      %v2171 = vand.u32 %v710, 4294901760
      %v2172 = vsub.f32 %v710, %v2171
      %v2173 = vand.u32 %v2172, 4294901760
      %v2174 = vsub.f32 %v2172, %v2173
      %v2175 = vand.u32 %v2174, 4294901760
      %2176 = vmatmul.mubr.f32.gmra.mrb[0].mxu0 %v2175
      %v2177 = vpop.f32.mrb[0].mxu0
      %v2178 = vadd.f32 %v695, %v2177
      %v2179 = vpop.f32.mrb[0].mxu0
      %v2180 = vadd.f32 %v695, %v2179
      %2181 = vmatprep.mubr.f32.mxu0 0.0
      %v2182 = vand.u32 %v712, 4294901760
      %v2183 = vsub.f32 %v712, %v2182
      %v2184 = vand.u32 %v2183, 4294901760
      %v2185 = vsub.f32 %v2183, %v2184
      %v2186 = vand.u32 %v2185, 4294901760
      %2187 = vmatmul.mubr.f32.gmra.mrb[0].mxu0 %v2186
      %v2188 = vpop.f32.mrb[0].mxu0
      %v2189 = vadd.f32 %v699, %v2188
      %v2190 = vpop.f32.mrb[0].mxu0
      %v2191 = vadd.f32 %v699, %v2190
      %2192 = vmatprep.mubr.f32.mxu0 0.0
      %v2193 = vand.u32 %v714, 4294901760
      %v2194 = vsub.f32 %v714, %v2193
      %v2195 = vand.u32 %v2194, 4294901760
      %v2196 = vsub.f32 %v2194, %v2195
      %v2197 = vand.u32 %v2196, 4294901760
      %2198 = vmatmul.mubr.f32.gmra.mrb[0].mxu0 %v2197
      %v2199 = vpop.f32.mrb[0].mxu0
      %v2200 = vadd.f32 %v703, %v2199
      %v2201 = vpop.f32.mrb[0].mxu0
      %v2202 = vadd.f32 %v703, %v2201
      %2203 = vmatprep.mubr.f32.mxu0 0.0
      %v2204 = vand.u32 %v716, 4294901760
      %v2205 = vsub.f32 %v716, %v2204
      %v2206 = vand.u32 %v2205, 4294901760
      %v2207 = vsub.f32 %v2205, %v2206
      %v2208 = vand.u32 %v2207, 4294901760
      %2209 = vmatmul.mubr.f32.gmra.mrb[0].mxu0 %v2208
      %v2210 = vpop.f32.mrb[0].mxu0
      %v2211 = vadd.f32 %v707, %v2210
      %v2212 = vpop.f32.mrb[0].mxu0
      %v2213 = vadd.f32 %v707, %v2212
      %2214 = vdwg.mxu0
      %v2215 = vand.u32 %v634, 4294901760
      %v2216 = vsub.f32 %v634, %v2215
      %v2217 = vand.u32 %v2216, 4294901760
      %v2218 = vsub.f32 %v2216, %v2217
      %v2219 = vand.u32 %v2218, 4294901760
      %2220 = vmatprep.subr.mxu0 %v2219
      %v2221 = vand.u32 %v633, 4294901760
      %v2222 = vsub.f32 %v633, %v2221
      %v2223 = vand.u32 %v2222, 4294901760
      %v2224 = vsub.f32 %v2222, %v2223
      %v2225 = vand.u32 %v2224, 4294901760
      %2226 = vmatpush1.msra.mxu0 %v2225
      %v2227 = vand.u32 %v650, 4294901760
      %v2228 = vsub.f32 %v650, %v2227
      %v2229 = vand.u32 %v2228, 4294901760
      %v2230 = vsub.f32 %v2228, %v2229
      %v2231 = vand.u32 %v2230, 4294901760
      %2232 = vmatprep.subr.mxu0 %v2231
      %v2233 = vand.u32 %v649, 4294901760
      %v2234 = vsub.f32 %v649, %v2233
      %v2235 = vand.u32 %v2234, 4294901760
      %v2236 = vsub.f32 %v2234, %v2235
      %v2237 = vand.u32 %v2236, 4294901760
      %2238 = vmatpush1.msra.mxu0 %v2237
      %v2239 = vand.u32 %v666, 4294901760
      %v2240 = vsub.f32 %v666, %v2239
      %v2241 = vand.u32 %v2240, 4294901760
      %v2242 = vsub.f32 %v2240, %v2241
      %v2243 = vand.u32 %v2242, 4294901760
      %2244 = vmatprep.subr.mxu0 %v2243
      %v2245 = vand.u32 %v665, 4294901760
      %v2246 = vsub.f32 %v665, %v2245
      %v2247 = vand.u32 %v2246, 4294901760
      %v2248 = vsub.f32 %v2246, %v2247
      %v2249 = vand.u32 %v2248, 4294901760
      %2250 = vmatpush1.msra.mxu0 %v2249
      %v2251 = vand.u32 %v682, 4294901760
      %v2252 = vsub.f32 %v682, %v2251
      %v2253 = vand.u32 %v2252, 4294901760
      %v2254 = vsub.f32 %v2252, %v2253
      %v2255 = vand.u32 %v2254, 4294901760
      %2256 = vmatprep.subr.mxu0 %v2255
      %v2257 = vand.u32 %v681, 4294901760
      %v2258 = vsub.f32 %v681, %v2257
      %v2259 = vand.u32 %v2258, 4294901760
      %v2260 = vsub.f32 %v2258, %v2259
      %v2261 = vand.u32 %v2260, 4294901760
      %2262 = vmatpush1.msra.mxu0 %v2261
      %2263 = vmatprep.subr.mxu0 0.0
      %2264 = vmatpush1.msra.mxu0 0.0
      %2265 = vmatprep.subr.mxu0 0.0
      %2266 = vmatpush1.msra.mxu0 0.0
      %2267 = vmatprep.subr.mxu0 0.0
      %2268 = vmatpush1.msra.mxu0 0.0
      %2269 = vmatprep.subr.mxu0 0.0
      %2270 = vmatpush1.msra.mxu0 0.0
      %2271 = vmatprep.subr.mxu0 0.0
      %2272 = vmatpush1.msra.mxu0 0.0
      %2273 = vmatprep.subr.mxu0 0.0
      %2274 = vmatpush1.msra.mxu0 0.0
      %2275 = vmatprep.subr.mxu0 0.0
      %2276 = vmatpush1.msra.mxu0 0.0
      %2277 = vmatprep.subr.mxu0 0.0
      %2278 = vmatpush1.msra.mxu0 0.0
      %2279 = vmatprep.subr.mxu0 0.0
      %2280 = vmatpush1.msra.mxu0 0.0
      %2281 = vmatprep.subr.mxu0 0.0
      %2282 = vmatpush1.msra.mxu0 0.0
      %2283 = vmatprep.subr.mxu0 0.0
      %2284 = vmatpush1.msra.mxu0 0.0
      %2285 = vmatprep.subr.mxu0 0.0
      %2286 = vmatpush1.msra.mxu0 0.0
      %2287 = vmatprep.subr.mxu0 0.0
      %2288 = vmatpush1.msra.mxu0 0.0
      %2289 = vmatprep.subr.mxu0 0.0
      %2290 = vmatpush1.msra.mxu0 0.0
      %2291 = vmatprep.subr.mxu0 0.0
      %2292 = vmatpush1.msra.mxu0 0.0
      %2293 = vmatprep.subr.mxu0 0.0
      %2294 = vmatpush1.msra.mxu0 0.0
      %2295 = vmatprep.subr.mxu0 0.0
      %2296 = vmatpush1.msra.mxu0 0.0
      %2297 = vmatprep.subr.mxu0 0.0
      %2298 = vmatpush1.msra.mxu0 0.0
      %2299 = vmatprep.subr.mxu0 0.0
      %2300 = vmatpush1.msra.mxu0 0.0
      %2301 = vmatprep.subr.mxu0 0.0
      %2302 = vmatpush1.msra.mxu0 0.0
      %2303 = vmatprep.subr.mxu0 0.0
      %2304 = vmatpush1.msra.mxu0 0.0
      %2305 = vmatprep.subr.mxu0 0.0
      %2306 = vmatpush1.msra.mxu0 0.0
      %2307 = vmatprep.subr.mxu0 0.0
      %2308 = vmatpush1.msra.mxu0 0.0
      %2309 = vmatprep.subr.mxu0 0.0
      %2310 = vmatpush1.msra.mxu0 0.0
      %2311 = vmatprep.subr.mxu0 0.0
      %2312 = vmatpush1.msra.mxu0 0.0
      %2313 = vmatprep.subr.mxu0 0.0
      %2314 = vmatpush1.msra.mxu0 0.0
      %2315 = vmatprep.subr.mxu0 0.0
      %2316 = vmatpush1.msra.mxu0 0.0
      %2317 = vmatprep.subr.mxu0 0.0
      %2318 = vmatpush1.msra.mxu0 0.0
      %2319 = vmatprep.mubr.f32.mxu0 0.0
      %v2320 = vand.u32 %v710, 4294901760
      %2321 = vmatmul.mubr.f32.gmra.mrb[0].mxu0 %v2320
      %v2322 = vpop.f32.mrb[0].mxu0
      %v2323 = vadd.f32 %v2178, %v2322
      %v2324 = vpop.f32.mrb[0].mxu0
      %v2325 = vadd.f32 %v2180, %v2324
      %2326 = vmatprep.mubr.f32.mxu0 0.0
      %v2327 = vand.u32 %v712, 4294901760
      %2328 = vmatmul.mubr.f32.gmra.mrb[0].mxu0 %v2327
      %v2329 = vpop.f32.mrb[0].mxu0
      %v2330 = vadd.f32 %v2189, %v2329
      %v2331 = vpop.f32.mrb[0].mxu0
      %v2332 = vadd.f32 %v2191, %v2331
      %2333 = vmatprep.mubr.f32.mxu0 0.0
      %v2334 = vand.u32 %v714, 4294901760
      %2335 = vmatmul.mubr.f32.gmra.mrb[0].mxu0 %v2334
      %v2336 = vpop.f32.mrb[0].mxu0
      %v2337 = vadd.f32 %v2200, %v2336
      %v2338 = vpop.f32.mrb[0].mxu0
      %v2339 = vadd.f32 %v2202, %v2338
      %2340 = vmatprep.mubr.f32.mxu0 0.0
      %v2341 = vand.u32 %v716, 4294901760
      %2342 = vmatmul.mubr.f32.gmra.mrb[0].mxu0 %v2341
      %v2343 = vpop.f32.mrb[0].mxu0
      %v2344 = vadd.f32 %v2211, %v2343
      %v2345 = vpop.f32.mrb[0].mxu0
      %v2346 = vadd.f32 %v2213, %v2345
      %2347 = vdwg.mxu0
      %v2348 = vand.u32 %v634, 4294901760
      %v2349 = vsub.f32 %v634, %v2348
      %2350 = vmatprep.subr.mxu0 %v2349
      %v2351 = vand.u32 %v633, 4294901760
      %v2352 = vsub.f32 %v633, %v2351
      %2353 = vmatpush1.msra.mxu0 %v2352
      %v2354 = vand.u32 %v650, 4294901760
      %v2355 = vsub.f32 %v650, %v2354
      %2356 = vmatprep.subr.mxu0 %v2355
      %v2357 = vand.u32 %v649, 4294901760
      %v2358 = vsub.f32 %v649, %v2357
      %2359 = vmatpush1.msra.mxu0 %v2358
      %v2360 = vand.u32 %v666, 4294901760
      %v2361 = vsub.f32 %v666, %v2360
      %2362 = vmatprep.subr.mxu0 %v2361
      %v2363 = vand.u32 %v665, 4294901760
      %v2364 = vsub.f32 %v665, %v2363
      %2365 = vmatpush1.msra.mxu0 %v2364
      %v2366 = vand.u32 %v682, 4294901760
      %v2367 = vsub.f32 %v682, %v2366
      %2368 = vmatprep.subr.mxu0 %v2367
      %v2369 = vand.u32 %v681, 4294901760
      %v2370 = vsub.f32 %v681, %v2369
      %2371 = vmatpush1.msra.mxu0 %v2370
      %2372 = vmatprep.subr.mxu0 0.0
      %2373 = vmatpush1.msra.mxu0 0.0
      %2374 = vmatprep.subr.mxu0 0.0
      %2375 = vmatpush1.msra.mxu0 0.0
      %2376 = vmatprep.subr.mxu0 0.0
      %2377 = vmatpush1.msra.mxu0 0.0
      %2378 = vmatprep.subr.mxu0 0.0
      %2379 = vmatpush1.msra.mxu0 0.0
      %2380 = vmatprep.subr.mxu0 0.0
      %2381 = vmatpush1.msra.mxu0 0.0
      %2382 = vmatprep.subr.mxu0 0.0
      %2383 = vmatpush1.msra.mxu0 0.0
      %2384 = vmatprep.subr.mxu0 0.0
      %2385 = vmatpush1.msra.mxu0 0.0
      %2386 = vmatprep.subr.mxu0 0.0
      %2387 = vmatpush1.msra.mxu0 0.0
      %2388 = vmatprep.subr.mxu0 0.0
      %2389 = vmatpush1.msra.mxu0 0.0
      %2390 = vmatprep.subr.mxu0 0.0
      %2391 = vmatpush1.msra.mxu0 0.0
      %2392 = vmatprep.subr.mxu0 0.0
      %2393 = vmatpush1.msra.mxu0 0.0
      %2394 = vmatprep.subr.mxu0 0.0
      %2395 = vmatpush1.msra.mxu0 0.0
      %2396 = vmatprep.subr.mxu0 0.0
      %2397 = vmatpush1.msra.mxu0 0.0
      %2398 = vmatprep.subr.mxu0 0.0
      %2399 = vmatpush1.msra.mxu0 0.0
      %2400 = vmatprep.subr.mxu0 0.0
      %2401 = vmatpush1.msra.mxu0 0.0
      %2402 = vmatprep.subr.mxu0 0.0
      %2403 = vmatpush1.msra.mxu0 0.0
      %2404 = vmatprep.subr.mxu0 0.0
      %2405 = vmatpush1.msra.mxu0 0.0
      %2406 = vmatprep.subr.mxu0 0.0
      %2407 = vmatpush1.msra.mxu0 0.0
      %2408 = vmatprep.subr.mxu0 0.0
      %2409 = vmatpush1.msra.mxu0 0.0
      %2410 = vmatprep.subr.mxu0 0.0
      %2411 = vmatpush1.msra.mxu0 0.0
      %2412 = vmatprep.subr.mxu0 0.0
      %2413 = vmatpush1.msra.mxu0 0.0
      %2414 = vmatprep.subr.mxu0 0.0
      %2415 = vmatpush1.msra.mxu0 0.0
      %2416 = vmatprep.subr.mxu0 0.0
      %2417 = vmatpush1.msra.mxu0 0.0
      %2418 = vmatprep.subr.mxu0 0.0
      %2419 = vmatpush1.msra.mxu0 0.0
      %2420 = vmatprep.subr.mxu0 0.0
      %2421 = vmatpush1.msra.mxu0 0.0
      %2422 = vmatprep.subr.mxu0 0.0
      %2423 = vmatpush1.msra.mxu0 0.0
      %2424 = vmatprep.subr.mxu0 0.0
      %2425 = vmatpush1.msra.mxu0 0.0
      %2426 = vmatprep.subr.mxu0 0.0
      %2427 = vmatpush1.msra.mxu0 0.0
      %2428 = vmatprep.mubr.f32.mxu0 0.0
      %v2429 = vand.u32 %v710, 4294901760
      %v2430 = vsub.f32 %v710, %v2429
      %2431 = vmatmul.mubr.f32.gmra.mrb[0].mxu0 %v2430
      %v2432 = vpop.f32.mrb[0].mxu0
      %v2433 = vadd.f32 %v2323, %v2432
      %v2434 = vpop.f32.mrb[0].mxu0
      %v2435 = vadd.f32 %v2325, %v2434
      %2436 = vmatprep.mubr.f32.mxu0 0.0
      %v2437 = vand.u32 %v712, 4294901760
      %v2438 = vsub.f32 %v712, %v2437
      %2439 = vmatmul.mubr.f32.gmra.mrb[0].mxu0 %v2438
      %v2440 = vpop.f32.mrb[0].mxu0
      %v2441 = vadd.f32 %v2330, %v2440
      %v2442 = vpop.f32.mrb[0].mxu0
      %v2443 = vadd.f32 %v2332, %v2442
      %2444 = vmatprep.mubr.f32.mxu0 0.0
      %v2445 = vand.u32 %v714, 4294901760
      %v2446 = vsub.f32 %v714, %v2445
      %2447 = vmatmul.mubr.f32.gmra.mrb[0].mxu0 %v2446
      %v2448 = vpop.f32.mrb[0].mxu0
      %v2449 = vadd.f32 %v2337, %v2448
      %v2450 = vpop.f32.mrb[0].mxu0
      %v2451 = vadd.f32 %v2339, %v2450
      %2452 = vmatprep.mubr.f32.mxu0 0.0
      %v2453 = vand.u32 %v716, 4294901760
      %v2454 = vsub.f32 %v716, %v2453
      %2455 = vmatmul.mubr.f32.gmra.mrb[0].mxu0 %v2454
      %v2456 = vpop.f32.mrb[0].mxu0
      %v2457 = vadd.f32 %v2344, %v2456
      %v2458 = vpop.f32.mrb[0].mxu0
      %v2459 = vadd.f32 %v2346, %v2458
      %2460 = vdwg.mxu0
      %v2461 = vand.u32 %v634, 4294901760
      %2462 = vmatprep.subr.mxu0 %v2461
      %v2463 = vand.u32 %v633, 4294901760
      %2464 = vmatpush1.msra.mxu0 %v2463
      %v2465 = vand.u32 %v650, 4294901760
      %2466 = vmatprep.subr.mxu0 %v2465
      %v2467 = vand.u32 %v649, 4294901760
      %2468 = vmatpush1.msra.mxu0 %v2467
      %v2469 = vand.u32 %v666, 4294901760
      %2470 = vmatprep.subr.mxu0 %v2469
      %v2471 = vand.u32 %v665, 4294901760
      %2472 = vmatpush1.msra.mxu0 %v2471
      %v2473 = vand.u32 %v682, 4294901760
      %2474 = vmatprep.subr.mxu0 %v2473
      %v2475 = vand.u32 %v681, 4294901760
      %2476 = vmatpush1.msra.mxu0 %v2475
      %2477 = vmatprep.subr.mxu0 0.0
      %2478 = vmatpush1.msra.mxu0 0.0
      %2479 = vmatprep.subr.mxu0 0.0
      %2480 = vmatpush1.msra.mxu0 0.0
      %2481 = vmatprep.subr.mxu0 0.0
      %2482 = vmatpush1.msra.mxu0 0.0
      %2483 = vmatprep.subr.mxu0 0.0
      %2484 = vmatpush1.msra.mxu0 0.0
      %2485 = vmatprep.subr.mxu0 0.0
      %2486 = vmatpush1.msra.mxu0 0.0
      %2487 = vmatprep.subr.mxu0 0.0
      %2488 = vmatpush1.msra.mxu0 0.0
      %2489 = vmatprep.subr.mxu0 0.0
      %2490 = vmatpush1.msra.mxu0 0.0
      %2491 = vmatprep.subr.mxu0 0.0
      %2492 = vmatpush1.msra.mxu0 0.0
      %2493 = vmatprep.subr.mxu0 0.0
      %2494 = vmatpush1.msra.mxu0 0.0
      %2495 = vmatprep.subr.mxu0 0.0
      %2496 = vmatpush1.msra.mxu0 0.0
      %2497 = vmatprep.subr.mxu0 0.0
      %2498 = vmatpush1.msra.mxu0 0.0
      %2499 = vmatprep.subr.mxu0 0.0
      %2500 = vmatpush1.msra.mxu0 0.0
      %2501 = vmatprep.subr.mxu0 0.0
      %2502 = vmatpush1.msra.mxu0 0.0
      %2503 = vmatprep.subr.mxu0 0.0
      %2504 = vmatpush1.msra.mxu0 0.0
      %2505 = vmatprep.subr.mxu0 0.0
      %2506 = vmatpush1.msra.mxu0 0.0
      %2507 = vmatprep.subr.mxu0 0.0
      %2508 = vmatpush1.msra.mxu0 0.0
      %2509 = vmatprep.subr.mxu0 0.0
      %2510 = vmatpush1.msra.mxu0 0.0
      %2511 = vmatprep.subr.mxu0 0.0
      %2512 = vmatpush1.msra.mxu0 0.0
      %2513 = vmatprep.subr.mxu0 0.0
      %2514 = vmatpush1.msra.mxu0 0.0
      %2515 = vmatprep.subr.mxu0 0.0
      %2516 = vmatpush1.msra.mxu0 0.0
      %2517 = vmatprep.subr.mxu0 0.0
      %2518 = vmatpush1.msra.mxu0 0.0
      %2519 = vmatprep.subr.mxu0 0.0
      %2520 = vmatpush1.msra.mxu0 0.0
      %2521 = vmatprep.subr.mxu0 0.0
      %2522 = vmatpush1.msra.mxu0 0.0
      %2523 = vmatprep.subr.mxu0 0.0
      %2524 = vmatpush1.msra.mxu0 0.0
      %2525 = vmatprep.subr.mxu0 0.0
      %2526 = vmatpush1.msra.mxu0 0.0
      %2527 = vmatprep.subr.mxu0 0.0
      %2528 = vmatpush1.msra.mxu0 0.0
      %2529 = vmatprep.subr.mxu0 0.0
      %2530 = vmatpush1.msra.mxu0 0.0
      %2531 = vmatprep.subr.mxu0 0.0
      %2532 = vmatpush1.msra.mxu0 0.0
      %2533 = vmatprep.mubr.f32.mxu0 0.0
      %v2534 = vand.u32 %v710, 4294901760
      %v2535 = vsub.f32 %v710, %v2534
      %v2536 = vand.u32 %v2535, 4294901760
      %2537 = vmatmul.mubr.f32.gmra.mrb[0].mxu0 %v2536
      %v2538 = vpop.f32.mrb[0].mxu0
      %v2539 = vadd.f32 %v2433, %v2538
      %v2540 = vpop.f32.mrb[0].mxu0
      %v2541 = vadd.f32 %v2435, %v2540
      %2542 = vmatprep.mubr.f32.mxu0 0.0
      %v2543 = vand.u32 %v712, 4294901760
      %v2544 = vsub.f32 %v712, %v2543
      %v2545 = vand.u32 %v2544, 4294901760
      %2546 = vmatmul.mubr.f32.gmra.mrb[0].mxu0 %v2545
      %v2547 = vpop.f32.mrb[0].mxu0
      %v2548 = vadd.f32 %v2441, %v2547
      %v2549 = vpop.f32.mrb[0].mxu0
      %v2550 = vadd.f32 %v2443, %v2549
      %2551 = vmatprep.mubr.f32.mxu0 0.0
      %v2552 = vand.u32 %v714, 4294901760
      %v2553 = vsub.f32 %v714, %v2552
      %v2554 = vand.u32 %v2553, 4294901760
      %2555 = vmatmul.mubr.f32.gmra.mrb[0].mxu0 %v2554
      %v2556 = vpop.f32.mrb[0].mxu0
      %v2557 = vadd.f32 %v2449, %v2556
      %v2558 = vpop.f32.mrb[0].mxu0
      %v2559 = vadd.f32 %v2451, %v2558
      %2560 = vmatprep.mubr.f32.mxu0 0.0
      %v2561 = vand.u32 %v716, 4294901760
      %v2562 = vsub.f32 %v716, %v2561
      %v2563 = vand.u32 %v2562, 4294901760
      %2564 = vmatmul.mubr.f32.gmra.mrb[0].mxu0 %v2563
      %v2565 = vpop.f32.mrb[0].mxu0
      %v2566 = vadd.f32 %v2457, %v2565
      %v2567 = vpop.f32.mrb[0].mxu0
      %v2568 = vadd.f32 %v2459, %v2567
      %2569 = vdwg.mxu0
      %v2570 = vand.u32 %v634, 4294901760
      %v2571 = vsub.f32 %v634, %v2570
      %v2572 = vand.u32 %v2571, 4294901760
      %2573 = vmatprep.subr.mxu0 %v2572
      %v2574 = vand.u32 %v633, 4294901760
      %v2575 = vsub.f32 %v633, %v2574
      %v2576 = vand.u32 %v2575, 4294901760
      %2577 = vmatpush1.msra.mxu0 %v2576
      %v2578 = vand.u32 %v650, 4294901760
      %v2579 = vsub.f32 %v650, %v2578
      %v2580 = vand.u32 %v2579, 4294901760
      %2581 = vmatprep.subr.mxu0 %v2580
      %v2582 = vand.u32 %v649, 4294901760
      %v2583 = vsub.f32 %v649, %v2582
      %v2584 = vand.u32 %v2583, 4294901760
      %2585 = vmatpush1.msra.mxu0 %v2584
      %v2586 = vand.u32 %v666, 4294901760
      %v2587 = vsub.f32 %v666, %v2586
      %v2588 = vand.u32 %v2587, 4294901760
      %2589 = vmatprep.subr.mxu0 %v2588
      %v2590 = vand.u32 %v665, 4294901760
      %v2591 = vsub.f32 %v665, %v2590
      %v2592 = vand.u32 %v2591, 4294901760
      %2593 = vmatpush1.msra.mxu0 %v2592
      %v2594 = vand.u32 %v682, 4294901760
      %v2595 = vsub.f32 %v682, %v2594
      %v2596 = vand.u32 %v2595, 4294901760
      %2597 = vmatprep.subr.mxu0 %v2596
      %v2598 = vand.u32 %v681, 4294901760
      %v2599 = vsub.f32 %v681, %v2598
      %v2600 = vand.u32 %v2599, 4294901760
      %2601 = vmatpush1.msra.mxu0 %v2600
      %2602 = vmatprep.subr.mxu0 0.0
      %2603 = vmatpush1.msra.mxu0 0.0
      %2604 = vmatprep.subr.mxu0 0.0
      %2605 = vmatpush1.msra.mxu0 0.0
      %2606 = vmatprep.subr.mxu0 0.0
      %2607 = vmatpush1.msra.mxu0 0.0
      %2608 = vmatprep.subr.mxu0 0.0
      %2609 = vmatpush1.msra.mxu0 0.0
      %2610 = vmatprep.subr.mxu0 0.0
      %2611 = vmatpush1.msra.mxu0 0.0
      %2612 = vmatprep.subr.mxu0 0.0
      %2613 = vmatpush1.msra.mxu0 0.0
      %2614 = vmatprep.subr.mxu0 0.0
      %2615 = vmatpush1.msra.mxu0 0.0
      %2616 = vmatprep.subr.mxu0 0.0
      %2617 = vmatpush1.msra.mxu0 0.0
      %2618 = vmatprep.subr.mxu0 0.0
      %2619 = vmatpush1.msra.mxu0 0.0
      %2620 = vmatprep.subr.mxu0 0.0
      %2621 = vmatpush1.msra.mxu0 0.0
      %2622 = vmatprep.subr.mxu0 0.0
      %2623 = vmatpush1.msra.mxu0 0.0
      %2624 = vmatprep.subr.mxu0 0.0
      %2625 = vmatpush1.msra.mxu0 0.0
      %2626 = vmatprep.subr.mxu0 0.0
      %2627 = vmatpush1.msra.mxu0 0.0
      %2628 = vmatprep.subr.mxu0 0.0
      %2629 = vmatpush1.msra.mxu0 0.0
      %2630 = vmatprep.subr.mxu0 0.0
      %2631 = vmatpush1.msra.mxu0 0.0
      %2632 = vmatprep.subr.mxu0 0.0
      %2633 = vmatpush1.msra.mxu0 0.0
      %2634 = vmatprep.subr.mxu0 0.0
      %2635 = vmatpush1.msra.mxu0 0.0
      %2636 = vmatprep.subr.mxu0 0.0
      %2637 = vmatpush1.msra.mxu0 0.0
      %2638 = vmatprep.subr.mxu0 0.0
      %2639 = vmatpush1.msra.mxu0 0.0
      %2640 = vmatprep.subr.mxu0 0.0
      %2641 = vmatpush1.msra.mxu0 0.0
      %2642 = vmatprep.subr.mxu0 0.0
      %2643 = vmatpush1.msra.mxu0 0.0
      %2644 = vmatprep.subr.mxu0 0.0
      %2645 = vmatpush1.msra.mxu0 0.0
      %2646 = vmatprep.subr.mxu0 0.0
      %2647 = vmatpush1.msra.mxu0 0.0
      %2648 = vmatprep.subr.mxu0 0.0
      %2649 = vmatpush1.msra.mxu0 0.0
      %2650 = vmatprep.subr.mxu0 0.0
      %2651 = vmatpush1.msra.mxu0 0.0
      %2652 = vmatprep.subr.mxu0 0.0
      %2653 = vmatpush1.msra.mxu0 0.0
      %2654 = vmatprep.subr.mxu0 0.0
      %2655 = vmatpush1.msra.mxu0 0.0
      %2656 = vmatprep.subr.mxu0 0.0
      %2657 = vmatpush1.msra.mxu0 0.0
      %2658 = vmatprep.mubr.f32.mxu0 0.0
      %v2659 = vand.u32 %v710, 4294901760
      %2660 = vmatmul.mubr.f32.gmra.mrb[0].mxu0 %v2659
      %v2661 = vpop.f32.mrb[0].mxu0
      %v2662 = vadd.f32 %v2539, %v2661
      %v2663 = vpop.f32.mrb[0].mxu0
      %v2664 = vadd.f32 %v2541, %v2663
      %2665 = vmatprep.mubr.f32.mxu0 0.0
      %v2666 = vand.u32 %v712, 4294901760
      %2667 = vmatmul.mubr.f32.gmra.mrb[0].mxu0 %v2666
      %v2668 = vpop.f32.mrb[0].mxu0
      %v2669 = vadd.f32 %v2548, %v2668
      %v2670 = vpop.f32.mrb[0].mxu0
      %v2671 = vadd.f32 %v2550, %v2670
      %2672 = vmatprep.mubr.f32.mxu0 0.0
      %v2673 = vand.u32 %v714, 4294901760
      %2674 = vmatmul.mubr.f32.gmra.mrb[0].mxu0 %v2673
      %v2675 = vpop.f32.mrb[0].mxu0
      %v2676 = vadd.f32 %v2557, %v2675
      %v2677 = vpop.f32.mrb[0].mxu0
      %v2678 = vadd.f32 %v2559, %v2677
      %2679 = vmatprep.mubr.f32.mxu0 0.0
      %v2680 = vand.u32 %v716, 4294901760
      %2681 = vmatmul.mubr.f32.gmra.mrb[0].mxu0 %v2680
      %v2682 = vpop.f32.mrb[0].mxu0
      %v2683 = vadd.f32 %v2566, %v2682
      %v2684 = vpop.f32.mrb[0].mxu0
      %v2685 = vadd.f32 %v2568, %v2684
      %2686 = vdwg.mxu0
      %v2687 = vand.u32 %v634, 4294901760
      %2688 = vmatprep.subr.mxu0 %v2687
      %v2689 = vand.u32 %v633, 4294901760
      %2690 = vmatpush1.msra.mxu0 %v2689
      %v2691 = vand.u32 %v650, 4294901760
      %2692 = vmatprep.subr.mxu0 %v2691
      %v2693 = vand.u32 %v649, 4294901760
      %2694 = vmatpush1.msra.mxu0 %v2693
      %v2695 = vand.u32 %v666, 4294901760
      %2696 = vmatprep.subr.mxu0 %v2695
      %v2697 = vand.u32 %v665, 4294901760
      %2698 = vmatpush1.msra.mxu0 %v2697
      %v2699 = vand.u32 %v682, 4294901760
      %2700 = vmatprep.subr.mxu0 %v2699
      %v2701 = vand.u32 %v681, 4294901760
      %2702 = vmatpush1.msra.mxu0 %v2701
      %2703 = vmatprep.subr.mxu0 0.0
      %2704 = vmatpush1.msra.mxu0 0.0
      %2705 = vmatprep.subr.mxu0 0.0
      %2706 = vmatpush1.msra.mxu0 0.0
      %2707 = vmatprep.subr.mxu0 0.0
      %2708 = vmatpush1.msra.mxu0 0.0
      %2709 = vmatprep.subr.mxu0 0.0
      %2710 = vmatpush1.msra.mxu0 0.0
      %2711 = vmatprep.subr.mxu0 0.0
      %2712 = vmatpush1.msra.mxu0 0.0
      %2713 = vmatprep.subr.mxu0 0.0
      %2714 = vmatpush1.msra.mxu0 0.0
      %2715 = vmatprep.subr.mxu0 0.0
      %2716 = vmatpush1.msra.mxu0 0.0
      %2717 = vmatprep.subr.mxu0 0.0
      %2718 = vmatpush1.msra.mxu0 0.0
      %2719 = vmatprep.subr.mxu0 0.0
      %2720 = vmatpush1.msra.mxu0 0.0
      %2721 = vmatprep.subr.mxu0 0.0
      %2722 = vmatpush1.msra.mxu0 0.0
      %2723 = vmatprep.subr.mxu0 0.0
      %2724 = vmatpush1.msra.mxu0 0.0
      %2725 = vmatprep.subr.mxu0 0.0
      %2726 = vmatpush1.msra.mxu0 0.0
      %2727 = vmatprep.subr.mxu0 0.0
      %2728 = vmatpush1.msra.mxu0 0.0
      %2729 = vmatprep.subr.mxu0 0.0
      %2730 = vmatpush1.msra.mxu0 0.0
      %2731 = vmatprep.subr.mxu0 0.0
      %2732 = vmatpush1.msra.mxu0 0.0
      %2733 = vmatprep.subr.mxu0 0.0
      %2734 = vmatpush1.msra.mxu0 0.0
      %2735 = vmatprep.subr.mxu0 0.0
      %2736 = vmatpush1.msra.mxu0 0.0
      %2737 = vmatprep.subr.mxu0 0.0
      %2738 = vmatpush1.msra.mxu0 0.0
      %2739 = vmatprep.subr.mxu0 0.0
      %2740 = vmatpush1.msra.mxu0 0.0
      %2741 = vmatprep.subr.mxu0 0.0
      %2742 = vmatpush1.msra.mxu0 0.0
      %2743 = vmatprep.subr.mxu0 0.0
      %2744 = vmatpush1.msra.mxu0 0.0
      %2745 = vmatprep.subr.mxu0 0.0
      %2746 = vmatpush1.msra.mxu0 0.0
      %2747 = vmatprep.subr.mxu0 0.0
      %2748 = vmatpush1.msra.mxu0 0.0
      %2749 = vmatprep.subr.mxu0 0.0
      %2750 = vmatpush1.msra.mxu0 0.0
      %2751 = vmatprep.subr.mxu0 0.0
      %2752 = vmatpush1.msra.mxu0 0.0
      %2753 = vmatprep.subr.mxu0 0.0
      %2754 = vmatpush1.msra.mxu0 0.0
      %2755 = vmatprep.subr.mxu0 0.0
      %2756 = vmatpush1.msra.mxu0 0.0
      %2757 = vmatprep.subr.mxu0 0.0
      %2758 = vmatpush1.msra.mxu0 0.0
      %2759 = vmatprep.mubr.f32.mxu0 0.0
      %v2760 = vand.u32 %v710, 4294901760
      %2761 = vmatmul.mubr.f32.gmra.mrb[0].mxu0 %v2760
      %v2762 = vpop.f32.mrb[0].mxu0
      %v2763 = vadd.f32 %v2662, %v2762
      %v2764 = vpop.f32.mrb[0].mxu0
      %v2765 = vadd.f32 %v2664, %v2764
      %2766 = vmatprep.mubr.f32.mxu0 0.0
      %v2767 = vand.u32 %v712, 4294901760
      %2768 = vmatmul.mubr.f32.gmra.mrb[0].mxu0 %v2767
      %v2769 = vpop.f32.mrb[0].mxu0
      %v2770 = vadd.f32 %v2669, %v2769
      %v2771 = vpop.f32.mrb[0].mxu0
      %v2772 = vadd.f32 %v2671, %v2771
      %2773 = vmatprep.mubr.f32.mxu0 0.0
      %v2774 = vand.u32 %v714, 4294901760
      %2775 = vmatmul.mubr.f32.gmra.mrb[0].mxu0 %v2774
      %v2776 = vpop.f32.mrb[0].mxu0
      %v2777 = vadd.f32 %v2676, %v2776
      %v2778 = vpop.f32.mrb[0].mxu0
      %v2779 = vadd.f32 %v2678, %v2778
      %2780 = vmatprep.mubr.f32.mxu0 0.0
      %v2781 = vand.u32 %v716, 4294901760
      %2782 = vmatmul.mubr.f32.gmra.mrb[0].mxu0 %v2781
      %v2783 = vpop.f32.mrb[0].mxu0
      %v2784 = vadd.f32 %v2683, %v2783
      %v2785 = vpop.f32.mrb[0].mxu0
      %v2786 = vadd.f32 %v2685, %v2785
      %2787 = vdwg.mxu0
      %v2788 = vand.u32 %v636, 4294901760
      %2789 = vmatprep.subr.mxu0 %v2788
      %v2790 = vand.u32 %v635, 4294901760
      %2791 = vmatpush1.msra.mxu0 %v2790
      %v2792 = vand.u32 %v652, 4294901760
      %2793 = vmatprep.subr.mxu0 %v2792
      %v2794 = vand.u32 %v651, 4294901760
      %2795 = vmatpush1.msra.mxu0 %v2794
      %v2796 = vand.u32 %v668, 4294901760
      %2797 = vmatprep.subr.mxu0 %v2796
      %v2798 = vand.u32 %v667, 4294901760
      %2799 = vmatpush1.msra.mxu0 %v2798
      %v2800 = vand.u32 %v684, 4294901760
      %2801 = vmatprep.subr.mxu0 %v2800
      %v2802 = vand.u32 %v683, 4294901760
      %2803 = vmatpush1.msra.mxu0 %v2802
      %2804 = vmatprep.subr.mxu0 0.0
      %2805 = vmatpush1.msra.mxu0 0.0
      %2806 = vmatprep.subr.mxu0 0.0
      %2807 = vmatpush1.msra.mxu0 0.0
      %2808 = vmatprep.subr.mxu0 0.0
      %2809 = vmatpush1.msra.mxu0 0.0
      %2810 = vmatprep.subr.mxu0 0.0
      %2811 = vmatpush1.msra.mxu0 0.0
      %2812 = vmatprep.subr.mxu0 0.0
      %2813 = vmatpush1.msra.mxu0 0.0
      %2814 = vmatprep.subr.mxu0 0.0
      %2815 = vmatpush1.msra.mxu0 0.0
      %2816 = vmatprep.subr.mxu0 0.0
      %2817 = vmatpush1.msra.mxu0 0.0
      %2818 = vmatprep.subr.mxu0 0.0
      %2819 = vmatpush1.msra.mxu0 0.0
      %2820 = vmatprep.subr.mxu0 0.0
      %2821 = vmatpush1.msra.mxu0 0.0
      %2822 = vmatprep.subr.mxu0 0.0
      %2823 = vmatpush1.msra.mxu0 0.0
      %2824 = vmatprep.subr.mxu0 0.0
      %2825 = vmatpush1.msra.mxu0 0.0
      %2826 = vmatprep.subr.mxu0 0.0
      %2827 = vmatpush1.msra.mxu0 0.0
      %2828 = vmatprep.subr.mxu0 0.0
      %2829 = vmatpush1.msra.mxu0 0.0
      %2830 = vmatprep.subr.mxu0 0.0
      %2831 = vmatpush1.msra.mxu0 0.0
      %2832 = vmatprep.subr.mxu0 0.0
      %2833 = vmatpush1.msra.mxu0 0.0
      %2834 = vmatprep.subr.mxu0 0.0
      %2835 = vmatpush1.msra.mxu0 0.0
      %2836 = vmatprep.subr.mxu0 0.0
      %2837 = vmatpush1.msra.mxu0 0.0
      %2838 = vmatprep.subr.mxu0 0.0
      %2839 = vmatpush1.msra.mxu0 0.0
      %2840 = vmatprep.subr.mxu0 0.0
      %2841 = vmatpush1.msra.mxu0 0.0
      %2842 = vmatprep.subr.mxu0 0.0
      %2843 = vmatpush1.msra.mxu0 0.0
      %2844 = vmatprep.subr.mxu0 0.0
      %2845 = vmatpush1.msra.mxu0 0.0
      %2846 = vmatprep.subr.mxu0 0.0
      %2847 = vmatpush1.msra.mxu0 0.0
      %2848 = vmatprep.subr.mxu0 0.0
      %2849 = vmatpush1.msra.mxu0 0.0
      %2850 = vmatprep.subr.mxu0 0.0
      %2851 = vmatpush1.msra.mxu0 0.0
      %2852 = vmatprep.subr.mxu0 0.0
      %2853 = vmatpush1.msra.mxu0 0.0
      %2854 = vmatprep.subr.mxu0 0.0
      %2855 = vmatpush1.msra.mxu0 0.0
      %2856 = vmatprep.subr.mxu0 0.0
      %2857 = vmatpush1.msra.mxu0 0.0
      %2858 = vmatprep.subr.mxu0 0.0
      %2859 = vmatpush1.msra.mxu0 0.0
      %2860 = vmatprep.mubr.f32.mxu0 0.0
      %v2861 = vand.u32 %v710, 4294901760
      %v2862 = vsub.f32 %v710, %v2861
      %v2863 = vand.u32 %v2862, 4294901760
      %v2864 = vsub.f32 %v2862, %v2863
      %v2865 = vand.u32 %v2864, 4294901760
      %2866 = vmatmul.mubr.f32.gmra.mrb[0].mxu0 %v2865
      %v2867 = vpop.f32.mrb[0].mxu0
      %v2868 = vadd.f32 %v695, %v2867
      %v2869 = vpop.f32.mrb[0].mxu0
      %v2870 = vadd.f32 %v695, %v2869
      %2871 = vmatprep.mubr.f32.mxu0 0.0
      %v2872 = vand.u32 %v712, 4294901760
      %v2873 = vsub.f32 %v712, %v2872
      %v2874 = vand.u32 %v2873, 4294901760
      %v2875 = vsub.f32 %v2873, %v2874
      %v2876 = vand.u32 %v2875, 4294901760
      %2877 = vmatmul.mubr.f32.gmra.mrb[0].mxu0 %v2876
      %v2878 = vpop.f32.mrb[0].mxu0
      %v2879 = vadd.f32 %v699, %v2878
      %v2880 = vpop.f32.mrb[0].mxu0
      %v2881 = vadd.f32 %v699, %v2880
      %2882 = vmatprep.mubr.f32.mxu0 0.0
      %v2883 = vand.u32 %v714, 4294901760
      %v2884 = vsub.f32 %v714, %v2883
      %v2885 = vand.u32 %v2884, 4294901760
      %v2886 = vsub.f32 %v2884, %v2885
      %v2887 = vand.u32 %v2886, 4294901760
      %2888 = vmatmul.mubr.f32.gmra.mrb[0].mxu0 %v2887
      %v2889 = vpop.f32.mrb[0].mxu0
      %v2890 = vadd.f32 %v703, %v2889
      %v2891 = vpop.f32.mrb[0].mxu0
      %v2892 = vadd.f32 %v703, %v2891
      %2893 = vmatprep.mubr.f32.mxu0 0.0
      %v2894 = vand.u32 %v716, 4294901760
      %v2895 = vsub.f32 %v716, %v2894
      %v2896 = vand.u32 %v2895, 4294901760
      %v2897 = vsub.f32 %v2895, %v2896
      %v2898 = vand.u32 %v2897, 4294901760
      %2899 = vmatmul.mubr.f32.gmra.mrb[0].mxu0 %v2898
      %v2900 = vpop.f32.mrb[0].mxu0
      %v2901 = vadd.f32 %v707, %v2900
      %v2902 = vpop.f32.mrb[0].mxu0
      %v2903 = vadd.f32 %v707, %v2902
      %2904 = vdwg.mxu0
      %v2905 = vand.u32 %v636, 4294901760
      %v2906 = vsub.f32 %v636, %v2905
      %v2907 = vand.u32 %v2906, 4294901760
      %v2908 = vsub.f32 %v2906, %v2907
      %v2909 = vand.u32 %v2908, 4294901760
      %2910 = vmatprep.subr.mxu0 %v2909
      %v2911 = vand.u32 %v635, 4294901760
      %v2912 = vsub.f32 %v635, %v2911
      %v2913 = vand.u32 %v2912, 4294901760
      %v2914 = vsub.f32 %v2912, %v2913
      %v2915 = vand.u32 %v2914, 4294901760
      %2916 = vmatpush1.msra.mxu0 %v2915
      %v2917 = vand.u32 %v652, 4294901760
      %v2918 = vsub.f32 %v652, %v2917
      %v2919 = vand.u32 %v2918, 4294901760
      %v2920 = vsub.f32 %v2918, %v2919
      %v2921 = vand.u32 %v2920, 4294901760
      %2922 = vmatprep.subr.mxu0 %v2921
      %v2923 = vand.u32 %v651, 4294901760
      %v2924 = vsub.f32 %v651, %v2923
      %v2925 = vand.u32 %v2924, 4294901760
      %v2926 = vsub.f32 %v2924, %v2925
      %v2927 = vand.u32 %v2926, 4294901760
      %2928 = vmatpush1.msra.mxu0 %v2927
      %v2929 = vand.u32 %v668, 4294901760
      %v2930 = vsub.f32 %v668, %v2929
      %v2931 = vand.u32 %v2930, 4294901760
      %v2932 = vsub.f32 %v2930, %v2931
      %v2933 = vand.u32 %v2932, 4294901760
      %2934 = vmatprep.subr.mxu0 %v2933
      %v2935 = vand.u32 %v667, 4294901760
      %v2936 = vsub.f32 %v667, %v2935
      %v2937 = vand.u32 %v2936, 4294901760
      %v2938 = vsub.f32 %v2936, %v2937
      %v2939 = vand.u32 %v2938, 4294901760
      %2940 = vmatpush1.msra.mxu0 %v2939
      %v2941 = vand.u32 %v684, 4294901760
      %v2942 = vsub.f32 %v684, %v2941
      %v2943 = vand.u32 %v2942, 4294901760
      %v2944 = vsub.f32 %v2942, %v2943
      %v2945 = vand.u32 %v2944, 4294901760
      %2946 = vmatprep.subr.mxu0 %v2945
      %v2947 = vand.u32 %v683, 4294901760
      %v2948 = vsub.f32 %v683, %v2947
      %v2949 = vand.u32 %v2948, 4294901760
      %v2950 = vsub.f32 %v2948, %v2949
      %v2951 = vand.u32 %v2950, 4294901760
      %2952 = vmatpush1.msra.mxu0 %v2951
      %2953 = vmatprep.subr.mxu0 0.0
      %2954 = vmatpush1.msra.mxu0 0.0
      %2955 = vmatprep.subr.mxu0 0.0
      %2956 = vmatpush1.msra.mxu0 0.0
      %2957 = vmatprep.subr.mxu0 0.0
      %2958 = vmatpush1.msra.mxu0 0.0
      %2959 = vmatprep.subr.mxu0 0.0
      %2960 = vmatpush1.msra.mxu0 0.0
      %2961 = vmatprep.subr.mxu0 0.0
      %2962 = vmatpush1.msra.mxu0 0.0
      %2963 = vmatprep.subr.mxu0 0.0
      %2964 = vmatpush1.msra.mxu0 0.0
      %2965 = vmatprep.subr.mxu0 0.0
      %2966 = vmatpush1.msra.mxu0 0.0
      %2967 = vmatprep.subr.mxu0 0.0
      %2968 = vmatpush1.msra.mxu0 0.0
      %2969 = vmatprep.subr.mxu0 0.0
      %2970 = vmatpush1.msra.mxu0 0.0
      %2971 = vmatprep.subr.mxu0 0.0
      %2972 = vmatpush1.msra.mxu0 0.0
      %2973 = vmatprep.subr.mxu0 0.0
      %2974 = vmatpush1.msra.mxu0 0.0
      %2975 = vmatprep.subr.mxu0 0.0
      %2976 = vmatpush1.msra.mxu0 0.0
      %2977 = vmatprep.subr.mxu0 0.0
      %2978 = vmatpush1.msra.mxu0 0.0
      %2979 = vmatprep.subr.mxu0 0.0
      %2980 = vmatpush1.msra.mxu0 0.0
      %2981 = vmatprep.subr.mxu0 0.0
      %2982 = vmatpush1.msra.mxu0 0.0
      %2983 = vmatprep.subr.mxu0 0.0
      %2984 = vmatpush1.msra.mxu0 0.0
      %2985 = vmatprep.subr.mxu0 0.0
      %2986 = vmatpush1.msra.mxu0 0.0
      %2987 = vmatprep.subr.mxu0 0.0
      %2988 = vmatpush1.msra.mxu0 0.0
      %2989 = vmatprep.subr.mxu0 0.0
      %2990 = vmatpush1.msra.mxu0 0.0
      %2991 = vmatprep.subr.mxu0 0.0
      %2992 = vmatpush1.msra.mxu0 0.0
      %2993 = vmatprep.subr.mxu0 0.0
      %2994 = vmatpush1.msra.mxu0 0.0
      %2995 = vmatprep.subr.mxu0 0.0
      %2996 = vmatpush1.msra.mxu0 0.0
      %2997 = vmatprep.subr.mxu0 0.0
      %2998 = vmatpush1.msra.mxu0 0.0
      %2999 = vmatprep.subr.mxu0 0.0
      %3000 = vmatpush1.msra.mxu0 0.0
      %3001 = vmatprep.subr.mxu0 0.0
      %3002 = vmatpush1.msra.mxu0 0.0
      %3003 = vmatprep.subr.mxu0 0.0
      %3004 = vmatpush1.msra.mxu0 0.0
      %3005 = vmatprep.subr.mxu0 0.0
      %3006 = vmatpush1.msra.mxu0 0.0
      %3007 = vmatprep.subr.mxu0 0.0
      %3008 = vmatpush1.msra.mxu0 0.0
      %3009 = vmatprep.mubr.f32.mxu0 0.0
      %v3010 = vand.u32 %v710, 4294901760
      %3011 = vmatmul.mubr.f32.gmra.mrb[0].mxu0 %v3010
      %v3012 = vpop.f32.mrb[0].mxu0
      %v3013 = vadd.f32 %v2868, %v3012
      %v3014 = vpop.f32.mrb[0].mxu0
      %v3015 = vadd.f32 %v2870, %v3014
      %3016 = vmatprep.mubr.f32.mxu0 0.0
      %v3017 = vand.u32 %v712, 4294901760
      %3018 = vmatmul.mubr.f32.gmra.mrb[0].mxu0 %v3017
      %v3019 = vpop.f32.mrb[0].mxu0
      %v3020 = vadd.f32 %v2879, %v3019
      %v3021 = vpop.f32.mrb[0].mxu0
      %v3022 = vadd.f32 %v2881, %v3021
      %3023 = vmatprep.mubr.f32.mxu0 0.0
      %v3024 = vand.u32 %v714, 4294901760
      %3025 = vmatmul.mubr.f32.gmra.mrb[0].mxu0 %v3024
      %v3026 = vpop.f32.mrb[0].mxu0
      %v3027 = vadd.f32 %v2890, %v3026
      %v3028 = vpop.f32.mrb[0].mxu0
      %v3029 = vadd.f32 %v2892, %v3028
      %3030 = vmatprep.mubr.f32.mxu0 0.0
      %v3031 = vand.u32 %v716, 4294901760
      %3032 = vmatmul.mubr.f32.gmra.mrb[0].mxu0 %v3031
      %v3033 = vpop.f32.mrb[0].mxu0
      %v3034 = vadd.f32 %v2901, %v3033
      %v3035 = vpop.f32.mrb[0].mxu0
      %v3036 = vadd.f32 %v2903, %v3035
      %3037 = vdwg.mxu0
      %v3038 = vand.u32 %v636, 4294901760
      %v3039 = vsub.f32 %v636, %v3038
      %3040 = vmatprep.subr.mxu0 %v3039
      %v3041 = vand.u32 %v635, 4294901760
      %v3042 = vsub.f32 %v635, %v3041
      %3043 = vmatpush1.msra.mxu0 %v3042
      %v3044 = vand.u32 %v652, 4294901760
      %v3045 = vsub.f32 %v652, %v3044
      %3046 = vmatprep.subr.mxu0 %v3045
      %v3047 = vand.u32 %v651, 4294901760
      %v3048 = vsub.f32 %v651, %v3047
      %3049 = vmatpush1.msra.mxu0 %v3048
      %v3050 = vand.u32 %v668, 4294901760
      %v3051 = vsub.f32 %v668, %v3050
      %3052 = vmatprep.subr.mxu0 %v3051
      %v3053 = vand.u32 %v667, 4294901760
      %v3054 = vsub.f32 %v667, %v3053
      %3055 = vmatpush1.msra.mxu0 %v3054
      %v3056 = vand.u32 %v684, 4294901760
      %v3057 = vsub.f32 %v684, %v3056
      %3058 = vmatprep.subr.mxu0 %v3057
      %v3059 = vand.u32 %v683, 4294901760
      %v3060 = vsub.f32 %v683, %v3059
      %3061 = vmatpush1.msra.mxu0 %v3060
      %3062 = vmatprep.subr.mxu0 0.0
      %3063 = vmatpush1.msra.mxu0 0.0
      %3064 = vmatprep.subr.mxu0 0.0
      %3065 = vmatpush1.msra.mxu0 0.0
      %3066 = vmatprep.subr.mxu0 0.0
      %3067 = vmatpush1.msra.mxu0 0.0
      %3068 = vmatprep.subr.mxu0 0.0
      %3069 = vmatpush1.msra.mxu0 0.0
      %3070 = vmatprep.subr.mxu0 0.0
      %3071 = vmatpush1.msra.mxu0 0.0
      %3072 = vmatprep.subr.mxu0 0.0
      %3073 = vmatpush1.msra.mxu0 0.0
      %3074 = vmatprep.subr.mxu0 0.0
      %3075 = vmatpush1.msra.mxu0 0.0
      %3076 = vmatprep.subr.mxu0 0.0
      %3077 = vmatpush1.msra.mxu0 0.0
      %3078 = vmatprep.subr.mxu0 0.0
      %3079 = vmatpush1.msra.mxu0 0.0
      %3080 = vmatprep.subr.mxu0 0.0
      %3081 = vmatpush1.msra.mxu0 0.0
      %3082 = vmatprep.subr.mxu0 0.0
      %3083 = vmatpush1.msra.mxu0 0.0
      %3084 = vmatprep.subr.mxu0 0.0
      %3085 = vmatpush1.msra.mxu0 0.0
      %3086 = vmatprep.subr.mxu0 0.0
      %3087 = vmatpush1.msra.mxu0 0.0
      %3088 = vmatprep.subr.mxu0 0.0
      %3089 = vmatpush1.msra.mxu0 0.0
      %3090 = vmatprep.subr.mxu0 0.0
      %3091 = vmatpush1.msra.mxu0 0.0
      %3092 = vmatprep.subr.mxu0 0.0
      %3093 = vmatpush1.msra.mxu0 0.0
      %3094 = vmatprep.subr.mxu0 0.0
      %3095 = vmatpush1.msra.mxu0 0.0
      %3096 = vmatprep.subr.mxu0 0.0
      %3097 = vmatpush1.msra.mxu0 0.0
      %3098 = vmatprep.subr.mxu0 0.0
      %3099 = vmatpush1.msra.mxu0 0.0
      %3100 = vmatprep.subr.mxu0 0.0
      %3101 = vmatpush1.msra.mxu0 0.0
      %3102 = vmatprep.subr.mxu0 0.0
      %3103 = vmatpush1.msra.mxu0 0.0
      %3104 = vmatprep.subr.mxu0 0.0
      %3105 = vmatpush1.msra.mxu0 0.0
      %3106 = vmatprep.subr.mxu0 0.0
      %3107 = vmatpush1.msra.mxu0 0.0
      %3108 = vmatprep.subr.mxu0 0.0
      %3109 = vmatpush1.msra.mxu0 0.0
      %3110 = vmatprep.subr.mxu0 0.0
      %3111 = vmatpush1.msra.mxu0 0.0
      %3112 = vmatprep.subr.mxu0 0.0
      %3113 = vmatpush1.msra.mxu0 0.0
      %3114 = vmatprep.subr.mxu0 0.0
      %3115 = vmatpush1.msra.mxu0 0.0
      %3116 = vmatprep.subr.mxu0 0.0
      %3117 = vmatpush1.msra.mxu0 0.0
      %3118 = vmatprep.mubr.f32.mxu0 0.0
      %v3119 = vand.u32 %v710, 4294901760
      %v3120 = vsub.f32 %v710, %v3119
      %3121 = vmatmul.mubr.f32.gmra.mrb[0].mxu0 %v3120
      %v3122 = vpop.f32.mrb[0].mxu0
      %v3123 = vadd.f32 %v3013, %v3122
      %v3124 = vpop.f32.mrb[0].mxu0
      %v3125 = vadd.f32 %v3015, %v3124
      %3126 = vmatprep.mubr.f32.mxu0 0.0
      %v3127 = vand.u32 %v712, 4294901760
      %v3128 = vsub.f32 %v712, %v3127
      %3129 = vmatmul.mubr.f32.gmra.mrb[0].mxu0 %v3128
      %v3130 = vpop.f32.mrb[0].mxu0
      %v3131 = vadd.f32 %v3020, %v3130
      %v3132 = vpop.f32.mrb[0].mxu0
      %v3133 = vadd.f32 %v3022, %v3132
      %3134 = vmatprep.mubr.f32.mxu0 0.0
      %v3135 = vand.u32 %v714, 4294901760
      %v3136 = vsub.f32 %v714, %v3135
      %3137 = vmatmul.mubr.f32.gmra.mrb[0].mxu0 %v3136
      %v3138 = vpop.f32.mrb[0].mxu0
      %v3139 = vadd.f32 %v3027, %v3138
      %v3140 = vpop.f32.mrb[0].mxu0
      %v3141 = vadd.f32 %v3029, %v3140
      %3142 = vmatprep.mubr.f32.mxu0 0.0
      %v3143 = vand.u32 %v716, 4294901760
      %v3144 = vsub.f32 %v716, %v3143
      %3145 = vmatmul.mubr.f32.gmra.mrb[0].mxu0 %v3144
      %v3146 = vpop.f32.mrb[0].mxu0
      %v3147 = vadd.f32 %v3034, %v3146
      %v3148 = vpop.f32.mrb[0].mxu0
      %v3149 = vadd.f32 %v3036, %v3148
      %3150 = vdwg.mxu0
      %v3151 = vand.u32 %v636, 4294901760
      %3152 = vmatprep.subr.mxu0 %v3151
      %v3153 = vand.u32 %v635, 4294901760
      %3154 = vmatpush1.msra.mxu0 %v3153
      %v3155 = vand.u32 %v652, 4294901760
      %3156 = vmatprep.subr.mxu0 %v3155
      %v3157 = vand.u32 %v651, 4294901760
      %3158 = vmatpush1.msra.mxu0 %v3157
      %v3159 = vand.u32 %v668, 4294901760
      %3160 = vmatprep.subr.mxu0 %v3159
      %v3161 = vand.u32 %v667, 4294901760
      %3162 = vmatpush1.msra.mxu0 %v3161
      %v3163 = vand.u32 %v684, 4294901760
      %3164 = vmatprep.subr.mxu0 %v3163
      %v3165 = vand.u32 %v683, 4294901760
      %3166 = vmatpush1.msra.mxu0 %v3165
      %3167 = vmatprep.subr.mxu0 0.0
      %3168 = vmatpush1.msra.mxu0 0.0
      %3169 = vmatprep.subr.mxu0 0.0
      %3170 = vmatpush1.msra.mxu0 0.0
      %3171 = vmatprep.subr.mxu0 0.0
      %3172 = vmatpush1.msra.mxu0 0.0
      %3173 = vmatprep.subr.mxu0 0.0
      %3174 = vmatpush1.msra.mxu0 0.0
      %3175 = vmatprep.subr.mxu0 0.0
      %3176 = vmatpush1.msra.mxu0 0.0
      %3177 = vmatprep.subr.mxu0 0.0
      %3178 = vmatpush1.msra.mxu0 0.0
      %3179 = vmatprep.subr.mxu0 0.0
      %3180 = vmatpush1.msra.mxu0 0.0
      %3181 = vmatprep.subr.mxu0 0.0
      %3182 = vmatpush1.msra.mxu0 0.0
      %3183 = vmatprep.subr.mxu0 0.0
      %3184 = vmatpush1.msra.mxu0 0.0
      %3185 = vmatprep.subr.mxu0 0.0
      %3186 = vmatpush1.msra.mxu0 0.0
      %3187 = vmatprep.subr.mxu0 0.0
      %3188 = vmatpush1.msra.mxu0 0.0
      %3189 = vmatprep.subr.mxu0 0.0
      %3190 = vmatpush1.msra.mxu0 0.0
      %3191 = vmatprep.subr.mxu0 0.0
      %3192 = vmatpush1.msra.mxu0 0.0
      %3193 = vmatprep.subr.mxu0 0.0
      %3194 = vmatpush1.msra.mxu0 0.0
      %3195 = vmatprep.subr.mxu0 0.0
      %3196 = vmatpush1.msra.mxu0 0.0
      %3197 = vmatprep.subr.mxu0 0.0
      %3198 = vmatpush1.msra.mxu0 0.0
      %3199 = vmatprep.subr.mxu0 0.0
      %3200 = vmatpush1.msra.mxu0 0.0
      %3201 = vmatprep.subr.mxu0 0.0
      %3202 = vmatpush1.msra.mxu0 0.0
      %3203 = vmatprep.subr.mxu0 0.0
      %3204 = vmatpush1.msra.mxu0 0.0
      %3205 = vmatprep.subr.mxu0 0.0
      %3206 = vmatpush1.msra.mxu0 0.0
      %3207 = vmatprep.subr.mxu0 0.0
      %3208 = vmatpush1.msra.mxu0 0.0
      %3209 = vmatprep.subr.mxu0 0.0
      %3210 = vmatpush1.msra.mxu0 0.0
      %3211 = vmatprep.subr.mxu0 0.0
      %3212 = vmatpush1.msra.mxu0 0.0
      %3213 = vmatprep.subr.mxu0 0.0
      %3214 = vmatpush1.msra.mxu0 0.0
      %3215 = vmatprep.subr.mxu0 0.0
      %3216 = vmatpush1.msra.mxu0 0.0
      %3217 = vmatprep.subr.mxu0 0.0
      %3218 = vmatpush1.msra.mxu0 0.0
      %3219 = vmatprep.subr.mxu0 0.0
      %3220 = vmatpush1.msra.mxu0 0.0
      %3221 = vmatprep.subr.mxu0 0.0
      %3222 = vmatpush1.msra.mxu0 0.0
      %3223 = vmatprep.mubr.f32.mxu0 0.0
      %v3224 = vand.u32 %v710, 4294901760
      %v3225 = vsub.f32 %v710, %v3224
      %v3226 = vand.u32 %v3225, 4294901760
      %3227 = vmatmul.mubr.f32.gmra.mrb[0].mxu0 %v3226
      %v3228 = vpop.f32.mrb[0].mxu0
      %v3229 = vadd.f32 %v3123, %v3228
      %v3230 = vpop.f32.mrb[0].mxu0
      %v3231 = vadd.f32 %v3125, %v3230
      %3232 = vmatprep.mubr.f32.mxu0 0.0
      %v3233 = vand.u32 %v712, 4294901760
      %v3234 = vsub.f32 %v712, %v3233
      %v3235 = vand.u32 %v3234, 4294901760
      %3236 = vmatmul.mubr.f32.gmra.mrb[0].mxu0 %v3235
      %v3237 = vpop.f32.mrb[0].mxu0
      %v3238 = vadd.f32 %v3131, %v3237
      %v3239 = vpop.f32.mrb[0].mxu0
      %v3240 = vadd.f32 %v3133, %v3239
      %3241 = vmatprep.mubr.f32.mxu0 0.0
      %v3242 = vand.u32 %v714, 4294901760
      %v3243 = vsub.f32 %v714, %v3242
      %v3244 = vand.u32 %v3243, 4294901760
      %3245 = vmatmul.mubr.f32.gmra.mrb[0].mxu0 %v3244
      %v3246 = vpop.f32.mrb[0].mxu0
      %v3247 = vadd.f32 %v3139, %v3246
      %v3248 = vpop.f32.mrb[0].mxu0
      %v3249 = vadd.f32 %v3141, %v3248
      %3250 = vmatprep.mubr.f32.mxu0 0.0
      %v3251 = vand.u32 %v716, 4294901760
      %v3252 = vsub.f32 %v716, %v3251
      %v3253 = vand.u32 %v3252, 4294901760
      %3254 = vmatmul.mubr.f32.gmra.mrb[0].mxu0 %v3253
      %v3255 = vpop.f32.mrb[0].mxu0
      %v3256 = vadd.f32 %v3147, %v3255
      %v3257 = vpop.f32.mrb[0].mxu0
      %v3258 = vadd.f32 %v3149, %v3257
      %3259 = vdwg.mxu0
      %v3260 = vand.u32 %v636, 4294901760
      %v3261 = vsub.f32 %v636, %v3260
      %v3262 = vand.u32 %v3261, 4294901760
      %3263 = vmatprep.subr.mxu0 %v3262
      %v3264 = vand.u32 %v635, 4294901760
      %v3265 = vsub.f32 %v635, %v3264
      %v3266 = vand.u32 %v3265, 4294901760
      %3267 = vmatpush1.msra.mxu0 %v3266
      %v3268 = vand.u32 %v652, 4294901760
      %v3269 = vsub.f32 %v652, %v3268
      %v3270 = vand.u32 %v3269, 4294901760
      %3271 = vmatprep.subr.mxu0 %v3270
      %v3272 = vand.u32 %v651, 4294901760
      %v3273 = vsub.f32 %v651, %v3272
      %v3274 = vand.u32 %v3273, 4294901760
      %3275 = vmatpush1.msra.mxu0 %v3274
      %v3276 = vand.u32 %v668, 4294901760
      %v3277 = vsub.f32 %v668, %v3276
      %v3278 = vand.u32 %v3277, 4294901760
      %3279 = vmatprep.subr.mxu0 %v3278
      %v3280 = vand.u32 %v667, 4294901760
      %v3281 = vsub.f32 %v667, %v3280
      %v3282 = vand.u32 %v3281, 4294901760
      %3283 = vmatpush1.msra.mxu0 %v3282
      %v3284 = vand.u32 %v684, 4294901760
      %v3285 = vsub.f32 %v684, %v3284
      %v3286 = vand.u32 %v3285, 4294901760
      %3287 = vmatprep.subr.mxu0 %v3286
      %v3288 = vand.u32 %v683, 4294901760
      %v3289 = vsub.f32 %v683, %v3288
      %v3290 = vand.u32 %v3289, 4294901760
      %3291 = vmatpush1.msra.mxu0 %v3290
      %3292 = vmatprep.subr.mxu0 0.0
      %3293 = vmatpush1.msra.mxu0 0.0
      %3294 = vmatprep.subr.mxu0 0.0
      %3295 = vmatpush1.msra.mxu0 0.0
      %3296 = vmatprep.subr.mxu0 0.0
      %3297 = vmatpush1.msra.mxu0 0.0
      %3298 = vmatprep.subr.mxu0 0.0
      %3299 = vmatpush1.msra.mxu0 0.0
      %3300 = vmatprep.subr.mxu0 0.0
      %3301 = vmatpush1.msra.mxu0 0.0
      %3302 = vmatprep.subr.mxu0 0.0
      %3303 = vmatpush1.msra.mxu0 0.0
      %3304 = vmatprep.subr.mxu0 0.0
      %3305 = vmatpush1.msra.mxu0 0.0
      %3306 = vmatprep.subr.mxu0 0.0
      %3307 = vmatpush1.msra.mxu0 0.0
      %3308 = vmatprep.subr.mxu0 0.0
      %3309 = vmatpush1.msra.mxu0 0.0
      %3310 = vmatprep.subr.mxu0 0.0
      %3311 = vmatpush1.msra.mxu0 0.0
      %3312 = vmatprep.subr.mxu0 0.0
      %3313 = vmatpush1.msra.mxu0 0.0
      %3314 = vmatprep.subr.mxu0 0.0
      %3315 = vmatpush1.msra.mxu0 0.0
      %3316 = vmatprep.subr.mxu0 0.0
      %3317 = vmatpush1.msra.mxu0 0.0
      %3318 = vmatprep.subr.mxu0 0.0
      %3319 = vmatpush1.msra.mxu0 0.0
      %3320 = vmatprep.subr.mxu0 0.0
      %3321 = vmatpush1.msra.mxu0 0.0
      %3322 = vmatprep.subr.mxu0 0.0
      %3323 = vmatpush1.msra.mxu0 0.0
      %3324 = vmatprep.subr.mxu0 0.0
      %3325 = vmatpush1.msra.mxu0 0.0
      %3326 = vmatprep.subr.mxu0 0.0
      %3327 = vmatpush1.msra.mxu0 0.0
      %3328 = vmatprep.subr.mxu0 0.0
      %3329 = vmatpush1.msra.mxu0 0.0
      %3330 = vmatprep.subr.mxu0 0.0
      %3331 = vmatpush1.msra.mxu0 0.0
      %3332 = vmatprep.subr.mxu0 0.0
      %3333 = vmatpush1.msra.mxu0 0.0
      %3334 = vmatprep.subr.mxu0 0.0
      %3335 = vmatpush1.msra.mxu0 0.0
      %3336 = vmatprep.subr.mxu0 0.0
      %3337 = vmatpush1.msra.mxu0 0.0
      %3338 = vmatprep.subr.mxu0 0.0
      %3339 = vmatpush1.msra.mxu0 0.0
      %3340 = vmatprep.subr.mxu0 0.0
      %3341 = vmatpush1.msra.mxu0 0.0
      %3342 = vmatprep.subr.mxu0 0.0
      %3343 = vmatpush1.msra.mxu0 0.0
      %3344 = vmatprep.subr.mxu0 0.0
      %3345 = vmatpush1.msra.mxu0 0.0
      %3346 = vmatprep.subr.mxu0 0.0
      %3347 = vmatpush1.msra.mxu0 0.0
      %3348 = vmatprep.mubr.f32.mxu0 0.0
      %v3349 = vand.u32 %v710, 4294901760
      %3350 = vmatmul.mubr.f32.gmra.mrb[0].mxu0 %v3349
      %v3351 = vpop.f32.mrb[0].mxu0
      %v3352 = vadd.f32 %v3229, %v3351
      %v3353 = vpop.f32.mrb[0].mxu0
      %v3354 = vadd.f32 %v3231, %v3353
      %3355 = vmatprep.mubr.f32.mxu0 0.0
      %v3356 = vand.u32 %v712, 4294901760
      %3357 = vmatmul.mubr.f32.gmra.mrb[0].mxu0 %v3356
      %v3358 = vpop.f32.mrb[0].mxu0
      %v3359 = vadd.f32 %v3238, %v3358
      %v3360 = vpop.f32.mrb[0].mxu0
      %v3361 = vadd.f32 %v3240, %v3360
      %3362 = vmatprep.mubr.f32.mxu0 0.0
      %v3363 = vand.u32 %v714, 4294901760
      %3364 = vmatmul.mubr.f32.gmra.mrb[0].mxu0 %v3363
      %v3365 = vpop.f32.mrb[0].mxu0
      %v3366 = vadd.f32 %v3247, %v3365
      %v3367 = vpop.f32.mrb[0].mxu0
      %v3368 = vadd.f32 %v3249, %v3367
      %3369 = vmatprep.mubr.f32.mxu0 0.0
      %v3370 = vand.u32 %v716, 4294901760
      %3371 = vmatmul.mubr.f32.gmra.mrb[0].mxu0 %v3370
      %v3372 = vpop.f32.mrb[0].mxu0
      %v3373 = vadd.f32 %v3256, %v3372
      %v3374 = vpop.f32.mrb[0].mxu0
      %v3375 = vadd.f32 %v3258, %v3374
      %3376 = vdwg.mxu0
      %v3377 = vand.u32 %v636, 4294901760
      %3378 = vmatprep.subr.mxu0 %v3377
      %v3379 = vand.u32 %v635, 4294901760
      %3380 = vmatpush1.msra.mxu0 %v3379
      %v3381 = vand.u32 %v652, 4294901760
      %3382 = vmatprep.subr.mxu0 %v3381
      %v3383 = vand.u32 %v651, 4294901760
      %3384 = vmatpush1.msra.mxu0 %v3383
      %v3385 = vand.u32 %v668, 4294901760
      %3386 = vmatprep.subr.mxu0 %v3385
      %v3387 = vand.u32 %v667, 4294901760
      %3388 = vmatpush1.msra.mxu0 %v3387
      %v3389 = vand.u32 %v684, 4294901760
      %3390 = vmatprep.subr.mxu0 %v3389
      %v3391 = vand.u32 %v683, 4294901760
      %3392 = vmatpush1.msra.mxu0 %v3391
      %3393 = vmatprep.subr.mxu0 0.0
      %3394 = vmatpush1.msra.mxu0 0.0
      %3395 = vmatprep.subr.mxu0 0.0
      %3396 = vmatpush1.msra.mxu0 0.0
      %3397 = vmatprep.subr.mxu0 0.0
      %3398 = vmatpush1.msra.mxu0 0.0
      %3399 = vmatprep.subr.mxu0 0.0
      %3400 = vmatpush1.msra.mxu0 0.0
      %3401 = vmatprep.subr.mxu0 0.0
      %3402 = vmatpush1.msra.mxu0 0.0
      %3403 = vmatprep.subr.mxu0 0.0
      %3404 = vmatpush1.msra.mxu0 0.0
      %3405 = vmatprep.subr.mxu0 0.0
      %3406 = vmatpush1.msra.mxu0 0.0
      %3407 = vmatprep.subr.mxu0 0.0
      %3408 = vmatpush1.msra.mxu0 0.0
      %3409 = vmatprep.subr.mxu0 0.0
      %3410 = vmatpush1.msra.mxu0 0.0
      %3411 = vmatprep.subr.mxu0 0.0
      %3412 = vmatpush1.msra.mxu0 0.0
      %3413 = vmatprep.subr.mxu0 0.0
      %3414 = vmatpush1.msra.mxu0 0.0
      %3415 = vmatprep.subr.mxu0 0.0
      %3416 = vmatpush1.msra.mxu0 0.0
      %3417 = vmatprep.subr.mxu0 0.0
      %3418 = vmatpush1.msra.mxu0 0.0
      %3419 = vmatprep.subr.mxu0 0.0
      %3420 = vmatpush1.msra.mxu0 0.0
      %3421 = vmatprep.subr.mxu0 0.0
      %3422 = vmatpush1.msra.mxu0 0.0
      %3423 = vmatprep.subr.mxu0 0.0
      %3424 = vmatpush1.msra.mxu0 0.0
      %3425 = vmatprep.subr.mxu0 0.0
      %3426 = vmatpush1.msra.mxu0 0.0
      %3427 = vmatprep.subr.mxu0 0.0
      %3428 = vmatpush1.msra.mxu0 0.0
      %3429 = vmatprep.subr.mxu0 0.0
      %3430 = vmatpush1.msra.mxu0 0.0
      %3431 = vmatprep.subr.mxu0 0.0
      %3432 = vmatpush1.msra.mxu0 0.0
      %3433 = vmatprep.subr.mxu0 0.0
      %3434 = vmatpush1.msra.mxu0 0.0
      %3435 = vmatprep.subr.mxu0 0.0
      %3436 = vmatpush1.msra.mxu0 0.0
      %3437 = vmatprep.subr.mxu0 0.0
      %3438 = vmatpush1.msra.mxu0 0.0
      %3439 = vmatprep.subr.mxu0 0.0
      %3440 = vmatpush1.msra.mxu0 0.0
      %3441 = vmatprep.subr.mxu0 0.0
      %3442 = vmatpush1.msra.mxu0 0.0
      %3443 = vmatprep.subr.mxu0 0.0
      %3444 = vmatpush1.msra.mxu0 0.0
      %3445 = vmatprep.subr.mxu0 0.0
      %3446 = vmatpush1.msra.mxu0 0.0
      %3447 = vmatprep.subr.mxu0 0.0
      %3448 = vmatpush1.msra.mxu0 0.0
      %3449 = vmatprep.mubr.f32.mxu0 0.0
      %v3450 = vand.u32 %v710, 4294901760
      %3451 = vmatmul.mubr.f32.gmra.mrb[0].mxu0 %v3450
      %v3452 = vpop.f32.mrb[0].mxu0
      %v3453 = vadd.f32 %v3352, %v3452
      %v3454 = vpop.f32.mrb[0].mxu0
      %v3455 = vadd.f32 %v3354, %v3454
      %3456 = vmatprep.mubr.f32.mxu0 0.0
      %v3457 = vand.u32 %v712, 4294901760
      %3458 = vmatmul.mubr.f32.gmra.mrb[0].mxu0 %v3457
      %v3459 = vpop.f32.mrb[0].mxu0
      %v3460 = vadd.f32 %v3359, %v3459
      %v3461 = vpop.f32.mrb[0].mxu0
      %v3462 = vadd.f32 %v3361, %v3461
      %3463 = vmatprep.mubr.f32.mxu0 0.0
      %v3464 = vand.u32 %v714, 4294901760
      %3465 = vmatmul.mubr.f32.gmra.mrb[0].mxu0 %v3464
      %v3466 = vpop.f32.mrb[0].mxu0
      %v3467 = vadd.f32 %v3366, %v3466
      %v3468 = vpop.f32.mrb[0].mxu0
      %v3469 = vadd.f32 %v3368, %v3468
      %3470 = vmatprep.mubr.f32.mxu0 0.0
      %v3471 = vand.u32 %v716, 4294901760
      %3472 = vmatmul.mubr.f32.gmra.mrb[0].mxu0 %v3471
      %v3473 = vpop.f32.mrb[0].mxu0
      %v3474 = vadd.f32 %v3373, %v3473
      %v3475 = vpop.f32.mrb[0].mxu0
      %v3476 = vadd.f32 %v3375, %v3475
      %3477 = vdwg.mxu0
      %v3478 = vand.u32 %v638, 4294901760
      %3479 = vmatprep.subr.mxu0 %v3478
      %v3480 = vand.u32 %v637, 4294901760
      %3481 = vmatpush1.msra.mxu0 %v3480
      %v3482 = vand.u32 %v654, 4294901760
      %3483 = vmatprep.subr.mxu0 %v3482
      %v3484 = vand.u32 %v653, 4294901760
      %3485 = vmatpush1.msra.mxu0 %v3484
      %v3486 = vand.u32 %v670, 4294901760
      %3487 = vmatprep.subr.mxu0 %v3486
      %v3488 = vand.u32 %v669, 4294901760
      %3489 = vmatpush1.msra.mxu0 %v3488
      %v3490 = vand.u32 %v686, 4294901760
      %3491 = vmatprep.subr.mxu0 %v3490
      %v3492 = vand.u32 %v685, 4294901760
      %3493 = vmatpush1.msra.mxu0 %v3492
      %3494 = vmatprep.subr.mxu0 0.0
      %3495 = vmatpush1.msra.mxu0 0.0
      %3496 = vmatprep.subr.mxu0 0.0
      %3497 = vmatpush1.msra.mxu0 0.0
      %3498 = vmatprep.subr.mxu0 0.0
      %3499 = vmatpush1.msra.mxu0 0.0
      %3500 = vmatprep.subr.mxu0 0.0
      %3501 = vmatpush1.msra.mxu0 0.0
      %3502 = vmatprep.subr.mxu0 0.0
      %3503 = vmatpush1.msra.mxu0 0.0
      %3504 = vmatprep.subr.mxu0 0.0
      %3505 = vmatpush1.msra.mxu0 0.0
      %3506 = vmatprep.subr.mxu0 0.0
      %3507 = vmatpush1.msra.mxu0 0.0
      %3508 = vmatprep.subr.mxu0 0.0
      %3509 = vmatpush1.msra.mxu0 0.0
      %3510 = vmatprep.subr.mxu0 0.0
      %3511 = vmatpush1.msra.mxu0 0.0
      %3512 = vmatprep.subr.mxu0 0.0
      %3513 = vmatpush1.msra.mxu0 0.0
      %3514 = vmatprep.subr.mxu0 0.0
      %3515 = vmatpush1.msra.mxu0 0.0
      %3516 = vmatprep.subr.mxu0 0.0
      %3517 = vmatpush1.msra.mxu0 0.0
      %3518 = vmatprep.subr.mxu0 0.0
      %3519 = vmatpush1.msra.mxu0 0.0
      %3520 = vmatprep.subr.mxu0 0.0
      %3521 = vmatpush1.msra.mxu0 0.0
      %3522 = vmatprep.subr.mxu0 0.0
      %3523 = vmatpush1.msra.mxu0 0.0
      %3524 = vmatprep.subr.mxu0 0.0
      %3525 = vmatpush1.msra.mxu0 0.0
      %3526 = vmatprep.subr.mxu0 0.0
      %3527 = vmatpush1.msra.mxu0 0.0
      %3528 = vmatprep.subr.mxu0 0.0
      %3529 = vmatpush1.msra.mxu0 0.0
      %3530 = vmatprep.subr.mxu0 0.0
      %3531 = vmatpush1.msra.mxu0 0.0
      %3532 = vmatprep.subr.mxu0 0.0
      %3533 = vmatpush1.msra.mxu0 0.0
      %3534 = vmatprep.subr.mxu0 0.0
      %3535 = vmatpush1.msra.mxu0 0.0
      %3536 = vmatprep.subr.mxu0 0.0
      %3537 = vmatpush1.msra.mxu0 0.0
      %3538 = vmatprep.subr.mxu0 0.0
      %3539 = vmatpush1.msra.mxu0 0.0
      %3540 = vmatprep.subr.mxu0 0.0
      %3541 = vmatpush1.msra.mxu0 0.0
      %3542 = vmatprep.subr.mxu0 0.0
      %3543 = vmatpush1.msra.mxu0 0.0
      %3544 = vmatprep.subr.mxu0 0.0
      %3545 = vmatpush1.msra.mxu0 0.0
      %3546 = vmatprep.subr.mxu0 0.0
      %3547 = vmatpush1.msra.mxu0 0.0
      %3548 = vmatprep.subr.mxu0 0.0
      %3549 = vmatpush1.msra.mxu0 0.0
      %3550 = vmatprep.mubr.f32.mxu0 0.0
      %v3551 = vand.u32 %v710, 4294901760
      %v3552 = vsub.f32 %v710, %v3551
      %v3553 = vand.u32 %v3552, 4294901760
      %v3554 = vsub.f32 %v3552, %v3553
      %v3555 = vand.u32 %v3554, 4294901760
      %3556 = vmatmul.mubr.f32.gmra.mrb[0].mxu0 %v3555
      %v3557 = vpop.f32.mrb[0].mxu0
      %v3558 = vadd.f32 %v695, %v3557
      %v3559 = vpop.f32.mrb[0].mxu0
      %v3560 = vadd.f32 %v695, %v3559
      %3561 = vmatprep.mubr.f32.mxu0 0.0
      %v3562 = vand.u32 %v712, 4294901760
      %v3563 = vsub.f32 %v712, %v3562
      %v3564 = vand.u32 %v3563, 4294901760
      %v3565 = vsub.f32 %v3563, %v3564
      %v3566 = vand.u32 %v3565, 4294901760
      %3567 = vmatmul.mubr.f32.gmra.mrb[0].mxu0 %v3566
      %v3568 = vpop.f32.mrb[0].mxu0
      %v3569 = vadd.f32 %v699, %v3568
      %v3570 = vpop.f32.mrb[0].mxu0
      %v3571 = vadd.f32 %v699, %v3570
      %3572 = vmatprep.mubr.f32.mxu0 0.0
      %v3573 = vand.u32 %v714, 4294901760
      %v3574 = vsub.f32 %v714, %v3573
      %v3575 = vand.u32 %v3574, 4294901760
      %v3576 = vsub.f32 %v3574, %v3575
      %v3577 = vand.u32 %v3576, 4294901760
      %3578 = vmatmul.mubr.f32.gmra.mrb[0].mxu0 %v3577
      %v3579 = vpop.f32.mrb[0].mxu0
      %v3580 = vadd.f32 %v703, %v3579
      %v3581 = vpop.f32.mrb[0].mxu0
      %v3582 = vadd.f32 %v703, %v3581
      %3583 = vmatprep.mubr.f32.mxu0 0.0
      %v3584 = vand.u32 %v716, 4294901760
      %v3585 = vsub.f32 %v716, %v3584
      %v3586 = vand.u32 %v3585, 4294901760
      %v3587 = vsub.f32 %v3585, %v3586
      %v3588 = vand.u32 %v3587, 4294901760
      %3589 = vmatmul.mubr.f32.gmra.mrb[0].mxu0 %v3588
      %v3590 = vpop.f32.mrb[0].mxu0
      %v3591 = vadd.f32 %v707, %v3590
      %v3592 = vpop.f32.mrb[0].mxu0
      %v3593 = vadd.f32 %v707, %v3592
      %3594 = vdwg.mxu0
      %v3595 = vand.u32 %v638, 4294901760
      %v3596 = vsub.f32 %v638, %v3595
      %v3597 = vand.u32 %v3596, 4294901760
      %v3598 = vsub.f32 %v3596, %v3597
      %v3599 = vand.u32 %v3598, 4294901760
      %3600 = vmatprep.subr.mxu0 %v3599
      %v3601 = vand.u32 %v637, 4294901760
      %v3602 = vsub.f32 %v637, %v3601
      %v3603 = vand.u32 %v3602, 4294901760
      %v3604 = vsub.f32 %v3602, %v3603
      %v3605 = vand.u32 %v3604, 4294901760
      %3606 = vmatpush1.msra.mxu0 %v3605
      %v3607 = vand.u32 %v654, 4294901760
      %v3608 = vsub.f32 %v654, %v3607
      %v3609 = vand.u32 %v3608, 4294901760
      %v3610 = vsub.f32 %v3608, %v3609
      %v3611 = vand.u32 %v3610, 4294901760
      %3612 = vmatprep.subr.mxu0 %v3611
      %v3613 = vand.u32 %v653, 4294901760
      %v3614 = vsub.f32 %v653, %v3613
      %v3615 = vand.u32 %v3614, 4294901760
      %v3616 = vsub.f32 %v3614, %v3615
      %v3617 = vand.u32 %v3616, 4294901760
      %3618 = vmatpush1.msra.mxu0 %v3617
      %v3619 = vand.u32 %v670, 4294901760
      %v3620 = vsub.f32 %v670, %v3619
      %v3621 = vand.u32 %v3620, 4294901760
      %v3622 = vsub.f32 %v3620, %v3621
      %v3623 = vand.u32 %v3622, 4294901760
      %3624 = vmatprep.subr.mxu0 %v3623
      %v3625 = vand.u32 %v669, 4294901760
      %v3626 = vsub.f32 %v669, %v3625
      %v3627 = vand.u32 %v3626, 4294901760
      %v3628 = vsub.f32 %v3626, %v3627
      %v3629 = vand.u32 %v3628, 4294901760
      %3630 = vmatpush1.msra.mxu0 %v3629
      %v3631 = vand.u32 %v686, 4294901760
      %v3632 = vsub.f32 %v686, %v3631
      %v3633 = vand.u32 %v3632, 4294901760
      %v3634 = vsub.f32 %v3632, %v3633
      %v3635 = vand.u32 %v3634, 4294901760
      %3636 = vmatprep.subr.mxu0 %v3635
      %v3637 = vand.u32 %v685, 4294901760
      %v3638 = vsub.f32 %v685, %v3637
      %v3639 = vand.u32 %v3638, 4294901760
      %v3640 = vsub.f32 %v3638, %v3639
      %v3641 = vand.u32 %v3640, 4294901760
      %3642 = vmatpush1.msra.mxu0 %v3641
      %3643 = vmatprep.subr.mxu0 0.0
      %3644 = vmatpush1.msra.mxu0 0.0
      %3645 = vmatprep.subr.mxu0 0.0
      %3646 = vmatpush1.msra.mxu0 0.0
      %3647 = vmatprep.subr.mxu0 0.0
      %3648 = vmatpush1.msra.mxu0 0.0
      %3649 = vmatprep.subr.mxu0 0.0
      %3650 = vmatpush1.msra.mxu0 0.0
      %3651 = vmatprep.subr.mxu0 0.0
      %3652 = vmatpush1.msra.mxu0 0.0
      %3653 = vmatprep.subr.mxu0 0.0
      %3654 = vmatpush1.msra.mxu0 0.0
      %3655 = vmatprep.subr.mxu0 0.0
      %3656 = vmatpush1.msra.mxu0 0.0
      %3657 = vmatprep.subr.mxu0 0.0
      %3658 = vmatpush1.msra.mxu0 0.0
      %3659 = vmatprep.subr.mxu0 0.0
      %3660 = vmatpush1.msra.mxu0 0.0
      %3661 = vmatprep.subr.mxu0 0.0
      %3662 = vmatpush1.msra.mxu0 0.0
      %3663 = vmatprep.subr.mxu0 0.0
      %3664 = vmatpush1.msra.mxu0 0.0
      %3665 = vmatprep.subr.mxu0 0.0
      %3666 = vmatpush1.msra.mxu0 0.0
      %3667 = vmatprep.subr.mxu0 0.0
      %3668 = vmatpush1.msra.mxu0 0.0
      %3669 = vmatprep.subr.mxu0 0.0
      %3670 = vmatpush1.msra.mxu0 0.0
      %3671 = vmatprep.subr.mxu0 0.0
      %3672 = vmatpush1.msra.mxu0 0.0
      %3673 = vmatprep.subr.mxu0 0.0
      %3674 = vmatpush1.msra.mxu0 0.0
      %3675 = vmatprep.subr.mxu0 0.0
      %3676 = vmatpush1.msra.mxu0 0.0
      %3677 = vmatprep.subr.mxu0 0.0
      %3678 = vmatpush1.msra.mxu0 0.0
      %3679 = vmatprep.subr.mxu0 0.0
      %3680 = vmatpush1.msra.mxu0 0.0
      %3681 = vmatprep.subr.mxu0 0.0
      %3682 = vmatpush1.msra.mxu0 0.0
      %3683 = vmatprep.subr.mxu0 0.0
      %3684 = vmatpush1.msra.mxu0 0.0
      %3685 = vmatprep.subr.mxu0 0.0
      %3686 = vmatpush1.msra.mxu0 0.0
      %3687 = vmatprep.subr.mxu0 0.0
      %3688 = vmatpush1.msra.mxu0 0.0
      %3689 = vmatprep.subr.mxu0 0.0
      %3690 = vmatpush1.msra.mxu0 0.0
      %3691 = vmatprep.subr.mxu0 0.0
      %3692 = vmatpush1.msra.mxu0 0.0
      %3693 = vmatprep.subr.mxu0 0.0
      %3694 = vmatpush1.msra.mxu0 0.0
      %3695 = vmatprep.subr.mxu0 0.0
      %3696 = vmatpush1.msra.mxu0 0.0
      %3697 = vmatprep.subr.mxu0 0.0
      %3698 = vmatpush1.msra.mxu0 0.0
      %3699 = vmatprep.mubr.f32.mxu0 0.0
      %v3700 = vand.u32 %v710, 4294901760
      %3701 = vmatmul.mubr.f32.gmra.mrb[0].mxu0 %v3700
      %v3702 = vpop.f32.mrb[0].mxu0
      %v3703 = vadd.f32 %v3558, %v3702
      %v3704 = vpop.f32.mrb[0].mxu0
      %v3705 = vadd.f32 %v3560, %v3704
      %3706 = vmatprep.mubr.f32.mxu0 0.0
      %v3707 = vand.u32 %v712, 4294901760
      %3708 = vmatmul.mubr.f32.gmra.mrb[0].mxu0 %v3707
      %v3709 = vpop.f32.mrb[0].mxu0
      %v3710 = vadd.f32 %v3569, %v3709
      %v3711 = vpop.f32.mrb[0].mxu0
      %v3712 = vadd.f32 %v3571, %v3711
      %3713 = vmatprep.mubr.f32.mxu0 0.0
      %v3714 = vand.u32 %v714, 4294901760
      %3715 = vmatmul.mubr.f32.gmra.mrb[0].mxu0 %v3714
      %v3716 = vpop.f32.mrb[0].mxu0
      %v3717 = vadd.f32 %v3580, %v3716
      %v3718 = vpop.f32.mrb[0].mxu0
      %v3719 = vadd.f32 %v3582, %v3718
      %3720 = vmatprep.mubr.f32.mxu0 0.0
      %v3721 = vand.u32 %v716, 4294901760
      %3722 = vmatmul.mubr.f32.gmra.mrb[0].mxu0 %v3721
      %v3723 = vpop.f32.mrb[0].mxu0
      %v3724 = vadd.f32 %v3591, %v3723
      %v3725 = vpop.f32.mrb[0].mxu0
      %v3726 = vadd.f32 %v3593, %v3725
      %3727 = vdwg.mxu0
      %v3728 = vand.u32 %v638, 4294901760
      %v3729 = vsub.f32 %v638, %v3728
      %3730 = vmatprep.subr.mxu0 %v3729
      %v3731 = vand.u32 %v637, 4294901760
      %v3732 = vsub.f32 %v637, %v3731
      %3733 = vmatpush1.msra.mxu0 %v3732
      %v3734 = vand.u32 %v654, 4294901760
      %v3735 = vsub.f32 %v654, %v3734
      %3736 = vmatprep.subr.mxu0 %v3735
      %v3737 = vand.u32 %v653, 4294901760
      %v3738 = vsub.f32 %v653, %v3737
      %3739 = vmatpush1.msra.mxu0 %v3738
      %v3740 = vand.u32 %v670, 4294901760
      %v3741 = vsub.f32 %v670, %v3740
      %3742 = vmatprep.subr.mxu0 %v3741
      %v3743 = vand.u32 %v669, 4294901760
      %v3744 = vsub.f32 %v669, %v3743
      %3745 = vmatpush1.msra.mxu0 %v3744
      %v3746 = vand.u32 %v686, 4294901760
      %v3747 = vsub.f32 %v686, %v3746
      %3748 = vmatprep.subr.mxu0 %v3747
      %v3749 = vand.u32 %v685, 4294901760
      %v3750 = vsub.f32 %v685, %v3749
      %3751 = vmatpush1.msra.mxu0 %v3750
      %3752 = vmatprep.subr.mxu0 0.0
      %3753 = vmatpush1.msra.mxu0 0.0
      %3754 = vmatprep.subr.mxu0 0.0
      %3755 = vmatpush1.msra.mxu0 0.0
      %3756 = vmatprep.subr.mxu0 0.0
      %3757 = vmatpush1.msra.mxu0 0.0
      %3758 = vmatprep.subr.mxu0 0.0
      %3759 = vmatpush1.msra.mxu0 0.0
      %3760 = vmatprep.subr.mxu0 0.0
      %3761 = vmatpush1.msra.mxu0 0.0
      %3762 = vmatprep.subr.mxu0 0.0
      %3763 = vmatpush1.msra.mxu0 0.0
      %3764 = vmatprep.subr.mxu0 0.0
      %3765 = vmatpush1.msra.mxu0 0.0
      %3766 = vmatprep.subr.mxu0 0.0
      %3767 = vmatpush1.msra.mxu0 0.0
      %3768 = vmatprep.subr.mxu0 0.0
      %3769 = vmatpush1.msra.mxu0 0.0
      %3770 = vmatprep.subr.mxu0 0.0
      %3771 = vmatpush1.msra.mxu0 0.0
      %3772 = vmatprep.subr.mxu0 0.0
      %3773 = vmatpush1.msra.mxu0 0.0
      %3774 = vmatprep.subr.mxu0 0.0
      %3775 = vmatpush1.msra.mxu0 0.0
      %3776 = vmatprep.subr.mxu0 0.0
      %3777 = vmatpush1.msra.mxu0 0.0
      %3778 = vmatprep.subr.mxu0 0.0
      %3779 = vmatpush1.msra.mxu0 0.0
      %3780 = vmatprep.subr.mxu0 0.0
      %3781 = vmatpush1.msra.mxu0 0.0
      %3782 = vmatprep.subr.mxu0 0.0
      %3783 = vmatpush1.msra.mxu0 0.0
      %3784 = vmatprep.subr.mxu0 0.0
      %3785 = vmatpush1.msra.mxu0 0.0
      %3786 = vmatprep.subr.mxu0 0.0
      %3787 = vmatpush1.msra.mxu0 0.0
      %3788 = vmatprep.subr.mxu0 0.0
      %3789 = vmatpush1.msra.mxu0 0.0
      %3790 = vmatprep.subr.mxu0 0.0
      %3791 = vmatpush1.msra.mxu0 0.0
      %3792 = vmatprep.subr.mxu0 0.0
      %3793 = vmatpush1.msra.mxu0 0.0
      %3794 = vmatprep.subr.mxu0 0.0
      %3795 = vmatpush1.msra.mxu0 0.0
      %3796 = vmatprep.subr.mxu0 0.0
      %3797 = vmatpush1.msra.mxu0 0.0
      %3798 = vmatprep.subr.mxu0 0.0
      %3799 = vmatpush1.msra.mxu0 0.0
      %3800 = vmatprep.subr.mxu0 0.0
      %3801 = vmatpush1.msra.mxu0 0.0
      %3802 = vmatprep.subr.mxu0 0.0
      %3803 = vmatpush1.msra.mxu0 0.0
      %3804 = vmatprep.subr.mxu0 0.0
      %3805 = vmatpush1.msra.mxu0 0.0
      %3806 = vmatprep.subr.mxu0 0.0
      %3807 = vmatpush1.msra.mxu0 0.0
      %3808 = vmatprep.mubr.f32.mxu0 0.0
      %v3809 = vand.u32 %v710, 4294901760
      %v3810 = vsub.f32 %v710, %v3809
      %3811 = vmatmul.mubr.f32.gmra.mrb[0].mxu0 %v3810
      %v3812 = vpop.f32.mrb[0].mxu0
      %v3813 = vadd.f32 %v3703, %v3812
      %v3814 = vpop.f32.mrb[0].mxu0
      %v3815 = vadd.f32 %v3705, %v3814
      %3816 = vmatprep.mubr.f32.mxu0 0.0
      %v3817 = vand.u32 %v712, 4294901760
      %v3818 = vsub.f32 %v712, %v3817
      %3819 = vmatmul.mubr.f32.gmra.mrb[0].mxu0 %v3818
      %v3820 = vpop.f32.mrb[0].mxu0
      %v3821 = vadd.f32 %v3710, %v3820
      %v3822 = vpop.f32.mrb[0].mxu0
      %v3823 = vadd.f32 %v3712, %v3822
      %3824 = vmatprep.mubr.f32.mxu0 0.0
      %v3825 = vand.u32 %v714, 4294901760
      %v3826 = vsub.f32 %v714, %v3825
      %3827 = vmatmul.mubr.f32.gmra.mrb[0].mxu0 %v3826
      %v3828 = vpop.f32.mrb[0].mxu0
      %v3829 = vadd.f32 %v3717, %v3828
      %v3830 = vpop.f32.mrb[0].mxu0
      %v3831 = vadd.f32 %v3719, %v3830
      %3832 = vmatprep.mubr.f32.mxu0 0.0
      %v3833 = vand.u32 %v716, 4294901760
      %v3834 = vsub.f32 %v716, %v3833
      %3835 = vmatmul.mubr.f32.gmra.mrb[0].mxu0 %v3834
      %v3836 = vpop.f32.mrb[0].mxu0
      %v3837 = vadd.f32 %v3724, %v3836
      %v3838 = vpop.f32.mrb[0].mxu0
      %v3839 = vadd.f32 %v3726, %v3838
      %3840 = vdwg.mxu0
      %v3841 = vand.u32 %v638, 4294901760
      %3842 = vmatprep.subr.mxu0 %v3841
      %v3843 = vand.u32 %v637, 4294901760
      %3844 = vmatpush1.msra.mxu0 %v3843
      %v3845 = vand.u32 %v654, 4294901760
      %3846 = vmatprep.subr.mxu0 %v3845
      %v3847 = vand.u32 %v653, 4294901760
      %3848 = vmatpush1.msra.mxu0 %v3847
      %v3849 = vand.u32 %v670, 4294901760
      %3850 = vmatprep.subr.mxu0 %v3849
      %v3851 = vand.u32 %v669, 4294901760
      %3852 = vmatpush1.msra.mxu0 %v3851
      %v3853 = vand.u32 %v686, 4294901760
      %3854 = vmatprep.subr.mxu0 %v3853
      %v3855 = vand.u32 %v685, 4294901760
      %3856 = vmatpush1.msra.mxu0 %v3855
      %3857 = vmatprep.subr.mxu0 0.0
      %3858 = vmatpush1.msra.mxu0 0.0
      %3859 = vmatprep.subr.mxu0 0.0
      %3860 = vmatpush1.msra.mxu0 0.0
      %3861 = vmatprep.subr.mxu0 0.0
      %3862 = vmatpush1.msra.mxu0 0.0
      %3863 = vmatprep.subr.mxu0 0.0
      %3864 = vmatpush1.msra.mxu0 0.0
      %3865 = vmatprep.subr.mxu0 0.0
      %3866 = vmatpush1.msra.mxu0 0.0
      %3867 = vmatprep.subr.mxu0 0.0
      %3868 = vmatpush1.msra.mxu0 0.0
      %3869 = vmatprep.subr.mxu0 0.0
      %3870 = vmatpush1.msra.mxu0 0.0
      %3871 = vmatprep.subr.mxu0 0.0
      %3872 = vmatpush1.msra.mxu0 0.0
      %3873 = vmatprep.subr.mxu0 0.0
      %3874 = vmatpush1.msra.mxu0 0.0
      %3875 = vmatprep.subr.mxu0 0.0
      %3876 = vmatpush1.msra.mxu0 0.0
      %3877 = vmatprep.subr.mxu0 0.0
      %3878 = vmatpush1.msra.mxu0 0.0
      %3879 = vmatprep.subr.mxu0 0.0
      %3880 = vmatpush1.msra.mxu0 0.0
      %3881 = vmatprep.subr.mxu0 0.0
      %3882 = vmatpush1.msra.mxu0 0.0
      %3883 = vmatprep.subr.mxu0 0.0
      %3884 = vmatpush1.msra.mxu0 0.0
      %3885 = vmatprep.subr.mxu0 0.0
      %3886 = vmatpush1.msra.mxu0 0.0
      %3887 = vmatprep.subr.mxu0 0.0
      %3888 = vmatpush1.msra.mxu0 0.0
      %3889 = vmatprep.subr.mxu0 0.0
      %3890 = vmatpush1.msra.mxu0 0.0
      %3891 = vmatprep.subr.mxu0 0.0
      %3892 = vmatpush1.msra.mxu0 0.0
      %3893 = vmatprep.subr.mxu0 0.0
      %3894 = vmatpush1.msra.mxu0 0.0
      %3895 = vmatprep.subr.mxu0 0.0
      %3896 = vmatpush1.msra.mxu0 0.0
      %3897 = vmatprep.subr.mxu0 0.0
      %3898 = vmatpush1.msra.mxu0 0.0
      %3899 = vmatprep.subr.mxu0 0.0
      %3900 = vmatpush1.msra.mxu0 0.0
      %3901 = vmatprep.subr.mxu0 0.0
      %3902 = vmatpush1.msra.mxu0 0.0
      %3903 = vmatprep.subr.mxu0 0.0
      %3904 = vmatpush1.msra.mxu0 0.0
      %3905 = vmatprep.subr.mxu0 0.0
      %3906 = vmatpush1.msra.mxu0 0.0
      %3907 = vmatprep.subr.mxu0 0.0
      %3908 = vmatpush1.msra.mxu0 0.0
      %3909 = vmatprep.subr.mxu0 0.0
      %3910 = vmatpush1.msra.mxu0 0.0
      %3911 = vmatprep.subr.mxu0 0.0
      %3912 = vmatpush1.msra.mxu0 0.0
      %3913 = vmatprep.mubr.f32.mxu0 0.0
      %v3914 = vand.u32 %v710, 4294901760
      %v3915 = vsub.f32 %v710, %v3914
      %v3916 = vand.u32 %v3915, 4294901760
      %3917 = vmatmul.mubr.f32.gmra.mrb[0].mxu0 %v3916
      %v3918 = vpop.f32.mrb[0].mxu0
      %v3919 = vadd.f32 %v3813, %v3918
      %v3920 = vpop.f32.mrb[0].mxu0
      %v3921 = vadd.f32 %v3815, %v3920
      %3922 = vmatprep.mubr.f32.mxu0 0.0
      %v3923 = vand.u32 %v712, 4294901760
      %v3924 = vsub.f32 %v712, %v3923
      %v3925 = vand.u32 %v3924, 4294901760
      %3926 = vmatmul.mubr.f32.gmra.mrb[0].mxu0 %v3925
      %v3927 = vpop.f32.mrb[0].mxu0
      %v3928 = vadd.f32 %v3821, %v3927
      %v3929 = vpop.f32.mrb[0].mxu0
      %v3930 = vadd.f32 %v3823, %v3929
      %3931 = vmatprep.mubr.f32.mxu0 0.0
      %v3932 = vand.u32 %v714, 4294901760
      %v3933 = vsub.f32 %v714, %v3932
      %v3934 = vand.u32 %v3933, 4294901760
      %3935 = vmatmul.mubr.f32.gmra.mrb[0].mxu0 %v3934
      %v3936 = vpop.f32.mrb[0].mxu0
      %v3937 = vadd.f32 %v3829, %v3936
      %v3938 = vpop.f32.mrb[0].mxu0
      %v3939 = vadd.f32 %v3831, %v3938
      %3940 = vmatprep.mubr.f32.mxu0 0.0
      %v3941 = vand.u32 %v716, 4294901760
      %v3942 = vsub.f32 %v716, %v3941
      %v3943 = vand.u32 %v3942, 4294901760
      %3944 = vmatmul.mubr.f32.gmra.mrb[0].mxu0 %v3943
      %v3945 = vpop.f32.mrb[0].mxu0
      %v3946 = vadd.f32 %v3837, %v3945
      %v3947 = vpop.f32.mrb[0].mxu0
      %v3948 = vadd.f32 %v3839, %v3947
      %3949 = vdwg.mxu0
      %v3950 = vand.u32 %v638, 4294901760
      %v3951 = vsub.f32 %v638, %v3950
      %v3952 = vand.u32 %v3951, 4294901760
      %3953 = vmatprep.subr.mxu0 %v3952
      %v3954 = vand.u32 %v637, 4294901760
      %v3955 = vsub.f32 %v637, %v3954
      %v3956 = vand.u32 %v3955, 4294901760
      %3957 = vmatpush1.msra.mxu0 %v3956
      %v3958 = vand.u32 %v654, 4294901760
      %v3959 = vsub.f32 %v654, %v3958
      %v3960 = vand.u32 %v3959, 4294901760
      %3961 = vmatprep.subr.mxu0 %v3960
      %v3962 = vand.u32 %v653, 4294901760
      %v3963 = vsub.f32 %v653, %v3962
      %v3964 = vand.u32 %v3963, 4294901760
      %3965 = vmatpush1.msra.mxu0 %v3964
      %v3966 = vand.u32 %v670, 4294901760
      %v3967 = vsub.f32 %v670, %v3966
      %v3968 = vand.u32 %v3967, 4294901760
      %3969 = vmatprep.subr.mxu0 %v3968
      %v3970 = vand.u32 %v669, 4294901760
      %v3971 = vsub.f32 %v669, %v3970
      %v3972 = vand.u32 %v3971, 4294901760
      %3973 = vmatpush1.msra.mxu0 %v3972
      %v3974 = vand.u32 %v686, 4294901760
      %v3975 = vsub.f32 %v686, %v3974
      %v3976 = vand.u32 %v3975, 4294901760
      %3977 = vmatprep.subr.mxu0 %v3976
      %v3978 = vand.u32 %v685, 4294901760
      %v3979 = vsub.f32 %v685, %v3978
      %v3980 = vand.u32 %v3979, 4294901760
      %3981 = vmatpush1.msra.mxu0 %v3980
      %3982 = vmatprep.subr.mxu0 0.0
      %3983 = vmatpush1.msra.mxu0 0.0
      %3984 = vmatprep.subr.mxu0 0.0
      %3985 = vmatpush1.msra.mxu0 0.0
      %3986 = vmatprep.subr.mxu0 0.0
      %3987 = vmatpush1.msra.mxu0 0.0
      %3988 = vmatprep.subr.mxu0 0.0
      %3989 = vmatpush1.msra.mxu0 0.0
      %3990 = vmatprep.subr.mxu0 0.0
      %3991 = vmatpush1.msra.mxu0 0.0
      %3992 = vmatprep.subr.mxu0 0.0
      %3993 = vmatpush1.msra.mxu0 0.0
      %3994 = vmatprep.subr.mxu0 0.0
      %3995 = vmatpush1.msra.mxu0 0.0
      %3996 = vmatprep.subr.mxu0 0.0
      %3997 = vmatpush1.msra.mxu0 0.0
      %3998 = vmatprep.subr.mxu0 0.0
      %3999 = vmatpush1.msra.mxu0 0.0
      %4000 = vmatprep.subr.mxu0 0.0
      %4001 = vmatpush1.msra.mxu0 0.0
      %4002 = vmatprep.subr.mxu0 0.0
      %4003 = vmatpush1.msra.mxu0 0.0
      %4004 = vmatprep.subr.mxu0 0.0
      %4005 = vmatpush1.msra.mxu0 0.0
      %4006 = vmatprep.subr.mxu0 0.0
      %4007 = vmatpush1.msra.mxu0 0.0
      %4008 = vmatprep.subr.mxu0 0.0
      %4009 = vmatpush1.msra.mxu0 0.0
      %4010 = vmatprep.subr.mxu0 0.0
      %4011 = vmatpush1.msra.mxu0 0.0
      %4012 = vmatprep.subr.mxu0 0.0
      %4013 = vmatpush1.msra.mxu0 0.0
      %4014 = vmatprep.subr.mxu0 0.0
      %4015 = vmatpush1.msra.mxu0 0.0
      %4016 = vmatprep.subr.mxu0 0.0
      %4017 = vmatpush1.msra.mxu0 0.0
      %4018 = vmatprep.subr.mxu0 0.0
      %4019 = vmatpush1.msra.mxu0 0.0
      %4020 = vmatprep.subr.mxu0 0.0
      %4021 = vmatpush1.msra.mxu0 0.0
      %4022 = vmatprep.subr.mxu0 0.0
      %4023 = vmatpush1.msra.mxu0 0.0
      %4024 = vmatprep.subr.mxu0 0.0
      %4025 = vmatpush1.msra.mxu0 0.0
      %4026 = vmatprep.subr.mxu0 0.0
      %4027 = vmatpush1.msra.mxu0 0.0
      %4028 = vmatprep.subr.mxu0 0.0
      %4029 = vmatpush1.msra.mxu0 0.0
      %4030 = vmatprep.subr.mxu0 0.0
      %4031 = vmatpush1.msra.mxu0 0.0
      %4032 = vmatprep.subr.mxu0 0.0
      %4033 = vmatpush1.msra.mxu0 0.0
      %4034 = vmatprep.subr.mxu0 0.0
      %4035 = vmatpush1.msra.mxu0 0.0
      %4036 = vmatprep.subr.mxu0 0.0
      %4037 = vmatpush1.msra.mxu0 0.0
      %4038 = vmatprep.mubr.f32.mxu0 0.0
      %v4039 = vand.u32 %v710, 4294901760
      %4040 = vmatmul.mubr.f32.gmra.mrb[0].mxu0 %v4039
      %v4041 = vpop.f32.mrb[0].mxu0
      %v4042 = vadd.f32 %v3919, %v4041
      %v4043 = vpop.f32.mrb[0].mxu0
      %v4044 = vadd.f32 %v3921, %v4043
      %4045 = vmatprep.mubr.f32.mxu0 0.0
      %v4046 = vand.u32 %v712, 4294901760
      %4047 = vmatmul.mubr.f32.gmra.mrb[0].mxu0 %v4046
      %v4048 = vpop.f32.mrb[0].mxu0
      %v4049 = vadd.f32 %v3928, %v4048
      %v4050 = vpop.f32.mrb[0].mxu0
      %v4051 = vadd.f32 %v3930, %v4050
      %4052 = vmatprep.mubr.f32.mxu0 0.0
      %v4053 = vand.u32 %v714, 4294901760
      %4054 = vmatmul.mubr.f32.gmra.mrb[0].mxu0 %v4053
      %v4055 = vpop.f32.mrb[0].mxu0
      %v4056 = vadd.f32 %v3937, %v4055
      %v4057 = vpop.f32.mrb[0].mxu0
      %v4058 = vadd.f32 %v3939, %v4057
      %4059 = vmatprep.mubr.f32.mxu0 0.0
      %v4060 = vand.u32 %v716, 4294901760
      %4061 = vmatmul.mubr.f32.gmra.mrb[0].mxu0 %v4060
      %v4062 = vpop.f32.mrb[0].mxu0
      %v4063 = vadd.f32 %v3946, %v4062
      %v4064 = vpop.f32.mrb[0].mxu0
      %v4065 = vadd.f32 %v3948, %v4064
      %4066 = vdwg.mxu0
      %v4067 = vand.u32 %v638, 4294901760
      %4068 = vmatprep.subr.mxu0 %v4067
      %v4069 = vand.u32 %v637, 4294901760
      %4070 = vmatpush1.msra.mxu0 %v4069
      %v4071 = vand.u32 %v654, 4294901760
      %4072 = vmatprep.subr.mxu0 %v4071
      %v4073 = vand.u32 %v653, 4294901760
      %4074 = vmatpush1.msra.mxu0 %v4073
      %v4075 = vand.u32 %v670, 4294901760
      %4076 = vmatprep.subr.mxu0 %v4075
      %v4077 = vand.u32 %v669, 4294901760
      %4078 = vmatpush1.msra.mxu0 %v4077
      %v4079 = vand.u32 %v686, 4294901760
      %4080 = vmatprep.subr.mxu0 %v4079
      %v4081 = vand.u32 %v685, 4294901760
      %4082 = vmatpush1.msra.mxu0 %v4081
      %4083 = vmatprep.subr.mxu0 0.0
      %4084 = vmatpush1.msra.mxu0 0.0
      %4085 = vmatprep.subr.mxu0 0.0
      %4086 = vmatpush1.msra.mxu0 0.0
      %4087 = vmatprep.subr.mxu0 0.0
      %4088 = vmatpush1.msra.mxu0 0.0
      %4089 = vmatprep.subr.mxu0 0.0
      %4090 = vmatpush1.msra.mxu0 0.0
      %4091 = vmatprep.subr.mxu0 0.0
      %4092 = vmatpush1.msra.mxu0 0.0
      %4093 = vmatprep.subr.mxu0 0.0
      %4094 = vmatpush1.msra.mxu0 0.0
      %4095 = vmatprep.subr.mxu0 0.0
      %4096 = vmatpush1.msra.mxu0 0.0
      %4097 = vmatprep.subr.mxu0 0.0
      %4098 = vmatpush1.msra.mxu0 0.0
      %4099 = vmatprep.subr.mxu0 0.0
      %4100 = vmatpush1.msra.mxu0 0.0
      %4101 = vmatprep.subr.mxu0 0.0
      %4102 = vmatpush1.msra.mxu0 0.0
      %4103 = vmatprep.subr.mxu0 0.0
      %4104 = vmatpush1.msra.mxu0 0.0
      %4105 = vmatprep.subr.mxu0 0.0
      %4106 = vmatpush1.msra.mxu0 0.0
      %4107 = vmatprep.subr.mxu0 0.0
      %4108 = vmatpush1.msra.mxu0 0.0
      %4109 = vmatprep.subr.mxu0 0.0
      %4110 = vmatpush1.msra.mxu0 0.0
      %4111 = vmatprep.subr.mxu0 0.0
      %4112 = vmatpush1.msra.mxu0 0.0
      %4113 = vmatprep.subr.mxu0 0.0
      %4114 = vmatpush1.msra.mxu0 0.0
      %4115 = vmatprep.subr.mxu0 0.0
      %4116 = vmatpush1.msra.mxu0 0.0
      %4117 = vmatprep.subr.mxu0 0.0
      %4118 = vmatpush1.msra.mxu0 0.0
      %4119 = vmatprep.subr.mxu0 0.0
      %4120 = vmatpush1.msra.mxu0 0.0
      %4121 = vmatprep.subr.mxu0 0.0
      %4122 = vmatpush1.msra.mxu0 0.0
      %4123 = vmatprep.subr.mxu0 0.0
      %4124 = vmatpush1.msra.mxu0 0.0
      %4125 = vmatprep.subr.mxu0 0.0
      %4126 = vmatpush1.msra.mxu0 0.0
      %4127 = vmatprep.subr.mxu0 0.0
      %4128 = vmatpush1.msra.mxu0 0.0
      %4129 = vmatprep.subr.mxu0 0.0
      %4130 = vmatpush1.msra.mxu0 0.0
      %4131 = vmatprep.subr.mxu0 0.0
      %4132 = vmatpush1.msra.mxu0 0.0
      %4133 = vmatprep.subr.mxu0 0.0
      %4134 = vmatpush1.msra.mxu0 0.0
      %4135 = vmatprep.subr.mxu0 0.0
      %4136 = vmatpush1.msra.mxu0 0.0
      %4137 = vmatprep.subr.mxu0 0.0
      %4138 = vmatpush1.msra.mxu0 0.0
      %4139 = vmatprep.mubr.f32.mxu0 0.0
      %v4140 = vand.u32 %v710, 4294901760
      %4141 = vmatmul.mubr.f32.gmra.mrb[0].mxu0 %v4140
      %v4142 = vpop.f32.mrb[0].mxu0
      %v4143 = vadd.f32 %v4042, %v4142
      %v4144 = vpop.f32.mrb[0].mxu0
      %v4145 = vadd.f32 %v4044, %v4144
      %4146 = vmatprep.mubr.f32.mxu0 0.0
      %v4147 = vand.u32 %v712, 4294901760
      %4148 = vmatmul.mubr.f32.gmra.mrb[0].mxu0 %v4147
      %v4149 = vpop.f32.mrb[0].mxu0
      %v4150 = vadd.f32 %v4049, %v4149
      %v4151 = vpop.f32.mrb[0].mxu0
      %v4152 = vadd.f32 %v4051, %v4151
      %4153 = vmatprep.mubr.f32.mxu0 0.0
      %v4154 = vand.u32 %v714, 4294901760
      %4155 = vmatmul.mubr.f32.gmra.mrb[0].mxu0 %v4154
      %v4156 = vpop.f32.mrb[0].mxu0
      %v4157 = vadd.f32 %v4056, %v4156
      %v4158 = vpop.f32.mrb[0].mxu0
      %v4159 = vadd.f32 %v4058, %v4158
      %4160 = vmatprep.mubr.f32.mxu0 0.0
      %v4161 = vand.u32 %v716, 4294901760
      %4162 = vmatmul.mubr.f32.gmra.mrb[0].mxu0 %v4161
      %v4163 = vpop.f32.mrb[0].mxu0
      %v4164 = vadd.f32 %v4063, %v4163
      %v4165 = vpop.f32.mrb[0].mxu0
      %v4166 = vadd.f32 %v4065, %v4165
      %4167 = vdwg.mxu0
      %v4168 = vand.u32 %v640, 4294901760
      %4169 = vmatprep.subr.mxu0 %v4168
      %v4170 = vand.u32 %v639, 4294901760
      %4171 = vmatpush1.msra.mxu0 %v4170
      %v4172 = vand.u32 %v656, 4294901760
      %4173 = vmatprep.subr.mxu0 %v4172
      %v4174 = vand.u32 %v655, 4294901760
      %4175 = vmatpush1.msra.mxu0 %v4174
      %v4176 = vand.u32 %v672, 4294901760
      %4177 = vmatprep.subr.mxu0 %v4176
      %v4178 = vand.u32 %v671, 4294901760
      %4179 = vmatpush1.msra.mxu0 %v4178
      %v4180 = vand.u32 %v688, 4294901760
      %4181 = vmatprep.subr.mxu0 %v4180
      %v4182 = vand.u32 %v687, 4294901760
      %4183 = vmatpush1.msra.mxu0 %v4182
      %4184 = vmatprep.subr.mxu0 0.0
      %4185 = vmatpush1.msra.mxu0 0.0
      %4186 = vmatprep.subr.mxu0 0.0
      %4187 = vmatpush1.msra.mxu0 0.0
      %4188 = vmatprep.subr.mxu0 0.0
      %4189 = vmatpush1.msra.mxu0 0.0
      %4190 = vmatprep.subr.mxu0 0.0
      %4191 = vmatpush1.msra.mxu0 0.0
      %4192 = vmatprep.subr.mxu0 0.0
      %4193 = vmatpush1.msra.mxu0 0.0
      %4194 = vmatprep.subr.mxu0 0.0
      %4195 = vmatpush1.msra.mxu0 0.0
      %4196 = vmatprep.subr.mxu0 0.0
      %4197 = vmatpush1.msra.mxu0 0.0
      %4198 = vmatprep.subr.mxu0 0.0
      %4199 = vmatpush1.msra.mxu0 0.0
      %4200 = vmatprep.subr.mxu0 0.0
      %4201 = vmatpush1.msra.mxu0 0.0
      %4202 = vmatprep.subr.mxu0 0.0
      %4203 = vmatpush1.msra.mxu0 0.0
      %4204 = vmatprep.subr.mxu0 0.0
      %4205 = vmatpush1.msra.mxu0 0.0
      %4206 = vmatprep.subr.mxu0 0.0
      %4207 = vmatpush1.msra.mxu0 0.0
      %4208 = vmatprep.subr.mxu0 0.0
      %4209 = vmatpush1.msra.mxu0 0.0
      %4210 = vmatprep.subr.mxu0 0.0
      %4211 = vmatpush1.msra.mxu0 0.0
      %4212 = vmatprep.subr.mxu0 0.0
      %4213 = vmatpush1.msra.mxu0 0.0
      %4214 = vmatprep.subr.mxu0 0.0
      %4215 = vmatpush1.msra.mxu0 0.0
      %4216 = vmatprep.subr.mxu0 0.0
      %4217 = vmatpush1.msra.mxu0 0.0
      %4218 = vmatprep.subr.mxu0 0.0
      %4219 = vmatpush1.msra.mxu0 0.0
      %4220 = vmatprep.subr.mxu0 0.0
      %4221 = vmatpush1.msra.mxu0 0.0
      %4222 = vmatprep.subr.mxu0 0.0
      %4223 = vmatpush1.msra.mxu0 0.0
      %4224 = vmatprep.subr.mxu0 0.0
      %4225 = vmatpush1.msra.mxu0 0.0
      %4226 = vmatprep.subr.mxu0 0.0
      %4227 = vmatpush1.msra.mxu0 0.0
      %4228 = vmatprep.subr.mxu0 0.0
      %4229 = vmatpush1.msra.mxu0 0.0
      %4230 = vmatprep.subr.mxu0 0.0
      %4231 = vmatpush1.msra.mxu0 0.0
      %4232 = vmatprep.subr.mxu0 0.0
      %4233 = vmatpush1.msra.mxu0 0.0
      %4234 = vmatprep.subr.mxu0 0.0
      %4235 = vmatpush1.msra.mxu0 0.0
      %4236 = vmatprep.subr.mxu0 0.0
      %4237 = vmatpush1.msra.mxu0 0.0
      %4238 = vmatprep.subr.mxu0 0.0
      %4239 = vmatpush1.msra.mxu0 0.0
      %4240 = vmatprep.mubr.f32.mxu0 0.0
      %v4241 = vand.u32 %v710, 4294901760
      %v4242 = vsub.f32 %v710, %v4241
      %v4243 = vand.u32 %v4242, 4294901760
      %v4244 = vsub.f32 %v4242, %v4243
      %v4245 = vand.u32 %v4244, 4294901760
      %4246 = vmatmul.mubr.f32.gmra.mrb[0].mxu0 %v4245
      %v4247 = vpop.f32.mrb[0].mxu0
      %v4248 = vadd.f32 %v695, %v4247
      %v4249 = vpop.f32.mrb[0].mxu0
      %v4250 = vadd.f32 %v695, %v4249
      %4251 = vmatprep.mubr.f32.mxu0 0.0
      %v4252 = vand.u32 %v712, 4294901760
      %v4253 = vsub.f32 %v712, %v4252
      %v4254 = vand.u32 %v4253, 4294901760
      %v4255 = vsub.f32 %v4253, %v4254
      %v4256 = vand.u32 %v4255, 4294901760
      %4257 = vmatmul.mubr.f32.gmra.mrb[0].mxu0 %v4256
      %v4258 = vpop.f32.mrb[0].mxu0
      %v4259 = vadd.f32 %v699, %v4258
      %v4260 = vpop.f32.mrb[0].mxu0
      %v4261 = vadd.f32 %v699, %v4260
      %4262 = vmatprep.mubr.f32.mxu0 0.0
      %v4263 = vand.u32 %v714, 4294901760
      %v4264 = vsub.f32 %v714, %v4263
      %v4265 = vand.u32 %v4264, 4294901760
      %v4266 = vsub.f32 %v4264, %v4265
      %v4267 = vand.u32 %v4266, 4294901760
      %4268 = vmatmul.mubr.f32.gmra.mrb[0].mxu0 %v4267
      %v4269 = vpop.f32.mrb[0].mxu0
      %v4270 = vadd.f32 %v703, %v4269
      %v4271 = vpop.f32.mrb[0].mxu0
      %v4272 = vadd.f32 %v703, %v4271
      %4273 = vmatprep.mubr.f32.mxu0 0.0
      %v4274 = vand.u32 %v716, 4294901760
      %v4275 = vsub.f32 %v716, %v4274
      %v4276 = vand.u32 %v4275, 4294901760
      %v4277 = vsub.f32 %v4275, %v4276
      %v4278 = vand.u32 %v4277, 4294901760
      %4279 = vmatmul.mubr.f32.gmra.mrb[0].mxu0 %v4278
      %v4280 = vpop.f32.mrb[0].mxu0
      %v4281 = vadd.f32 %v707, %v4280
      %v4282 = vpop.f32.mrb[0].mxu0
      %v4283 = vadd.f32 %v707, %v4282
      %4284 = vdwg.mxu0
      %v4285 = vand.u32 %v640, 4294901760
      %v4286 = vsub.f32 %v640, %v4285
      %v4287 = vand.u32 %v4286, 4294901760
      %v4288 = vsub.f32 %v4286, %v4287
      %v4289 = vand.u32 %v4288, 4294901760
      %4290 = vmatprep.subr.mxu0 %v4289
      %v4291 = vand.u32 %v639, 4294901760
      %v4292 = vsub.f32 %v639, %v4291
      %v4293 = vand.u32 %v4292, 4294901760
      %v4294 = vsub.f32 %v4292, %v4293
      %v4295 = vand.u32 %v4294, 4294901760
      %4296 = vmatpush1.msra.mxu0 %v4295
      %v4297 = vand.u32 %v656, 4294901760
      %v4298 = vsub.f32 %v656, %v4297
      %v4299 = vand.u32 %v4298, 4294901760
      %v4300 = vsub.f32 %v4298, %v4299
      %v4301 = vand.u32 %v4300, 4294901760
      %4302 = vmatprep.subr.mxu0 %v4301
      %v4303 = vand.u32 %v655, 4294901760
      %v4304 = vsub.f32 %v655, %v4303
      %v4305 = vand.u32 %v4304, 4294901760
      %v4306 = vsub.f32 %v4304, %v4305
      %v4307 = vand.u32 %v4306, 4294901760
      %4308 = vmatpush1.msra.mxu0 %v4307
      %v4309 = vand.u32 %v672, 4294901760
      %v4310 = vsub.f32 %v672, %v4309
      %v4311 = vand.u32 %v4310, 4294901760
      %v4312 = vsub.f32 %v4310, %v4311
      %v4313 = vand.u32 %v4312, 4294901760
      %4314 = vmatprep.subr.mxu0 %v4313
      %v4315 = vand.u32 %v671, 4294901760
      %v4316 = vsub.f32 %v671, %v4315
      %v4317 = vand.u32 %v4316, 4294901760
      %v4318 = vsub.f32 %v4316, %v4317
      %v4319 = vand.u32 %v4318, 4294901760
      %4320 = vmatpush1.msra.mxu0 %v4319
      %v4321 = vand.u32 %v688, 4294901760
      %v4322 = vsub.f32 %v688, %v4321
      %v4323 = vand.u32 %v4322, 4294901760
      %v4324 = vsub.f32 %v4322, %v4323
      %v4325 = vand.u32 %v4324, 4294901760
      %4326 = vmatprep.subr.mxu0 %v4325
      %v4327 = vand.u32 %v687, 4294901760
      %v4328 = vsub.f32 %v687, %v4327
      %v4329 = vand.u32 %v4328, 4294901760
      %v4330 = vsub.f32 %v4328, %v4329
      %v4331 = vand.u32 %v4330, 4294901760
      %4332 = vmatpush1.msra.mxu0 %v4331
      %4333 = vmatprep.subr.mxu0 0.0
      %4334 = vmatpush1.msra.mxu0 0.0
      %4335 = vmatprep.subr.mxu0 0.0
      %4336 = vmatpush1.msra.mxu0 0.0
      %4337 = vmatprep.subr.mxu0 0.0
      %4338 = vmatpush1.msra.mxu0 0.0
      %4339 = vmatprep.subr.mxu0 0.0
      %4340 = vmatpush1.msra.mxu0 0.0
      %4341 = vmatprep.subr.mxu0 0.0
      %4342 = vmatpush1.msra.mxu0 0.0
      %4343 = vmatprep.subr.mxu0 0.0
      %4344 = vmatpush1.msra.mxu0 0.0
      %4345 = vmatprep.subr.mxu0 0.0
      %4346 = vmatpush1.msra.mxu0 0.0
      %4347 = vmatprep.subr.mxu0 0.0
      %4348 = vmatpush1.msra.mxu0 0.0
      %4349 = vmatprep.subr.mxu0 0.0
      %4350 = vmatpush1.msra.mxu0 0.0
      %4351 = vmatprep.subr.mxu0 0.0
      %4352 = vmatpush1.msra.mxu0 0.0
      %4353 = vmatprep.subr.mxu0 0.0
      %4354 = vmatpush1.msra.mxu0 0.0
      %4355 = vmatprep.subr.mxu0 0.0
      %4356 = vmatpush1.msra.mxu0 0.0
      %4357 = vmatprep.subr.mxu0 0.0
      %4358 = vmatpush1.msra.mxu0 0.0
      %4359 = vmatprep.subr.mxu0 0.0
      %4360 = vmatpush1.msra.mxu0 0.0
      %4361 = vmatprep.subr.mxu0 0.0
      %4362 = vmatpush1.msra.mxu0 0.0
      %4363 = vmatprep.subr.mxu0 0.0
      %4364 = vmatpush1.msra.mxu0 0.0
      %4365 = vmatprep.subr.mxu0 0.0
      %4366 = vmatpush1.msra.mxu0 0.0
      %4367 = vmatprep.subr.mxu0 0.0
      %4368 = vmatpush1.msra.mxu0 0.0
      %4369 = vmatprep.subr.mxu0 0.0
      %4370 = vmatpush1.msra.mxu0 0.0
      %4371 = vmatprep.subr.mxu0 0.0
      %4372 = vmatpush1.msra.mxu0 0.0
      %4373 = vmatprep.subr.mxu0 0.0
      %4374 = vmatpush1.msra.mxu0 0.0
      %4375 = vmatprep.subr.mxu0 0.0
      %4376 = vmatpush1.msra.mxu0 0.0
      %4377 = vmatprep.subr.mxu0 0.0
      %4378 = vmatpush1.msra.mxu0 0.0
      %4379 = vmatprep.subr.mxu0 0.0
      %4380 = vmatpush1.msra.mxu0 0.0
      %4381 = vmatprep.subr.mxu0 0.0
      %4382 = vmatpush1.msra.mxu0 0.0
      %4383 = vmatprep.subr.mxu0 0.0
      %4384 = vmatpush1.msra.mxu0 0.0
      %4385 = vmatprep.subr.mxu0 0.0
      %4386 = vmatpush1.msra.mxu0 0.0
      %4387 = vmatprep.subr.mxu0 0.0
      %4388 = vmatpush1.msra.mxu0 0.0
      %4389 = vmatprep.mubr.f32.mxu0 0.0
      %v4390 = vand.u32 %v710, 4294901760
      %4391 = vmatmul.mubr.f32.gmra.mrb[0].mxu0 %v4390
      %v4392 = vpop.f32.mrb[0].mxu0
      %v4393 = vadd.f32 %v4248, %v4392
      %v4394 = vpop.f32.mrb[0].mxu0
      %v4395 = vadd.f32 %v4250, %v4394
      %4396 = vmatprep.mubr.f32.mxu0 0.0
      %v4397 = vand.u32 %v712, 4294901760
      %4398 = vmatmul.mubr.f32.gmra.mrb[0].mxu0 %v4397
      %v4399 = vpop.f32.mrb[0].mxu0
      %v4400 = vadd.f32 %v4259, %v4399
      %v4401 = vpop.f32.mrb[0].mxu0
      %v4402 = vadd.f32 %v4261, %v4401
      %4403 = vmatprep.mubr.f32.mxu0 0.0
      %v4404 = vand.u32 %v714, 4294901760
      %4405 = vmatmul.mubr.f32.gmra.mrb[0].mxu0 %v4404
      %v4406 = vpop.f32.mrb[0].mxu0
      %v4407 = vadd.f32 %v4270, %v4406
      %v4408 = vpop.f32.mrb[0].mxu0
      %v4409 = vadd.f32 %v4272, %v4408
      %4410 = vmatprep.mubr.f32.mxu0 0.0
      %v4411 = vand.u32 %v716, 4294901760
      %4412 = vmatmul.mubr.f32.gmra.mrb[0].mxu0 %v4411
      %v4413 = vpop.f32.mrb[0].mxu0
      %v4414 = vadd.f32 %v4281, %v4413
      %v4415 = vpop.f32.mrb[0].mxu0
      %v4416 = vadd.f32 %v4283, %v4415
      %4417 = vdwg.mxu0
      %v4418 = vand.u32 %v640, 4294901760
      %v4419 = vsub.f32 %v640, %v4418
      %4420 = vmatprep.subr.mxu0 %v4419
      %v4421 = vand.u32 %v639, 4294901760
      %v4422 = vsub.f32 %v639, %v4421
      %4423 = vmatpush1.msra.mxu0 %v4422
      %v4424 = vand.u32 %v656, 4294901760
      %v4425 = vsub.f32 %v656, %v4424
      %4426 = vmatprep.subr.mxu0 %v4425
      %v4427 = vand.u32 %v655, 4294901760
      %v4428 = vsub.f32 %v655, %v4427
      %4429 = vmatpush1.msra.mxu0 %v4428
      %v4430 = vand.u32 %v672, 4294901760
      %v4431 = vsub.f32 %v672, %v4430
      %4432 = vmatprep.subr.mxu0 %v4431
      %v4433 = vand.u32 %v671, 4294901760
      %v4434 = vsub.f32 %v671, %v4433
      %4435 = vmatpush1.msra.mxu0 %v4434
      %v4436 = vand.u32 %v688, 4294901760
      %v4437 = vsub.f32 %v688, %v4436
      %4438 = vmatprep.subr.mxu0 %v4437
      %v4439 = vand.u32 %v687, 4294901760
      %v4440 = vsub.f32 %v687, %v4439
      %4441 = vmatpush1.msra.mxu0 %v4440
      %4442 = vmatprep.subr.mxu0 0.0
      %4443 = vmatpush1.msra.mxu0 0.0
      %4444 = vmatprep.subr.mxu0 0.0
      %4445 = vmatpush1.msra.mxu0 0.0
      %4446 = vmatprep.subr.mxu0 0.0
      %4447 = vmatpush1.msra.mxu0 0.0
      %4448 = vmatprep.subr.mxu0 0.0
      %4449 = vmatpush1.msra.mxu0 0.0
      %4450 = vmatprep.subr.mxu0 0.0
      %4451 = vmatpush1.msra.mxu0 0.0
      %4452 = vmatprep.subr.mxu0 0.0
      %4453 = vmatpush1.msra.mxu0 0.0
      %4454 = vmatprep.subr.mxu0 0.0
      %4455 = vmatpush1.msra.mxu0 0.0
      %4456 = vmatprep.subr.mxu0 0.0
      %4457 = vmatpush1.msra.mxu0 0.0
      %4458 = vmatprep.subr.mxu0 0.0
      %4459 = vmatpush1.msra.mxu0 0.0
      %4460 = vmatprep.subr.mxu0 0.0
      %4461 = vmatpush1.msra.mxu0 0.0
      %4462 = vmatprep.subr.mxu0 0.0
      %4463 = vmatpush1.msra.mxu0 0.0
      %4464 = vmatprep.subr.mxu0 0.0
      %4465 = vmatpush1.msra.mxu0 0.0
      %4466 = vmatprep.subr.mxu0 0.0
      %4467 = vmatpush1.msra.mxu0 0.0
      %4468 = vmatprep.subr.mxu0 0.0
      %4469 = vmatpush1.msra.mxu0 0.0
      %4470 = vmatprep.subr.mxu0 0.0
      %4471 = vmatpush1.msra.mxu0 0.0
      %4472 = vmatprep.subr.mxu0 0.0
      %4473 = vmatpush1.msra.mxu0 0.0
      %4474 = vmatprep.subr.mxu0 0.0
      %4475 = vmatpush1.msra.mxu0 0.0
      %4476 = vmatprep.subr.mxu0 0.0
      %4477 = vmatpush1.msra.mxu0 0.0
      %4478 = vmatprep.subr.mxu0 0.0
      %4479 = vmatpush1.msra.mxu0 0.0
      %4480 = vmatprep.subr.mxu0 0.0
      %4481 = vmatpush1.msra.mxu0 0.0
      %4482 = vmatprep.subr.mxu0 0.0
      %4483 = vmatpush1.msra.mxu0 0.0
      %4484 = vmatprep.subr.mxu0 0.0
      %4485 = vmatpush1.msra.mxu0 0.0
      %4486 = vmatprep.subr.mxu0 0.0
      %4487 = vmatpush1.msra.mxu0 0.0
      %4488 = vmatprep.subr.mxu0 0.0
      %4489 = vmatpush1.msra.mxu0 0.0
      %4490 = vmatprep.subr.mxu0 0.0
      %4491 = vmatpush1.msra.mxu0 0.0
      %4492 = vmatprep.subr.mxu0 0.0
      %4493 = vmatpush1.msra.mxu0 0.0
      %4494 = vmatprep.subr.mxu0 0.0
      %4495 = vmatpush1.msra.mxu0 0.0
      %4496 = vmatprep.subr.mxu0 0.0
      %4497 = vmatpush1.msra.mxu0 0.0
      %4498 = vmatprep.mubr.f32.mxu0 0.0
      %v4499 = vand.u32 %v710, 4294901760
      %v4500 = vsub.f32 %v710, %v4499
      %4501 = vmatmul.mubr.f32.gmra.mrb[0].mxu0 %v4500
      %v4502 = vpop.f32.mrb[0].mxu0
      %v4503 = vadd.f32 %v4393, %v4502
      %v4504 = vpop.f32.mrb[0].mxu0
      %v4505 = vadd.f32 %v4395, %v4504
      %4506 = vmatprep.mubr.f32.mxu0 0.0
      %v4507 = vand.u32 %v712, 4294901760
      %v4508 = vsub.f32 %v712, %v4507
      %4509 = vmatmul.mubr.f32.gmra.mrb[0].mxu0 %v4508
      %v4510 = vpop.f32.mrb[0].mxu0
      %v4511 = vadd.f32 %v4400, %v4510
      %v4512 = vpop.f32.mrb[0].mxu0
      %v4513 = vadd.f32 %v4402, %v4512
      %4514 = vmatprep.mubr.f32.mxu0 0.0
      %v4515 = vand.u32 %v714, 4294901760
      %v4516 = vsub.f32 %v714, %v4515
      %4517 = vmatmul.mubr.f32.gmra.mrb[0].mxu0 %v4516
      %v4518 = vpop.f32.mrb[0].mxu0
      %v4519 = vadd.f32 %v4407, %v4518
      %v4520 = vpop.f32.mrb[0].mxu0
      %v4521 = vadd.f32 %v4409, %v4520
      %4522 = vmatprep.mubr.f32.mxu0 0.0
      %v4523 = vand.u32 %v716, 4294901760
      %v4524 = vsub.f32 %v716, %v4523
      %4525 = vmatmul.mubr.f32.gmra.mrb[0].mxu0 %v4524
      %v4526 = vpop.f32.mrb[0].mxu0
      %v4527 = vadd.f32 %v4414, %v4526
      %v4528 = vpop.f32.mrb[0].mxu0
      %v4529 = vadd.f32 %v4416, %v4528
      %4530 = vdwg.mxu0
      %v4531 = vand.u32 %v640, 4294901760
      %4532 = vmatprep.subr.mxu0 %v4531
      %v4533 = vand.u32 %v639, 4294901760
      %4534 = vmatpush1.msra.mxu0 %v4533
      %v4535 = vand.u32 %v656, 4294901760
      %4536 = vmatprep.subr.mxu0 %v4535
      %v4537 = vand.u32 %v655, 4294901760
      %4538 = vmatpush1.msra.mxu0 %v4537
      %v4539 = vand.u32 %v672, 4294901760
      %4540 = vmatprep.subr.mxu0 %v4539
      %v4541 = vand.u32 %v671, 4294901760
      %4542 = vmatpush1.msra.mxu0 %v4541
      %v4543 = vand.u32 %v688, 4294901760
      %4544 = vmatprep.subr.mxu0 %v4543
      %v4545 = vand.u32 %v687, 4294901760
      %4546 = vmatpush1.msra.mxu0 %v4545
      %4547 = vmatprep.subr.mxu0 0.0
      %4548 = vmatpush1.msra.mxu0 0.0
      %4549 = vmatprep.subr.mxu0 0.0
      %4550 = vmatpush1.msra.mxu0 0.0
      %4551 = vmatprep.subr.mxu0 0.0
      %4552 = vmatpush1.msra.mxu0 0.0
      %4553 = vmatprep.subr.mxu0 0.0
      %4554 = vmatpush1.msra.mxu0 0.0
      %4555 = vmatprep.subr.mxu0 0.0
      %4556 = vmatpush1.msra.mxu0 0.0
      %4557 = vmatprep.subr.mxu0 0.0
      %4558 = vmatpush1.msra.mxu0 0.0
      %4559 = vmatprep.subr.mxu0 0.0
      %4560 = vmatpush1.msra.mxu0 0.0
      %4561 = vmatprep.subr.mxu0 0.0
      %4562 = vmatpush1.msra.mxu0 0.0
      %4563 = vmatprep.subr.mxu0 0.0
      %4564 = vmatpush1.msra.mxu0 0.0
      %4565 = vmatprep.subr.mxu0 0.0
      %4566 = vmatpush1.msra.mxu0 0.0
      %4567 = vmatprep.subr.mxu0 0.0
      %4568 = vmatpush1.msra.mxu0 0.0
      %4569 = vmatprep.subr.mxu0 0.0
      %4570 = vmatpush1.msra.mxu0 0.0
      %4571 = vmatprep.subr.mxu0 0.0
      %4572 = vmatpush1.msra.mxu0 0.0
      %4573 = vmatprep.subr.mxu0 0.0
      %4574 = vmatpush1.msra.mxu0 0.0
      %4575 = vmatprep.subr.mxu0 0.0
      %4576 = vmatpush1.msra.mxu0 0.0
      %4577 = vmatprep.subr.mxu0 0.0
      %4578 = vmatpush1.msra.mxu0 0.0
      %4579 = vmatprep.subr.mxu0 0.0
      %4580 = vmatpush1.msra.mxu0 0.0
      %4581 = vmatprep.subr.mxu0 0.0
      %4582 = vmatpush1.msra.mxu0 0.0
      %4583 = vmatprep.subr.mxu0 0.0
      %4584 = vmatpush1.msra.mxu0 0.0
      %4585 = vmatprep.subr.mxu0 0.0
      %4586 = vmatpush1.msra.mxu0 0.0
      %4587 = vmatprep.subr.mxu0 0.0
      %4588 = vmatpush1.msra.mxu0 0.0
      %4589 = vmatprep.subr.mxu0 0.0
      %4590 = vmatpush1.msra.mxu0 0.0
      %4591 = vmatprep.subr.mxu0 0.0
      %4592 = vmatpush1.msra.mxu0 0.0
      %4593 = vmatprep.subr.mxu0 0.0
      %4594 = vmatpush1.msra.mxu0 0.0
      %4595 = vmatprep.subr.mxu0 0.0
      %4596 = vmatpush1.msra.mxu0 0.0
      %4597 = vmatprep.subr.mxu0 0.0
      %4598 = vmatpush1.msra.mxu0 0.0
      %4599 = vmatprep.subr.mxu0 0.0
      %4600 = vmatpush1.msra.mxu0 0.0
      %4601 = vmatprep.subr.mxu0 0.0
      %4602 = vmatpush1.msra.mxu0 0.0
      %4603 = vmatprep.mubr.f32.mxu0 0.0
      %v4604 = vand.u32 %v710, 4294901760
      %v4605 = vsub.f32 %v710, %v4604
      %v4606 = vand.u32 %v4605, 4294901760
      %4607 = vmatmul.mubr.f32.gmra.mrb[0].mxu0 %v4606
      %v4608 = vpop.f32.mrb[0].mxu0
      %v4609 = vadd.f32 %v4503, %v4608
      %v4610 = vpop.f32.mrb[0].mxu0
      %v4611 = vadd.f32 %v4505, %v4610
      %4612 = vmatprep.mubr.f32.mxu0 0.0
      %v4613 = vand.u32 %v712, 4294901760
      %v4614 = vsub.f32 %v712, %v4613
      %v4615 = vand.u32 %v4614, 4294901760
      %4616 = vmatmul.mubr.f32.gmra.mrb[0].mxu0 %v4615
      %v4617 = vpop.f32.mrb[0].mxu0
      %v4618 = vadd.f32 %v4511, %v4617
      %v4619 = vpop.f32.mrb[0].mxu0
      %v4620 = vadd.f32 %v4513, %v4619
      %4621 = vmatprep.mubr.f32.mxu0 0.0
      %v4622 = vand.u32 %v714, 4294901760
      %v4623 = vsub.f32 %v714, %v4622
      %v4624 = vand.u32 %v4623, 4294901760
      %4625 = vmatmul.mubr.f32.gmra.mrb[0].mxu0 %v4624
      %v4626 = vpop.f32.mrb[0].mxu0
      %v4627 = vadd.f32 %v4519, %v4626
      %v4628 = vpop.f32.mrb[0].mxu0
      %v4629 = vadd.f32 %v4521, %v4628
      %4630 = vmatprep.mubr.f32.mxu0 0.0
      %v4631 = vand.u32 %v716, 4294901760
      %v4632 = vsub.f32 %v716, %v4631
      %v4633 = vand.u32 %v4632, 4294901760
      %4634 = vmatmul.mubr.f32.gmra.mrb[0].mxu0 %v4633
      %v4635 = vpop.f32.mrb[0].mxu0
      %v4636 = vadd.f32 %v4527, %v4635
      %v4637 = vpop.f32.mrb[0].mxu0
      %v4638 = vadd.f32 %v4529, %v4637
      %4639 = vdwg.mxu0
      %v4640 = vand.u32 %v640, 4294901760
      %v4641 = vsub.f32 %v640, %v4640
      %v4642 = vand.u32 %v4641, 4294901760
      %4643 = vmatprep.subr.mxu0 %v4642
      %v4644 = vand.u32 %v639, 4294901760
      %v4645 = vsub.f32 %v639, %v4644
      %v4646 = vand.u32 %v4645, 4294901760
      %4647 = vmatpush1.msra.mxu0 %v4646
      %v4648 = vand.u32 %v656, 4294901760
      %v4649 = vsub.f32 %v656, %v4648
      %v4650 = vand.u32 %v4649, 4294901760
      %4651 = vmatprep.subr.mxu0 %v4650
      %v4652 = vand.u32 %v655, 4294901760
      %v4653 = vsub.f32 %v655, %v4652
      %v4654 = vand.u32 %v4653, 4294901760
      %4655 = vmatpush1.msra.mxu0 %v4654
      %v4656 = vand.u32 %v672, 4294901760
      %v4657 = vsub.f32 %v672, %v4656
      %v4658 = vand.u32 %v4657, 4294901760
      %4659 = vmatprep.subr.mxu0 %v4658
      %v4660 = vand.u32 %v671, 4294901760
      %v4661 = vsub.f32 %v671, %v4660
      %v4662 = vand.u32 %v4661, 4294901760
      %4663 = vmatpush1.msra.mxu0 %v4662
      %v4664 = vand.u32 %v688, 4294901760
      %v4665 = vsub.f32 %v688, %v4664
      %v4666 = vand.u32 %v4665, 4294901760
      %4667 = vmatprep.subr.mxu0 %v4666
      %v4668 = vand.u32 %v687, 4294901760
      %v4669 = vsub.f32 %v687, %v4668
      %v4670 = vand.u32 %v4669, 4294901760
      %4671 = vmatpush1.msra.mxu0 %v4670
      %4672 = vmatprep.subr.mxu0 0.0
      %4673 = vmatpush1.msra.mxu0 0.0
      %4674 = vmatprep.subr.mxu0 0.0
      %4675 = vmatpush1.msra.mxu0 0.0
      %4676 = vmatprep.subr.mxu0 0.0
      %4677 = vmatpush1.msra.mxu0 0.0
      %4678 = vmatprep.subr.mxu0 0.0
      %4679 = vmatpush1.msra.mxu0 0.0
      %4680 = vmatprep.subr.mxu0 0.0
      %4681 = vmatpush1.msra.mxu0 0.0
      %4682 = vmatprep.subr.mxu0 0.0
      %4683 = vmatpush1.msra.mxu0 0.0
      %4684 = vmatprep.subr.mxu0 0.0
      %4685 = vmatpush1.msra.mxu0 0.0
      %4686 = vmatprep.subr.mxu0 0.0
      %4687 = vmatpush1.msra.mxu0 0.0
      %4688 = vmatprep.subr.mxu0 0.0
      %4689 = vmatpush1.msra.mxu0 0.0
      %4690 = vmatprep.subr.mxu0 0.0
      %4691 = vmatpush1.msra.mxu0 0.0
      %4692 = vmatprep.subr.mxu0 0.0
      %4693 = vmatpush1.msra.mxu0 0.0
      %4694 = vmatprep.subr.mxu0 0.0
      %4695 = vmatpush1.msra.mxu0 0.0
      %4696 = vmatprep.subr.mxu0 0.0
      %4697 = vmatpush1.msra.mxu0 0.0
      %4698 = vmatprep.subr.mxu0 0.0
      %4699 = vmatpush1.msra.mxu0 0.0
      %4700 = vmatprep.subr.mxu0 0.0
      %4701 = vmatpush1.msra.mxu0 0.0
      %4702 = vmatprep.subr.mxu0 0.0
      %4703 = vmatpush1.msra.mxu0 0.0
      %4704 = vmatprep.subr.mxu0 0.0
      %4705 = vmatpush1.msra.mxu0 0.0
      %4706 = vmatprep.subr.mxu0 0.0
      %4707 = vmatpush1.msra.mxu0 0.0
      %4708 = vmatprep.subr.mxu0 0.0
      %4709 = vmatpush1.msra.mxu0 0.0
      %4710 = vmatprep.subr.mxu0 0.0
      %4711 = vmatpush1.msra.mxu0 0.0
      %4712 = vmatprep.subr.mxu0 0.0
      %4713 = vmatpush1.msra.mxu0 0.0
      %4714 = vmatprep.subr.mxu0 0.0
      %4715 = vmatpush1.msra.mxu0 0.0
      %4716 = vmatprep.subr.mxu0 0.0
      %4717 = vmatpush1.msra.mxu0 0.0
      %4718 = vmatprep.subr.mxu0 0.0
      %4719 = vmatpush1.msra.mxu0 0.0
      %4720 = vmatprep.subr.mxu0 0.0
      %4721 = vmatpush1.msra.mxu0 0.0
      %4722 = vmatprep.subr.mxu0 0.0
      %4723 = vmatpush1.msra.mxu0 0.0
      %4724 = vmatprep.subr.mxu0 0.0
      %4725 = vmatpush1.msra.mxu0 0.0
      %4726 = vmatprep.subr.mxu0 0.0
      %4727 = vmatpush1.msra.mxu0 0.0
      %4728 = vmatprep.mubr.f32.mxu0 0.0
      %v4729 = vand.u32 %v710, 4294901760
      %4730 = vmatmul.mubr.f32.gmra.mrb[0].mxu0 %v4729
      %v4731 = vpop.f32.mrb[0].mxu0
      %v4732 = vadd.f32 %v4609, %v4731
      %v4733 = vpop.f32.mrb[0].mxu0
      %v4734 = vadd.f32 %v4611, %v4733
      %4735 = vmatprep.mubr.f32.mxu0 0.0
      %v4736 = vand.u32 %v712, 4294901760
      %4737 = vmatmul.mubr.f32.gmra.mrb[0].mxu0 %v4736
      %v4738 = vpop.f32.mrb[0].mxu0
      %v4739 = vadd.f32 %v4618, %v4738
      %v4740 = vpop.f32.mrb[0].mxu0
      %v4741 = vadd.f32 %v4620, %v4740
      %4742 = vmatprep.mubr.f32.mxu0 0.0
      %v4743 = vand.u32 %v714, 4294901760
      %4744 = vmatmul.mubr.f32.gmra.mrb[0].mxu0 %v4743
      %v4745 = vpop.f32.mrb[0].mxu0
      %v4746 = vadd.f32 %v4627, %v4745
      %v4747 = vpop.f32.mrb[0].mxu0
      %v4748 = vadd.f32 %v4629, %v4747
      %4749 = vmatprep.mubr.f32.mxu0 0.0
      %v4750 = vand.u32 %v716, 4294901760
      %4751 = vmatmul.mubr.f32.gmra.mrb[0].mxu0 %v4750
      %v4752 = vpop.f32.mrb[0].mxu0
      %v4753 = vadd.f32 %v4636, %v4752
      %v4754 = vpop.f32.mrb[0].mxu0
      %v4755 = vadd.f32 %v4638, %v4754
      %4756 = vdwg.mxu0
      %v4757 = vand.u32 %v640, 4294901760
      %4758 = vmatprep.subr.mxu0 %v4757
      %v4759 = vand.u32 %v639, 4294901760
      %4760 = vmatpush1.msra.mxu0 %v4759
      %v4761 = vand.u32 %v656, 4294901760
      %4762 = vmatprep.subr.mxu0 %v4761
      %v4763 = vand.u32 %v655, 4294901760
      %4764 = vmatpush1.msra.mxu0 %v4763
      %v4765 = vand.u32 %v672, 4294901760
      %4766 = vmatprep.subr.mxu0 %v4765
      %v4767 = vand.u32 %v671, 4294901760
      %4768 = vmatpush1.msra.mxu0 %v4767
      %v4769 = vand.u32 %v688, 4294901760
      %4770 = vmatprep.subr.mxu0 %v4769
      %v4771 = vand.u32 %v687, 4294901760
      %4772 = vmatpush1.msra.mxu0 %v4771
      %4773 = vmatprep.subr.mxu0 0.0
      %4774 = vmatpush1.msra.mxu0 0.0
      %4775 = vmatprep.subr.mxu0 0.0
      %4776 = vmatpush1.msra.mxu0 0.0
      %4777 = vmatprep.subr.mxu0 0.0
      %4778 = vmatpush1.msra.mxu0 0.0
      %4779 = vmatprep.subr.mxu0 0.0
      %4780 = vmatpush1.msra.mxu0 0.0
      %4781 = vmatprep.subr.mxu0 0.0
      %4782 = vmatpush1.msra.mxu0 0.0
      %4783 = vmatprep.subr.mxu0 0.0
      %4784 = vmatpush1.msra.mxu0 0.0
      %4785 = vmatprep.subr.mxu0 0.0
      %4786 = vmatpush1.msra.mxu0 0.0
      %4787 = vmatprep.subr.mxu0 0.0
      %4788 = vmatpush1.msra.mxu0 0.0
      %4789 = vmatprep.subr.mxu0 0.0
      %4790 = vmatpush1.msra.mxu0 0.0
      %4791 = vmatprep.subr.mxu0 0.0
      %4792 = vmatpush1.msra.mxu0 0.0
      %4793 = vmatprep.subr.mxu0 0.0
      %4794 = vmatpush1.msra.mxu0 0.0
      %4795 = vmatprep.subr.mxu0 0.0
      %4796 = vmatpush1.msra.mxu0 0.0
      %4797 = vmatprep.subr.mxu0 0.0
      %4798 = vmatpush1.msra.mxu0 0.0
      %4799 = vmatprep.subr.mxu0 0.0
      %4800 = vmatpush1.msra.mxu0 0.0
      %4801 = vmatprep.subr.mxu0 0.0
      %4802 = vmatpush1.msra.mxu0 0.0
      %4803 = vmatprep.subr.mxu0 0.0
      %4804 = vmatpush1.msra.mxu0 0.0
      %4805 = vmatprep.subr.mxu0 0.0
      %4806 = vmatpush1.msra.mxu0 0.0
      %4807 = vmatprep.subr.mxu0 0.0
      %4808 = vmatpush1.msra.mxu0 0.0
      %4809 = vmatprep.subr.mxu0 0.0
      %4810 = vmatpush1.msra.mxu0 0.0
      %4811 = vmatprep.subr.mxu0 0.0
      %4812 = vmatpush1.msra.mxu0 0.0
      %4813 = vmatprep.subr.mxu0 0.0
      %4814 = vmatpush1.msra.mxu0 0.0
      %4815 = vmatprep.subr.mxu0 0.0
      %4816 = vmatpush1.msra.mxu0 0.0
      %4817 = vmatprep.subr.mxu0 0.0
      %4818 = vmatpush1.msra.mxu0 0.0
      %4819 = vmatprep.subr.mxu0 0.0
      %4820 = vmatpush1.msra.mxu0 0.0
      %4821 = vmatprep.subr.mxu0 0.0
      %4822 = vmatpush1.msra.mxu0 0.0
      %4823 = vmatprep.subr.mxu0 0.0
      %4824 = vmatpush1.msra.mxu0 0.0
      %4825 = vmatprep.subr.mxu0 0.0
      %4826 = vmatpush1.msra.mxu0 0.0
      %4827 = vmatprep.subr.mxu0 0.0
      %4828 = vmatpush1.msra.mxu0 0.0
      %4829 = vmatprep.mubr.f32.mxu0 0.0
      %v4830 = vand.u32 %v710, 4294901760
      %4831 = vmatmul.mubr.f32.gmra.mrb[0].mxu0 %v4830
      %v4832 = vpop.f32.mrb[0].mxu0
      %v4833 = vadd.f32 %v4732, %v4832
      %v4834 = vpop.f32.mrb[0].mxu0
      %v4835 = vadd.f32 %v4734, %v4834
      %4836 = vmatprep.mubr.f32.mxu0 0.0
      %v4837 = vand.u32 %v712, 4294901760
      %4838 = vmatmul.mubr.f32.gmra.mrb[0].mxu0 %v4837
      %v4839 = vpop.f32.mrb[0].mxu0
      %v4840 = vadd.f32 %v4739, %v4839
      %v4841 = vpop.f32.mrb[0].mxu0
      %v4842 = vadd.f32 %v4741, %v4841
      %4843 = vmatprep.mubr.f32.mxu0 0.0
      %v4844 = vand.u32 %v714, 4294901760
      %4845 = vmatmul.mubr.f32.gmra.mrb[0].mxu0 %v4844
      %v4846 = vpop.f32.mrb[0].mxu0
      %v4847 = vadd.f32 %v4746, %v4846
      %v4848 = vpop.f32.mrb[0].mxu0
      %v4849 = vadd.f32 %v4748, %v4848
      %4850 = vmatprep.mubr.f32.mxu0 0.0
      %v4851 = vand.u32 %v716, 4294901760
      %4852 = vmatmul.mubr.f32.gmra.mrb[0].mxu0 %v4851
      %v4853 = vpop.f32.mrb[0].mxu0
      %v4854 = vadd.f32 %v4753, %v4853
      %v4855 = vpop.f32.mrb[0].mxu0
      %v4856 = vadd.f32 %v4755, %v4855
      %4857 = vdwg.mxu0
      %v4858 = vand.u32 %v642, 4294901760
      %4859 = vmatprep.subr.mxu0 %v4858
      %v4860 = vand.u32 %v641, 4294901760
      %4861 = vmatpush1.msra.mxu0 %v4860
      %v4862 = vand.u32 %v658, 4294901760
      %4863 = vmatprep.subr.mxu0 %v4862
      %v4864 = vand.u32 %v657, 4294901760
      %4865 = vmatpush1.msra.mxu0 %v4864
      %v4866 = vand.u32 %v674, 4294901760
      %4867 = vmatprep.subr.mxu0 %v4866
      %v4868 = vand.u32 %v673, 4294901760
      %4869 = vmatpush1.msra.mxu0 %v4868
      %v4870 = vand.u32 %v690, 4294901760
      %4871 = vmatprep.subr.mxu0 %v4870
      %v4872 = vand.u32 %v689, 4294901760
      %4873 = vmatpush1.msra.mxu0 %v4872
      %4874 = vmatprep.subr.mxu0 0.0
      %4875 = vmatpush1.msra.mxu0 0.0
      %4876 = vmatprep.subr.mxu0 0.0
      %4877 = vmatpush1.msra.mxu0 0.0
      %4878 = vmatprep.subr.mxu0 0.0
      %4879 = vmatpush1.msra.mxu0 0.0
      %4880 = vmatprep.subr.mxu0 0.0
      %4881 = vmatpush1.msra.mxu0 0.0
      %4882 = vmatprep.subr.mxu0 0.0
      %4883 = vmatpush1.msra.mxu0 0.0
      %4884 = vmatprep.subr.mxu0 0.0
      %4885 = vmatpush1.msra.mxu0 0.0
      %4886 = vmatprep.subr.mxu0 0.0
      %4887 = vmatpush1.msra.mxu0 0.0
      %4888 = vmatprep.subr.mxu0 0.0
      %4889 = vmatpush1.msra.mxu0 0.0
      %4890 = vmatprep.subr.mxu0 0.0
      %4891 = vmatpush1.msra.mxu0 0.0
      %4892 = vmatprep.subr.mxu0 0.0
      %4893 = vmatpush1.msra.mxu0 0.0
      %4894 = vmatprep.subr.mxu0 0.0
      %4895 = vmatpush1.msra.mxu0 0.0
      %4896 = vmatprep.subr.mxu0 0.0
      %4897 = vmatpush1.msra.mxu0 0.0
      %4898 = vmatprep.subr.mxu0 0.0
      %4899 = vmatpush1.msra.mxu0 0.0
      %4900 = vmatprep.subr.mxu0 0.0
      %4901 = vmatpush1.msra.mxu0 0.0
      %4902 = vmatprep.subr.mxu0 0.0
      %4903 = vmatpush1.msra.mxu0 0.0
      %4904 = vmatprep.subr.mxu0 0.0
      %4905 = vmatpush1.msra.mxu0 0.0
      %4906 = vmatprep.subr.mxu0 0.0
      %4907 = vmatpush1.msra.mxu0 0.0
      %4908 = vmatprep.subr.mxu0 0.0
      %4909 = vmatpush1.msra.mxu0 0.0
      %4910 = vmatprep.subr.mxu0 0.0
      %4911 = vmatpush1.msra.mxu0 0.0
      %4912 = vmatprep.subr.mxu0 0.0
      %4913 = vmatpush1.msra.mxu0 0.0
      %4914 = vmatprep.subr.mxu0 0.0
      %4915 = vmatpush1.msra.mxu0 0.0
      %4916 = vmatprep.subr.mxu0 0.0
      %4917 = vmatpush1.msra.mxu0 0.0
      %4918 = vmatprep.subr.mxu0 0.0
      %4919 = vmatpush1.msra.mxu0 0.0
      %4920 = vmatprep.subr.mxu0 0.0
      %4921 = vmatpush1.msra.mxu0 0.0
      %4922 = vmatprep.subr.mxu0 0.0
      %4923 = vmatpush1.msra.mxu0 0.0
      %4924 = vmatprep.subr.mxu0 0.0
      %4925 = vmatpush1.msra.mxu0 0.0
      %4926 = vmatprep.subr.mxu0 0.0
      %4927 = vmatpush1.msra.mxu0 0.0
      %4928 = vmatprep.subr.mxu0 0.0
      %4929 = vmatpush1.msra.mxu0 0.0
      %4930 = vmatprep.mubr.f32.mxu0 0.0
      %v4931 = vand.u32 %v710, 4294901760
      %v4932 = vsub.f32 %v710, %v4931
      %v4933 = vand.u32 %v4932, 4294901760
      %v4934 = vsub.f32 %v4932, %v4933
      %v4935 = vand.u32 %v4934, 4294901760
      %4936 = vmatmul.mubr.f32.gmra.mrb[0].mxu0 %v4935
      %v4937 = vpop.f32.mrb[0].mxu0
      %v4938 = vadd.f32 %v695, %v4937
      %v4939 = vpop.f32.mrb[0].mxu0
      %v4940 = vadd.f32 %v695, %v4939
      %4941 = vmatprep.mubr.f32.mxu0 0.0
      %v4942 = vand.u32 %v712, 4294901760
      %v4943 = vsub.f32 %v712, %v4942
      %v4944 = vand.u32 %v4943, 4294901760
      %v4945 = vsub.f32 %v4943, %v4944
      %v4946 = vand.u32 %v4945, 4294901760
      %4947 = vmatmul.mubr.f32.gmra.mrb[0].mxu0 %v4946
      %v4948 = vpop.f32.mrb[0].mxu0
      %v4949 = vadd.f32 %v699, %v4948
      %v4950 = vpop.f32.mrb[0].mxu0
      %v4951 = vadd.f32 %v699, %v4950
      %4952 = vmatprep.mubr.f32.mxu0 0.0
      %v4953 = vand.u32 %v714, 4294901760
      %v4954 = vsub.f32 %v714, %v4953
      %v4955 = vand.u32 %v4954, 4294901760
      %v4956 = vsub.f32 %v4954, %v4955
      %v4957 = vand.u32 %v4956, 4294901760
      %4958 = vmatmul.mubr.f32.gmra.mrb[0].mxu0 %v4957
      %v4959 = vpop.f32.mrb[0].mxu0
      %v4960 = vadd.f32 %v703, %v4959
      %v4961 = vpop.f32.mrb[0].mxu0
      %v4962 = vadd.f32 %v703, %v4961
      %4963 = vmatprep.mubr.f32.mxu0 0.0
      %v4964 = vand.u32 %v716, 4294901760
      %v4965 = vsub.f32 %v716, %v4964
      %v4966 = vand.u32 %v4965, 4294901760
      %v4967 = vsub.f32 %v4965, %v4966
      %v4968 = vand.u32 %v4967, 4294901760
      %4969 = vmatmul.mubr.f32.gmra.mrb[0].mxu0 %v4968
      %v4970 = vpop.f32.mrb[0].mxu0
      %v4971 = vadd.f32 %v707, %v4970
      %v4972 = vpop.f32.mrb[0].mxu0
      %v4973 = vadd.f32 %v707, %v4972
      %4974 = vdwg.mxu0
      %v4975 = vand.u32 %v642, 4294901760
      %v4976 = vsub.f32 %v642, %v4975
      %v4977 = vand.u32 %v4976, 4294901760
      %v4978 = vsub.f32 %v4976, %v4977
      %v4979 = vand.u32 %v4978, 4294901760
      %4980 = vmatprep.subr.mxu0 %v4979
      %v4981 = vand.u32 %v641, 4294901760
      %v4982 = vsub.f32 %v641, %v4981
      %v4983 = vand.u32 %v4982, 4294901760
      %v4984 = vsub.f32 %v4982, %v4983
      %v4985 = vand.u32 %v4984, 4294901760
      %4986 = vmatpush1.msra.mxu0 %v4985
      %v4987 = vand.u32 %v658, 4294901760
      %v4988 = vsub.f32 %v658, %v4987
      %v4989 = vand.u32 %v4988, 4294901760
      %v4990 = vsub.f32 %v4988, %v4989
      %v4991 = vand.u32 %v4990, 4294901760
      %4992 = vmatprep.subr.mxu0 %v4991
      %v4993 = vand.u32 %v657, 4294901760
      %v4994 = vsub.f32 %v657, %v4993
      %v4995 = vand.u32 %v4994, 4294901760
      %v4996 = vsub.f32 %v4994, %v4995
      %v4997 = vand.u32 %v4996, 4294901760
      %4998 = vmatpush1.msra.mxu0 %v4997
      %v4999 = vand.u32 %v674, 4294901760
      %v5000 = vsub.f32 %v674, %v4999
      %v5001 = vand.u32 %v5000, 4294901760
      %v5002 = vsub.f32 %v5000, %v5001
      %v5003 = vand.u32 %v5002, 4294901760
      %5004 = vmatprep.subr.mxu0 %v5003
      %v5005 = vand.u32 %v673, 4294901760
      %v5006 = vsub.f32 %v673, %v5005
      %v5007 = vand.u32 %v5006, 4294901760
      %v5008 = vsub.f32 %v5006, %v5007
      %v5009 = vand.u32 %v5008, 4294901760
      %5010 = vmatpush1.msra.mxu0 %v5009
      %v5011 = vand.u32 %v690, 4294901760
      %v5012 = vsub.f32 %v690, %v5011
      %v5013 = vand.u32 %v5012, 4294901760
      %v5014 = vsub.f32 %v5012, %v5013
      %v5015 = vand.u32 %v5014, 4294901760
      %5016 = vmatprep.subr.mxu0 %v5015
      %v5017 = vand.u32 %v689, 4294901760
      %v5018 = vsub.f32 %v689, %v5017
      %v5019 = vand.u32 %v5018, 4294901760
      %v5020 = vsub.f32 %v5018, %v5019
      %v5021 = vand.u32 %v5020, 4294901760
      %5022 = vmatpush1.msra.mxu0 %v5021
      %5023 = vmatprep.subr.mxu0 0.0
      %5024 = vmatpush1.msra.mxu0 0.0
      %5025 = vmatprep.subr.mxu0 0.0
      %5026 = vmatpush1.msra.mxu0 0.0
      %5027 = vmatprep.subr.mxu0 0.0
      %5028 = vmatpush1.msra.mxu0 0.0
      %5029 = vmatprep.subr.mxu0 0.0
      %5030 = vmatpush1.msra.mxu0 0.0
      %5031 = vmatprep.subr.mxu0 0.0
      %5032 = vmatpush1.msra.mxu0 0.0
      %5033 = vmatprep.subr.mxu0 0.0
      %5034 = vmatpush1.msra.mxu0 0.0
      %5035 = vmatprep.subr.mxu0 0.0
      %5036 = vmatpush1.msra.mxu0 0.0
      %5037 = vmatprep.subr.mxu0 0.0
      %5038 = vmatpush1.msra.mxu0 0.0
      %5039 = vmatprep.subr.mxu0 0.0
      %5040 = vmatpush1.msra.mxu0 0.0
      %5041 = vmatprep.subr.mxu0 0.0
      %5042 = vmatpush1.msra.mxu0 0.0
      %5043 = vmatprep.subr.mxu0 0.0
      %5044 = vmatpush1.msra.mxu0 0.0
      %5045 = vmatprep.subr.mxu0 0.0
      %5046 = vmatpush1.msra.mxu0 0.0
      %5047 = vmatprep.subr.mxu0 0.0
      %5048 = vmatpush1.msra.mxu0 0.0
      %5049 = vmatprep.subr.mxu0 0.0
      %5050 = vmatpush1.msra.mxu0 0.0
      %5051 = vmatprep.subr.mxu0 0.0
      %5052 = vmatpush1.msra.mxu0 0.0
      %5053 = vmatprep.subr.mxu0 0.0
      %5054 = vmatpush1.msra.mxu0 0.0
      %5055 = vmatprep.subr.mxu0 0.0
      %5056 = vmatpush1.msra.mxu0 0.0
      %5057 = vmatprep.subr.mxu0 0.0
      %5058 = vmatpush1.msra.mxu0 0.0
      %5059 = vmatprep.subr.mxu0 0.0
      %5060 = vmatpush1.msra.mxu0 0.0
      %5061 = vmatprep.subr.mxu0 0.0
      %5062 = vmatpush1.msra.mxu0 0.0
      %5063 = vmatprep.subr.mxu0 0.0
      %5064 = vmatpush1.msra.mxu0 0.0
      %5065 = vmatprep.subr.mxu0 0.0
      %5066 = vmatpush1.msra.mxu0 0.0
      %5067 = vmatprep.subr.mxu0 0.0
      %5068 = vmatpush1.msra.mxu0 0.0
      %5069 = vmatprep.subr.mxu0 0.0
      %5070 = vmatpush1.msra.mxu0 0.0
      %5071 = vmatprep.subr.mxu0 0.0
      %5072 = vmatpush1.msra.mxu0 0.0
      %5073 = vmatprep.subr.mxu0 0.0
      %5074 = vmatpush1.msra.mxu0 0.0
      %5075 = vmatprep.subr.mxu0 0.0
      %5076 = vmatpush1.msra.mxu0 0.0
      %5077 = vmatprep.subr.mxu0 0.0
      %5078 = vmatpush1.msra.mxu0 0.0
      %5079 = vmatprep.mubr.f32.mxu0 0.0
      %v5080 = vand.u32 %v710, 4294901760
      %5081 = vmatmul.mubr.f32.gmra.mrb[0].mxu0 %v5080
      %v5082 = vpop.f32.mrb[0].mxu0
      %v5083 = vadd.f32 %v4938, %v5082
      %v5084 = vpop.f32.mrb[0].mxu0
      %v5085 = vadd.f32 %v4940, %v5084
      %5086 = vmatprep.mubr.f32.mxu0 0.0
      %v5087 = vand.u32 %v712, 4294901760
      %5088 = vmatmul.mubr.f32.gmra.mrb[0].mxu0 %v5087
      %v5089 = vpop.f32.mrb[0].mxu0
      %v5090 = vadd.f32 %v4949, %v5089
      %v5091 = vpop.f32.mrb[0].mxu0
      %v5092 = vadd.f32 %v4951, %v5091
      %5093 = vmatprep.mubr.f32.mxu0 0.0
      %v5094 = vand.u32 %v714, 4294901760
      %5095 = vmatmul.mubr.f32.gmra.mrb[0].mxu0 %v5094
      %v5096 = vpop.f32.mrb[0].mxu0
      %v5097 = vadd.f32 %v4960, %v5096
      %v5098 = vpop.f32.mrb[0].mxu0
      %v5099 = vadd.f32 %v4962, %v5098
      %5100 = vmatprep.mubr.f32.mxu0 0.0
      %v5101 = vand.u32 %v716, 4294901760
      %5102 = vmatmul.mubr.f32.gmra.mrb[0].mxu0 %v5101
      %v5103 = vpop.f32.mrb[0].mxu0
      %v5104 = vadd.f32 %v4971, %v5103
      %v5105 = vpop.f32.mrb[0].mxu0
      %v5106 = vadd.f32 %v4973, %v5105
      %5107 = vdwg.mxu0
      %v5108 = vand.u32 %v642, 4294901760
      %v5109 = vsub.f32 %v642, %v5108
      %5110 = vmatprep.subr.mxu0 %v5109
      %v5111 = vand.u32 %v641, 4294901760
      %v5112 = vsub.f32 %v641, %v5111
      %5113 = vmatpush1.msra.mxu0 %v5112
      %v5114 = vand.u32 %v658, 4294901760
      %v5115 = vsub.f32 %v658, %v5114
      %5116 = vmatprep.subr.mxu0 %v5115
      %v5117 = vand.u32 %v657, 4294901760
      %v5118 = vsub.f32 %v657, %v5117
      %5119 = vmatpush1.msra.mxu0 %v5118
      %v5120 = vand.u32 %v674, 4294901760
      %v5121 = vsub.f32 %v674, %v5120
      %5122 = vmatprep.subr.mxu0 %v5121
      %v5123 = vand.u32 %v673, 4294901760
      %v5124 = vsub.f32 %v673, %v5123
      %5125 = vmatpush1.msra.mxu0 %v5124
      %v5126 = vand.u32 %v690, 4294901760
      %v5127 = vsub.f32 %v690, %v5126
      %5128 = vmatprep.subr.mxu0 %v5127
      %v5129 = vand.u32 %v689, 4294901760
      %v5130 = vsub.f32 %v689, %v5129
      %5131 = vmatpush1.msra.mxu0 %v5130
      %5132 = vmatprep.subr.mxu0 0.0
      %5133 = vmatpush1.msra.mxu0 0.0
      %5134 = vmatprep.subr.mxu0 0.0
      %5135 = vmatpush1.msra.mxu0 0.0
      %5136 = vmatprep.subr.mxu0 0.0
      %5137 = vmatpush1.msra.mxu0 0.0
      %5138 = vmatprep.subr.mxu0 0.0
      %5139 = vmatpush1.msra.mxu0 0.0
      %5140 = vmatprep.subr.mxu0 0.0
      %5141 = vmatpush1.msra.mxu0 0.0
      %5142 = vmatprep.subr.mxu0 0.0
      %5143 = vmatpush1.msra.mxu0 0.0
      %5144 = vmatprep.subr.mxu0 0.0
      %5145 = vmatpush1.msra.mxu0 0.0
      %5146 = vmatprep.subr.mxu0 0.0
      %5147 = vmatpush1.msra.mxu0 0.0
      %5148 = vmatprep.subr.mxu0 0.0
      %5149 = vmatpush1.msra.mxu0 0.0
      %5150 = vmatprep.subr.mxu0 0.0
      %5151 = vmatpush1.msra.mxu0 0.0
      %5152 = vmatprep.subr.mxu0 0.0
      %5153 = vmatpush1.msra.mxu0 0.0
      %5154 = vmatprep.subr.mxu0 0.0
      %5155 = vmatpush1.msra.mxu0 0.0
      %5156 = vmatprep.subr.mxu0 0.0
      %5157 = vmatpush1.msra.mxu0 0.0
      %5158 = vmatprep.subr.mxu0 0.0
      %5159 = vmatpush1.msra.mxu0 0.0
      %5160 = vmatprep.subr.mxu0 0.0
      %5161 = vmatpush1.msra.mxu0 0.0
      %5162 = vmatprep.subr.mxu0 0.0
      %5163 = vmatpush1.msra.mxu0 0.0
      %5164 = vmatprep.subr.mxu0 0.0
      %5165 = vmatpush1.msra.mxu0 0.0
      %5166 = vmatprep.subr.mxu0 0.0
      %5167 = vmatpush1.msra.mxu0 0.0
      %5168 = vmatprep.subr.mxu0 0.0
      %5169 = vmatpush1.msra.mxu0 0.0
      %5170 = vmatprep.subr.mxu0 0.0
      %5171 = vmatpush1.msra.mxu0 0.0
      %5172 = vmatprep.subr.mxu0 0.0
      %5173 = vmatpush1.msra.mxu0 0.0
      %5174 = vmatprep.subr.mxu0 0.0
      %5175 = vmatpush1.msra.mxu0 0.0
      %5176 = vmatprep.subr.mxu0 0.0
      %5177 = vmatpush1.msra.mxu0 0.0
      %5178 = vmatprep.subr.mxu0 0.0
      %5179 = vmatpush1.msra.mxu0 0.0
      %5180 = vmatprep.subr.mxu0 0.0
      %5181 = vmatpush1.msra.mxu0 0.0
      %5182 = vmatprep.subr.mxu0 0.0
      %5183 = vmatpush1.msra.mxu0 0.0
      %5184 = vmatprep.subr.mxu0 0.0
      %5185 = vmatpush1.msra.mxu0 0.0
      %5186 = vmatprep.subr.mxu0 0.0
      %5187 = vmatpush1.msra.mxu0 0.0
      %5188 = vmatprep.mubr.f32.mxu0 0.0
      %v5189 = vand.u32 %v710, 4294901760
      %v5190 = vsub.f32 %v710, %v5189
      %5191 = vmatmul.mubr.f32.gmra.mrb[0].mxu0 %v5190
      %v5192 = vpop.f32.mrb[0].mxu0
      %v5193 = vadd.f32 %v5083, %v5192
      %v5194 = vpop.f32.mrb[0].mxu0
      %v5195 = vadd.f32 %v5085, %v5194
      %5196 = vmatprep.mubr.f32.mxu0 0.0
      %v5197 = vand.u32 %v712, 4294901760
      %v5198 = vsub.f32 %v712, %v5197
      %5199 = vmatmul.mubr.f32.gmra.mrb[0].mxu0 %v5198
      %v5200 = vpop.f32.mrb[0].mxu0
      %v5201 = vadd.f32 %v5090, %v5200
      %v5202 = vpop.f32.mrb[0].mxu0
      %v5203 = vadd.f32 %v5092, %v5202
      %5204 = vmatprep.mubr.f32.mxu0 0.0
      %v5205 = vand.u32 %v714, 4294901760
      %v5206 = vsub.f32 %v714, %v5205
      %5207 = vmatmul.mubr.f32.gmra.mrb[0].mxu0 %v5206
      %v5208 = vpop.f32.mrb[0].mxu0
      %v5209 = vadd.f32 %v5097, %v5208
      %v5210 = vpop.f32.mrb[0].mxu0
      %v5211 = vadd.f32 %v5099, %v5210
      %5212 = vmatprep.mubr.f32.mxu0 0.0
      %v5213 = vand.u32 %v716, 4294901760
      %v5214 = vsub.f32 %v716, %v5213
      %5215 = vmatmul.mubr.f32.gmra.mrb[0].mxu0 %v5214
      %v5216 = vpop.f32.mrb[0].mxu0
      %v5217 = vadd.f32 %v5104, %v5216
      %v5218 = vpop.f32.mrb[0].mxu0
      %v5219 = vadd.f32 %v5106, %v5218
      %5220 = vdwg.mxu0
      %v5221 = vand.u32 %v642, 4294901760
      %5222 = vmatprep.subr.mxu0 %v5221
      %v5223 = vand.u32 %v641, 4294901760
      %5224 = vmatpush1.msra.mxu0 %v5223
      %v5225 = vand.u32 %v658, 4294901760
      %5226 = vmatprep.subr.mxu0 %v5225
      %v5227 = vand.u32 %v657, 4294901760
      %5228 = vmatpush1.msra.mxu0 %v5227
      %v5229 = vand.u32 %v674, 4294901760
      %5230 = vmatprep.subr.mxu0 %v5229
      %v5231 = vand.u32 %v673, 4294901760
      %5232 = vmatpush1.msra.mxu0 %v5231
      %v5233 = vand.u32 %v690, 4294901760
      %5234 = vmatprep.subr.mxu0 %v5233
      %v5235 = vand.u32 %v689, 4294901760
      %5236 = vmatpush1.msra.mxu0 %v5235
      %5237 = vmatprep.subr.mxu0 0.0
      %5238 = vmatpush1.msra.mxu0 0.0
      %5239 = vmatprep.subr.mxu0 0.0
      %5240 = vmatpush1.msra.mxu0 0.0
      %5241 = vmatprep.subr.mxu0 0.0
      %5242 = vmatpush1.msra.mxu0 0.0
      %5243 = vmatprep.subr.mxu0 0.0
      %5244 = vmatpush1.msra.mxu0 0.0
      %5245 = vmatprep.subr.mxu0 0.0
      %5246 = vmatpush1.msra.mxu0 0.0
      %5247 = vmatprep.subr.mxu0 0.0
      %5248 = vmatpush1.msra.mxu0 0.0
      %5249 = vmatprep.subr.mxu0 0.0
      %5250 = vmatpush1.msra.mxu0 0.0
      %5251 = vmatprep.subr.mxu0 0.0
      %5252 = vmatpush1.msra.mxu0 0.0
      %5253 = vmatprep.subr.mxu0 0.0
      %5254 = vmatpush1.msra.mxu0 0.0
      %5255 = vmatprep.subr.mxu0 0.0
      %5256 = vmatpush1.msra.mxu0 0.0
      %5257 = vmatprep.subr.mxu0 0.0
      %5258 = vmatpush1.msra.mxu0 0.0
      %5259 = vmatprep.subr.mxu0 0.0
      %5260 = vmatpush1.msra.mxu0 0.0
      %5261 = vmatprep.subr.mxu0 0.0
      %5262 = vmatpush1.msra.mxu0 0.0
      %5263 = vmatprep.subr.mxu0 0.0
      %5264 = vmatpush1.msra.mxu0 0.0
      %5265 = vmatprep.subr.mxu0 0.0
      %5266 = vmatpush1.msra.mxu0 0.0
      %5267 = vmatprep.subr.mxu0 0.0
      %5268 = vmatpush1.msra.mxu0 0.0
      %5269 = vmatprep.subr.mxu0 0.0
      %5270 = vmatpush1.msra.mxu0 0.0
      %5271 = vmatprep.subr.mxu0 0.0
      %5272 = vmatpush1.msra.mxu0 0.0
      %5273 = vmatprep.subr.mxu0 0.0
      %5274 = vmatpush1.msra.mxu0 0.0
      %5275 = vmatprep.subr.mxu0 0.0
      %5276 = vmatpush1.msra.mxu0 0.0
      %5277 = vmatprep.subr.mxu0 0.0
      %5278 = vmatpush1.msra.mxu0 0.0
      %5279 = vmatprep.subr.mxu0 0.0
      %5280 = vmatpush1.msra.mxu0 0.0
      %5281 = vmatprep.subr.mxu0 0.0
      %5282 = vmatpush1.msra.mxu0 0.0
      %5283 = vmatprep.subr.mxu0 0.0
      %5284 = vmatpush1.msra.mxu0 0.0
      %5285 = vmatprep.subr.mxu0 0.0
      %5286 = vmatpush1.msra.mxu0 0.0
      %5287 = vmatprep.subr.mxu0 0.0
      %5288 = vmatpush1.msra.mxu0 0.0
      %5289 = vmatprep.subr.mxu0 0.0
      %5290 = vmatpush1.msra.mxu0 0.0
      %5291 = vmatprep.subr.mxu0 0.0
      %5292 = vmatpush1.msra.mxu0 0.0
      %5293 = vmatprep.mubr.f32.mxu0 0.0
      %v5294 = vand.u32 %v710, 4294901760
      %v5295 = vsub.f32 %v710, %v5294
      %v5296 = vand.u32 %v5295, 4294901760
      %5297 = vmatmul.mubr.f32.gmra.mrb[0].mxu0 %v5296
      %v5298 = vpop.f32.mrb[0].mxu0
      %v5299 = vadd.f32 %v5193, %v5298
      %v5300 = vpop.f32.mrb[0].mxu0
      %v5301 = vadd.f32 %v5195, %v5300
      %5302 = vmatprep.mubr.f32.mxu0 0.0
      %v5303 = vand.u32 %v712, 4294901760
      %v5304 = vsub.f32 %v712, %v5303
      %v5305 = vand.u32 %v5304, 4294901760
      %5306 = vmatmul.mubr.f32.gmra.mrb[0].mxu0 %v5305
      %v5307 = vpop.f32.mrb[0].mxu0
      %v5308 = vadd.f32 %v5201, %v5307
      %v5309 = vpop.f32.mrb[0].mxu0
      %v5310 = vadd.f32 %v5203, %v5309
      %5311 = vmatprep.mubr.f32.mxu0 0.0
      %v5312 = vand.u32 %v714, 4294901760
      %v5313 = vsub.f32 %v714, %v5312
      %v5314 = vand.u32 %v5313, 4294901760
      %5315 = vmatmul.mubr.f32.gmra.mrb[0].mxu0 %v5314
      %v5316 = vpop.f32.mrb[0].mxu0
      %v5317 = vadd.f32 %v5209, %v5316
      %v5318 = vpop.f32.mrb[0].mxu0
      %v5319 = vadd.f32 %v5211, %v5318
      %5320 = vmatprep.mubr.f32.mxu0 0.0
      %v5321 = vand.u32 %v716, 4294901760
      %v5322 = vsub.f32 %v716, %v5321
      %v5323 = vand.u32 %v5322, 4294901760
      %5324 = vmatmul.mubr.f32.gmra.mrb[0].mxu0 %v5323
      %v5325 = vpop.f32.mrb[0].mxu0
      %v5326 = vadd.f32 %v5217, %v5325
      %v5327 = vpop.f32.mrb[0].mxu0
      %v5328 = vadd.f32 %v5219, %v5327
      %5329 = vdwg.mxu0
      %v5330 = vand.u32 %v642, 4294901760
      %v5331 = vsub.f32 %v642, %v5330
      %v5332 = vand.u32 %v5331, 4294901760
      %5333 = vmatprep.subr.mxu0 %v5332
      %v5334 = vand.u32 %v641, 4294901760
      %v5335 = vsub.f32 %v641, %v5334
      %v5336 = vand.u32 %v5335, 4294901760
      %5337 = vmatpush1.msra.mxu0 %v5336
      %v5338 = vand.u32 %v658, 4294901760
      %v5339 = vsub.f32 %v658, %v5338
      %v5340 = vand.u32 %v5339, 4294901760
      %5341 = vmatprep.subr.mxu0 %v5340
      %v5342 = vand.u32 %v657, 4294901760
      %v5343 = vsub.f32 %v657, %v5342
      %v5344 = vand.u32 %v5343, 4294901760
      %5345 = vmatpush1.msra.mxu0 %v5344
      %v5346 = vand.u32 %v674, 4294901760
      %v5347 = vsub.f32 %v674, %v5346
      %v5348 = vand.u32 %v5347, 4294901760
      %5349 = vmatprep.subr.mxu0 %v5348
      %v5350 = vand.u32 %v673, 4294901760
      %v5351 = vsub.f32 %v673, %v5350
      %v5352 = vand.u32 %v5351, 4294901760
      %5353 = vmatpush1.msra.mxu0 %v5352
      %v5354 = vand.u32 %v690, 4294901760
      %v5355 = vsub.f32 %v690, %v5354
      %v5356 = vand.u32 %v5355, 4294901760
      %5357 = vmatprep.subr.mxu0 %v5356
      %v5358 = vand.u32 %v689, 4294901760
      %v5359 = vsub.f32 %v689, %v5358
      %v5360 = vand.u32 %v5359, 4294901760
      %5361 = vmatpush1.msra.mxu0 %v5360
      %5362 = vmatprep.subr.mxu0 0.0
      %5363 = vmatpush1.msra.mxu0 0.0
      %5364 = vmatprep.subr.mxu0 0.0
      %5365 = vmatpush1.msra.mxu0 0.0
      %5366 = vmatprep.subr.mxu0 0.0
      %5367 = vmatpush1.msra.mxu0 0.0
      %5368 = vmatprep.subr.mxu0 0.0
      %5369 = vmatpush1.msra.mxu0 0.0
      %5370 = vmatprep.subr.mxu0 0.0
      %5371 = vmatpush1.msra.mxu0 0.0
      %5372 = vmatprep.subr.mxu0 0.0
      %5373 = vmatpush1.msra.mxu0 0.0
      %5374 = vmatprep.subr.mxu0 0.0
      %5375 = vmatpush1.msra.mxu0 0.0
      %5376 = vmatprep.subr.mxu0 0.0
      %5377 = vmatpush1.msra.mxu0 0.0
      %5378 = vmatprep.subr.mxu0 0.0
      %5379 = vmatpush1.msra.mxu0 0.0
      %5380 = vmatprep.subr.mxu0 0.0
      %5381 = vmatpush1.msra.mxu0 0.0
      %5382 = vmatprep.subr.mxu0 0.0
      %5383 = vmatpush1.msra.mxu0 0.0
      %5384 = vmatprep.subr.mxu0 0.0
      %5385 = vmatpush1.msra.mxu0 0.0
      %5386 = vmatprep.subr.mxu0 0.0
      %5387 = vmatpush1.msra.mxu0 0.0
      %5388 = vmatprep.subr.mxu0 0.0
      %5389 = vmatpush1.msra.mxu0 0.0
      %5390 = vmatprep.subr.mxu0 0.0
      %5391 = vmatpush1.msra.mxu0 0.0
      %5392 = vmatprep.subr.mxu0 0.0
      %5393 = vmatpush1.msra.mxu0 0.0
      %5394 = vmatprep.subr.mxu0 0.0
      %5395 = vmatpush1.msra.mxu0 0.0
      %5396 = vmatprep.subr.mxu0 0.0
      %5397 = vmatpush1.msra.mxu0 0.0
      %5398 = vmatprep.subr.mxu0 0.0
      %5399 = vmatpush1.msra.mxu0 0.0
      %5400 = vmatprep.subr.mxu0 0.0
      %5401 = vmatpush1.msra.mxu0 0.0
      %5402 = vmatprep.subr.mxu0 0.0
      %5403 = vmatpush1.msra.mxu0 0.0
      %5404 = vmatprep.subr.mxu0 0.0
      %5405 = vmatpush1.msra.mxu0 0.0
      %5406 = vmatprep.subr.mxu0 0.0
      %5407 = vmatpush1.msra.mxu0 0.0
      %5408 = vmatprep.subr.mxu0 0.0
      %5409 = vmatpush1.msra.mxu0 0.0
      %5410 = vmatprep.subr.mxu0 0.0
      %5411 = vmatpush1.msra.mxu0 0.0
      %5412 = vmatprep.subr.mxu0 0.0
      %5413 = vmatpush1.msra.mxu0 0.0
      %5414 = vmatprep.subr.mxu0 0.0
      %5415 = vmatpush1.msra.mxu0 0.0
      %5416 = vmatprep.subr.mxu0 0.0
      %5417 = vmatpush1.msra.mxu0 0.0
      %5418 = vmatprep.mubr.f32.mxu0 0.0
      %v5419 = vand.u32 %v710, 4294901760
      %5420 = vmatmul.mubr.f32.gmra.mrb[0].mxu0 %v5419
      %v5421 = vpop.f32.mrb[0].mxu0
      %v5422 = vadd.f32 %v5299, %v5421
      %v5423 = vpop.f32.mrb[0].mxu0
      %v5424 = vadd.f32 %v5301, %v5423
      %5425 = vmatprep.mubr.f32.mxu0 0.0
      %v5426 = vand.u32 %v712, 4294901760
      %5427 = vmatmul.mubr.f32.gmra.mrb[0].mxu0 %v5426
      %v5428 = vpop.f32.mrb[0].mxu0
      %v5429 = vadd.f32 %v5308, %v5428
      %v5430 = vpop.f32.mrb[0].mxu0
      %v5431 = vadd.f32 %v5310, %v5430
      %5432 = vmatprep.mubr.f32.mxu0 0.0
      %v5433 = vand.u32 %v714, 4294901760
      %5434 = vmatmul.mubr.f32.gmra.mrb[0].mxu0 %v5433
      %v5435 = vpop.f32.mrb[0].mxu0
      %v5436 = vadd.f32 %v5317, %v5435
      %v5437 = vpop.f32.mrb[0].mxu0
      %v5438 = vadd.f32 %v5319, %v5437
      %5439 = vmatprep.mubr.f32.mxu0 0.0
      %v5440 = vand.u32 %v716, 4294901760
      %5441 = vmatmul.mubr.f32.gmra.mrb[0].mxu0 %v5440
      %v5442 = vpop.f32.mrb[0].mxu0
      %v5443 = vadd.f32 %v5326, %v5442
      %v5444 = vpop.f32.mrb[0].mxu0
      %v5445 = vadd.f32 %v5328, %v5444
      %5446 = vdwg.mxu0
      %v5447 = vand.u32 %v642, 4294901760
      %5448 = vmatprep.subr.mxu0 %v5447
      %v5449 = vand.u32 %v641, 4294901760
      %5450 = vmatpush1.msra.mxu0 %v5449
      %v5451 = vand.u32 %v658, 4294901760
      %5452 = vmatprep.subr.mxu0 %v5451
      %v5453 = vand.u32 %v657, 4294901760
      %5454 = vmatpush1.msra.mxu0 %v5453
      %v5455 = vand.u32 %v674, 4294901760
      %5456 = vmatprep.subr.mxu0 %v5455
      %v5457 = vand.u32 %v673, 4294901760
      %5458 = vmatpush1.msra.mxu0 %v5457
      %v5459 = vand.u32 %v690, 4294901760
      %5460 = vmatprep.subr.mxu0 %v5459
      %v5461 = vand.u32 %v689, 4294901760
      %5462 = vmatpush1.msra.mxu0 %v5461
      %5463 = vmatprep.subr.mxu0 0.0
      %5464 = vmatpush1.msra.mxu0 0.0
      %5465 = vmatprep.subr.mxu0 0.0
      %5466 = vmatpush1.msra.mxu0 0.0
      %5467 = vmatprep.subr.mxu0 0.0
      %5468 = vmatpush1.msra.mxu0 0.0
      %5469 = vmatprep.subr.mxu0 0.0
      %5470 = vmatpush1.msra.mxu0 0.0
      %5471 = vmatprep.subr.mxu0 0.0
      %5472 = vmatpush1.msra.mxu0 0.0
      %5473 = vmatprep.subr.mxu0 0.0
      %5474 = vmatpush1.msra.mxu0 0.0
      %5475 = vmatprep.subr.mxu0 0.0
      %5476 = vmatpush1.msra.mxu0 0.0
      %5477 = vmatprep.subr.mxu0 0.0
      %5478 = vmatpush1.msra.mxu0 0.0
      %5479 = vmatprep.subr.mxu0 0.0
      %5480 = vmatpush1.msra.mxu0 0.0
      %5481 = vmatprep.subr.mxu0 0.0
      %5482 = vmatpush1.msra.mxu0 0.0
      %5483 = vmatprep.subr.mxu0 0.0
      %5484 = vmatpush1.msra.mxu0 0.0
      %5485 = vmatprep.subr.mxu0 0.0
      %5486 = vmatpush1.msra.mxu0 0.0
      %5487 = vmatprep.subr.mxu0 0.0
      %5488 = vmatpush1.msra.mxu0 0.0
      %5489 = vmatprep.subr.mxu0 0.0
      %5490 = vmatpush1.msra.mxu0 0.0
      %5491 = vmatprep.subr.mxu0 0.0
      %5492 = vmatpush1.msra.mxu0 0.0
      %5493 = vmatprep.subr.mxu0 0.0
      %5494 = vmatpush1.msra.mxu0 0.0
      %5495 = vmatprep.subr.mxu0 0.0
      %5496 = vmatpush1.msra.mxu0 0.0
      %5497 = vmatprep.subr.mxu0 0.0
      %5498 = vmatpush1.msra.mxu0 0.0
      %5499 = vmatprep.subr.mxu0 0.0
      %5500 = vmatpush1.msra.mxu0 0.0
      %5501 = vmatprep.subr.mxu0 0.0
      %5502 = vmatpush1.msra.mxu0 0.0
      %5503 = vmatprep.subr.mxu0 0.0
      %5504 = vmatpush1.msra.mxu0 0.0
      %5505 = vmatprep.subr.mxu0 0.0
      %5506 = vmatpush1.msra.mxu0 0.0
      %5507 = vmatprep.subr.mxu0 0.0
      %5508 = vmatpush1.msra.mxu0 0.0
      %5509 = vmatprep.subr.mxu0 0.0
      %5510 = vmatpush1.msra.mxu0 0.0
      %5511 = vmatprep.subr.mxu0 0.0
      %5512 = vmatpush1.msra.mxu0 0.0
      %5513 = vmatprep.subr.mxu0 0.0
      %5514 = vmatpush1.msra.mxu0 0.0
      %5515 = vmatprep.subr.mxu0 0.0
      %5516 = vmatpush1.msra.mxu0 0.0
      %5517 = vmatprep.subr.mxu0 0.0
      %5518 = vmatpush1.msra.mxu0 0.0
      %5519 = vmatprep.mubr.f32.mxu0 0.0
      %v5520 = vand.u32 %v710, 4294901760
      %5521 = vmatmul.mubr.f32.gmra.mrb[0].mxu0 %v5520
      %v5522 = vpop.f32.mrb[0].mxu0
      %v5523 = vadd.f32 %v5422, %v5522
      %v5524 = vpop.f32.mrb[0].mxu0
      %v5525 = vadd.f32 %v5424, %v5524
      %5526 = vmatprep.mubr.f32.mxu0 0.0
      %v5527 = vand.u32 %v712, 4294901760
      %5528 = vmatmul.mubr.f32.gmra.mrb[0].mxu0 %v5527
      %v5529 = vpop.f32.mrb[0].mxu0
      %v5530 = vadd.f32 %v5429, %v5529
      %v5531 = vpop.f32.mrb[0].mxu0
      %v5532 = vadd.f32 %v5431, %v5531
      %5533 = vmatprep.mubr.f32.mxu0 0.0
      %v5534 = vand.u32 %v714, 4294901760
      %5535 = vmatmul.mubr.f32.gmra.mrb[0].mxu0 %v5534
      %v5536 = vpop.f32.mrb[0].mxu0
      %v5537 = vadd.f32 %v5436, %v5536
      %v5538 = vpop.f32.mrb[0].mxu0
      %v5539 = vadd.f32 %v5438, %v5538
      %5540 = vmatprep.mubr.f32.mxu0 0.0
      %v5541 = vand.u32 %v716, 4294901760
      %5542 = vmatmul.mubr.f32.gmra.mrb[0].mxu0 %v5541
      %v5543 = vpop.f32.mrb[0].mxu0
      %v5544 = vadd.f32 %v5443, %v5543
      %v5545 = vpop.f32.mrb[0].mxu0
      %v5546 = vadd.f32 %v5445, %v5545
      %5547 = vdwg.mxu0
      %v5548 = vand.u32 %v644, 4294901760
      %5549 = vmatprep.subr.mxu0 %v5548
      %v5550 = vand.u32 %v643, 4294901760
      %5551 = vmatpush1.msra.mxu0 %v5550
      %v5552 = vand.u32 %v660, 4294901760
      %5553 = vmatprep.subr.mxu0 %v5552
      %v5554 = vand.u32 %v659, 4294901760
      %5555 = vmatpush1.msra.mxu0 %v5554
      %v5556 = vand.u32 %v676, 4294901760
      %5557 = vmatprep.subr.mxu0 %v5556
      %v5558 = vand.u32 %v675, 4294901760
      %5559 = vmatpush1.msra.mxu0 %v5558
      %v5560 = vand.u32 %v692, 4294901760
      %5561 = vmatprep.subr.mxu0 %v5560
      %v5562 = vand.u32 %v691, 4294901760
      %5563 = vmatpush1.msra.mxu0 %v5562
      %5564 = vmatprep.subr.mxu0 0.0
      %5565 = vmatpush1.msra.mxu0 0.0
      %5566 = vmatprep.subr.mxu0 0.0
      %5567 = vmatpush1.msra.mxu0 0.0
      %5568 = vmatprep.subr.mxu0 0.0
      %5569 = vmatpush1.msra.mxu0 0.0
      %5570 = vmatprep.subr.mxu0 0.0
      %5571 = vmatpush1.msra.mxu0 0.0
      %5572 = vmatprep.subr.mxu0 0.0
      %5573 = vmatpush1.msra.mxu0 0.0
      %5574 = vmatprep.subr.mxu0 0.0
      %5575 = vmatpush1.msra.mxu0 0.0
      %5576 = vmatprep.subr.mxu0 0.0
      %5577 = vmatpush1.msra.mxu0 0.0
      %5578 = vmatprep.subr.mxu0 0.0
      %5579 = vmatpush1.msra.mxu0 0.0
      %5580 = vmatprep.subr.mxu0 0.0
      %5581 = vmatpush1.msra.mxu0 0.0
      %5582 = vmatprep.subr.mxu0 0.0
      %5583 = vmatpush1.msra.mxu0 0.0
      %5584 = vmatprep.subr.mxu0 0.0
      %5585 = vmatpush1.msra.mxu0 0.0
      %5586 = vmatprep.subr.mxu0 0.0
      %5587 = vmatpush1.msra.mxu0 0.0
      %5588 = vmatprep.subr.mxu0 0.0
      %5589 = vmatpush1.msra.mxu0 0.0
      %5590 = vmatprep.subr.mxu0 0.0
      %5591 = vmatpush1.msra.mxu0 0.0
      %5592 = vmatprep.subr.mxu0 0.0
      %5593 = vmatpush1.msra.mxu0 0.0
      %5594 = vmatprep.subr.mxu0 0.0
      %5595 = vmatpush1.msra.mxu0 0.0
      %5596 = vmatprep.subr.mxu0 0.0
      %5597 = vmatpush1.msra.mxu0 0.0
      %5598 = vmatprep.subr.mxu0 0.0
      %5599 = vmatpush1.msra.mxu0 0.0
      %5600 = vmatprep.subr.mxu0 0.0
      %5601 = vmatpush1.msra.mxu0 0.0
      %5602 = vmatprep.subr.mxu0 0.0
      %5603 = vmatpush1.msra.mxu0 0.0
      %5604 = vmatprep.subr.mxu0 0.0
      %5605 = vmatpush1.msra.mxu0 0.0
      %5606 = vmatprep.subr.mxu0 0.0
      %5607 = vmatpush1.msra.mxu0 0.0
      %5608 = vmatprep.subr.mxu0 0.0
      %5609 = vmatpush1.msra.mxu0 0.0
      %5610 = vmatprep.subr.mxu0 0.0
      %5611 = vmatpush1.msra.mxu0 0.0
      %5612 = vmatprep.subr.mxu0 0.0
      %5613 = vmatpush1.msra.mxu0 0.0
      %5614 = vmatprep.subr.mxu0 0.0
      %5615 = vmatpush1.msra.mxu0 0.0
      %5616 = vmatprep.subr.mxu0 0.0
      %5617 = vmatpush1.msra.mxu0 0.0
      %5618 = vmatprep.subr.mxu0 0.0
      %5619 = vmatpush1.msra.mxu0 0.0
      %5620 = vmatprep.mubr.f32.mxu0 0.0
      %v5621 = vand.u32 %v710, 4294901760
      %v5622 = vsub.f32 %v710, %v5621
      %v5623 = vand.u32 %v5622, 4294901760
      %v5624 = vsub.f32 %v5622, %v5623
      %v5625 = vand.u32 %v5624, 4294901760
      %5626 = vmatmul.mubr.f32.gmra.mrb[0].mxu0 %v5625
      %v5627 = vpop.f32.mrb[0].mxu0
      %v5628 = vadd.f32 %v695, %v5627
      %v5629 = vpop.f32.mrb[0].mxu0
      %v5630 = vadd.f32 %v695, %v5629
      %5631 = vmatprep.mubr.f32.mxu0 0.0
      %v5632 = vand.u32 %v712, 4294901760
      %v5633 = vsub.f32 %v712, %v5632
      %v5634 = vand.u32 %v5633, 4294901760
      %v5635 = vsub.f32 %v5633, %v5634
      %v5636 = vand.u32 %v5635, 4294901760
      %5637 = vmatmul.mubr.f32.gmra.mrb[0].mxu0 %v5636
      %v5638 = vpop.f32.mrb[0].mxu0
      %v5639 = vadd.f32 %v699, %v5638
      %v5640 = vpop.f32.mrb[0].mxu0
      %v5641 = vadd.f32 %v699, %v5640
      %5642 = vmatprep.mubr.f32.mxu0 0.0
      %v5643 = vand.u32 %v714, 4294901760
      %v5644 = vsub.f32 %v714, %v5643
      %v5645 = vand.u32 %v5644, 4294901760
      %v5646 = vsub.f32 %v5644, %v5645
      %v5647 = vand.u32 %v5646, 4294901760
      %5648 = vmatmul.mubr.f32.gmra.mrb[0].mxu0 %v5647
      %v5649 = vpop.f32.mrb[0].mxu0
      %v5650 = vadd.f32 %v703, %v5649
      %v5651 = vpop.f32.mrb[0].mxu0
      %v5652 = vadd.f32 %v703, %v5651
      %5653 = vmatprep.mubr.f32.mxu0 0.0
      %v5654 = vand.u32 %v716, 4294901760
      %v5655 = vsub.f32 %v716, %v5654
      %v5656 = vand.u32 %v5655, 4294901760
      %v5657 = vsub.f32 %v5655, %v5656
      %v5658 = vand.u32 %v5657, 4294901760
      %5659 = vmatmul.mubr.f32.gmra.mrb[0].mxu0 %v5658
      %v5660 = vpop.f32.mrb[0].mxu0
      %v5661 = vadd.f32 %v707, %v5660
      %v5662 = vpop.f32.mrb[0].mxu0
      %v5663 = vadd.f32 %v707, %v5662
      %5664 = vdwg.mxu0
      %v5665 = vand.u32 %v644, 4294901760
      %v5666 = vsub.f32 %v644, %v5665
      %v5667 = vand.u32 %v5666, 4294901760
      %v5668 = vsub.f32 %v5666, %v5667
      %v5669 = vand.u32 %v5668, 4294901760
      %5670 = vmatprep.subr.mxu0 %v5669
      %v5671 = vand.u32 %v643, 4294901760
      %v5672 = vsub.f32 %v643, %v5671
      %v5673 = vand.u32 %v5672, 4294901760
      %v5674 = vsub.f32 %v5672, %v5673
      %v5675 = vand.u32 %v5674, 4294901760
      %5676 = vmatpush1.msra.mxu0 %v5675
      %v5677 = vand.u32 %v660, 4294901760
      %v5678 = vsub.f32 %v660, %v5677
      %v5679 = vand.u32 %v5678, 4294901760
      %v5680 = vsub.f32 %v5678, %v5679
      %v5681 = vand.u32 %v5680, 4294901760
      %5682 = vmatprep.subr.mxu0 %v5681
      %v5683 = vand.u32 %v659, 4294901760
      %v5684 = vsub.f32 %v659, %v5683
      %v5685 = vand.u32 %v5684, 4294901760
      %v5686 = vsub.f32 %v5684, %v5685
      %v5687 = vand.u32 %v5686, 4294901760
      %5688 = vmatpush1.msra.mxu0 %v5687
      %v5689 = vand.u32 %v676, 4294901760
      %v5690 = vsub.f32 %v676, %v5689
      %v5691 = vand.u32 %v5690, 4294901760
      %v5692 = vsub.f32 %v5690, %v5691
      %v5693 = vand.u32 %v5692, 4294901760
      %5694 = vmatprep.subr.mxu0 %v5693
      %v5695 = vand.u32 %v675, 4294901760
      %v5696 = vsub.f32 %v675, %v5695
      %v5697 = vand.u32 %v5696, 4294901760
      %v5698 = vsub.f32 %v5696, %v5697
      %v5699 = vand.u32 %v5698, 4294901760
      %5700 = vmatpush1.msra.mxu0 %v5699
      %v5701 = vand.u32 %v692, 4294901760
      %v5702 = vsub.f32 %v692, %v5701
      %v5703 = vand.u32 %v5702, 4294901760
      %v5704 = vsub.f32 %v5702, %v5703
      %v5705 = vand.u32 %v5704, 4294901760
      %5706 = vmatprep.subr.mxu0 %v5705
      %v5707 = vand.u32 %v691, 4294901760
      %v5708 = vsub.f32 %v691, %v5707
      %v5709 = vand.u32 %v5708, 4294901760
      %v5710 = vsub.f32 %v5708, %v5709
      %v5711 = vand.u32 %v5710, 4294901760
      %5712 = vmatpush1.msra.mxu0 %v5711
      %5713 = vmatprep.subr.mxu0 0.0
      %5714 = vmatpush1.msra.mxu0 0.0
      %5715 = vmatprep.subr.mxu0 0.0
      %5716 = vmatpush1.msra.mxu0 0.0
      %5717 = vmatprep.subr.mxu0 0.0
      %5718 = vmatpush1.msra.mxu0 0.0
      %5719 = vmatprep.subr.mxu0 0.0
      %5720 = vmatpush1.msra.mxu0 0.0
      %5721 = vmatprep.subr.mxu0 0.0
      %5722 = vmatpush1.msra.mxu0 0.0
      %5723 = vmatprep.subr.mxu0 0.0
      %5724 = vmatpush1.msra.mxu0 0.0
      %5725 = vmatprep.subr.mxu0 0.0
      %5726 = vmatpush1.msra.mxu0 0.0
      %5727 = vmatprep.subr.mxu0 0.0
      %5728 = vmatpush1.msra.mxu0 0.0
      %5729 = vmatprep.subr.mxu0 0.0
      %5730 = vmatpush1.msra.mxu0 0.0
      %5731 = vmatprep.subr.mxu0 0.0
      %5732 = vmatpush1.msra.mxu0 0.0
      %5733 = vmatprep.subr.mxu0 0.0
      %5734 = vmatpush1.msra.mxu0 0.0
      %5735 = vmatprep.subr.mxu0 0.0
      %5736 = vmatpush1.msra.mxu0 0.0
      %5737 = vmatprep.subr.mxu0 0.0
      %5738 = vmatpush1.msra.mxu0 0.0
      %5739 = vmatprep.subr.mxu0 0.0
      %5740 = vmatpush1.msra.mxu0 0.0
      %5741 = vmatprep.subr.mxu0 0.0
      %5742 = vmatpush1.msra.mxu0 0.0
      %5743 = vmatprep.subr.mxu0 0.0
      %5744 = vmatpush1.msra.mxu0 0.0
      %5745 = vmatprep.subr.mxu0 0.0
      %5746 = vmatpush1.msra.mxu0 0.0
      %5747 = vmatprep.subr.mxu0 0.0
      %5748 = vmatpush1.msra.mxu0 0.0
      %5749 = vmatprep.subr.mxu0 0.0
      %5750 = vmatpush1.msra.mxu0 0.0
      %5751 = vmatprep.subr.mxu0 0.0
      %5752 = vmatpush1.msra.mxu0 0.0
      %5753 = vmatprep.subr.mxu0 0.0
      %5754 = vmatpush1.msra.mxu0 0.0
      %5755 = vmatprep.subr.mxu0 0.0
      %5756 = vmatpush1.msra.mxu0 0.0
      %5757 = vmatprep.subr.mxu0 0.0
      %5758 = vmatpush1.msra.mxu0 0.0
      %5759 = vmatprep.subr.mxu0 0.0
      %5760 = vmatpush1.msra.mxu0 0.0
      %5761 = vmatprep.subr.mxu0 0.0
      %5762 = vmatpush1.msra.mxu0 0.0
      %5763 = vmatprep.subr.mxu0 0.0
      %5764 = vmatpush1.msra.mxu0 0.0
      %5765 = vmatprep.subr.mxu0 0.0
      %5766 = vmatpush1.msra.mxu0 0.0
      %5767 = vmatprep.subr.mxu0 0.0
      %5768 = vmatpush1.msra.mxu0 0.0
      %5769 = vmatprep.mubr.f32.mxu0 0.0
      %v5770 = vand.u32 %v710, 4294901760
      %5771 = vmatmul.mubr.f32.gmra.mrb[0].mxu0 %v5770
      %v5772 = vpop.f32.mrb[0].mxu0
      %v5773 = vadd.f32 %v5628, %v5772
      %v5774 = vpop.f32.mrb[0].mxu0
      %v5775 = vadd.f32 %v5630, %v5774
      %5776 = vmatprep.mubr.f32.mxu0 0.0
      %v5777 = vand.u32 %v712, 4294901760
      %5778 = vmatmul.mubr.f32.gmra.mrb[0].mxu0 %v5777
      %v5779 = vpop.f32.mrb[0].mxu0
      %v5780 = vadd.f32 %v5639, %v5779
      %v5781 = vpop.f32.mrb[0].mxu0
      %v5782 = vadd.f32 %v5641, %v5781
      %5783 = vmatprep.mubr.f32.mxu0 0.0
      %v5784 = vand.u32 %v714, 4294901760
      %5785 = vmatmul.mubr.f32.gmra.mrb[0].mxu0 %v5784
      %v5786 = vpop.f32.mrb[0].mxu0
      %v5787 = vadd.f32 %v5650, %v5786
      %v5788 = vpop.f32.mrb[0].mxu0
      %v5789 = vadd.f32 %v5652, %v5788
      %5790 = vmatprep.mubr.f32.mxu0 0.0
      %v5791 = vand.u32 %v716, 4294901760
      %5792 = vmatmul.mubr.f32.gmra.mrb[0].mxu0 %v5791
      %v5793 = vpop.f32.mrb[0].mxu0
      %v5794 = vadd.f32 %v5661, %v5793
      %v5795 = vpop.f32.mrb[0].mxu0
      %v5796 = vadd.f32 %v5663, %v5795
      %5797 = vdwg.mxu0
      %v5798 = vand.u32 %v644, 4294901760
      %v5799 = vsub.f32 %v644, %v5798
      %5800 = vmatprep.subr.mxu0 %v5799
      %v5801 = vand.u32 %v643, 4294901760
      %v5802 = vsub.f32 %v643, %v5801
      %5803 = vmatpush1.msra.mxu0 %v5802
      %v5804 = vand.u32 %v660, 4294901760
      %v5805 = vsub.f32 %v660, %v5804
      %5806 = vmatprep.subr.mxu0 %v5805
      %v5807 = vand.u32 %v659, 4294901760
      %v5808 = vsub.f32 %v659, %v5807
      %5809 = vmatpush1.msra.mxu0 %v5808
      %v5810 = vand.u32 %v676, 4294901760
      %v5811 = vsub.f32 %v676, %v5810
      %5812 = vmatprep.subr.mxu0 %v5811
      %v5813 = vand.u32 %v675, 4294901760
      %v5814 = vsub.f32 %v675, %v5813
      %5815 = vmatpush1.msra.mxu0 %v5814
      %v5816 = vand.u32 %v692, 4294901760
      %v5817 = vsub.f32 %v692, %v5816
      %5818 = vmatprep.subr.mxu0 %v5817
      %v5819 = vand.u32 %v691, 4294901760
      %v5820 = vsub.f32 %v691, %v5819
      %5821 = vmatpush1.msra.mxu0 %v5820
      %5822 = vmatprep.subr.mxu0 0.0
      %5823 = vmatpush1.msra.mxu0 0.0
      %5824 = vmatprep.subr.mxu0 0.0
      %5825 = vmatpush1.msra.mxu0 0.0
      %5826 = vmatprep.subr.mxu0 0.0
      %5827 = vmatpush1.msra.mxu0 0.0
      %5828 = vmatprep.subr.mxu0 0.0
      %5829 = vmatpush1.msra.mxu0 0.0
      %5830 = vmatprep.subr.mxu0 0.0
      %5831 = vmatpush1.msra.mxu0 0.0
      %5832 = vmatprep.subr.mxu0 0.0
      %5833 = vmatpush1.msra.mxu0 0.0
      %5834 = vmatprep.subr.mxu0 0.0
      %5835 = vmatpush1.msra.mxu0 0.0
      %5836 = vmatprep.subr.mxu0 0.0
      %5837 = vmatpush1.msra.mxu0 0.0
      %5838 = vmatprep.subr.mxu0 0.0
      %5839 = vmatpush1.msra.mxu0 0.0
      %5840 = vmatprep.subr.mxu0 0.0
      %5841 = vmatpush1.msra.mxu0 0.0
      %5842 = vmatprep.subr.mxu0 0.0
      %5843 = vmatpush1.msra.mxu0 0.0
      %5844 = vmatprep.subr.mxu0 0.0
      %5845 = vmatpush1.msra.mxu0 0.0
      %5846 = vmatprep.subr.mxu0 0.0
      %5847 = vmatpush1.msra.mxu0 0.0
      %5848 = vmatprep.subr.mxu0 0.0
      %5849 = vmatpush1.msra.mxu0 0.0
      %5850 = vmatprep.subr.mxu0 0.0
      %5851 = vmatpush1.msra.mxu0 0.0
      %5852 = vmatprep.subr.mxu0 0.0
      %5853 = vmatpush1.msra.mxu0 0.0
      %5854 = vmatprep.subr.mxu0 0.0
      %5855 = vmatpush1.msra.mxu0 0.0
      %5856 = vmatprep.subr.mxu0 0.0
      %5857 = vmatpush1.msra.mxu0 0.0
      %5858 = vmatprep.subr.mxu0 0.0
      %5859 = vmatpush1.msra.mxu0 0.0
      %5860 = vmatprep.subr.mxu0 0.0
      %5861 = vmatpush1.msra.mxu0 0.0
      %5862 = vmatprep.subr.mxu0 0.0
      %5863 = vmatpush1.msra.mxu0 0.0
      %5864 = vmatprep.subr.mxu0 0.0
      %5865 = vmatpush1.msra.mxu0 0.0
      %5866 = vmatprep.subr.mxu0 0.0
      %5867 = vmatpush1.msra.mxu0 0.0
      %5868 = vmatprep.subr.mxu0 0.0
      %5869 = vmatpush1.msra.mxu0 0.0
      %5870 = vmatprep.subr.mxu0 0.0
      %5871 = vmatpush1.msra.mxu0 0.0
      %5872 = vmatprep.subr.mxu0 0.0
      %5873 = vmatpush1.msra.mxu0 0.0
      %5874 = vmatprep.subr.mxu0 0.0
      %5875 = vmatpush1.msra.mxu0 0.0
      %5876 = vmatprep.subr.mxu0 0.0
      %5877 = vmatpush1.msra.mxu0 0.0
      %5878 = vmatprep.mubr.f32.mxu0 0.0
      %v5879 = vand.u32 %v710, 4294901760
      %v5880 = vsub.f32 %v710, %v5879
      %5881 = vmatmul.mubr.f32.gmra.mrb[0].mxu0 %v5880
      %v5882 = vpop.f32.mrb[0].mxu0
      %v5883 = vadd.f32 %v5773, %v5882
      %v5884 = vpop.f32.mrb[0].mxu0
      %v5885 = vadd.f32 %v5775, %v5884
      %5886 = vmatprep.mubr.f32.mxu0 0.0
      %v5887 = vand.u32 %v712, 4294901760
      %v5888 = vsub.f32 %v712, %v5887
      %5889 = vmatmul.mubr.f32.gmra.mrb[0].mxu0 %v5888
      %v5890 = vpop.f32.mrb[0].mxu0
      %v5891 = vadd.f32 %v5780, %v5890
      %v5892 = vpop.f32.mrb[0].mxu0
      %v5893 = vadd.f32 %v5782, %v5892
      %5894 = vmatprep.mubr.f32.mxu0 0.0
      %v5895 = vand.u32 %v714, 4294901760
      %v5896 = vsub.f32 %v714, %v5895
      %5897 = vmatmul.mubr.f32.gmra.mrb[0].mxu0 %v5896
      %v5898 = vpop.f32.mrb[0].mxu0
      %v5899 = vadd.f32 %v5787, %v5898
      %v5900 = vpop.f32.mrb[0].mxu0
      %v5901 = vadd.f32 %v5789, %v5900
      %5902 = vmatprep.mubr.f32.mxu0 0.0
      %v5903 = vand.u32 %v716, 4294901760
      %v5904 = vsub.f32 %v716, %v5903
      %5905 = vmatmul.mubr.f32.gmra.mrb[0].mxu0 %v5904
      %v5906 = vpop.f32.mrb[0].mxu0
      %v5907 = vadd.f32 %v5794, %v5906
      %v5908 = vpop.f32.mrb[0].mxu0
      %v5909 = vadd.f32 %v5796, %v5908
      %5910 = vdwg.mxu0
      %v5911 = vand.u32 %v644, 4294901760
      %5912 = vmatprep.subr.mxu0 %v5911
      %v5913 = vand.u32 %v643, 4294901760
      %5914 = vmatpush1.msra.mxu0 %v5913
      %v5915 = vand.u32 %v660, 4294901760
      %5916 = vmatprep.subr.mxu0 %v5915
      %v5917 = vand.u32 %v659, 4294901760
      %5918 = vmatpush1.msra.mxu0 %v5917
      %v5919 = vand.u32 %v676, 4294901760
      %5920 = vmatprep.subr.mxu0 %v5919
      %v5921 = vand.u32 %v675, 4294901760
      %5922 = vmatpush1.msra.mxu0 %v5921
      %v5923 = vand.u32 %v692, 4294901760
      %5924 = vmatprep.subr.mxu0 %v5923
      %v5925 = vand.u32 %v691, 4294901760
      %5926 = vmatpush1.msra.mxu0 %v5925
      %5927 = vmatprep.subr.mxu0 0.0
      %5928 = vmatpush1.msra.mxu0 0.0
      %5929 = vmatprep.subr.mxu0 0.0
      %5930 = vmatpush1.msra.mxu0 0.0
      %5931 = vmatprep.subr.mxu0 0.0
      %5932 = vmatpush1.msra.mxu0 0.0
      %5933 = vmatprep.subr.mxu0 0.0
      %5934 = vmatpush1.msra.mxu0 0.0
      %5935 = vmatprep.subr.mxu0 0.0
      %5936 = vmatpush1.msra.mxu0 0.0
      %5937 = vmatprep.subr.mxu0 0.0
      %5938 = vmatpush1.msra.mxu0 0.0
      %5939 = vmatprep.subr.mxu0 0.0
      %5940 = vmatpush1.msra.mxu0 0.0
      %5941 = vmatprep.subr.mxu0 0.0
      %5942 = vmatpush1.msra.mxu0 0.0
      %5943 = vmatprep.subr.mxu0 0.0
      %5944 = vmatpush1.msra.mxu0 0.0
      %5945 = vmatprep.subr.mxu0 0.0
      %5946 = vmatpush1.msra.mxu0 0.0
      %5947 = vmatprep.subr.mxu0 0.0
      %5948 = vmatpush1.msra.mxu0 0.0
      %5949 = vmatprep.subr.mxu0 0.0
      %5950 = vmatpush1.msra.mxu0 0.0
      %5951 = vmatprep.subr.mxu0 0.0
      %5952 = vmatpush1.msra.mxu0 0.0
      %5953 = vmatprep.subr.mxu0 0.0
      %5954 = vmatpush1.msra.mxu0 0.0
      %5955 = vmatprep.subr.mxu0 0.0
      %5956 = vmatpush1.msra.mxu0 0.0
      %5957 = vmatprep.subr.mxu0 0.0
      %5958 = vmatpush1.msra.mxu0 0.0
      %5959 = vmatprep.subr.mxu0 0.0
      %5960 = vmatpush1.msra.mxu0 0.0
      %5961 = vmatprep.subr.mxu0 0.0
      %5962 = vmatpush1.msra.mxu0 0.0
      %5963 = vmatprep.subr.mxu0 0.0
      %5964 = vmatpush1.msra.mxu0 0.0
      %5965 = vmatprep.subr.mxu0 0.0
      %5966 = vmatpush1.msra.mxu0 0.0
      %5967 = vmatprep.subr.mxu0 0.0
      %5968 = vmatpush1.msra.mxu0 0.0
      %5969 = vmatprep.subr.mxu0 0.0
      %5970 = vmatpush1.msra.mxu0 0.0
      %5971 = vmatprep.subr.mxu0 0.0
      %5972 = vmatpush1.msra.mxu0 0.0
      %5973 = vmatprep.subr.mxu0 0.0
      %5974 = vmatpush1.msra.mxu0 0.0
      %5975 = vmatprep.subr.mxu0 0.0
      %5976 = vmatpush1.msra.mxu0 0.0
      %5977 = vmatprep.subr.mxu0 0.0
      %5978 = vmatpush1.msra.mxu0 0.0
      %5979 = vmatprep.subr.mxu0 0.0
      %5980 = vmatpush1.msra.mxu0 0.0
      %5981 = vmatprep.subr.mxu0 0.0
      %5982 = vmatpush1.msra.mxu0 0.0
      %5983 = vmatprep.mubr.f32.mxu0 0.0
      %v5984 = vand.u32 %v710, 4294901760
      %v5985 = vsub.f32 %v710, %v5984
      %v5986 = vand.u32 %v5985, 4294901760
      %5987 = vmatmul.mubr.f32.gmra.mrb[0].mxu0 %v5986
      %v5988 = vpop.f32.mrb[0].mxu0
      %v5989 = vadd.f32 %v5883, %v5988
      %v5990 = vpop.f32.mrb[0].mxu0
      %v5991 = vadd.f32 %v5885, %v5990
      %5992 = vmatprep.mubr.f32.mxu0 0.0
      %v5993 = vand.u32 %v712, 4294901760
      %v5994 = vsub.f32 %v712, %v5993
      %v5995 = vand.u32 %v5994, 4294901760
      %5996 = vmatmul.mubr.f32.gmra.mrb[0].mxu0 %v5995
      %v5997 = vpop.f32.mrb[0].mxu0
      %v5998 = vadd.f32 %v5891, %v5997
      %v5999 = vpop.f32.mrb[0].mxu0
      %v6000 = vadd.f32 %v5893, %v5999
      %6001 = vmatprep.mubr.f32.mxu0 0.0
      %v6002 = vand.u32 %v714, 4294901760
      %v6003 = vsub.f32 %v714, %v6002
      %v6004 = vand.u32 %v6003, 4294901760
      %6005 = vmatmul.mubr.f32.gmra.mrb[0].mxu0 %v6004
      %v6006 = vpop.f32.mrb[0].mxu0
      %v6007 = vadd.f32 %v5899, %v6006
      %v6008 = vpop.f32.mrb[0].mxu0
      %v6009 = vadd.f32 %v5901, %v6008
      %6010 = vmatprep.mubr.f32.mxu0 0.0
      %v6011 = vand.u32 %v716, 4294901760
      %v6012 = vsub.f32 %v716, %v6011
      %v6013 = vand.u32 %v6012, 4294901760
      %6014 = vmatmul.mubr.f32.gmra.mrb[0].mxu0 %v6013
      %v6015 = vpop.f32.mrb[0].mxu0
      %v6016 = vadd.f32 %v5907, %v6015
      %v6017 = vpop.f32.mrb[0].mxu0
      %v6018 = vadd.f32 %v5909, %v6017
      %6019 = vdwg.mxu0
      %v6020 = vand.u32 %v644, 4294901760
      %v6021 = vsub.f32 %v644, %v6020
      %v6022 = vand.u32 %v6021, 4294901760
      %6023 = vmatprep.subr.mxu0 %v6022
      %v6024 = vand.u32 %v643, 4294901760
      %v6025 = vsub.f32 %v643, %v6024
      %v6026 = vand.u32 %v6025, 4294901760
      %6027 = vmatpush1.msra.mxu0 %v6026
      %v6028 = vand.u32 %v660, 4294901760
      %v6029 = vsub.f32 %v660, %v6028
      %v6030 = vand.u32 %v6029, 4294901760
      %6031 = vmatprep.subr.mxu0 %v6030
      %v6032 = vand.u32 %v659, 4294901760
      %v6033 = vsub.f32 %v659, %v6032
      %v6034 = vand.u32 %v6033, 4294901760
      %6035 = vmatpush1.msra.mxu0 %v6034
      %v6036 = vand.u32 %v676, 4294901760
      %v6037 = vsub.f32 %v676, %v6036
      %v6038 = vand.u32 %v6037, 4294901760
      %6039 = vmatprep.subr.mxu0 %v6038
      %v6040 = vand.u32 %v675, 4294901760
      %v6041 = vsub.f32 %v675, %v6040
      %v6042 = vand.u32 %v6041, 4294901760
      %6043 = vmatpush1.msra.mxu0 %v6042
      %v6044 = vand.u32 %v692, 4294901760
      %v6045 = vsub.f32 %v692, %v6044
      %v6046 = vand.u32 %v6045, 4294901760
      %6047 = vmatprep.subr.mxu0 %v6046
      %v6048 = vand.u32 %v691, 4294901760
      %v6049 = vsub.f32 %v691, %v6048
      %v6050 = vand.u32 %v6049, 4294901760
      %6051 = vmatpush1.msra.mxu0 %v6050
      %6052 = vmatprep.subr.mxu0 0.0
      %6053 = vmatpush1.msra.mxu0 0.0
      %6054 = vmatprep.subr.mxu0 0.0
      %6055 = vmatpush1.msra.mxu0 0.0
      %6056 = vmatprep.subr.mxu0 0.0
      %6057 = vmatpush1.msra.mxu0 0.0
      %6058 = vmatprep.subr.mxu0 0.0
      %6059 = vmatpush1.msra.mxu0 0.0
      %6060 = vmatprep.subr.mxu0 0.0
      %6061 = vmatpush1.msra.mxu0 0.0
      %6062 = vmatprep.subr.mxu0 0.0
      %6063 = vmatpush1.msra.mxu0 0.0
      %6064 = vmatprep.subr.mxu0 0.0
      %6065 = vmatpush1.msra.mxu0 0.0
      %6066 = vmatprep.subr.mxu0 0.0
      %6067 = vmatpush1.msra.mxu0 0.0
      %6068 = vmatprep.subr.mxu0 0.0
      %6069 = vmatpush1.msra.mxu0 0.0
      %6070 = vmatprep.subr.mxu0 0.0
      %6071 = vmatpush1.msra.mxu0 0.0
      %6072 = vmatprep.subr.mxu0 0.0
      %6073 = vmatpush1.msra.mxu0 0.0
      %6074 = vmatprep.subr.mxu0 0.0
      %6075 = vmatpush1.msra.mxu0 0.0
      %6076 = vmatprep.subr.mxu0 0.0
      %6077 = vmatpush1.msra.mxu0 0.0
      %6078 = vmatprep.subr.mxu0 0.0
      %6079 = vmatpush1.msra.mxu0 0.0
      %6080 = vmatprep.subr.mxu0 0.0
      %6081 = vmatpush1.msra.mxu0 0.0
      %6082 = vmatprep.subr.mxu0 0.0
      %6083 = vmatpush1.msra.mxu0 0.0
      %6084 = vmatprep.subr.mxu0 0.0
      %6085 = vmatpush1.msra.mxu0 0.0
      %6086 = vmatprep.subr.mxu0 0.0
      %6087 = vmatpush1.msra.mxu0 0.0
      %6088 = vmatprep.subr.mxu0 0.0
      %6089 = vmatpush1.msra.mxu0 0.0
      %6090 = vmatprep.subr.mxu0 0.0
      %6091 = vmatpush1.msra.mxu0 0.0
      %6092 = vmatprep.subr.mxu0 0.0
      %6093 = vmatpush1.msra.mxu0 0.0
      %6094 = vmatprep.subr.mxu0 0.0
      %6095 = vmatpush1.msra.mxu0 0.0
      %6096 = vmatprep.subr.mxu0 0.0
      %6097 = vmatpush1.msra.mxu0 0.0
      %6098 = vmatprep.subr.mxu0 0.0
      %6099 = vmatpush1.msra.mxu0 0.0
      %6100 = vmatprep.subr.mxu0 0.0
      %6101 = vmatpush1.msra.mxu0 0.0
      %6102 = vmatprep.subr.mxu0 0.0
      %6103 = vmatpush1.msra.mxu0 0.0
      %6104 = vmatprep.subr.mxu0 0.0
      %6105 = vmatpush1.msra.mxu0 0.0
      %6106 = vmatprep.subr.mxu0 0.0
      %6107 = vmatpush1.msra.mxu0 0.0
      %6108 = vmatprep.mubr.f32.mxu0 0.0
      %v6109 = vand.u32 %v710, 4294901760
      %6110 = vmatmul.mubr.f32.gmra.mrb[0].mxu0 %v6109
      %v6111 = vpop.f32.mrb[0].mxu0
      %v6112 = vadd.f32 %v5989, %v6111
      %v6113 = vpop.f32.mrb[0].mxu0
      %v6114 = vadd.f32 %v5991, %v6113
      %6115 = vmatprep.mubr.f32.mxu0 0.0
      %v6116 = vand.u32 %v712, 4294901760
      %6117 = vmatmul.mubr.f32.gmra.mrb[0].mxu0 %v6116
      %v6118 = vpop.f32.mrb[0].mxu0
      %v6119 = vadd.f32 %v5998, %v6118
      %v6120 = vpop.f32.mrb[0].mxu0
      %v6121 = vadd.f32 %v6000, %v6120
      %6122 = vmatprep.mubr.f32.mxu0 0.0
      %v6123 = vand.u32 %v714, 4294901760
      %6124 = vmatmul.mubr.f32.gmra.mrb[0].mxu0 %v6123
      %v6125 = vpop.f32.mrb[0].mxu0
      %v6126 = vadd.f32 %v6007, %v6125
      %v6127 = vpop.f32.mrb[0].mxu0
      %v6128 = vadd.f32 %v6009, %v6127
      %6129 = vmatprep.mubr.f32.mxu0 0.0
      %v6130 = vand.u32 %v716, 4294901760
      %6131 = vmatmul.mubr.f32.gmra.mrb[0].mxu0 %v6130
      %v6132 = vpop.f32.mrb[0].mxu0
      %v6133 = vadd.f32 %v6016, %v6132
      %v6134 = vpop.f32.mrb[0].mxu0
      %v6135 = vadd.f32 %v6018, %v6134
      %6136 = vdwg.mxu0
      %v6137 = vand.u32 %v644, 4294901760
      %6138 = vmatprep.subr.mxu0 %v6137
      %v6139 = vand.u32 %v643, 4294901760
      %6140 = vmatpush1.msra.mxu0 %v6139
      %v6141 = vand.u32 %v660, 4294901760
      %6142 = vmatprep.subr.mxu0 %v6141
      %v6143 = vand.u32 %v659, 4294901760
      %6144 = vmatpush1.msra.mxu0 %v6143
      %v6145 = vand.u32 %v676, 4294901760
      %6146 = vmatprep.subr.mxu0 %v6145
      %v6147 = vand.u32 %v675, 4294901760
      %6148 = vmatpush1.msra.mxu0 %v6147
      %v6149 = vand.u32 %v692, 4294901760
      %6150 = vmatprep.subr.mxu0 %v6149
      %v6151 = vand.u32 %v691, 4294901760
      %6152 = vmatpush1.msra.mxu0 %v6151
      %6153 = vmatprep.subr.mxu0 0.0
      %6154 = vmatpush1.msra.mxu0 0.0
      %6155 = vmatprep.subr.mxu0 0.0
      %6156 = vmatpush1.msra.mxu0 0.0
      %6157 = vmatprep.subr.mxu0 0.0
      %6158 = vmatpush1.msra.mxu0 0.0
      %6159 = vmatprep.subr.mxu0 0.0
      %6160 = vmatpush1.msra.mxu0 0.0
      %6161 = vmatprep.subr.mxu0 0.0
      %6162 = vmatpush1.msra.mxu0 0.0
      %6163 = vmatprep.subr.mxu0 0.0
      %6164 = vmatpush1.msra.mxu0 0.0
      %6165 = vmatprep.subr.mxu0 0.0
      %6166 = vmatpush1.msra.mxu0 0.0
      %6167 = vmatprep.subr.mxu0 0.0
      %6168 = vmatpush1.msra.mxu0 0.0
      %6169 = vmatprep.subr.mxu0 0.0
      %6170 = vmatpush1.msra.mxu0 0.0
      %6171 = vmatprep.subr.mxu0 0.0
      %6172 = vmatpush1.msra.mxu0 0.0
      %6173 = vmatprep.subr.mxu0 0.0
      %6174 = vmatpush1.msra.mxu0 0.0
      %6175 = vmatprep.subr.mxu0 0.0
      %6176 = vmatpush1.msra.mxu0 0.0
      %6177 = vmatprep.subr.mxu0 0.0
      %6178 = vmatpush1.msra.mxu0 0.0
      %6179 = vmatprep.subr.mxu0 0.0
      %6180 = vmatpush1.msra.mxu0 0.0
      %6181 = vmatprep.subr.mxu0 0.0
      %6182 = vmatpush1.msra.mxu0 0.0
      %6183 = vmatprep.subr.mxu0 0.0
      %6184 = vmatpush1.msra.mxu0 0.0
      %6185 = vmatprep.subr.mxu0 0.0
      %6186 = vmatpush1.msra.mxu0 0.0
      %6187 = vmatprep.subr.mxu0 0.0
      %6188 = vmatpush1.msra.mxu0 0.0
      %6189 = vmatprep.subr.mxu0 0.0
      %6190 = vmatpush1.msra.mxu0 0.0
      %6191 = vmatprep.subr.mxu0 0.0
      %6192 = vmatpush1.msra.mxu0 0.0
      %6193 = vmatprep.subr.mxu0 0.0
      %6194 = vmatpush1.msra.mxu0 0.0
      %6195 = vmatprep.subr.mxu0 0.0
      %6196 = vmatpush1.msra.mxu0 0.0
      %6197 = vmatprep.subr.mxu0 0.0
      %6198 = vmatpush1.msra.mxu0 0.0
      %6199 = vmatprep.subr.mxu0 0.0
      %6200 = vmatpush1.msra.mxu0 0.0
      %6201 = vmatprep.subr.mxu0 0.0
      %6202 = vmatpush1.msra.mxu0 0.0
      %6203 = vmatprep.subr.mxu0 0.0
      %6204 = vmatpush1.msra.mxu0 0.0
      %6205 = vmatprep.subr.mxu0 0.0
      %6206 = vmatpush1.msra.mxu0 0.0
      %6207 = vmatprep.subr.mxu0 0.0
      %6208 = vmatpush1.msra.mxu0 0.0
      %6209 = vmatprep.mubr.f32.mxu0 0.0
      %v6210 = vand.u32 %v710, 4294901760
      %6211 = vmatmul.mubr.f32.gmra.mrb[0].mxu0 %v6210
      %v6212 = vpop.f32.mrb[0].mxu0
      %v6213 = vadd.f32 %v6112, %v6212
      %v6214 = vpop.f32.mrb[0].mxu0
      %v6215 = vadd.f32 %v6114, %v6214
      %6216 = vmatprep.mubr.f32.mxu0 0.0
      %v6217 = vand.u32 %v712, 4294901760
      %6218 = vmatmul.mubr.f32.gmra.mrb[0].mxu0 %v6217
      %v6219 = vpop.f32.mrb[0].mxu0
      %v6220 = vadd.f32 %v6119, %v6219
      %v6221 = vpop.f32.mrb[0].mxu0
      %v6222 = vadd.f32 %v6121, %v6221
      %6223 = vmatprep.mubr.f32.mxu0 0.0
      %v6224 = vand.u32 %v714, 4294901760
      %6225 = vmatmul.mubr.f32.gmra.mrb[0].mxu0 %v6224
      %v6226 = vpop.f32.mrb[0].mxu0
      %v6227 = vadd.f32 %v6126, %v6226
      %v6228 = vpop.f32.mrb[0].mxu0
      %v6229 = vadd.f32 %v6128, %v6228
      %6230 = vmatprep.mubr.f32.mxu0 0.0
      %v6231 = vand.u32 %v716, 4294901760
      %6232 = vmatmul.mubr.f32.gmra.mrb[0].mxu0 %v6231
      %v6233 = vpop.f32.mrb[0].mxu0
      %v6234 = vadd.f32 %v6133, %v6233
      %v6235 = vpop.f32.mrb[0].mxu0
      %v6236 = vadd.f32 %v6135, %v6235
      %6237 = vdwg.mxu0
      %v6238 = vtanh.pop %v1383
      %v6239 = vtanh.pop %v1385
      %v6240 = vtanh.pop %v2073
      %v6241 = vtanh.pop %v2075
      %v6242 = vtanh.pop %v2763
      %v6243 = vtanh.pop %v2765
      %v6244 = vtanh.pop %v3453
      %v6245 = vtanh.pop %v3455
      %v6246 = vtanh.pop %v4143
      %v6247 = vtanh.pop %v4145
      %v6248 = vtanh.pop %v4833
      %v6249 = vtanh.pop %v4835
      %v6250 = vtanh.pop %v5523
      %v6251 = vtanh.pop %v5525
      %v6252 = vtanh.pop %v6213
      %v6253 = vtanh.pop %v6215
      %v6254 = vtanh.pop %v1390
      %v6255 = vtanh.pop %v1392
      %v6256 = vtanh.pop %v2080
      %v6257 = vtanh.pop %v2082
      %v6258 = vtanh.pop %v2770
      %v6259 = vtanh.pop %v2772
      %v6260 = vtanh.pop %v3460
      %v6261 = vtanh.pop %v3462
      %v6262 = vtanh.pop %v4150
      %v6263 = vtanh.pop %v4152
      %v6264 = vtanh.pop %v4840
      %v6265 = vtanh.pop %v4842
      %v6266 = vtanh.pop %v5530
      %v6267 = vtanh.pop %v5532
      %v6268 = vtanh.pop %v6220
      %v6269 = vtanh.pop %v6222
      %v6270 = vtanh.pop %v1397
      %v6271 = vtanh.pop %v1399
      %v6272 = vtanh.pop %v2087
      %v6273 = vtanh.pop %v2089
      %v6274 = vtanh.pop %v2777
      %v6275 = vtanh.pop %v2779
      %v6276 = vtanh.pop %v3467
      %v6277 = vtanh.pop %v3469
      %v6278 = vtanh.pop %v4157
      %v6279 = vtanh.pop %v4159
      %v6280 = vtanh.pop %v4847
      %v6281 = vtanh.pop %v4849
      %v6282 = vtanh.pop %v5537
      %v6283 = vtanh.pop %v5539
      %v6284 = vtanh.pop %v6227
      %v6285 = vtanh.pop %v6229
      %v6286 = vtanh.pop %v1404
      %v6287 = vtanh.pop %v1406
      %v6288 = vtanh.pop %v2094
      %v6289 = vtanh.pop %v2096
      %v6290 = vtanh.pop %v2784
      %v6291 = vtanh.pop %v2786
      %v6292 = vtanh.pop %v3474
      %v6293 = vtanh.pop %v3476
      %v6294 = vtanh.pop %v4164
      %v6295 = vtanh.pop %v4166
      %v6296 = vtanh.pop %v4854
      %v6297 = vtanh.pop %v4856
      %v6298 = vtanh.pop %v5544
      %v6299 = vtanh.pop %v5546
      %v6300 = vtanh.pop %v6234
      %v6301 = vtanh.pop %v6236
      %6303 = vset.pattern.permute.xlu0 68
      %6304 = vperm.xlu0 %6303, %v156
      %v6305 = vpop.permute.xlu0 %6304
      %6307 = vrot.lane.b32.xlu0 %v156, 94
      %v6308 = vpop.permute.xlu0 %6307
      %v6309 = vsel %vm709, %v6308, 0
      %v6311 = vand.u32 %v6239, 4294901760
      %6312 = vmatprep.subr.mxu0 %v6311
      %v6313 = vand.u32 %v6238, 4294901760
      %6314 = vmatpush1.msra.mxu0 %v6313
      %v6315 = vand.u32 %v6255, 4294901760
      %6316 = vmatprep.subr.mxu0 %v6315
      %v6317 = vand.u32 %v6254, 4294901760
      %6318 = vmatpush1.msra.mxu0 %v6317
      %v6319 = vand.u32 %v6271, 4294901760
      %6320 = vmatprep.subr.mxu0 %v6319
      %v6321 = vand.u32 %v6270, 4294901760
      %6322 = vmatpush1.msra.mxu0 %v6321
      %v6323 = vand.u32 %v6287, 4294901760
      %6324 = vmatprep.subr.mxu0 %v6323
      %v6325 = vand.u32 %v6286, 4294901760
      %6326 = vmatpush1.msra.mxu0 %v6325
      %6327 = vmatprep.subr.mxu0 0.0
      %6328 = vmatpush1.msra.mxu0 0.0
      %6329 = vmatprep.subr.mxu0 0.0
      %6330 = vmatpush1.msra.mxu0 0.0
      %6331 = vmatprep.subr.mxu0 0.0
      %6332 = vmatpush1.msra.mxu0 0.0
      %6333 = vmatprep.subr.mxu0 0.0
      %6334 = vmatpush1.msra.mxu0 0.0
      %6335 = vmatprep.subr.mxu0 0.0
      %6336 = vmatpush1.msra.mxu0 0.0
      %6337 = vmatprep.subr.mxu0 0.0
      %6338 = vmatpush1.msra.mxu0 0.0
      %6339 = vmatprep.subr.mxu0 0.0
      %6340 = vmatpush1.msra.mxu0 0.0
      %6341 = vmatprep.subr.mxu0 0.0
      %6342 = vmatpush1.msra.mxu0 0.0
      %6343 = vmatprep.subr.mxu0 0.0
      %6344 = vmatpush1.msra.mxu0 0.0
      %6345 = vmatprep.subr.mxu0 0.0
      %6346 = vmatpush1.msra.mxu0 0.0
      %6347 = vmatprep.subr.mxu0 0.0
      %6348 = vmatpush1.msra.mxu0 0.0
      %6349 = vmatprep.subr.mxu0 0.0
      %6350 = vmatpush1.msra.mxu0 0.0
      %6351 = vmatprep.subr.mxu0 0.0
      %6352 = vmatpush1.msra.mxu0 0.0
      %6353 = vmatprep.subr.mxu0 0.0
      %6354 = vmatpush1.msra.mxu0 0.0
      %6355 = vmatprep.subr.mxu0 0.0
      %6356 = vmatpush1.msra.mxu0 0.0
      %6357 = vmatprep.subr.mxu0 0.0
      %6358 = vmatpush1.msra.mxu0 0.0
      %6359 = vmatprep.subr.mxu0 0.0
      %6360 = vmatpush1.msra.mxu0 0.0
      %6361 = vmatprep.subr.mxu0 0.0
      %6362 = vmatpush1.msra.mxu0 0.0
      %6363 = vmatprep.subr.mxu0 0.0
      %6364 = vmatpush1.msra.mxu0 0.0
      %6365 = vmatprep.subr.mxu0 0.0
      %6366 = vmatpush1.msra.mxu0 0.0
      %6367 = vmatprep.subr.mxu0 0.0
      %6368 = vmatpush1.msra.mxu0 0.0
      %6369 = vmatprep.subr.mxu0 0.0
      %6370 = vmatpush1.msra.mxu0 0.0
      %6371 = vmatprep.subr.mxu0 0.0
      %6372 = vmatpush1.msra.mxu0 0.0
      %6373 = vmatprep.subr.mxu0 0.0
      %6374 = vmatpush1.msra.mxu0 0.0
      %6375 = vmatprep.subr.mxu0 0.0
      %6376 = vmatpush1.msra.mxu0 0.0
      %6377 = vmatprep.subr.mxu0 0.0
      %6378 = vmatpush1.msra.mxu0 0.0
      %6379 = vmatprep.subr.mxu0 0.0
      %6380 = vmatpush1.msra.mxu0 0.0
      %6381 = vmatprep.subr.mxu0 0.0
      %6382 = vmatpush1.msra.mxu0 0.0
      %6383 = vmatprep.mubr.f32.mxu0 0.0
      %v6384 = vand.u32 %v6309, 4294901760
      %v6385 = vsub.f32 %v6309, %v6384
      %v6386 = vand.u32 %v6385, 4294901760
      %v6387 = vsub.f32 %v6385, %v6386
      %v6388 = vand.u32 %v6387, 4294901760
      %6389 = vmatmul.mubr.f32.gmra.mrb[0].mxu0 %v6388
      %v6390 = vpop.f32.mrb[0].mxu0
      %v6391 = vadd.f32 %v6305, %v6390
      %v6392 = vpop.f32.mrb[0].mxu0
      %v6393 = vadd.f32 %v6305, %v6392
      %6394 = vdwg.mxu0
      %v6395 = vand.u32 %v6239, 4294901760
      %v6396 = vsub.f32 %v6239, %v6395
      %v6397 = vand.u32 %v6396, 4294901760
      %v6398 = vsub.f32 %v6396, %v6397
      %v6399 = vand.u32 %v6398, 4294901760
      %6400 = vmatprep.subr.mxu0 %v6399
      %v6401 = vand.u32 %v6238, 4294901760
      %v6402 = vsub.f32 %v6238, %v6401
      %v6403 = vand.u32 %v6402, 4294901760
      %v6404 = vsub.f32 %v6402, %v6403
      %v6405 = vand.u32 %v6404, 4294901760
      %6406 = vmatpush1.msra.mxu0 %v6405
      %v6407 = vand.u32 %v6255, 4294901760
      %v6408 = vsub.f32 %v6255, %v6407
      %v6409 = vand.u32 %v6408, 4294901760
      %v6410 = vsub.f32 %v6408, %v6409
      %v6411 = vand.u32 %v6410, 4294901760
      %6412 = vmatprep.subr.mxu0 %v6411
      %v6413 = vand.u32 %v6254, 4294901760
      %v6414 = vsub.f32 %v6254, %v6413
      %v6415 = vand.u32 %v6414, 4294901760
      %v6416 = vsub.f32 %v6414, %v6415
      %v6417 = vand.u32 %v6416, 4294901760
      %6418 = vmatpush1.msra.mxu0 %v6417
      %v6419 = vand.u32 %v6271, 4294901760
      %v6420 = vsub.f32 %v6271, %v6419
      %v6421 = vand.u32 %v6420, 4294901760
      %v6422 = vsub.f32 %v6420, %v6421
      %v6423 = vand.u32 %v6422, 4294901760
      %6424 = vmatprep.subr.mxu0 %v6423
      %v6425 = vand.u32 %v6270, 4294901760
      %v6426 = vsub.f32 %v6270, %v6425
      %v6427 = vand.u32 %v6426, 4294901760
      %v6428 = vsub.f32 %v6426, %v6427
      %v6429 = vand.u32 %v6428, 4294901760
      %6430 = vmatpush1.msra.mxu0 %v6429
      %v6431 = vand.u32 %v6287, 4294901760
      %v6432 = vsub.f32 %v6287, %v6431
      %v6433 = vand.u32 %v6432, 4294901760
      %v6434 = vsub.f32 %v6432, %v6433
      %v6435 = vand.u32 %v6434, 4294901760
      %6436 = vmatprep.subr.mxu0 %v6435
      %v6437 = vand.u32 %v6286, 4294901760
      %v6438 = vsub.f32 %v6286, %v6437
      %v6439 = vand.u32 %v6438, 4294901760
      %v6440 = vsub.f32 %v6438, %v6439
      %v6441 = vand.u32 %v6440, 4294901760
      %6442 = vmatpush1.msra.mxu0 %v6441
      %6443 = vmatprep.subr.mxu0 0.0
      %6444 = vmatpush1.msra.mxu0 0.0
      %6445 = vmatprep.subr.mxu0 0.0
      %6446 = vmatpush1.msra.mxu0 0.0
      %6447 = vmatprep.subr.mxu0 0.0
      %6448 = vmatpush1.msra.mxu0 0.0
      %6449 = vmatprep.subr.mxu0 0.0
      %6450 = vmatpush1.msra.mxu0 0.0
      %6451 = vmatprep.subr.mxu0 0.0
      %6452 = vmatpush1.msra.mxu0 0.0
      %6453 = vmatprep.subr.mxu0 0.0
      %6454 = vmatpush1.msra.mxu0 0.0
      %6455 = vmatprep.subr.mxu0 0.0
      %6456 = vmatpush1.msra.mxu0 0.0
      %6457 = vmatprep.subr.mxu0 0.0
      %6458 = vmatpush1.msra.mxu0 0.0
      %6459 = vmatprep.subr.mxu0 0.0
      %6460 = vmatpush1.msra.mxu0 0.0
      %6461 = vmatprep.subr.mxu0 0.0
      %6462 = vmatpush1.msra.mxu0 0.0
      %6463 = vmatprep.subr.mxu0 0.0
      %6464 = vmatpush1.msra.mxu0 0.0
      %6465 = vmatprep.subr.mxu0 0.0
      %6466 = vmatpush1.msra.mxu0 0.0
      %6467 = vmatprep.subr.mxu0 0.0
      %6468 = vmatpush1.msra.mxu0 0.0
      %6469 = vmatprep.subr.mxu0 0.0
      %6470 = vmatpush1.msra.mxu0 0.0
      %6471 = vmatprep.subr.mxu0 0.0
      %6472 = vmatpush1.msra.mxu0 0.0
      %6473 = vmatprep.subr.mxu0 0.0
      %6474 = vmatpush1.msra.mxu0 0.0
      %6475 = vmatprep.subr.mxu0 0.0
      %6476 = vmatpush1.msra.mxu0 0.0
      %6477 = vmatprep.subr.mxu0 0.0
      %6478 = vmatpush1.msra.mxu0 0.0
      %6479 = vmatprep.subr.mxu0 0.0
      %6480 = vmatpush1.msra.mxu0 0.0
      %6481 = vmatprep.subr.mxu0 0.0
      %6482 = vmatpush1.msra.mxu0 0.0
      %6483 = vmatprep.subr.mxu0 0.0
      %6484 = vmatpush1.msra.mxu0 0.0
      %6485 = vmatprep.subr.mxu0 0.0
      %6486 = vmatpush1.msra.mxu0 0.0
      %6487 = vmatprep.subr.mxu0 0.0
      %6488 = vmatpush1.msra.mxu0 0.0
      %6489 = vmatprep.subr.mxu0 0.0
      %6490 = vmatpush1.msra.mxu0 0.0
      %6491 = vmatprep.subr.mxu0 0.0
      %6492 = vmatpush1.msra.mxu0 0.0
      %6493 = vmatprep.subr.mxu0 0.0
      %6494 = vmatpush1.msra.mxu0 0.0
      %6495 = vmatprep.subr.mxu0 0.0
      %6496 = vmatpush1.msra.mxu0 0.0
      %6497 = vmatprep.subr.mxu0 0.0
      %6498 = vmatpush1.msra.mxu0 0.0
      %6499 = vmatprep.mubr.f32.mxu0 0.0
      %v6500 = vand.u32 %v6309, 4294901760
      %6501 = vmatmul.mubr.f32.gmra.mrb[0].mxu0 %v6500
      %v6502 = vpop.f32.mrb[0].mxu0
      %v6503 = vadd.f32 %v6391, %v6502
      %v6504 = vpop.f32.mrb[0].mxu0
      %v6505 = vadd.f32 %v6393, %v6504
      %6506 = vdwg.mxu0
      %v6507 = vand.u32 %v6239, 4294901760
      %v6508 = vsub.f32 %v6239, %v6507
      %6509 = vmatprep.subr.mxu0 %v6508
      %v6510 = vand.u32 %v6238, 4294901760
      %v6511 = vsub.f32 %v6238, %v6510
      %6512 = vmatpush1.msra.mxu0 %v6511
      %v6513 = vand.u32 %v6255, 4294901760
      %v6514 = vsub.f32 %v6255, %v6513
      %6515 = vmatprep.subr.mxu0 %v6514
      %v6516 = vand.u32 %v6254, 4294901760
      %v6517 = vsub.f32 %v6254, %v6516
      %6518 = vmatpush1.msra.mxu0 %v6517
      %v6519 = vand.u32 %v6271, 4294901760
      %v6520 = vsub.f32 %v6271, %v6519
      %6521 = vmatprep.subr.mxu0 %v6520
      %v6522 = vand.u32 %v6270, 4294901760
      %v6523 = vsub.f32 %v6270, %v6522
      %6524 = vmatpush1.msra.mxu0 %v6523
      %v6525 = vand.u32 %v6287, 4294901760
      %v6526 = vsub.f32 %v6287, %v6525
      %6527 = vmatprep.subr.mxu0 %v6526
      %v6528 = vand.u32 %v6286, 4294901760
      %v6529 = vsub.f32 %v6286, %v6528
      %6530 = vmatpush1.msra.mxu0 %v6529
      %6531 = vmatprep.subr.mxu0 0.0
      %6532 = vmatpush1.msra.mxu0 0.0
      %6533 = vmatprep.subr.mxu0 0.0
      %6534 = vmatpush1.msra.mxu0 0.0
      %6535 = vmatprep.subr.mxu0 0.0
      %6536 = vmatpush1.msra.mxu0 0.0
      %6537 = vmatprep.subr.mxu0 0.0
      %6538 = vmatpush1.msra.mxu0 0.0
      %6539 = vmatprep.subr.mxu0 0.0
      %6540 = vmatpush1.msra.mxu0 0.0
      %6541 = vmatprep.subr.mxu0 0.0
      %6542 = vmatpush1.msra.mxu0 0.0
      %6543 = vmatprep.subr.mxu0 0.0
      %6544 = vmatpush1.msra.mxu0 0.0
      %6545 = vmatprep.subr.mxu0 0.0
      %6546 = vmatpush1.msra.mxu0 0.0
      %6547 = vmatprep.subr.mxu0 0.0
      %6548 = vmatpush1.msra.mxu0 0.0
      %6549 = vmatprep.subr.mxu0 0.0
      %6550 = vmatpush1.msra.mxu0 0.0
      %6551 = vmatprep.subr.mxu0 0.0
      %6552 = vmatpush1.msra.mxu0 0.0
      %6553 = vmatprep.subr.mxu0 0.0
      %6554 = vmatpush1.msra.mxu0 0.0
      %6555 = vmatprep.subr.mxu0 0.0
      %6556 = vmatpush1.msra.mxu0 0.0
      %6557 = vmatprep.subr.mxu0 0.0
      %6558 = vmatpush1.msra.mxu0 0.0
      %6559 = vmatprep.subr.mxu0 0.0
      %6560 = vmatpush1.msra.mxu0 0.0
      %6561 = vmatprep.subr.mxu0 0.0
      %6562 = vmatpush1.msra.mxu0 0.0
      %6563 = vmatprep.subr.mxu0 0.0
      %6564 = vmatpush1.msra.mxu0 0.0
      %6565 = vmatprep.subr.mxu0 0.0
      %6566 = vmatpush1.msra.mxu0 0.0
      %6567 = vmatprep.subr.mxu0 0.0
      %6568 = vmatpush1.msra.mxu0 0.0
      %6569 = vmatprep.subr.mxu0 0.0
      %6570 = vmatpush1.msra.mxu0 0.0
      %6571 = vmatprep.subr.mxu0 0.0
      %6572 = vmatpush1.msra.mxu0 0.0
      %6573 = vmatprep.subr.mxu0 0.0
      %6574 = vmatpush1.msra.mxu0 0.0
      %6575 = vmatprep.subr.mxu0 0.0
      %6576 = vmatpush1.msra.mxu0 0.0
      %6577 = vmatprep.subr.mxu0 0.0
      %6578 = vmatpush1.msra.mxu0 0.0
      %6579 = vmatprep.subr.mxu0 0.0
      %6580 = vmatpush1.msra.mxu0 0.0
      %6581 = vmatprep.subr.mxu0 0.0
      %6582 = vmatpush1.msra.mxu0 0.0
      %6583 = vmatprep.subr.mxu0 0.0
      %6584 = vmatpush1.msra.mxu0 0.0
      %6585 = vmatprep.subr.mxu0 0.0
      %6586 = vmatpush1.msra.mxu0 0.0
      %6587 = vmatprep.mubr.f32.mxu0 0.0
      %v6588 = vand.u32 %v6309, 4294901760
      %v6589 = vsub.f32 %v6309, %v6588
      %6590 = vmatmul.mubr.f32.gmra.mrb[0].mxu0 %v6589
      %v6591 = vpop.f32.mrb[0].mxu0
      %v6592 = vadd.f32 %v6503, %v6591
      %v6593 = vpop.f32.mrb[0].mxu0
      %v6594 = vadd.f32 %v6505, %v6593
      %6595 = vdwg.mxu0
      %v6596 = vand.u32 %v6239, 4294901760
      %6597 = vmatprep.subr.mxu0 %v6596
      %v6598 = vand.u32 %v6238, 4294901760
      %6599 = vmatpush1.msra.mxu0 %v6598
      %v6600 = vand.u32 %v6255, 4294901760
      %6601 = vmatprep.subr.mxu0 %v6600
      %v6602 = vand.u32 %v6254, 4294901760
      %6603 = vmatpush1.msra.mxu0 %v6602
      %v6604 = vand.u32 %v6271, 4294901760
      %6605 = vmatprep.subr.mxu0 %v6604
      %v6606 = vand.u32 %v6270, 4294901760
      %6607 = vmatpush1.msra.mxu0 %v6606
      %v6608 = vand.u32 %v6287, 4294901760
      %6609 = vmatprep.subr.mxu0 %v6608
      %v6610 = vand.u32 %v6286, 4294901760
      %6611 = vmatpush1.msra.mxu0 %v6610
      %6612 = vmatprep.subr.mxu0 0.0
      %6613 = vmatpush1.msra.mxu0 0.0
      %6614 = vmatprep.subr.mxu0 0.0
      %6615 = vmatpush1.msra.mxu0 0.0
      %6616 = vmatprep.subr.mxu0 0.0
      %6617 = vmatpush1.msra.mxu0 0.0
      %6618 = vmatprep.subr.mxu0 0.0
      %6619 = vmatpush1.msra.mxu0 0.0
      %6620 = vmatprep.subr.mxu0 0.0
      %6621 = vmatpush1.msra.mxu0 0.0
      %6622 = vmatprep.subr.mxu0 0.0
      %6623 = vmatpush1.msra.mxu0 0.0
      %6624 = vmatprep.subr.mxu0 0.0
      %6625 = vmatpush1.msra.mxu0 0.0
      %6626 = vmatprep.subr.mxu0 0.0
      %6627 = vmatpush1.msra.mxu0 0.0
      %6628 = vmatprep.subr.mxu0 0.0
      %6629 = vmatpush1.msra.mxu0 0.0
      %6630 = vmatprep.subr.mxu0 0.0
      %6631 = vmatpush1.msra.mxu0 0.0
      %6632 = vmatprep.subr.mxu0 0.0
      %6633 = vmatpush1.msra.mxu0 0.0
      %6634 = vmatprep.subr.mxu0 0.0
      %6635 = vmatpush1.msra.mxu0 0.0
      %6636 = vmatprep.subr.mxu0 0.0
      %6637 = vmatpush1.msra.mxu0 0.0
      %6638 = vmatprep.subr.mxu0 0.0
      %6639 = vmatpush1.msra.mxu0 0.0
      %6640 = vmatprep.subr.mxu0 0.0
      %6641 = vmatpush1.msra.mxu0 0.0
      %6642 = vmatprep.subr.mxu0 0.0
      %6643 = vmatpush1.msra.mxu0 0.0
      %6644 = vmatprep.subr.mxu0 0.0
      %6645 = vmatpush1.msra.mxu0 0.0
      %6646 = vmatprep.subr.mxu0 0.0
      %6647 = vmatpush1.msra.mxu0 0.0
      %6648 = vmatprep.subr.mxu0 0.0
      %6649 = vmatpush1.msra.mxu0 0.0
      %6650 = vmatprep.subr.mxu0 0.0
      %6651 = vmatpush1.msra.mxu0 0.0
      %6652 = vmatprep.subr.mxu0 0.0
      %6653 = vmatpush1.msra.mxu0 0.0
      %6654 = vmatprep.subr.mxu0 0.0
      %6655 = vmatpush1.msra.mxu0 0.0
      %6656 = vmatprep.subr.mxu0 0.0
      %6657 = vmatpush1.msra.mxu0 0.0
      %6658 = vmatprep.subr.mxu0 0.0
      %6659 = vmatpush1.msra.mxu0 0.0
      %6660 = vmatprep.subr.mxu0 0.0
      %6661 = vmatpush1.msra.mxu0 0.0
      %6662 = vmatprep.subr.mxu0 0.0
      %6663 = vmatpush1.msra.mxu0 0.0
      %6664 = vmatprep.subr.mxu0 0.0
      %6665 = vmatpush1.msra.mxu0 0.0
      %6666 = vmatprep.subr.mxu0 0.0
      %6667 = vmatpush1.msra.mxu0 0.0
      %6668 = vmatprep.mubr.f32.mxu0 0.0
      %v6669 = vand.u32 %v6309, 4294901760
      %v6670 = vsub.f32 %v6309, %v6669
      %v6671 = vand.u32 %v6670, 4294901760
      %6672 = vmatmul.mubr.f32.gmra.mrb[0].mxu0 %v6671
      %v6673 = vpop.f32.mrb[0].mxu0
      %v6674 = vadd.f32 %v6592, %v6673
      %v6675 = vpop.f32.mrb[0].mxu0
      %v6676 = vadd.f32 %v6594, %v6675
      %6677 = vdwg.mxu0
      %v6678 = vand.u32 %v6239, 4294901760
      %v6679 = vsub.f32 %v6239, %v6678
      %v6680 = vand.u32 %v6679, 4294901760
      %6681 = vmatprep.subr.mxu0 %v6680
      %v6682 = vand.u32 %v6238, 4294901760
      %v6683 = vsub.f32 %v6238, %v6682
      %v6684 = vand.u32 %v6683, 4294901760
      %6685 = vmatpush1.msra.mxu0 %v6684
      %v6686 = vand.u32 %v6255, 4294901760
      %v6687 = vsub.f32 %v6255, %v6686
      %v6688 = vand.u32 %v6687, 4294901760
      %6689 = vmatprep.subr.mxu0 %v6688
      %v6690 = vand.u32 %v6254, 4294901760
      %v6691 = vsub.f32 %v6254, %v6690
      %v6692 = vand.u32 %v6691, 4294901760
      %6693 = vmatpush1.msra.mxu0 %v6692
      %v6694 = vand.u32 %v6271, 4294901760
      %v6695 = vsub.f32 %v6271, %v6694
      %v6696 = vand.u32 %v6695, 4294901760
      %6697 = vmatprep.subr.mxu0 %v6696
      %v6698 = vand.u32 %v6270, 4294901760
      %v6699 = vsub.f32 %v6270, %v6698
      %v6700 = vand.u32 %v6699, 4294901760
      %6701 = vmatpush1.msra.mxu0 %v6700
      %v6702 = vand.u32 %v6287, 4294901760
      %v6703 = vsub.f32 %v6287, %v6702
      %v6704 = vand.u32 %v6703, 4294901760
      %6705 = vmatprep.subr.mxu0 %v6704
      %v6706 = vand.u32 %v6286, 4294901760
      %v6707 = vsub.f32 %v6286, %v6706
      %v6708 = vand.u32 %v6707, 4294901760
      %6709 = vmatpush1.msra.mxu0 %v6708
      %6710 = vmatprep.subr.mxu0 0.0
      %6711 = vmatpush1.msra.mxu0 0.0
      %6712 = vmatprep.subr.mxu0 0.0
      %6713 = vmatpush1.msra.mxu0 0.0
      %6714 = vmatprep.subr.mxu0 0.0
      %6715 = vmatpush1.msra.mxu0 0.0
      %6716 = vmatprep.subr.mxu0 0.0
      %6717 = vmatpush1.msra.mxu0 0.0
      %6718 = vmatprep.subr.mxu0 0.0
      %6719 = vmatpush1.msra.mxu0 0.0
      %6720 = vmatprep.subr.mxu0 0.0
      %6721 = vmatpush1.msra.mxu0 0.0
      %6722 = vmatprep.subr.mxu0 0.0
      %6723 = vmatpush1.msra.mxu0 0.0
      %6724 = vmatprep.subr.mxu0 0.0
      %6725 = vmatpush1.msra.mxu0 0.0
      %6726 = vmatprep.subr.mxu0 0.0
      %6727 = vmatpush1.msra.mxu0 0.0
      %6728 = vmatprep.subr.mxu0 0.0
      %6729 = vmatpush1.msra.mxu0 0.0
      %6730 = vmatprep.subr.mxu0 0.0
      %6731 = vmatpush1.msra.mxu0 0.0
      %6732 = vmatprep.subr.mxu0 0.0
      %6733 = vmatpush1.msra.mxu0 0.0
      %6734 = vmatprep.subr.mxu0 0.0
      %6735 = vmatpush1.msra.mxu0 0.0
      %6736 = vmatprep.subr.mxu0 0.0
      %6737 = vmatpush1.msra.mxu0 0.0
      %6738 = vmatprep.subr.mxu0 0.0
      %6739 = vmatpush1.msra.mxu0 0.0
      %6740 = vmatprep.subr.mxu0 0.0
      %6741 = vmatpush1.msra.mxu0 0.0
      %6742 = vmatprep.subr.mxu0 0.0
      %6743 = vmatpush1.msra.mxu0 0.0
      %6744 = vmatprep.subr.mxu0 0.0
      %6745 = vmatpush1.msra.mxu0 0.0
      %6746 = vmatprep.subr.mxu0 0.0
      %6747 = vmatpush1.msra.mxu0 0.0
      %6748 = vmatprep.subr.mxu0 0.0
      %6749 = vmatpush1.msra.mxu0 0.0
      %6750 = vmatprep.subr.mxu0 0.0
      %6751 = vmatpush1.msra.mxu0 0.0
      %6752 = vmatprep.subr.mxu0 0.0
      %6753 = vmatpush1.msra.mxu0 0.0
      %6754 = vmatprep.subr.mxu0 0.0
      %6755 = vmatpush1.msra.mxu0 0.0
      %6756 = vmatprep.subr.mxu0 0.0
      %6757 = vmatpush1.msra.mxu0 0.0
      %6758 = vmatprep.subr.mxu0 0.0
      %6759 = vmatpush1.msra.mxu0 0.0
      %6760 = vmatprep.subr.mxu0 0.0
      %6761 = vmatpush1.msra.mxu0 0.0
      %6762 = vmatprep.subr.mxu0 0.0
      %6763 = vmatpush1.msra.mxu0 0.0
      %6764 = vmatprep.subr.mxu0 0.0
      %6765 = vmatpush1.msra.mxu0 0.0
      %6766 = vmatprep.mubr.f32.mxu0 0.0
      %v6767 = vand.u32 %v6309, 4294901760
      %6768 = vmatmul.mubr.f32.gmra.mrb[0].mxu0 %v6767
      %v6769 = vpop.f32.mrb[0].mxu0
      %v6770 = vadd.f32 %v6674, %v6769
      %v6771 = vpop.f32.mrb[0].mxu0
      %v6772 = vadd.f32 %v6676, %v6771
      %6773 = vdwg.mxu0
      %v6774 = vand.u32 %v6239, 4294901760
      %6775 = vmatprep.subr.mxu0 %v6774
      %v6776 = vand.u32 %v6238, 4294901760
      %6777 = vmatpush1.msra.mxu0 %v6776
      %v6778 = vand.u32 %v6255, 4294901760
      %6779 = vmatprep.subr.mxu0 %v6778
      %v6780 = vand.u32 %v6254, 4294901760
      %6781 = vmatpush1.msra.mxu0 %v6780
      %v6782 = vand.u32 %v6271, 4294901760
      %6783 = vmatprep.subr.mxu0 %v6782
      %v6784 = vand.u32 %v6270, 4294901760
      %6785 = vmatpush1.msra.mxu0 %v6784
      %v6786 = vand.u32 %v6287, 4294901760
      %6787 = vmatprep.subr.mxu0 %v6786
      %v6788 = vand.u32 %v6286, 4294901760
      %6789 = vmatpush1.msra.mxu0 %v6788
      %6790 = vmatprep.subr.mxu0 0.0
      %6791 = vmatpush1.msra.mxu0 0.0
      %6792 = vmatprep.subr.mxu0 0.0
      %6793 = vmatpush1.msra.mxu0 0.0
      %6794 = vmatprep.subr.mxu0 0.0
      %6795 = vmatpush1.msra.mxu0 0.0
      %6796 = vmatprep.subr.mxu0 0.0
      %6797 = vmatpush1.msra.mxu0 0.0
      %6798 = vmatprep.subr.mxu0 0.0
      %6799 = vmatpush1.msra.mxu0 0.0
      %6800 = vmatprep.subr.mxu0 0.0
      %6801 = vmatpush1.msra.mxu0 0.0
      %6802 = vmatprep.subr.mxu0 0.0
      %6803 = vmatpush1.msra.mxu0 0.0
      %6804 = vmatprep.subr.mxu0 0.0
      %6805 = vmatpush1.msra.mxu0 0.0
      %6806 = vmatprep.subr.mxu0 0.0
      %6807 = vmatpush1.msra.mxu0 0.0
      %6808 = vmatprep.subr.mxu0 0.0
      %6809 = vmatpush1.msra.mxu0 0.0
      %6810 = vmatprep.subr.mxu0 0.0
      %6811 = vmatpush1.msra.mxu0 0.0
      %6812 = vmatprep.subr.mxu0 0.0
      %6813 = vmatpush1.msra.mxu0 0.0
      %6814 = vmatprep.subr.mxu0 0.0
      %6815 = vmatpush1.msra.mxu0 0.0
      %6816 = vmatprep.subr.mxu0 0.0
      %6817 = vmatpush1.msra.mxu0 0.0
      %6818 = vmatprep.subr.mxu0 0.0
      %6819 = vmatpush1.msra.mxu0 0.0
      %6820 = vmatprep.subr.mxu0 0.0
      %6821 = vmatpush1.msra.mxu0 0.0
      %6822 = vmatprep.subr.mxu0 0.0
      %6823 = vmatpush1.msra.mxu0 0.0
      %6824 = vmatprep.subr.mxu0 0.0
      %6825 = vmatpush1.msra.mxu0 0.0
      %6826 = vmatprep.subr.mxu0 0.0
      %6827 = vmatpush1.msra.mxu0 0.0
      %6828 = vmatprep.subr.mxu0 0.0
      %6829 = vmatpush1.msra.mxu0 0.0
      %6830 = vmatprep.subr.mxu0 0.0
      %6831 = vmatpush1.msra.mxu0 0.0
      %6832 = vmatprep.subr.mxu0 0.0
      %6833 = vmatpush1.msra.mxu0 0.0
      %6834 = vmatprep.subr.mxu0 0.0
      %6835 = vmatpush1.msra.mxu0 0.0
      %6836 = vmatprep.subr.mxu0 0.0
      %6837 = vmatpush1.msra.mxu0 0.0
      %6838 = vmatprep.subr.mxu0 0.0
      %6839 = vmatpush1.msra.mxu0 0.0
      %6840 = vmatprep.subr.mxu0 0.0
      %6841 = vmatpush1.msra.mxu0 0.0
      %6842 = vmatprep.subr.mxu0 0.0
      %6843 = vmatpush1.msra.mxu0 0.0
      %6844 = vmatprep.subr.mxu0 0.0
      %6845 = vmatpush1.msra.mxu0 0.0
      %6846 = vmatprep.mubr.f32.mxu0 0.0
      %v6847 = vand.u32 %v6309, 4294901760
      %6848 = vmatmul.mubr.f32.gmra.mrb[0].mxu0 %v6847
      %v6849 = vpop.f32.mrb[0].mxu0
      %v6850 = vadd.f32 %v6770, %v6849
      %v6851 = vpop.f32.mrb[0].mxu0
      %v6852 = vadd.f32 %v6772, %v6851
      %6853 = vdwg.mxu0
      %v6854 = vand.u32 %v6241, 4294901760
      %6855 = vmatprep.subr.mxu0 %v6854
      %v6856 = vand.u32 %v6240, 4294901760
      %6857 = vmatpush1.msra.mxu0 %v6856
      %v6858 = vand.u32 %v6257, 4294901760
      %6859 = vmatprep.subr.mxu0 %v6858
      %v6860 = vand.u32 %v6256, 4294901760
      %6861 = vmatpush1.msra.mxu0 %v6860
      %v6862 = vand.u32 %v6273, 4294901760
      %6863 = vmatprep.subr.mxu0 %v6862
      %v6864 = vand.u32 %v6272, 4294901760
      %6865 = vmatpush1.msra.mxu0 %v6864
      %v6866 = vand.u32 %v6289, 4294901760
      %6867 = vmatprep.subr.mxu0 %v6866
      %v6868 = vand.u32 %v6288, 4294901760
      %6869 = vmatpush1.msra.mxu0 %v6868
      %6870 = vmatprep.subr.mxu0 0.0
      %6871 = vmatpush1.msra.mxu0 0.0
      %6872 = vmatprep.subr.mxu0 0.0
      %6873 = vmatpush1.msra.mxu0 0.0
      %6874 = vmatprep.subr.mxu0 0.0
      %6875 = vmatpush1.msra.mxu0 0.0
      %6876 = vmatprep.subr.mxu0 0.0
      %6877 = vmatpush1.msra.mxu0 0.0
      %6878 = vmatprep.subr.mxu0 0.0
      %6879 = vmatpush1.msra.mxu0 0.0
      %6880 = vmatprep.subr.mxu0 0.0
      %6881 = vmatpush1.msra.mxu0 0.0
      %6882 = vmatprep.subr.mxu0 0.0
      %6883 = vmatpush1.msra.mxu0 0.0
      %6884 = vmatprep.subr.mxu0 0.0
      %6885 = vmatpush1.msra.mxu0 0.0
      %6886 = vmatprep.subr.mxu0 0.0
      %6887 = vmatpush1.msra.mxu0 0.0
      %6888 = vmatprep.subr.mxu0 0.0
      %6889 = vmatpush1.msra.mxu0 0.0
      %6890 = vmatprep.subr.mxu0 0.0
      %6891 = vmatpush1.msra.mxu0 0.0
      %6892 = vmatprep.subr.mxu0 0.0
      %6893 = vmatpush1.msra.mxu0 0.0
      %6894 = vmatprep.subr.mxu0 0.0
      %6895 = vmatpush1.msra.mxu0 0.0
      %6896 = vmatprep.subr.mxu0 0.0
      %6897 = vmatpush1.msra.mxu0 0.0
      %6898 = vmatprep.subr.mxu0 0.0
      %6899 = vmatpush1.msra.mxu0 0.0
      %6900 = vmatprep.subr.mxu0 0.0
      %6901 = vmatpush1.msra.mxu0 0.0
      %6902 = vmatprep.subr.mxu0 0.0
      %6903 = vmatpush1.msra.mxu0 0.0
      %6904 = vmatprep.subr.mxu0 0.0
      %6905 = vmatpush1.msra.mxu0 0.0
      %6906 = vmatprep.subr.mxu0 0.0
      %6907 = vmatpush1.msra.mxu0 0.0
      %6908 = vmatprep.subr.mxu0 0.0
      %6909 = vmatpush1.msra.mxu0 0.0
      %6910 = vmatprep.subr.mxu0 0.0
      %6911 = vmatpush1.msra.mxu0 0.0
      %6912 = vmatprep.subr.mxu0 0.0
      %6913 = vmatpush1.msra.mxu0 0.0
      %6914 = vmatprep.subr.mxu0 0.0
      %6915 = vmatpush1.msra.mxu0 0.0
      %6916 = vmatprep.subr.mxu0 0.0
      %6917 = vmatpush1.msra.mxu0 0.0
      %6918 = vmatprep.subr.mxu0 0.0
      %6919 = vmatpush1.msra.mxu0 0.0
      %6920 = vmatprep.subr.mxu0 0.0
      %6921 = vmatpush1.msra.mxu0 0.0
      %6922 = vmatprep.subr.mxu0 0.0
      %6923 = vmatpush1.msra.mxu0 0.0
      %6924 = vmatprep.subr.mxu0 0.0
      %6925 = vmatpush1.msra.mxu0 0.0
      %6926 = vmatprep.mubr.f32.mxu0 0.0
      %v6927 = vand.u32 %v6309, 4294901760
      %v6928 = vsub.f32 %v6309, %v6927
      %v6929 = vand.u32 %v6928, 4294901760
      %v6930 = vsub.f32 %v6928, %v6929
      %v6931 = vand.u32 %v6930, 4294901760
      %6932 = vmatmul.mubr.f32.gmra.mrb[0].mxu0 %v6931
      %v6933 = vpop.f32.mrb[0].mxu0
      %v6934 = vadd.f32 %v6305, %v6933
      %v6935 = vpop.f32.mrb[0].mxu0
      %v6936 = vadd.f32 %v6305, %v6935
      %6937 = vdwg.mxu0
      %v6938 = vand.u32 %v6241, 4294901760
      %v6939 = vsub.f32 %v6241, %v6938
      %v6940 = vand.u32 %v6939, 4294901760
      %v6941 = vsub.f32 %v6939, %v6940
      %v6942 = vand.u32 %v6941, 4294901760
      %6943 = vmatprep.subr.mxu0 %v6942
      %v6944 = vand.u32 %v6240, 4294901760
      %v6945 = vsub.f32 %v6240, %v6944
      %v6946 = vand.u32 %v6945, 4294901760
      %v6947 = vsub.f32 %v6945, %v6946
      %v6948 = vand.u32 %v6947, 4294901760
      %6949 = vmatpush1.msra.mxu0 %v6948
      %v6950 = vand.u32 %v6257, 4294901760
      %v6951 = vsub.f32 %v6257, %v6950
      %v6952 = vand.u32 %v6951, 4294901760
      %v6953 = vsub.f32 %v6951, %v6952
      %v6954 = vand.u32 %v6953, 4294901760
      %6955 = vmatprep.subr.mxu0 %v6954
      %v6956 = vand.u32 %v6256, 4294901760
      %v6957 = vsub.f32 %v6256, %v6956
      %v6958 = vand.u32 %v6957, 4294901760
      %v6959 = vsub.f32 %v6957, %v6958
      %v6960 = vand.u32 %v6959, 4294901760
      %6961 = vmatpush1.msra.mxu0 %v6960
      %v6962 = vand.u32 %v6273, 4294901760
      %v6963 = vsub.f32 %v6273, %v6962
      %v6964 = vand.u32 %v6963, 4294901760
      %v6965 = vsub.f32 %v6963, %v6964
      %v6966 = vand.u32 %v6965, 4294901760
      %6967 = vmatprep.subr.mxu0 %v6966
      %v6968 = vand.u32 %v6272, 4294901760
      %v6969 = vsub.f32 %v6272, %v6968
      %v6970 = vand.u32 %v6969, 4294901760
      %v6971 = vsub.f32 %v6969, %v6970
      %v6972 = vand.u32 %v6971, 4294901760
      %6973 = vmatpush1.msra.mxu0 %v6972
      %v6974 = vand.u32 %v6289, 4294901760
      %v6975 = vsub.f32 %v6289, %v6974
      %v6976 = vand.u32 %v6975, 4294901760
      %v6977 = vsub.f32 %v6975, %v6976
      %v6978 = vand.u32 %v6977, 4294901760
      %6979 = vmatprep.subr.mxu0 %v6978
      %v6980 = vand.u32 %v6288, 4294901760
      %v6981 = vsub.f32 %v6288, %v6980
      %v6982 = vand.u32 %v6981, 4294901760
      %v6983 = vsub.f32 %v6981, %v6982
      %v6984 = vand.u32 %v6983, 4294901760
      %6985 = vmatpush1.msra.mxu0 %v6984
      %6986 = vmatprep.subr.mxu0 0.0
      %6987 = vmatpush1.msra.mxu0 0.0
      %6988 = vmatprep.subr.mxu0 0.0
      %6989 = vmatpush1.msra.mxu0 0.0
      %6990 = vmatprep.subr.mxu0 0.0
      %6991 = vmatpush1.msra.mxu0 0.0
      %6992 = vmatprep.subr.mxu0 0.0
      %6993 = vmatpush1.msra.mxu0 0.0
      %6994 = vmatprep.subr.mxu0 0.0
      %6995 = vmatpush1.msra.mxu0 0.0
      %6996 = vmatprep.subr.mxu0 0.0
      %6997 = vmatpush1.msra.mxu0 0.0
      %6998 = vmatprep.subr.mxu0 0.0
      %6999 = vmatpush1.msra.mxu0 0.0
      %7000 = vmatprep.subr.mxu0 0.0
      %7001 = vmatpush1.msra.mxu0 0.0
      %7002 = vmatprep.subr.mxu0 0.0
      %7003 = vmatpush1.msra.mxu0 0.0
      %7004 = vmatprep.subr.mxu0 0.0
      %7005 = vmatpush1.msra.mxu0 0.0
      %7006 = vmatprep.subr.mxu0 0.0
      %7007 = vmatpush1.msra.mxu0 0.0
      %7008 = vmatprep.subr.mxu0 0.0
      %7009 = vmatpush1.msra.mxu0 0.0
      %7010 = vmatprep.subr.mxu0 0.0
      %7011 = vmatpush1.msra.mxu0 0.0
      %7012 = vmatprep.subr.mxu0 0.0
      %7013 = vmatpush1.msra.mxu0 0.0
      %7014 = vmatprep.subr.mxu0 0.0
      %7015 = vmatpush1.msra.mxu0 0.0
      %7016 = vmatprep.subr.mxu0 0.0
      %7017 = vmatpush1.msra.mxu0 0.0
      %7018 = vmatprep.subr.mxu0 0.0
      %7019 = vmatpush1.msra.mxu0 0.0
      %7020 = vmatprep.subr.mxu0 0.0
      %7021 = vmatpush1.msra.mxu0 0.0
      %7022 = vmatprep.subr.mxu0 0.0
      %7023 = vmatpush1.msra.mxu0 0.0
      %7024 = vmatprep.subr.mxu0 0.0
      %7025 = vmatpush1.msra.mxu0 0.0
      %7026 = vmatprep.subr.mxu0 0.0
      %7027 = vmatpush1.msra.mxu0 0.0
      %7028 = vmatprep.subr.mxu0 0.0
      %7029 = vmatpush1.msra.mxu0 0.0
      %7030 = vmatprep.subr.mxu0 0.0
      %7031 = vmatpush1.msra.mxu0 0.0
      %7032 = vmatprep.subr.mxu0 0.0
      %7033 = vmatpush1.msra.mxu0 0.0
      %7034 = vmatprep.subr.mxu0 0.0
      %7035 = vmatpush1.msra.mxu0 0.0
      %7036 = vmatprep.subr.mxu0 0.0
      %7037 = vmatpush1.msra.mxu0 0.0
      %7038 = vmatprep.subr.mxu0 0.0
      %7039 = vmatpush1.msra.mxu0 0.0
      %7040 = vmatprep.subr.mxu0 0.0
      %7041 = vmatpush1.msra.mxu0 0.0
      %7042 = vmatprep.mubr.f32.mxu0 0.0
      %v7043 = vand.u32 %v6309, 4294901760
      %7044 = vmatmul.mubr.f32.gmra.mrb[0].mxu0 %v7043
      %v7045 = vpop.f32.mrb[0].mxu0
      %v7046 = vadd.f32 %v6934, %v7045
      %v7047 = vpop.f32.mrb[0].mxu0
      %v7048 = vadd.f32 %v6936, %v7047
      %7049 = vdwg.mxu0
      %v7050 = vand.u32 %v6241, 4294901760
      %v7051 = vsub.f32 %v6241, %v7050
      %7052 = vmatprep.subr.mxu0 %v7051
      %v7053 = vand.u32 %v6240, 4294901760
      %v7054 = vsub.f32 %v6240, %v7053
      %7055 = vmatpush1.msra.mxu0 %v7054
      %v7056 = vand.u32 %v6257, 4294901760
      %v7057 = vsub.f32 %v6257, %v7056
      %7058 = vmatprep.subr.mxu0 %v7057
      %v7059 = vand.u32 %v6256, 4294901760
      %v7060 = vsub.f32 %v6256, %v7059
      %7061 = vmatpush1.msra.mxu0 %v7060
      %v7062 = vand.u32 %v6273, 4294901760
      %v7063 = vsub.f32 %v6273, %v7062
      %7064 = vmatprep.subr.mxu0 %v7063
      %v7065 = vand.u32 %v6272, 4294901760
      %v7066 = vsub.f32 %v6272, %v7065
      %7067 = vmatpush1.msra.mxu0 %v7066
      %v7068 = vand.u32 %v6289, 4294901760
      %v7069 = vsub.f32 %v6289, %v7068
      %7070 = vmatprep.subr.mxu0 %v7069
      %v7071 = vand.u32 %v6288, 4294901760
      %v7072 = vsub.f32 %v6288, %v7071
      %7073 = vmatpush1.msra.mxu0 %v7072
      %7074 = vmatprep.subr.mxu0 0.0
      %7075 = vmatpush1.msra.mxu0 0.0
      %7076 = vmatprep.subr.mxu0 0.0
      %7077 = vmatpush1.msra.mxu0 0.0
      %7078 = vmatprep.subr.mxu0 0.0
      %7079 = vmatpush1.msra.mxu0 0.0
      %7080 = vmatprep.subr.mxu0 0.0
      %7081 = vmatpush1.msra.mxu0 0.0
      %7082 = vmatprep.subr.mxu0 0.0
      %7083 = vmatpush1.msra.mxu0 0.0
      %7084 = vmatprep.subr.mxu0 0.0
      %7085 = vmatpush1.msra.mxu0 0.0
      %7086 = vmatprep.subr.mxu0 0.0
      %7087 = vmatpush1.msra.mxu0 0.0
      %7088 = vmatprep.subr.mxu0 0.0
      %7089 = vmatpush1.msra.mxu0 0.0
      %7090 = vmatprep.subr.mxu0 0.0
      %7091 = vmatpush1.msra.mxu0 0.0
      %7092 = vmatprep.subr.mxu0 0.0
      %7093 = vmatpush1.msra.mxu0 0.0
      %7094 = vmatprep.subr.mxu0 0.0
      %7095 = vmatpush1.msra.mxu0 0.0
      %7096 = vmatprep.subr.mxu0 0.0
      %7097 = vmatpush1.msra.mxu0 0.0
      %7098 = vmatprep.subr.mxu0 0.0
      %7099 = vmatpush1.msra.mxu0 0.0
      %7100 = vmatprep.subr.mxu0 0.0
      %7101 = vmatpush1.msra.mxu0 0.0
      %7102 = vmatprep.subr.mxu0 0.0
      %7103 = vmatpush1.msra.mxu0 0.0
      %7104 = vmatprep.subr.mxu0 0.0
      %7105 = vmatpush1.msra.mxu0 0.0
      %7106 = vmatprep.subr.mxu0 0.0
      %7107 = vmatpush1.msra.mxu0 0.0
      %7108 = vmatprep.subr.mxu0 0.0
      %7109 = vmatpush1.msra.mxu0 0.0
      %7110 = vmatprep.subr.mxu0 0.0
      %7111 = vmatpush1.msra.mxu0 0.0
      %7112 = vmatprep.subr.mxu0 0.0
      %7113 = vmatpush1.msra.mxu0 0.0
      %7114 = vmatprep.subr.mxu0 0.0
      %7115 = vmatpush1.msra.mxu0 0.0
      %7116 = vmatprep.subr.mxu0 0.0
      %7117 = vmatpush1.msra.mxu0 0.0
      %7118 = vmatprep.subr.mxu0 0.0
      %7119 = vmatpush1.msra.mxu0 0.0
      %7120 = vmatprep.subr.mxu0 0.0
      %7121 = vmatpush1.msra.mxu0 0.0
      %7122 = vmatprep.subr.mxu0 0.0
      %7123 = vmatpush1.msra.mxu0 0.0
      %7124 = vmatprep.subr.mxu0 0.0
      %7125 = vmatpush1.msra.mxu0 0.0
      %7126 = vmatprep.subr.mxu0 0.0
      %7127 = vmatpush1.msra.mxu0 0.0
      %7128 = vmatprep.subr.mxu0 0.0
      %7129 = vmatpush1.msra.mxu0 0.0
      %7130 = vmatprep.mubr.f32.mxu0 0.0
      %v7131 = vand.u32 %v6309, 4294901760
      %v7132 = vsub.f32 %v6309, %v7131
      %7133 = vmatmul.mubr.f32.gmra.mrb[0].mxu0 %v7132
      %v7134 = vpop.f32.mrb[0].mxu0
      %v7135 = vadd.f32 %v7046, %v7134
      %v7136 = vpop.f32.mrb[0].mxu0
      %v7137 = vadd.f32 %v7048, %v7136
      %7138 = vdwg.mxu0
      %v7139 = vand.u32 %v6241, 4294901760
      %7140 = vmatprep.subr.mxu0 %v7139
      %v7141 = vand.u32 %v6240, 4294901760
      %7142 = vmatpush1.msra.mxu0 %v7141
      %v7143 = vand.u32 %v6257, 4294901760
      %7144 = vmatprep.subr.mxu0 %v7143
      %v7145 = vand.u32 %v6256, 4294901760
      %7146 = vmatpush1.msra.mxu0 %v7145
      %v7147 = vand.u32 %v6273, 4294901760
      %7148 = vmatprep.subr.mxu0 %v7147
      %v7149 = vand.u32 %v6272, 4294901760
      %7150 = vmatpush1.msra.mxu0 %v7149
      %v7151 = vand.u32 %v6289, 4294901760
      %7152 = vmatprep.subr.mxu0 %v7151
      %v7153 = vand.u32 %v6288, 4294901760
      %7154 = vmatpush1.msra.mxu0 %v7153
      %7155 = vmatprep.subr.mxu0 0.0
      %7156 = vmatpush1.msra.mxu0 0.0
      %7157 = vmatprep.subr.mxu0 0.0
      %7158 = vmatpush1.msra.mxu0 0.0
      %7159 = vmatprep.subr.mxu0 0.0
      %7160 = vmatpush1.msra.mxu0 0.0
      %7161 = vmatprep.subr.mxu0 0.0
      %7162 = vmatpush1.msra.mxu0 0.0
      %7163 = vmatprep.subr.mxu0 0.0
      %7164 = vmatpush1.msra.mxu0 0.0
      %7165 = vmatprep.subr.mxu0 0.0
      %7166 = vmatpush1.msra.mxu0 0.0
      %7167 = vmatprep.subr.mxu0 0.0
      %7168 = vmatpush1.msra.mxu0 0.0
      %7169 = vmatprep.subr.mxu0 0.0
      %7170 = vmatpush1.msra.mxu0 0.0
      %7171 = vmatprep.subr.mxu0 0.0
      %7172 = vmatpush1.msra.mxu0 0.0
      %7173 = vmatprep.subr.mxu0 0.0
      %7174 = vmatpush1.msra.mxu0 0.0
      %7175 = vmatprep.subr.mxu0 0.0
      %7176 = vmatpush1.msra.mxu0 0.0
      %7177 = vmatprep.subr.mxu0 0.0
      %7178 = vmatpush1.msra.mxu0 0.0
      %7179 = vmatprep.subr.mxu0 0.0
      %7180 = vmatpush1.msra.mxu0 0.0
      %7181 = vmatprep.subr.mxu0 0.0
      %7182 = vmatpush1.msra.mxu0 0.0
      %7183 = vmatprep.subr.mxu0 0.0
      %7184 = vmatpush1.msra.mxu0 0.0
      %7185 = vmatprep.subr.mxu0 0.0
      %7186 = vmatpush1.msra.mxu0 0.0
      %7187 = vmatprep.subr.mxu0 0.0
      %7188 = vmatpush1.msra.mxu0 0.0
      %7189 = vmatprep.subr.mxu0 0.0
      %7190 = vmatpush1.msra.mxu0 0.0
      %7191 = vmatprep.subr.mxu0 0.0
      %7192 = vmatpush1.msra.mxu0 0.0
      %7193 = vmatprep.subr.mxu0 0.0
      %7194 = vmatpush1.msra.mxu0 0.0
      %7195 = vmatprep.subr.mxu0 0.0
      %7196 = vmatpush1.msra.mxu0 0.0
      %7197 = vmatprep.subr.mxu0 0.0
      %7198 = vmatpush1.msra.mxu0 0.0
      %7199 = vmatprep.subr.mxu0 0.0
      %7200 = vmatpush1.msra.mxu0 0.0
      %7201 = vmatprep.subr.mxu0 0.0
      %7202 = vmatpush1.msra.mxu0 0.0
      %7203 = vmatprep.subr.mxu0 0.0
      %7204 = vmatpush1.msra.mxu0 0.0
      %7205 = vmatprep.subr.mxu0 0.0
      %7206 = vmatpush1.msra.mxu0 0.0
      %7207 = vmatprep.subr.mxu0 0.0
      %7208 = vmatpush1.msra.mxu0 0.0
      %7209 = vmatprep.subr.mxu0 0.0
      %7210 = vmatpush1.msra.mxu0 0.0
      %7211 = vmatprep.mubr.f32.mxu0 0.0
      %v7212 = vand.u32 %v6309, 4294901760
      %v7213 = vsub.f32 %v6309, %v7212
      %v7214 = vand.u32 %v7213, 4294901760
      %7215 = vmatmul.mubr.f32.gmra.mrb[0].mxu0 %v7214
      %v7216 = vpop.f32.mrb[0].mxu0
      %v7217 = vadd.f32 %v7135, %v7216
      %v7218 = vpop.f32.mrb[0].mxu0
      %v7219 = vadd.f32 %v7137, %v7218
      %7220 = vdwg.mxu0
      %v7221 = vand.u32 %v6241, 4294901760
      %v7222 = vsub.f32 %v6241, %v7221
      %v7223 = vand.u32 %v7222, 4294901760
      %7224 = vmatprep.subr.mxu0 %v7223
      %v7225 = vand.u32 %v6240, 4294901760
      %v7226 = vsub.f32 %v6240, %v7225
      %v7227 = vand.u32 %v7226, 4294901760
      %7228 = vmatpush1.msra.mxu0 %v7227
      %v7229 = vand.u32 %v6257, 4294901760
      %v7230 = vsub.f32 %v6257, %v7229
      %v7231 = vand.u32 %v7230, 4294901760
      %7232 = vmatprep.subr.mxu0 %v7231
      %v7233 = vand.u32 %v6256, 4294901760
      %v7234 = vsub.f32 %v6256, %v7233
      %v7235 = vand.u32 %v7234, 4294901760
      %7236 = vmatpush1.msra.mxu0 %v7235
      %v7237 = vand.u32 %v6273, 4294901760
      %v7238 = vsub.f32 %v6273, %v7237
      %v7239 = vand.u32 %v7238, 4294901760
      %7240 = vmatprep.subr.mxu0 %v7239
      %v7241 = vand.u32 %v6272, 4294901760
      %v7242 = vsub.f32 %v6272, %v7241
      %v7243 = vand.u32 %v7242, 4294901760
      %7244 = vmatpush1.msra.mxu0 %v7243
      %v7245 = vand.u32 %v6289, 4294901760
      %v7246 = vsub.f32 %v6289, %v7245
      %v7247 = vand.u32 %v7246, 4294901760
      %7248 = vmatprep.subr.mxu0 %v7247
      %v7249 = vand.u32 %v6288, 4294901760
      %v7250 = vsub.f32 %v6288, %v7249
      %v7251 = vand.u32 %v7250, 4294901760
      %7252 = vmatpush1.msra.mxu0 %v7251
      %7253 = vmatprep.subr.mxu0 0.0
      %7254 = vmatpush1.msra.mxu0 0.0
      %7255 = vmatprep.subr.mxu0 0.0
      %7256 = vmatpush1.msra.mxu0 0.0
      %7257 = vmatprep.subr.mxu0 0.0
      %7258 = vmatpush1.msra.mxu0 0.0
      %7259 = vmatprep.subr.mxu0 0.0
      %7260 = vmatpush1.msra.mxu0 0.0
      %7261 = vmatprep.subr.mxu0 0.0
      %7262 = vmatpush1.msra.mxu0 0.0
      %7263 = vmatprep.subr.mxu0 0.0
      %7264 = vmatpush1.msra.mxu0 0.0
      %7265 = vmatprep.subr.mxu0 0.0
      %7266 = vmatpush1.msra.mxu0 0.0
      %7267 = vmatprep.subr.mxu0 0.0
      %7268 = vmatpush1.msra.mxu0 0.0
      %7269 = vmatprep.subr.mxu0 0.0
      %7270 = vmatpush1.msra.mxu0 0.0
      %7271 = vmatprep.subr.mxu0 0.0
      %7272 = vmatpush1.msra.mxu0 0.0
      %7273 = vmatprep.subr.mxu0 0.0
      %7274 = vmatpush1.msra.mxu0 0.0
      %7275 = vmatprep.subr.mxu0 0.0
      %7276 = vmatpush1.msra.mxu0 0.0
      %7277 = vmatprep.subr.mxu0 0.0
      %7278 = vmatpush1.msra.mxu0 0.0
      %7279 = vmatprep.subr.mxu0 0.0
      %7280 = vmatpush1.msra.mxu0 0.0
      %7281 = vmatprep.subr.mxu0 0.0
      %7282 = vmatpush1.msra.mxu0 0.0
      %7283 = vmatprep.subr.mxu0 0.0
      %7284 = vmatpush1.msra.mxu0 0.0
      %7285 = vmatprep.subr.mxu0 0.0
      %7286 = vmatpush1.msra.mxu0 0.0
      %7287 = vmatprep.subr.mxu0 0.0
      %7288 = vmatpush1.msra.mxu0 0.0
      %7289 = vmatprep.subr.mxu0 0.0
      %7290 = vmatpush1.msra.mxu0 0.0
      %7291 = vmatprep.subr.mxu0 0.0
      %7292 = vmatpush1.msra.mxu0 0.0
      %7293 = vmatprep.subr.mxu0 0.0
      %7294 = vmatpush1.msra.mxu0 0.0
      %7295 = vmatprep.subr.mxu0 0.0
      %7296 = vmatpush1.msra.mxu0 0.0
      %7297 = vmatprep.subr.mxu0 0.0
      %7298 = vmatpush1.msra.mxu0 0.0
      %7299 = vmatprep.subr.mxu0 0.0
      %7300 = vmatpush1.msra.mxu0 0.0
      %7301 = vmatprep.subr.mxu0 0.0
      %7302 = vmatpush1.msra.mxu0 0.0
      %7303 = vmatprep.subr.mxu0 0.0
      %7304 = vmatpush1.msra.mxu0 0.0
      %7305 = vmatprep.subr.mxu0 0.0
      %7306 = vmatpush1.msra.mxu0 0.0
      %7307 = vmatprep.subr.mxu0 0.0
      %7308 = vmatpush1.msra.mxu0 0.0
      %7309 = vmatprep.mubr.f32.mxu0 0.0
      %v7310 = vand.u32 %v6309, 4294901760
      %7311 = vmatmul.mubr.f32.gmra.mrb[0].mxu0 %v7310
      %v7312 = vpop.f32.mrb[0].mxu0
      %v7313 = vadd.f32 %v7217, %v7312
      %v7314 = vpop.f32.mrb[0].mxu0
      %v7315 = vadd.f32 %v7219, %v7314
      %7316 = vdwg.mxu0
      %v7317 = vand.u32 %v6241, 4294901760
      %7318 = vmatprep.subr.mxu0 %v7317
      %v7319 = vand.u32 %v6240, 4294901760
      %7320 = vmatpush1.msra.mxu0 %v7319
      %v7321 = vand.u32 %v6257, 4294901760
      %7322 = vmatprep.subr.mxu0 %v7321
      %v7323 = vand.u32 %v6256, 4294901760
      %7324 = vmatpush1.msra.mxu0 %v7323
      %v7325 = vand.u32 %v6273, 4294901760
      %7326 = vmatprep.subr.mxu0 %v7325
      %v7327 = vand.u32 %v6272, 4294901760
      %7328 = vmatpush1.msra.mxu0 %v7327
      %v7329 = vand.u32 %v6289, 4294901760
      %7330 = vmatprep.subr.mxu0 %v7329
      %v7331 = vand.u32 %v6288, 4294901760
      %7332 = vmatpush1.msra.mxu0 %v7331
      %7333 = vmatprep.subr.mxu0 0.0
      %7334 = vmatpush1.msra.mxu0 0.0
      %7335 = vmatprep.subr.mxu0 0.0
      %7336 = vmatpush1.msra.mxu0 0.0
      %7337 = vmatprep.subr.mxu0 0.0
      %7338 = vmatpush1.msra.mxu0 0.0
      %7339 = vmatprep.subr.mxu0 0.0
      %7340 = vmatpush1.msra.mxu0 0.0
      %7341 = vmatprep.subr.mxu0 0.0
      %7342 = vmatpush1.msra.mxu0 0.0
      %7343 = vmatprep.subr.mxu0 0.0
      %7344 = vmatpush1.msra.mxu0 0.0
      %7345 = vmatprep.subr.mxu0 0.0
      %7346 = vmatpush1.msra.mxu0 0.0
      %7347 = vmatprep.subr.mxu0 0.0
      %7348 = vmatpush1.msra.mxu0 0.0
      %7349 = vmatprep.subr.mxu0 0.0
      %7350 = vmatpush1.msra.mxu0 0.0
      %7351 = vmatprep.subr.mxu0 0.0
      %7352 = vmatpush1.msra.mxu0 0.0
      %7353 = vmatprep.subr.mxu0 0.0
      %7354 = vmatpush1.msra.mxu0 0.0
      %7355 = vmatprep.subr.mxu0 0.0
      %7356 = vmatpush1.msra.mxu0 0.0
      %7357 = vmatprep.subr.mxu0 0.0
      %7358 = vmatpush1.msra.mxu0 0.0
      %7359 = vmatprep.subr.mxu0 0.0
      %7360 = vmatpush1.msra.mxu0 0.0
      %7361 = vmatprep.subr.mxu0 0.0
      %7362 = vmatpush1.msra.mxu0 0.0
      %7363 = vmatprep.subr.mxu0 0.0
      %7364 = vmatpush1.msra.mxu0 0.0
      %7365 = vmatprep.subr.mxu0 0.0
      %7366 = vmatpush1.msra.mxu0 0.0
      %7367 = vmatprep.subr.mxu0 0.0
      %7368 = vmatpush1.msra.mxu0 0.0
      %7369 = vmatprep.subr.mxu0 0.0
      %7370 = vmatpush1.msra.mxu0 0.0
      %7371 = vmatprep.subr.mxu0 0.0
      %7372 = vmatpush1.msra.mxu0 0.0
      %7373 = vmatprep.subr.mxu0 0.0
      %7374 = vmatpush1.msra.mxu0 0.0
      %7375 = vmatprep.subr.mxu0 0.0
      %7376 = vmatpush1.msra.mxu0 0.0
      %7377 = vmatprep.subr.mxu0 0.0
      %7378 = vmatpush1.msra.mxu0 0.0
      %7379 = vmatprep.subr.mxu0 0.0
      %7380 = vmatpush1.msra.mxu0 0.0
      %7381 = vmatprep.subr.mxu0 0.0
      %7382 = vmatpush1.msra.mxu0 0.0
      %7383 = vmatprep.subr.mxu0 0.0
      %7384 = vmatpush1.msra.mxu0 0.0
      %7385 = vmatprep.subr.mxu0 0.0
      %7386 = vmatpush1.msra.mxu0 0.0
      %7387 = vmatprep.subr.mxu0 0.0
      %7388 = vmatpush1.msra.mxu0 0.0
      %7389 = vmatprep.mubr.f32.mxu0 0.0
      %v7390 = vand.u32 %v6309, 4294901760
      %7391 = vmatmul.mubr.f32.gmra.mrb[0].mxu0 %v7390
      %v7392 = vpop.f32.mrb[0].mxu0
      %v7393 = vadd.f32 %v7313, %v7392
      %v7394 = vpop.f32.mrb[0].mxu0
      %v7395 = vadd.f32 %v7315, %v7394
      %7396 = vdwg.mxu0
      %v7397 = vand.u32 %v6243, 4294901760
      %7398 = vmatprep.subr.mxu0 %v7397
      %v7399 = vand.u32 %v6242, 4294901760
      %7400 = vmatpush1.msra.mxu0 %v7399
      %v7401 = vand.u32 %v6259, 4294901760
      %7402 = vmatprep.subr.mxu0 %v7401
      %v7403 = vand.u32 %v6258, 4294901760
      %7404 = vmatpush1.msra.mxu0 %v7403
      %v7405 = vand.u32 %v6275, 4294901760
      %7406 = vmatprep.subr.mxu0 %v7405
      %v7407 = vand.u32 %v6274, 4294901760
      %7408 = vmatpush1.msra.mxu0 %v7407
      %v7409 = vand.u32 %v6291, 4294901760
      %7410 = vmatprep.subr.mxu0 %v7409
      %v7411 = vand.u32 %v6290, 4294901760
      %7412 = vmatpush1.msra.mxu0 %v7411
      %7413 = vmatprep.subr.mxu0 0.0
      %7414 = vmatpush1.msra.mxu0 0.0
      %7415 = vmatprep.subr.mxu0 0.0
      %7416 = vmatpush1.msra.mxu0 0.0
      %7417 = vmatprep.subr.mxu0 0.0
      %7418 = vmatpush1.msra.mxu0 0.0
      %7419 = vmatprep.subr.mxu0 0.0
      %7420 = vmatpush1.msra.mxu0 0.0
      %7421 = vmatprep.subr.mxu0 0.0
      %7422 = vmatpush1.msra.mxu0 0.0
      %7423 = vmatprep.subr.mxu0 0.0
      %7424 = vmatpush1.msra.mxu0 0.0
      %7425 = vmatprep.subr.mxu0 0.0
      %7426 = vmatpush1.msra.mxu0 0.0
      %7427 = vmatprep.subr.mxu0 0.0
      %7428 = vmatpush1.msra.mxu0 0.0
      %7429 = vmatprep.subr.mxu0 0.0
      %7430 = vmatpush1.msra.mxu0 0.0
      %7431 = vmatprep.subr.mxu0 0.0
      %7432 = vmatpush1.msra.mxu0 0.0
      %7433 = vmatprep.subr.mxu0 0.0
      %7434 = vmatpush1.msra.mxu0 0.0
      %7435 = vmatprep.subr.mxu0 0.0
      %7436 = vmatpush1.msra.mxu0 0.0
      %7437 = vmatprep.subr.mxu0 0.0
      %7438 = vmatpush1.msra.mxu0 0.0
      %7439 = vmatprep.subr.mxu0 0.0
      %7440 = vmatpush1.msra.mxu0 0.0
      %7441 = vmatprep.subr.mxu0 0.0
      %7442 = vmatpush1.msra.mxu0 0.0
      %7443 = vmatprep.subr.mxu0 0.0
      %7444 = vmatpush1.msra.mxu0 0.0
      %7445 = vmatprep.subr.mxu0 0.0
      %7446 = vmatpush1.msra.mxu0 0.0
      %7447 = vmatprep.subr.mxu0 0.0
      %7448 = vmatpush1.msra.mxu0 0.0
      %7449 = vmatprep.subr.mxu0 0.0
      %7450 = vmatpush1.msra.mxu0 0.0
      %7451 = vmatprep.subr.mxu0 0.0
      %7452 = vmatpush1.msra.mxu0 0.0
      %7453 = vmatprep.subr.mxu0 0.0
      %7454 = vmatpush1.msra.mxu0 0.0
      %7455 = vmatprep.subr.mxu0 0.0
      %7456 = vmatpush1.msra.mxu0 0.0
      %7457 = vmatprep.subr.mxu0 0.0
      %7458 = vmatpush1.msra.mxu0 0.0
      %7459 = vmatprep.subr.mxu0 0.0
      %7460 = vmatpush1.msra.mxu0 0.0
      %7461 = vmatprep.subr.mxu0 0.0
      %7462 = vmatpush1.msra.mxu0 0.0
      %7463 = vmatprep.subr.mxu0 0.0
      %7464 = vmatpush1.msra.mxu0 0.0
      %7465 = vmatprep.subr.mxu0 0.0
      %7466 = vmatpush1.msra.mxu0 0.0
      %7467 = vmatprep.subr.mxu0 0.0
      %7468 = vmatpush1.msra.mxu0 0.0
      %7469 = vmatprep.mubr.f32.mxu0 0.0
      %v7470 = vand.u32 %v6309, 4294901760
      %v7471 = vsub.f32 %v6309, %v7470
      %v7472 = vand.u32 %v7471, 4294901760
      %v7473 = vsub.f32 %v7471, %v7472
      %v7474 = vand.u32 %v7473, 4294901760
      %7475 = vmatmul.mubr.f32.gmra.mrb[0].mxu0 %v7474
      %v7476 = vpop.f32.mrb[0].mxu0
      %v7477 = vadd.f32 %v6305, %v7476
      %v7478 = vpop.f32.mrb[0].mxu0
      %v7479 = vadd.f32 %v6305, %v7478
      %7480 = vdwg.mxu0
      %v7481 = vand.u32 %v6243, 4294901760
      %v7482 = vsub.f32 %v6243, %v7481
      %v7483 = vand.u32 %v7482, 4294901760
      %v7484 = vsub.f32 %v7482, %v7483
      %v7485 = vand.u32 %v7484, 4294901760
      %7486 = vmatprep.subr.mxu0 %v7485
      %v7487 = vand.u32 %v6242, 4294901760
      %v7488 = vsub.f32 %v6242, %v7487
      %v7489 = vand.u32 %v7488, 4294901760
      %v7490 = vsub.f32 %v7488, %v7489
      %v7491 = vand.u32 %v7490, 4294901760
      %7492 = vmatpush1.msra.mxu0 %v7491
      %v7493 = vand.u32 %v6259, 4294901760
      %v7494 = vsub.f32 %v6259, %v7493
      %v7495 = vand.u32 %v7494, 4294901760
      %v7496 = vsub.f32 %v7494, %v7495
      %v7497 = vand.u32 %v7496, 4294901760
      %7498 = vmatprep.subr.mxu0 %v7497
      %v7499 = vand.u32 %v6258, 4294901760
      %v7500 = vsub.f32 %v6258, %v7499
      %v7501 = vand.u32 %v7500, 4294901760
      %v7502 = vsub.f32 %v7500, %v7501
      %v7503 = vand.u32 %v7502, 4294901760
      %7504 = vmatpush1.msra.mxu0 %v7503
      %v7505 = vand.u32 %v6275, 4294901760
      %v7506 = vsub.f32 %v6275, %v7505
      %v7507 = vand.u32 %v7506, 4294901760
      %v7508 = vsub.f32 %v7506, %v7507
      %v7509 = vand.u32 %v7508, 4294901760
      %7510 = vmatprep.subr.mxu0 %v7509
      %v7511 = vand.u32 %v6274, 4294901760
      %v7512 = vsub.f32 %v6274, %v7511
      %v7513 = vand.u32 %v7512, 4294901760
      %v7514 = vsub.f32 %v7512, %v7513
      %v7515 = vand.u32 %v7514, 4294901760
      %7516 = vmatpush1.msra.mxu0 %v7515
      %v7517 = vand.u32 %v6291, 4294901760
      %v7518 = vsub.f32 %v6291, %v7517
      %v7519 = vand.u32 %v7518, 4294901760
      %v7520 = vsub.f32 %v7518, %v7519
      %v7521 = vand.u32 %v7520, 4294901760
      %7522 = vmatprep.subr.mxu0 %v7521
      %v7523 = vand.u32 %v6290, 4294901760
      %v7524 = vsub.f32 %v6290, %v7523
      %v7525 = vand.u32 %v7524, 4294901760
      %v7526 = vsub.f32 %v7524, %v7525
      %v7527 = vand.u32 %v7526, 4294901760
      %7528 = vmatpush1.msra.mxu0 %v7527
      %7529 = vmatprep.subr.mxu0 0.0
      %7530 = vmatpush1.msra.mxu0 0.0
      %7531 = vmatprep.subr.mxu0 0.0
      %7532 = vmatpush1.msra.mxu0 0.0
      %7533 = vmatprep.subr.mxu0 0.0
      %7534 = vmatpush1.msra.mxu0 0.0
      %7535 = vmatprep.subr.mxu0 0.0
      %7536 = vmatpush1.msra.mxu0 0.0
      %7537 = vmatprep.subr.mxu0 0.0
      %7538 = vmatpush1.msra.mxu0 0.0
      %7539 = vmatprep.subr.mxu0 0.0
      %7540 = vmatpush1.msra.mxu0 0.0
      %7541 = vmatprep.subr.mxu0 0.0
      %7542 = vmatpush1.msra.mxu0 0.0
      %7543 = vmatprep.subr.mxu0 0.0
      %7544 = vmatpush1.msra.mxu0 0.0
      %7545 = vmatprep.subr.mxu0 0.0
      %7546 = vmatpush1.msra.mxu0 0.0
      %7547 = vmatprep.subr.mxu0 0.0
      %7548 = vmatpush1.msra.mxu0 0.0
      %7549 = vmatprep.subr.mxu0 0.0
      %7550 = vmatpush1.msra.mxu0 0.0
      %7551 = vmatprep.subr.mxu0 0.0
      %7552 = vmatpush1.msra.mxu0 0.0
      %7553 = vmatprep.subr.mxu0 0.0
      %7554 = vmatpush1.msra.mxu0 0.0
      %7555 = vmatprep.subr.mxu0 0.0
      %7556 = vmatpush1.msra.mxu0 0.0
      %7557 = vmatprep.subr.mxu0 0.0
      %7558 = vmatpush1.msra.mxu0 0.0
      %7559 = vmatprep.subr.mxu0 0.0
      %7560 = vmatpush1.msra.mxu0 0.0
      %7561 = vmatprep.subr.mxu0 0.0
      %7562 = vmatpush1.msra.mxu0 0.0
      %7563 = vmatprep.subr.mxu0 0.0
      %7564 = vmatpush1.msra.mxu0 0.0
      %7565 = vmatprep.subr.mxu0 0.0
      %7566 = vmatpush1.msra.mxu0 0.0
      %7567 = vmatprep.subr.mxu0 0.0
      %7568 = vmatpush1.msra.mxu0 0.0
      %7569 = vmatprep.subr.mxu0 0.0
      %7570 = vmatpush1.msra.mxu0 0.0
      %7571 = vmatprep.subr.mxu0 0.0
      %7572 = vmatpush1.msra.mxu0 0.0
      %7573 = vmatprep.subr.mxu0 0.0
      %7574 = vmatpush1.msra.mxu0 0.0
      %7575 = vmatprep.subr.mxu0 0.0
      %7576 = vmatpush1.msra.mxu0 0.0
      %7577 = vmatprep.subr.mxu0 0.0
      %7578 = vmatpush1.msra.mxu0 0.0
      %7579 = vmatprep.subr.mxu0 0.0
      %7580 = vmatpush1.msra.mxu0 0.0
      %7581 = vmatprep.subr.mxu0 0.0
      %7582 = vmatpush1.msra.mxu0 0.0
      %7583 = vmatprep.subr.mxu0 0.0
      %7584 = vmatpush1.msra.mxu0 0.0
      %7585 = vmatprep.mubr.f32.mxu0 0.0
      %v7586 = vand.u32 %v6309, 4294901760
      %7587 = vmatmul.mubr.f32.gmra.mrb[0].mxu0 %v7586
      %v7588 = vpop.f32.mrb[0].mxu0
      %v7589 = vadd.f32 %v7477, %v7588
      %v7590 = vpop.f32.mrb[0].mxu0
      %v7591 = vadd.f32 %v7479, %v7590
      %7592 = vdwg.mxu0
      %v7593 = vand.u32 %v6243, 4294901760
      %v7594 = vsub.f32 %v6243, %v7593
      %7595 = vmatprep.subr.mxu0 %v7594
      %v7596 = vand.u32 %v6242, 4294901760
      %v7597 = vsub.f32 %v6242, %v7596
      %7598 = vmatpush1.msra.mxu0 %v7597
      %v7599 = vand.u32 %v6259, 4294901760
      %v7600 = vsub.f32 %v6259, %v7599
      %7601 = vmatprep.subr.mxu0 %v7600
      %v7602 = vand.u32 %v6258, 4294901760
      %v7603 = vsub.f32 %v6258, %v7602
      %7604 = vmatpush1.msra.mxu0 %v7603
      %v7605 = vand.u32 %v6275, 4294901760
      %v7606 = vsub.f32 %v6275, %v7605
      %7607 = vmatprep.subr.mxu0 %v7606
      %v7608 = vand.u32 %v6274, 4294901760
      %v7609 = vsub.f32 %v6274, %v7608
      %7610 = vmatpush1.msra.mxu0 %v7609
      %v7611 = vand.u32 %v6291, 4294901760
      %v7612 = vsub.f32 %v6291, %v7611
      %7613 = vmatprep.subr.mxu0 %v7612
      %v7614 = vand.u32 %v6290, 4294901760
      %v7615 = vsub.f32 %v6290, %v7614
      %7616 = vmatpush1.msra.mxu0 %v7615
      %7617 = vmatprep.subr.mxu0 0.0
      %7618 = vmatpush1.msra.mxu0 0.0
      %7619 = vmatprep.subr.mxu0 0.0
      %7620 = vmatpush1.msra.mxu0 0.0
      %7621 = vmatprep.subr.mxu0 0.0
      %7622 = vmatpush1.msra.mxu0 0.0
      %7623 = vmatprep.subr.mxu0 0.0
      %7624 = vmatpush1.msra.mxu0 0.0
      %7625 = vmatprep.subr.mxu0 0.0
      %7626 = vmatpush1.msra.mxu0 0.0
      %7627 = vmatprep.subr.mxu0 0.0
      %7628 = vmatpush1.msra.mxu0 0.0
      %7629 = vmatprep.subr.mxu0 0.0
      %7630 = vmatpush1.msra.mxu0 0.0
      %7631 = vmatprep.subr.mxu0 0.0
      %7632 = vmatpush1.msra.mxu0 0.0
      %7633 = vmatprep.subr.mxu0 0.0
      %7634 = vmatpush1.msra.mxu0 0.0
      %7635 = vmatprep.subr.mxu0 0.0
      %7636 = vmatpush1.msra.mxu0 0.0
      %7637 = vmatprep.subr.mxu0 0.0
      %7638 = vmatpush1.msra.mxu0 0.0
      %7639 = vmatprep.subr.mxu0 0.0
      %7640 = vmatpush1.msra.mxu0 0.0
      %7641 = vmatprep.subr.mxu0 0.0
      %7642 = vmatpush1.msra.mxu0 0.0
      %7643 = vmatprep.subr.mxu0 0.0
      %7644 = vmatpush1.msra.mxu0 0.0
      %7645 = vmatprep.subr.mxu0 0.0
      %7646 = vmatpush1.msra.mxu0 0.0
      %7647 = vmatprep.subr.mxu0 0.0
      %7648 = vmatpush1.msra.mxu0 0.0
      %7649 = vmatprep.subr.mxu0 0.0
      %7650 = vmatpush1.msra.mxu0 0.0
      %7651 = vmatprep.subr.mxu0 0.0
      %7652 = vmatpush1.msra.mxu0 0.0
      %7653 = vmatprep.subr.mxu0 0.0
      %7654 = vmatpush1.msra.mxu0 0.0
      %7655 = vmatprep.subr.mxu0 0.0
      %7656 = vmatpush1.msra.mxu0 0.0
      %7657 = vmatprep.subr.mxu0 0.0
      %7658 = vmatpush1.msra.mxu0 0.0
      %7659 = vmatprep.subr.mxu0 0.0
      %7660 = vmatpush1.msra.mxu0 0.0
      %7661 = vmatprep.subr.mxu0 0.0
      %7662 = vmatpush1.msra.mxu0 0.0
      %7663 = vmatprep.subr.mxu0 0.0
      %7664 = vmatpush1.msra.mxu0 0.0
      %7665 = vmatprep.subr.mxu0 0.0
      %7666 = vmatpush1.msra.mxu0 0.0
      %7667 = vmatprep.subr.mxu0 0.0
      %7668 = vmatpush1.msra.mxu0 0.0
      %7669 = vmatprep.subr.mxu0 0.0
      %7670 = vmatpush1.msra.mxu0 0.0
      %7671 = vmatprep.subr.mxu0 0.0
      %7672 = vmatpush1.msra.mxu0 0.0
      %7673 = vmatprep.mubr.f32.mxu0 0.0
      %v7674 = vand.u32 %v6309, 4294901760
      %v7675 = vsub.f32 %v6309, %v7674
      %7676 = vmatmul.mubr.f32.gmra.mrb[0].mxu0 %v7675
      %v7677 = vpop.f32.mrb[0].mxu0
      %v7678 = vadd.f32 %v7589, %v7677
      %v7679 = vpop.f32.mrb[0].mxu0
      %v7680 = vadd.f32 %v7591, %v7679
      %7681 = vdwg.mxu0
      %v7682 = vand.u32 %v6243, 4294901760
      %7683 = vmatprep.subr.mxu0 %v7682
      %v7684 = vand.u32 %v6242, 4294901760
      %7685 = vmatpush1.msra.mxu0 %v7684
      %v7686 = vand.u32 %v6259, 4294901760
      %7687 = vmatprep.subr.mxu0 %v7686
      %v7688 = vand.u32 %v6258, 4294901760
      %7689 = vmatpush1.msra.mxu0 %v7688
      %v7690 = vand.u32 %v6275, 4294901760
      %7691 = vmatprep.subr.mxu0 %v7690
      %v7692 = vand.u32 %v6274, 4294901760
      %7693 = vmatpush1.msra.mxu0 %v7692
      %v7694 = vand.u32 %v6291, 4294901760
      %7695 = vmatprep.subr.mxu0 %v7694
      %v7696 = vand.u32 %v6290, 4294901760
      %7697 = vmatpush1.msra.mxu0 %v7696
      %7698 = vmatprep.subr.mxu0 0.0
      %7699 = vmatpush1.msra.mxu0 0.0
      %7700 = vmatprep.subr.mxu0 0.0
      %7701 = vmatpush1.msra.mxu0 0.0
      %7702 = vmatprep.subr.mxu0 0.0
      %7703 = vmatpush1.msra.mxu0 0.0
      %7704 = vmatprep.subr.mxu0 0.0
      %7705 = vmatpush1.msra.mxu0 0.0
      %7706 = vmatprep.subr.mxu0 0.0
      %7707 = vmatpush1.msra.mxu0 0.0
      %7708 = vmatprep.subr.mxu0 0.0
      %7709 = vmatpush1.msra.mxu0 0.0
      %7710 = vmatprep.subr.mxu0 0.0
      %7711 = vmatpush1.msra.mxu0 0.0
      %7712 = vmatprep.subr.mxu0 0.0
      %7713 = vmatpush1.msra.mxu0 0.0
      %7714 = vmatprep.subr.mxu0 0.0
      %7715 = vmatpush1.msra.mxu0 0.0
      %7716 = vmatprep.subr.mxu0 0.0
      %7717 = vmatpush1.msra.mxu0 0.0
      %7718 = vmatprep.subr.mxu0 0.0
      %7719 = vmatpush1.msra.mxu0 0.0
      %7720 = vmatprep.subr.mxu0 0.0
      %7721 = vmatpush1.msra.mxu0 0.0
      %7722 = vmatprep.subr.mxu0 0.0
      %7723 = vmatpush1.msra.mxu0 0.0
      %7724 = vmatprep.subr.mxu0 0.0
      %7725 = vmatpush1.msra.mxu0 0.0
      %7726 = vmatprep.subr.mxu0 0.0
      %7727 = vmatpush1.msra.mxu0 0.0
      %7728 = vmatprep.subr.mxu0 0.0
      %7729 = vmatpush1.msra.mxu0 0.0
      %7730 = vmatprep.subr.mxu0 0.0
      %7731 = vmatpush1.msra.mxu0 0.0
      %7732 = vmatprep.subr.mxu0 0.0
      %7733 = vmatpush1.msra.mxu0 0.0
      %7734 = vmatprep.subr.mxu0 0.0
      %7735 = vmatpush1.msra.mxu0 0.0
      %7736 = vmatprep.subr.mxu0 0.0
      %7737 = vmatpush1.msra.mxu0 0.0
      %7738 = vmatprep.subr.mxu0 0.0
      %7739 = vmatpush1.msra.mxu0 0.0
      %7740 = vmatprep.subr.mxu0 0.0
      %7741 = vmatpush1.msra.mxu0 0.0
      %7742 = vmatprep.subr.mxu0 0.0
      %7743 = vmatpush1.msra.mxu0 0.0
      %7744 = vmatprep.subr.mxu0 0.0
      %7745 = vmatpush1.msra.mxu0 0.0
      %7746 = vmatprep.subr.mxu0 0.0
      %7747 = vmatpush1.msra.mxu0 0.0
      %7748 = vmatprep.subr.mxu0 0.0
      %7749 = vmatpush1.msra.mxu0 0.0
      %7750 = vmatprep.subr.mxu0 0.0
      %7751 = vmatpush1.msra.mxu0 0.0
      %7752 = vmatprep.subr.mxu0 0.0
      %7753 = vmatpush1.msra.mxu0 0.0
      %7754 = vmatprep.mubr.f32.mxu0 0.0
      %v7755 = vand.u32 %v6309, 4294901760
      %v7756 = vsub.f32 %v6309, %v7755
      %v7757 = vand.u32 %v7756, 4294901760
      %7758 = vmatmul.mubr.f32.gmra.mrb[0].mxu0 %v7757
      %v7759 = vpop.f32.mrb[0].mxu0
      %v7760 = vadd.f32 %v7678, %v7759
      %v7761 = vpop.f32.mrb[0].mxu0
      %v7762 = vadd.f32 %v7680, %v7761
      %7763 = vdwg.mxu0
      %v7764 = vand.u32 %v6243, 4294901760
      %v7765 = vsub.f32 %v6243, %v7764
      %v7766 = vand.u32 %v7765, 4294901760
      %7767 = vmatprep.subr.mxu0 %v7766
      %v7768 = vand.u32 %v6242, 4294901760
      %v7769 = vsub.f32 %v6242, %v7768
      %v7770 = vand.u32 %v7769, 4294901760
      %7771 = vmatpush1.msra.mxu0 %v7770
      %v7772 = vand.u32 %v6259, 4294901760
      %v7773 = vsub.f32 %v6259, %v7772
      %v7774 = vand.u32 %v7773, 4294901760
      %7775 = vmatprep.subr.mxu0 %v7774
      %v7776 = vand.u32 %v6258, 4294901760
      %v7777 = vsub.f32 %v6258, %v7776
      %v7778 = vand.u32 %v7777, 4294901760
      %7779 = vmatpush1.msra.mxu0 %v7778
      %v7780 = vand.u32 %v6275, 4294901760
      %v7781 = vsub.f32 %v6275, %v7780
      %v7782 = vand.u32 %v7781, 4294901760
      %7783 = vmatprep.subr.mxu0 %v7782
      %v7784 = vand.u32 %v6274, 4294901760
      %v7785 = vsub.f32 %v6274, %v7784
      %v7786 = vand.u32 %v7785, 4294901760
      %7787 = vmatpush1.msra.mxu0 %v7786
      %v7788 = vand.u32 %v6291, 4294901760
      %v7789 = vsub.f32 %v6291, %v7788
      %v7790 = vand.u32 %v7789, 4294901760
      %7791 = vmatprep.subr.mxu0 %v7790
      %v7792 = vand.u32 %v6290, 4294901760
      %v7793 = vsub.f32 %v6290, %v7792
      %v7794 = vand.u32 %v7793, 4294901760
      %7795 = vmatpush1.msra.mxu0 %v7794
      %7796 = vmatprep.subr.mxu0 0.0
      %7797 = vmatpush1.msra.mxu0 0.0
      %7798 = vmatprep.subr.mxu0 0.0
      %7799 = vmatpush1.msra.mxu0 0.0
      %7800 = vmatprep.subr.mxu0 0.0
      %7801 = vmatpush1.msra.mxu0 0.0
      %7802 = vmatprep.subr.mxu0 0.0
      %7803 = vmatpush1.msra.mxu0 0.0
      %7804 = vmatprep.subr.mxu0 0.0
      %7805 = vmatpush1.msra.mxu0 0.0
      %7806 = vmatprep.subr.mxu0 0.0
      %7807 = vmatpush1.msra.mxu0 0.0
      %7808 = vmatprep.subr.mxu0 0.0
      %7809 = vmatpush1.msra.mxu0 0.0
      %7810 = vmatprep.subr.mxu0 0.0
      %7811 = vmatpush1.msra.mxu0 0.0
      %7812 = vmatprep.subr.mxu0 0.0
      %7813 = vmatpush1.msra.mxu0 0.0
      %7814 = vmatprep.subr.mxu0 0.0
      %7815 = vmatpush1.msra.mxu0 0.0
      %7816 = vmatprep.subr.mxu0 0.0
      %7817 = vmatpush1.msra.mxu0 0.0
      %7818 = vmatprep.subr.mxu0 0.0
      %7819 = vmatpush1.msra.mxu0 0.0
      %7820 = vmatprep.subr.mxu0 0.0
      %7821 = vmatpush1.msra.mxu0 0.0
      %7822 = vmatprep.subr.mxu0 0.0
      %7823 = vmatpush1.msra.mxu0 0.0
      %7824 = vmatprep.subr.mxu0 0.0
      %7825 = vmatpush1.msra.mxu0 0.0
      %7826 = vmatprep.subr.mxu0 0.0
      %7827 = vmatpush1.msra.mxu0 0.0
      %7828 = vmatprep.subr.mxu0 0.0
      %7829 = vmatpush1.msra.mxu0 0.0
      %7830 = vmatprep.subr.mxu0 0.0
      %7831 = vmatpush1.msra.mxu0 0.0
      %7832 = vmatprep.subr.mxu0 0.0
      %7833 = vmatpush1.msra.mxu0 0.0
      %7834 = vmatprep.subr.mxu0 0.0
      %7835 = vmatpush1.msra.mxu0 0.0
      %7836 = vmatprep.subr.mxu0 0.0
      %7837 = vmatpush1.msra.mxu0 0.0
      %7838 = vmatprep.subr.mxu0 0.0
      %7839 = vmatpush1.msra.mxu0 0.0
      %7840 = vmatprep.subr.mxu0 0.0
      %7841 = vmatpush1.msra.mxu0 0.0
      %7842 = vmatprep.subr.mxu0 0.0
      %7843 = vmatpush1.msra.mxu0 0.0
      %7844 = vmatprep.subr.mxu0 0.0
      %7845 = vmatpush1.msra.mxu0 0.0
      %7846 = vmatprep.subr.mxu0 0.0
      %7847 = vmatpush1.msra.mxu0 0.0
      %7848 = vmatprep.subr.mxu0 0.0
      %7849 = vmatpush1.msra.mxu0 0.0
      %7850 = vmatprep.subr.mxu0 0.0
      %7851 = vmatpush1.msra.mxu0 0.0
      %7852 = vmatprep.mubr.f32.mxu0 0.0
      %v7853 = vand.u32 %v6309, 4294901760
      %7854 = vmatmul.mubr.f32.gmra.mrb[0].mxu0 %v7853
      %v7855 = vpop.f32.mrb[0].mxu0
      %v7856 = vadd.f32 %v7760, %v7855
      %v7857 = vpop.f32.mrb[0].mxu0
      %v7858 = vadd.f32 %v7762, %v7857
      %7859 = vdwg.mxu0
      %v7860 = vand.u32 %v6243, 4294901760
      %7861 = vmatprep.subr.mxu0 %v7860
      %v7862 = vand.u32 %v6242, 4294901760
      %7863 = vmatpush1.msra.mxu0 %v7862
      %v7864 = vand.u32 %v6259, 4294901760
      %7865 = vmatprep.subr.mxu0 %v7864
      %v7866 = vand.u32 %v6258, 4294901760
      %7867 = vmatpush1.msra.mxu0 %v7866
      %v7868 = vand.u32 %v6275, 4294901760
      %7869 = vmatprep.subr.mxu0 %v7868
      %v7870 = vand.u32 %v6274, 4294901760
      %7871 = vmatpush1.msra.mxu0 %v7870
      %v7872 = vand.u32 %v6291, 4294901760
      %7873 = vmatprep.subr.mxu0 %v7872
      %v7874 = vand.u32 %v6290, 4294901760
      %7875 = vmatpush1.msra.mxu0 %v7874
      %7876 = vmatprep.subr.mxu0 0.0
      %7877 = vmatpush1.msra.mxu0 0.0
      %7878 = vmatprep.subr.mxu0 0.0
      %7879 = vmatpush1.msra.mxu0 0.0
      %7880 = vmatprep.subr.mxu0 0.0
      %7881 = vmatpush1.msra.mxu0 0.0
      %7882 = vmatprep.subr.mxu0 0.0
      %7883 = vmatpush1.msra.mxu0 0.0
      %7884 = vmatprep.subr.mxu0 0.0
      %7885 = vmatpush1.msra.mxu0 0.0
      %7886 = vmatprep.subr.mxu0 0.0
      %7887 = vmatpush1.msra.mxu0 0.0
      %7888 = vmatprep.subr.mxu0 0.0
      %7889 = vmatpush1.msra.mxu0 0.0
      %7890 = vmatprep.subr.mxu0 0.0
      %7891 = vmatpush1.msra.mxu0 0.0
      %7892 = vmatprep.subr.mxu0 0.0
      %7893 = vmatpush1.msra.mxu0 0.0
      %7894 = vmatprep.subr.mxu0 0.0
      %7895 = vmatpush1.msra.mxu0 0.0
      %7896 = vmatprep.subr.mxu0 0.0
      %7897 = vmatpush1.msra.mxu0 0.0
      %7898 = vmatprep.subr.mxu0 0.0
      %7899 = vmatpush1.msra.mxu0 0.0
      %7900 = vmatprep.subr.mxu0 0.0
      %7901 = vmatpush1.msra.mxu0 0.0
      %7902 = vmatprep.subr.mxu0 0.0
      %7903 = vmatpush1.msra.mxu0 0.0
      %7904 = vmatprep.subr.mxu0 0.0
      %7905 = vmatpush1.msra.mxu0 0.0
      %7906 = vmatprep.subr.mxu0 0.0
      %7907 = vmatpush1.msra.mxu0 0.0
      %7908 = vmatprep.subr.mxu0 0.0
      %7909 = vmatpush1.msra.mxu0 0.0
      %7910 = vmatprep.subr.mxu0 0.0
      %7911 = vmatpush1.msra.mxu0 0.0
      %7912 = vmatprep.subr.mxu0 0.0
      %7913 = vmatpush1.msra.mxu0 0.0
      %7914 = vmatprep.subr.mxu0 0.0
      %7915 = vmatpush1.msra.mxu0 0.0
      %7916 = vmatprep.subr.mxu0 0.0
      %7917 = vmatpush1.msra.mxu0 0.0
      %7918 = vmatprep.subr.mxu0 0.0
      %7919 = vmatpush1.msra.mxu0 0.0
      %7920 = vmatprep.subr.mxu0 0.0
      %7921 = vmatpush1.msra.mxu0 0.0
      %7922 = vmatprep.subr.mxu0 0.0
      %7923 = vmatpush1.msra.mxu0 0.0
      %7924 = vmatprep.subr.mxu0 0.0
      %7925 = vmatpush1.msra.mxu0 0.0
      %7926 = vmatprep.subr.mxu0 0.0
      %7927 = vmatpush1.msra.mxu0 0.0
      %7928 = vmatprep.subr.mxu0 0.0
      %7929 = vmatpush1.msra.mxu0 0.0
      %7930 = vmatprep.subr.mxu0 0.0
      %7931 = vmatpush1.msra.mxu0 0.0
      %7932 = vmatprep.mubr.f32.mxu0 0.0
      %v7933 = vand.u32 %v6309, 4294901760
      %7934 = vmatmul.mubr.f32.gmra.mrb[0].mxu0 %v7933
      %v7935 = vpop.f32.mrb[0].mxu0
      %v7936 = vadd.f32 %v7856, %v7935
      %v7937 = vpop.f32.mrb[0].mxu0
      %v7938 = vadd.f32 %v7858, %v7937
      %7939 = vdwg.mxu0
      %v7940 = vand.u32 %v6245, 4294901760
      %7941 = vmatprep.subr.mxu0 %v7940
      %v7942 = vand.u32 %v6244, 4294901760
      %7943 = vmatpush1.msra.mxu0 %v7942
      %v7944 = vand.u32 %v6261, 4294901760
      %7945 = vmatprep.subr.mxu0 %v7944
      %v7946 = vand.u32 %v6260, 4294901760
      %7947 = vmatpush1.msra.mxu0 %v7946
      %v7948 = vand.u32 %v6277, 4294901760
      %7949 = vmatprep.subr.mxu0 %v7948
      %v7950 = vand.u32 %v6276, 4294901760
      %7951 = vmatpush1.msra.mxu0 %v7950
      %v7952 = vand.u32 %v6293, 4294901760
      %7953 = vmatprep.subr.mxu0 %v7952
      %v7954 = vand.u32 %v6292, 4294901760
      %7955 = vmatpush1.msra.mxu0 %v7954
      %7956 = vmatprep.subr.mxu0 0.0
      %7957 = vmatpush1.msra.mxu0 0.0
      %7958 = vmatprep.subr.mxu0 0.0
      %7959 = vmatpush1.msra.mxu0 0.0
      %7960 = vmatprep.subr.mxu0 0.0
      %7961 = vmatpush1.msra.mxu0 0.0
      %7962 = vmatprep.subr.mxu0 0.0
      %7963 = vmatpush1.msra.mxu0 0.0
      %7964 = vmatprep.subr.mxu0 0.0
      %7965 = vmatpush1.msra.mxu0 0.0
      %7966 = vmatprep.subr.mxu0 0.0
      %7967 = vmatpush1.msra.mxu0 0.0
      %7968 = vmatprep.subr.mxu0 0.0
      %7969 = vmatpush1.msra.mxu0 0.0
      %7970 = vmatprep.subr.mxu0 0.0
      %7971 = vmatpush1.msra.mxu0 0.0
      %7972 = vmatprep.subr.mxu0 0.0
      %7973 = vmatpush1.msra.mxu0 0.0
      %7974 = vmatprep.subr.mxu0 0.0
      %7975 = vmatpush1.msra.mxu0 0.0
      %7976 = vmatprep.subr.mxu0 0.0
      %7977 = vmatpush1.msra.mxu0 0.0
      %7978 = vmatprep.subr.mxu0 0.0
      %7979 = vmatpush1.msra.mxu0 0.0
      %7980 = vmatprep.subr.mxu0 0.0
      %7981 = vmatpush1.msra.mxu0 0.0
      %7982 = vmatprep.subr.mxu0 0.0
      %7983 = vmatpush1.msra.mxu0 0.0
      %7984 = vmatprep.subr.mxu0 0.0
      %7985 = vmatpush1.msra.mxu0 0.0
      %7986 = vmatprep.subr.mxu0 0.0
      %7987 = vmatpush1.msra.mxu0 0.0
      %7988 = vmatprep.subr.mxu0 0.0
      %7989 = vmatpush1.msra.mxu0 0.0
      %7990 = vmatprep.subr.mxu0 0.0
      %7991 = vmatpush1.msra.mxu0 0.0
      %7992 = vmatprep.subr.mxu0 0.0
      %7993 = vmatpush1.msra.mxu0 0.0
      %7994 = vmatprep.subr.mxu0 0.0
      %7995 = vmatpush1.msra.mxu0 0.0
      %7996 = vmatprep.subr.mxu0 0.0
      %7997 = vmatpush1.msra.mxu0 0.0
      %7998 = vmatprep.subr.mxu0 0.0
      %7999 = vmatpush1.msra.mxu0 0.0
      %8000 = vmatprep.subr.mxu0 0.0
      %8001 = vmatpush1.msra.mxu0 0.0
      %8002 = vmatprep.subr.mxu0 0.0
      %8003 = vmatpush1.msra.mxu0 0.0
      %8004 = vmatprep.subr.mxu0 0.0
      %8005 = vmatpush1.msra.mxu0 0.0
      %8006 = vmatprep.subr.mxu0 0.0
      %8007 = vmatpush1.msra.mxu0 0.0
      %8008 = vmatprep.subr.mxu0 0.0
      %8009 = vmatpush1.msra.mxu0 0.0
      %8010 = vmatprep.subr.mxu0 0.0
      %8011 = vmatpush1.msra.mxu0 0.0
      %8012 = vmatprep.mubr.f32.mxu0 0.0
      %v8013 = vand.u32 %v6309, 4294901760
      %v8014 = vsub.f32 %v6309, %v8013
      %v8015 = vand.u32 %v8014, 4294901760
      %v8016 = vsub.f32 %v8014, %v8015
      %v8017 = vand.u32 %v8016, 4294901760
      %8018 = vmatmul.mubr.f32.gmra.mrb[0].mxu0 %v8017
      %v8019 = vpop.f32.mrb[0].mxu0
      %v8020 = vadd.f32 %v6305, %v8019
      %v8021 = vpop.f32.mrb[0].mxu0
      %v8022 = vadd.f32 %v6305, %v8021
      %8023 = vdwg.mxu0
      %v8024 = vand.u32 %v6245, 4294901760
      %v8025 = vsub.f32 %v6245, %v8024
      %v8026 = vand.u32 %v8025, 4294901760
      %v8027 = vsub.f32 %v8025, %v8026
      %v8028 = vand.u32 %v8027, 4294901760
      %8029 = vmatprep.subr.mxu0 %v8028
      %v8030 = vand.u32 %v6244, 4294901760
      %v8031 = vsub.f32 %v6244, %v8030
      %v8032 = vand.u32 %v8031, 4294901760
      %v8033 = vsub.f32 %v8031, %v8032
      %v8034 = vand.u32 %v8033, 4294901760
      %8035 = vmatpush1.msra.mxu0 %v8034
      %v8036 = vand.u32 %v6261, 4294901760
      %v8037 = vsub.f32 %v6261, %v8036
      %v8038 = vand.u32 %v8037, 4294901760
      %v8039 = vsub.f32 %v8037, %v8038
      %v8040 = vand.u32 %v8039, 4294901760
      %8041 = vmatprep.subr.mxu0 %v8040
      %v8042 = vand.u32 %v6260, 4294901760
      %v8043 = vsub.f32 %v6260, %v8042
      %v8044 = vand.u32 %v8043, 4294901760
      %v8045 = vsub.f32 %v8043, %v8044
      %v8046 = vand.u32 %v8045, 4294901760
      %8047 = vmatpush1.msra.mxu0 %v8046
      %v8048 = vand.u32 %v6277, 4294901760
      %v8049 = vsub.f32 %v6277, %v8048
      %v8050 = vand.u32 %v8049, 4294901760
      %v8051 = vsub.f32 %v8049, %v8050
      %v8052 = vand.u32 %v8051, 4294901760
      %8053 = vmatprep.subr.mxu0 %v8052
      %v8054 = vand.u32 %v6276, 4294901760
      %v8055 = vsub.f32 %v6276, %v8054
      %v8056 = vand.u32 %v8055, 4294901760
      %v8057 = vsub.f32 %v8055, %v8056
      %v8058 = vand.u32 %v8057, 4294901760
      %8059 = vmatpush1.msra.mxu0 %v8058
      %v8060 = vand.u32 %v6293, 4294901760
      %v8061 = vsub.f32 %v6293, %v8060
      %v8062 = vand.u32 %v8061, 4294901760
      %v8063 = vsub.f32 %v8061, %v8062
      %v8064 = vand.u32 %v8063, 4294901760
      %8065 = vmatprep.subr.mxu0 %v8064
      %v8066 = vand.u32 %v6292, 4294901760
      %v8067 = vsub.f32 %v6292, %v8066
      %v8068 = vand.u32 %v8067, 4294901760
      %v8069 = vsub.f32 %v8067, %v8068
      %v8070 = vand.u32 %v8069, 4294901760
      %8071 = vmatpush1.msra.mxu0 %v8070
      %8072 = vmatprep.subr.mxu0 0.0
      %8073 = vmatpush1.msra.mxu0 0.0
      %8074 = vmatprep.subr.mxu0 0.0
      %8075 = vmatpush1.msra.mxu0 0.0
      %8076 = vmatprep.subr.mxu0 0.0
      %8077 = vmatpush1.msra.mxu0 0.0
      %8078 = vmatprep.subr.mxu0 0.0
      %8079 = vmatpush1.msra.mxu0 0.0
      %8080 = vmatprep.subr.mxu0 0.0
      %8081 = vmatpush1.msra.mxu0 0.0
      %8082 = vmatprep.subr.mxu0 0.0
      %8083 = vmatpush1.msra.mxu0 0.0
      %8084 = vmatprep.subr.mxu0 0.0
      %8085 = vmatpush1.msra.mxu0 0.0
      %8086 = vmatprep.subr.mxu0 0.0
      %8087 = vmatpush1.msra.mxu0 0.0
      %8088 = vmatprep.subr.mxu0 0.0
      %8089 = vmatpush1.msra.mxu0 0.0
      %8090 = vmatprep.subr.mxu0 0.0
      %8091 = vmatpush1.msra.mxu0 0.0
      %8092 = vmatprep.subr.mxu0 0.0
      %8093 = vmatpush1.msra.mxu0 0.0
      %8094 = vmatprep.subr.mxu0 0.0
      %8095 = vmatpush1.msra.mxu0 0.0
      %8096 = vmatprep.subr.mxu0 0.0
      %8097 = vmatpush1.msra.mxu0 0.0
      %8098 = vmatprep.subr.mxu0 0.0
      %8099 = vmatpush1.msra.mxu0 0.0
      %8100 = vmatprep.subr.mxu0 0.0
      %8101 = vmatpush1.msra.mxu0 0.0
      %8102 = vmatprep.subr.mxu0 0.0
      %8103 = vmatpush1.msra.mxu0 0.0
      %8104 = vmatprep.subr.mxu0 0.0
      %8105 = vmatpush1.msra.mxu0 0.0
      %8106 = vmatprep.subr.mxu0 0.0
      %8107 = vmatpush1.msra.mxu0 0.0
      %8108 = vmatprep.subr.mxu0 0.0
      %8109 = vmatpush1.msra.mxu0 0.0
      %8110 = vmatprep.subr.mxu0 0.0
      %8111 = vmatpush1.msra.mxu0 0.0
      %8112 = vmatprep.subr.mxu0 0.0
      %8113 = vmatpush1.msra.mxu0 0.0
      %8114 = vmatprep.subr.mxu0 0.0
      %8115 = vmatpush1.msra.mxu0 0.0
      %8116 = vmatprep.subr.mxu0 0.0
      %8117 = vmatpush1.msra.mxu0 0.0
      %8118 = vmatprep.subr.mxu0 0.0
      %8119 = vmatpush1.msra.mxu0 0.0
      %8120 = vmatprep.subr.mxu0 0.0
      %8121 = vmatpush1.msra.mxu0 0.0
      %8122 = vmatprep.subr.mxu0 0.0
      %8123 = vmatpush1.msra.mxu0 0.0
      %8124 = vmatprep.subr.mxu0 0.0
      %8125 = vmatpush1.msra.mxu0 0.0
      %8126 = vmatprep.subr.mxu0 0.0
      %8127 = vmatpush1.msra.mxu0 0.0
      %8128 = vmatprep.mubr.f32.mxu0 0.0
      %v8129 = vand.u32 %v6309, 4294901760
      %8130 = vmatmul.mubr.f32.gmra.mrb[0].mxu0 %v8129
      %v8131 = vpop.f32.mrb[0].mxu0
      %v8132 = vadd.f32 %v8020, %v8131
      %v8133 = vpop.f32.mrb[0].mxu0
      %v8134 = vadd.f32 %v8022, %v8133
      %8135 = vdwg.mxu0
      %v8136 = vand.u32 %v6245, 4294901760
      %v8137 = vsub.f32 %v6245, %v8136
      %8138 = vmatprep.subr.mxu0 %v8137
      %v8139 = vand.u32 %v6244, 4294901760
      %v8140 = vsub.f32 %v6244, %v8139
      %8141 = vmatpush1.msra.mxu0 %v8140
      %v8142 = vand.u32 %v6261, 4294901760
      %v8143 = vsub.f32 %v6261, %v8142
      %8144 = vmatprep.subr.mxu0 %v8143
      %v8145 = vand.u32 %v6260, 4294901760
      %v8146 = vsub.f32 %v6260, %v8145
      %8147 = vmatpush1.msra.mxu0 %v8146
      %v8148 = vand.u32 %v6277, 4294901760
      %v8149 = vsub.f32 %v6277, %v8148
      %8150 = vmatprep.subr.mxu0 %v8149
      %v8151 = vand.u32 %v6276, 4294901760
      %v8152 = vsub.f32 %v6276, %v8151
      %8153 = vmatpush1.msra.mxu0 %v8152
      %v8154 = vand.u32 %v6293, 4294901760
      %v8155 = vsub.f32 %v6293, %v8154
      %8156 = vmatprep.subr.mxu0 %v8155
      %v8157 = vand.u32 %v6292, 4294901760
      %v8158 = vsub.f32 %v6292, %v8157
      %8159 = vmatpush1.msra.mxu0 %v8158
      %8160 = vmatprep.subr.mxu0 0.0
      %8161 = vmatpush1.msra.mxu0 0.0
      %8162 = vmatprep.subr.mxu0 0.0
      %8163 = vmatpush1.msra.mxu0 0.0
      %8164 = vmatprep.subr.mxu0 0.0
      %8165 = vmatpush1.msra.mxu0 0.0
      %8166 = vmatprep.subr.mxu0 0.0
      %8167 = vmatpush1.msra.mxu0 0.0
      %8168 = vmatprep.subr.mxu0 0.0
      %8169 = vmatpush1.msra.mxu0 0.0
      %8170 = vmatprep.subr.mxu0 0.0
      %8171 = vmatpush1.msra.mxu0 0.0
      %8172 = vmatprep.subr.mxu0 0.0
      %8173 = vmatpush1.msra.mxu0 0.0
      %8174 = vmatprep.subr.mxu0 0.0
      %8175 = vmatpush1.msra.mxu0 0.0
      %8176 = vmatprep.subr.mxu0 0.0
      %8177 = vmatpush1.msra.mxu0 0.0
      %8178 = vmatprep.subr.mxu0 0.0
      %8179 = vmatpush1.msra.mxu0 0.0
      %8180 = vmatprep.subr.mxu0 0.0
      %8181 = vmatpush1.msra.mxu0 0.0
      %8182 = vmatprep.subr.mxu0 0.0
      %8183 = vmatpush1.msra.mxu0 0.0
      %8184 = vmatprep.subr.mxu0 0.0
      %8185 = vmatpush1.msra.mxu0 0.0
      %8186 = vmatprep.subr.mxu0 0.0
      %8187 = vmatpush1.msra.mxu0 0.0
      %8188 = vmatprep.subr.mxu0 0.0
      %8189 = vmatpush1.msra.mxu0 0.0
      %8190 = vmatprep.subr.mxu0 0.0
      %8191 = vmatpush1.msra.mxu0 0.0
      %8192 = vmatprep.subr.mxu0 0.0
      %8193 = vmatpush1.msra.mxu0 0.0
      %8194 = vmatprep.subr.mxu0 0.0
      %8195 = vmatpush1.msra.mxu0 0.0
      %8196 = vmatprep.subr.mxu0 0.0
      %8197 = vmatpush1.msra.mxu0 0.0
      %8198 = vmatprep.subr.mxu0 0.0
      %8199 = vmatpush1.msra.mxu0 0.0
      %8200 = vmatprep.subr.mxu0 0.0
      %8201 = vmatpush1.msra.mxu0 0.0
      %8202 = vmatprep.subr.mxu0 0.0
      %8203 = vmatpush1.msra.mxu0 0.0
      %8204 = vmatprep.subr.mxu0 0.0
      %8205 = vmatpush1.msra.mxu0 0.0
      %8206 = vmatprep.subr.mxu0 0.0
      %8207 = vmatpush1.msra.mxu0 0.0
      %8208 = vmatprep.subr.mxu0 0.0
      %8209 = vmatpush1.msra.mxu0 0.0
      %8210 = vmatprep.subr.mxu0 0.0
      %8211 = vmatpush1.msra.mxu0 0.0
      %8212 = vmatprep.subr.mxu0 0.0
      %8213 = vmatpush1.msra.mxu0 0.0
      %8214 = vmatprep.subr.mxu0 0.0
      %8215 = vmatpush1.msra.mxu0 0.0
      %8216 = vmatprep.mubr.f32.mxu0 0.0
      %v8217 = vand.u32 %v6309, 4294901760
      %v8218 = vsub.f32 %v6309, %v8217
      %8219 = vmatmul.mubr.f32.gmra.mrb[0].mxu0 %v8218
      %v8220 = vpop.f32.mrb[0].mxu0
      %v8221 = vadd.f32 %v8132, %v8220
      %v8222 = vpop.f32.mrb[0].mxu0
      %v8223 = vadd.f32 %v8134, %v8222
      %8224 = vdwg.mxu0
      %v8225 = vand.u32 %v6245, 4294901760
      %8226 = vmatprep.subr.mxu0 %v8225
      %v8227 = vand.u32 %v6244, 4294901760
      %8228 = vmatpush1.msra.mxu0 %v8227
      %v8229 = vand.u32 %v6261, 4294901760
      %8230 = vmatprep.subr.mxu0 %v8229
      %v8231 = vand.u32 %v6260, 4294901760
      %8232 = vmatpush1.msra.mxu0 %v8231
      %v8233 = vand.u32 %v6277, 4294901760
      %8234 = vmatprep.subr.mxu0 %v8233
      %v8235 = vand.u32 %v6276, 4294901760
      %8236 = vmatpush1.msra.mxu0 %v8235
      %v8237 = vand.u32 %v6293, 4294901760
      %8238 = vmatprep.subr.mxu0 %v8237
      %v8239 = vand.u32 %v6292, 4294901760
      %8240 = vmatpush1.msra.mxu0 %v8239
      %8241 = vmatprep.subr.mxu0 0.0
      %8242 = vmatpush1.msra.mxu0 0.0
      %8243 = vmatprep.subr.mxu0 0.0
      %8244 = vmatpush1.msra.mxu0 0.0
      %8245 = vmatprep.subr.mxu0 0.0
      %8246 = vmatpush1.msra.mxu0 0.0
      %8247 = vmatprep.subr.mxu0 0.0
      %8248 = vmatpush1.msra.mxu0 0.0
      %8249 = vmatprep.subr.mxu0 0.0
      %8250 = vmatpush1.msra.mxu0 0.0
      %8251 = vmatprep.subr.mxu0 0.0
      %8252 = vmatpush1.msra.mxu0 0.0
      %8253 = vmatprep.subr.mxu0 0.0
      %8254 = vmatpush1.msra.mxu0 0.0
      %8255 = vmatprep.subr.mxu0 0.0
      %8256 = vmatpush1.msra.mxu0 0.0
      %8257 = vmatprep.subr.mxu0 0.0
      %8258 = vmatpush1.msra.mxu0 0.0
      %8259 = vmatprep.subr.mxu0 0.0
      %8260 = vmatpush1.msra.mxu0 0.0
      %8261 = vmatprep.subr.mxu0 0.0
      %8262 = vmatpush1.msra.mxu0 0.0
      %8263 = vmatprep.subr.mxu0 0.0
      %8264 = vmatpush1.msra.mxu0 0.0
      %8265 = vmatprep.subr.mxu0 0.0
      %8266 = vmatpush1.msra.mxu0 0.0
      %8267 = vmatprep.subr.mxu0 0.0
      %8268 = vmatpush1.msra.mxu0 0.0
      %8269 = vmatprep.subr.mxu0 0.0
      %8270 = vmatpush1.msra.mxu0 0.0
      %8271 = vmatprep.subr.mxu0 0.0
      %8272 = vmatpush1.msra.mxu0 0.0
      %8273 = vmatprep.subr.mxu0 0.0
      %8274 = vmatpush1.msra.mxu0 0.0
      %8275 = vmatprep.subr.mxu0 0.0
      %8276 = vmatpush1.msra.mxu0 0.0
      %8277 = vmatprep.subr.mxu0 0.0
      %8278 = vmatpush1.msra.mxu0 0.0
      %8279 = vmatprep.subr.mxu0 0.0
      %8280 = vmatpush1.msra.mxu0 0.0
      %8281 = vmatprep.subr.mxu0 0.0
      %8282 = vmatpush1.msra.mxu0 0.0
      %8283 = vmatprep.subr.mxu0 0.0
      %8284 = vmatpush1.msra.mxu0 0.0
      %8285 = vmatprep.subr.mxu0 0.0
      %8286 = vmatpush1.msra.mxu0 0.0
      %8287 = vmatprep.subr.mxu0 0.0
      %8288 = vmatpush1.msra.mxu0 0.0
      %8289 = vmatprep.subr.mxu0 0.0
      %8290 = vmatpush1.msra.mxu0 0.0
      %8291 = vmatprep.subr.mxu0 0.0
      %8292 = vmatpush1.msra.mxu0 0.0
      %8293 = vmatprep.subr.mxu0 0.0
      %8294 = vmatpush1.msra.mxu0 0.0
      %8295 = vmatprep.subr.mxu0 0.0
      %8296 = vmatpush1.msra.mxu0 0.0
      %8297 = vmatprep.mubr.f32.mxu0 0.0
      %v8298 = vand.u32 %v6309, 4294901760
      %v8299 = vsub.f32 %v6309, %v8298
      %v8300 = vand.u32 %v8299, 4294901760
      %8301 = vmatmul.mubr.f32.gmra.mrb[0].mxu0 %v8300
      %v8302 = vpop.f32.mrb[0].mxu0
      %v8303 = vadd.f32 %v8221, %v8302
      %v8304 = vpop.f32.mrb[0].mxu0
      %v8305 = vadd.f32 %v8223, %v8304
      %8306 = vdwg.mxu0
      %v8307 = vand.u32 %v6245, 4294901760
      %v8308 = vsub.f32 %v6245, %v8307
      %v8309 = vand.u32 %v8308, 4294901760
      %8310 = vmatprep.subr.mxu0 %v8309
      %v8311 = vand.u32 %v6244, 4294901760
      %v8312 = vsub.f32 %v6244, %v8311
      %v8313 = vand.u32 %v8312, 4294901760
      %8314 = vmatpush1.msra.mxu0 %v8313
      %v8315 = vand.u32 %v6261, 4294901760
      %v8316 = vsub.f32 %v6261, %v8315
      %v8317 = vand.u32 %v8316, 4294901760
      %8318 = vmatprep.subr.mxu0 %v8317
      %v8319 = vand.u32 %v6260, 4294901760
      %v8320 = vsub.f32 %v6260, %v8319
      %v8321 = vand.u32 %v8320, 4294901760
      %8322 = vmatpush1.msra.mxu0 %v8321
      %v8323 = vand.u32 %v6277, 4294901760
      %v8324 = vsub.f32 %v6277, %v8323
      %v8325 = vand.u32 %v8324, 4294901760
      %8326 = vmatprep.subr.mxu0 %v8325
      %v8327 = vand.u32 %v6276, 4294901760
      %v8328 = vsub.f32 %v6276, %v8327
      %v8329 = vand.u32 %v8328, 4294901760
      %8330 = vmatpush1.msra.mxu0 %v8329
      %v8331 = vand.u32 %v6293, 4294901760
      %v8332 = vsub.f32 %v6293, %v8331
      %v8333 = vand.u32 %v8332, 4294901760
      %8334 = vmatprep.subr.mxu0 %v8333
      %v8335 = vand.u32 %v6292, 4294901760
      %v8336 = vsub.f32 %v6292, %v8335
      %v8337 = vand.u32 %v8336, 4294901760
      %8338 = vmatpush1.msra.mxu0 %v8337
      %8339 = vmatprep.subr.mxu0 0.0
      %8340 = vmatpush1.msra.mxu0 0.0
      %8341 = vmatprep.subr.mxu0 0.0
      %8342 = vmatpush1.msra.mxu0 0.0
      %8343 = vmatprep.subr.mxu0 0.0
      %8344 = vmatpush1.msra.mxu0 0.0
      %8345 = vmatprep.subr.mxu0 0.0
      %8346 = vmatpush1.msra.mxu0 0.0
      %8347 = vmatprep.subr.mxu0 0.0
      %8348 = vmatpush1.msra.mxu0 0.0
      %8349 = vmatprep.subr.mxu0 0.0
      %8350 = vmatpush1.msra.mxu0 0.0
      %8351 = vmatprep.subr.mxu0 0.0
      %8352 = vmatpush1.msra.mxu0 0.0
      %8353 = vmatprep.subr.mxu0 0.0
      %8354 = vmatpush1.msra.mxu0 0.0
      %8355 = vmatprep.subr.mxu0 0.0
      %8356 = vmatpush1.msra.mxu0 0.0
      %8357 = vmatprep.subr.mxu0 0.0
      %8358 = vmatpush1.msra.mxu0 0.0
      %8359 = vmatprep.subr.mxu0 0.0
      %8360 = vmatpush1.msra.mxu0 0.0
      %8361 = vmatprep.subr.mxu0 0.0
      %8362 = vmatpush1.msra.mxu0 0.0
      %8363 = vmatprep.subr.mxu0 0.0
      %8364 = vmatpush1.msra.mxu0 0.0
      %8365 = vmatprep.subr.mxu0 0.0
      %8366 = vmatpush1.msra.mxu0 0.0
      %8367 = vmatprep.subr.mxu0 0.0
      %8368 = vmatpush1.msra.mxu0 0.0
      %8369 = vmatprep.subr.mxu0 0.0
      %8370 = vmatpush1.msra.mxu0 0.0
      %8371 = vmatprep.subr.mxu0 0.0
      %8372 = vmatpush1.msra.mxu0 0.0
      %8373 = vmatprep.subr.mxu0 0.0
      %8374 = vmatpush1.msra.mxu0 0.0
      %8375 = vmatprep.subr.mxu0 0.0
      %8376 = vmatpush1.msra.mxu0 0.0
      %8377 = vmatprep.subr.mxu0 0.0
      %8378 = vmatpush1.msra.mxu0 0.0
      %8379 = vmatprep.subr.mxu0 0.0
      %8380 = vmatpush1.msra.mxu0 0.0
      %8381 = vmatprep.subr.mxu0 0.0
      %8382 = vmatpush1.msra.mxu0 0.0
      %8383 = vmatprep.subr.mxu0 0.0
      %8384 = vmatpush1.msra.mxu0 0.0
      %8385 = vmatprep.subr.mxu0 0.0
      %8386 = vmatpush1.msra.mxu0 0.0
      %8387 = vmatprep.subr.mxu0 0.0
      %8388 = vmatpush1.msra.mxu0 0.0
      %8389 = vmatprep.subr.mxu0 0.0
      %8390 = vmatpush1.msra.mxu0 0.0
      %8391 = vmatprep.subr.mxu0 0.0
      %8392 = vmatpush1.msra.mxu0 0.0
      %8393 = vmatprep.subr.mxu0 0.0
      %8394 = vmatpush1.msra.mxu0 0.0
      %8395 = vmatprep.mubr.f32.mxu0 0.0
      %v8396 = vand.u32 %v6309, 4294901760
      %8397 = vmatmul.mubr.f32.gmra.mrb[0].mxu0 %v8396
      %v8398 = vpop.f32.mrb[0].mxu0
      %v8399 = vadd.f32 %v8303, %v8398
      %v8400 = vpop.f32.mrb[0].mxu0
      %v8401 = vadd.f32 %v8305, %v8400
      %8402 = vdwg.mxu0
      %v8403 = vand.u32 %v6245, 4294901760
      %8404 = vmatprep.subr.mxu0 %v8403
      %v8405 = vand.u32 %v6244, 4294901760
      %8406 = vmatpush1.msra.mxu0 %v8405
      %v8407 = vand.u32 %v6261, 4294901760
      %8408 = vmatprep.subr.mxu0 %v8407
      %v8409 = vand.u32 %v6260, 4294901760
      %8410 = vmatpush1.msra.mxu0 %v8409
      %v8411 = vand.u32 %v6277, 4294901760
      %8412 = vmatprep.subr.mxu0 %v8411
      %v8413 = vand.u32 %v6276, 4294901760
      %8414 = vmatpush1.msra.mxu0 %v8413
      %v8415 = vand.u32 %v6293, 4294901760
      %8416 = vmatprep.subr.mxu0 %v8415
      %v8417 = vand.u32 %v6292, 4294901760
      %8418 = vmatpush1.msra.mxu0 %v8417
      %8419 = vmatprep.subr.mxu0 0.0
      %8420 = vmatpush1.msra.mxu0 0.0
      %8421 = vmatprep.subr.mxu0 0.0
      %8422 = vmatpush1.msra.mxu0 0.0
      %8423 = vmatprep.subr.mxu0 0.0
      %8424 = vmatpush1.msra.mxu0 0.0
      %8425 = vmatprep.subr.mxu0 0.0
      %8426 = vmatpush1.msra.mxu0 0.0
      %8427 = vmatprep.subr.mxu0 0.0
      %8428 = vmatpush1.msra.mxu0 0.0
      %8429 = vmatprep.subr.mxu0 0.0
      %8430 = vmatpush1.msra.mxu0 0.0
      %8431 = vmatprep.subr.mxu0 0.0
      %8432 = vmatpush1.msra.mxu0 0.0
      %8433 = vmatprep.subr.mxu0 0.0
      %8434 = vmatpush1.msra.mxu0 0.0
      %8435 = vmatprep.subr.mxu0 0.0
      %8436 = vmatpush1.msra.mxu0 0.0
      %8437 = vmatprep.subr.mxu0 0.0
      %8438 = vmatpush1.msra.mxu0 0.0
      %8439 = vmatprep.subr.mxu0 0.0
      %8440 = vmatpush1.msra.mxu0 0.0
      %8441 = vmatprep.subr.mxu0 0.0
      %8442 = vmatpush1.msra.mxu0 0.0
      %8443 = vmatprep.subr.mxu0 0.0
      %8444 = vmatpush1.msra.mxu0 0.0
      %8445 = vmatprep.subr.mxu0 0.0
      %8446 = vmatpush1.msra.mxu0 0.0
      %8447 = vmatprep.subr.mxu0 0.0
      %8448 = vmatpush1.msra.mxu0 0.0
      %8449 = vmatprep.subr.mxu0 0.0
      %8450 = vmatpush1.msra.mxu0 0.0
      %8451 = vmatprep.subr.mxu0 0.0
      %8452 = vmatpush1.msra.mxu0 0.0
      %8453 = vmatprep.subr.mxu0 0.0
      %8454 = vmatpush1.msra.mxu0 0.0
      %8455 = vmatprep.subr.mxu0 0.0
      %8456 = vmatpush1.msra.mxu0 0.0
      %8457 = vmatprep.subr.mxu0 0.0
      %8458 = vmatpush1.msra.mxu0 0.0
      %8459 = vmatprep.subr.mxu0 0.0
      %8460 = vmatpush1.msra.mxu0 0.0
      %8461 = vmatprep.subr.mxu0 0.0
      %8462 = vmatpush1.msra.mxu0 0.0
      %8463 = vmatprep.subr.mxu0 0.0
      %8464 = vmatpush1.msra.mxu0 0.0
      %8465 = vmatprep.subr.mxu0 0.0
      %8466 = vmatpush1.msra.mxu0 0.0
      %8467 = vmatprep.subr.mxu0 0.0
      %8468 = vmatpush1.msra.mxu0 0.0
      %8469 = vmatprep.subr.mxu0 0.0
      %8470 = vmatpush1.msra.mxu0 0.0
      %8471 = vmatprep.subr.mxu0 0.0
      %8472 = vmatpush1.msra.mxu0 0.0
      %8473 = vmatprep.subr.mxu0 0.0
      %8474 = vmatpush1.msra.mxu0 0.0
      %8475 = vmatprep.mubr.f32.mxu0 0.0
      %v8476 = vand.u32 %v6309, 4294901760
      %8477 = vmatmul.mubr.f32.gmra.mrb[0].mxu0 %v8476
      %v8478 = vpop.f32.mrb[0].mxu0
      %v8479 = vadd.f32 %v8399, %v8478
      %v8480 = vpop.f32.mrb[0].mxu0
      %v8481 = vadd.f32 %v8401, %v8480
      %8482 = vdwg.mxu0
      %v8483 = vand.u32 %v6247, 4294901760
      %8484 = vmatprep.subr.mxu0 %v8483
      %v8485 = vand.u32 %v6246, 4294901760
      %8486 = vmatpush1.msra.mxu0 %v8485
      %v8487 = vand.u32 %v6263, 4294901760
      %8488 = vmatprep.subr.mxu0 %v8487
      %v8489 = vand.u32 %v6262, 4294901760
      %8490 = vmatpush1.msra.mxu0 %v8489
      %v8491 = vand.u32 %v6279, 4294901760
      %8492 = vmatprep.subr.mxu0 %v8491
      %v8493 = vand.u32 %v6278, 4294901760
      %8494 = vmatpush1.msra.mxu0 %v8493
      %v8495 = vand.u32 %v6295, 4294901760
      %8496 = vmatprep.subr.mxu0 %v8495
      %v8497 = vand.u32 %v6294, 4294901760
      %8498 = vmatpush1.msra.mxu0 %v8497
      %8499 = vmatprep.subr.mxu0 0.0
      %8500 = vmatpush1.msra.mxu0 0.0
      %8501 = vmatprep.subr.mxu0 0.0
      %8502 = vmatpush1.msra.mxu0 0.0
      %8503 = vmatprep.subr.mxu0 0.0
      %8504 = vmatpush1.msra.mxu0 0.0
      %8505 = vmatprep.subr.mxu0 0.0
      %8506 = vmatpush1.msra.mxu0 0.0
      %8507 = vmatprep.subr.mxu0 0.0
      %8508 = vmatpush1.msra.mxu0 0.0
      %8509 = vmatprep.subr.mxu0 0.0
      %8510 = vmatpush1.msra.mxu0 0.0
      %8511 = vmatprep.subr.mxu0 0.0
      %8512 = vmatpush1.msra.mxu0 0.0
      %8513 = vmatprep.subr.mxu0 0.0
      %8514 = vmatpush1.msra.mxu0 0.0
      %8515 = vmatprep.subr.mxu0 0.0
      %8516 = vmatpush1.msra.mxu0 0.0
      %8517 = vmatprep.subr.mxu0 0.0
      %8518 = vmatpush1.msra.mxu0 0.0
      %8519 = vmatprep.subr.mxu0 0.0
      %8520 = vmatpush1.msra.mxu0 0.0
      %8521 = vmatprep.subr.mxu0 0.0
      %8522 = vmatpush1.msra.mxu0 0.0
      %8523 = vmatprep.subr.mxu0 0.0
      %8524 = vmatpush1.msra.mxu0 0.0
      %8525 = vmatprep.subr.mxu0 0.0
      %8526 = vmatpush1.msra.mxu0 0.0
      %8527 = vmatprep.subr.mxu0 0.0
      %8528 = vmatpush1.msra.mxu0 0.0
      %8529 = vmatprep.subr.mxu0 0.0
      %8530 = vmatpush1.msra.mxu0 0.0
      %8531 = vmatprep.subr.mxu0 0.0
      %8532 = vmatpush1.msra.mxu0 0.0
      %8533 = vmatprep.subr.mxu0 0.0
      %8534 = vmatpush1.msra.mxu0 0.0
      %8535 = vmatprep.subr.mxu0 0.0
      %8536 = vmatpush1.msra.mxu0 0.0
      %8537 = vmatprep.subr.mxu0 0.0
      %8538 = vmatpush1.msra.mxu0 0.0
      %8539 = vmatprep.subr.mxu0 0.0
      %8540 = vmatpush1.msra.mxu0 0.0
      %8541 = vmatprep.subr.mxu0 0.0
      %8542 = vmatpush1.msra.mxu0 0.0
      %8543 = vmatprep.subr.mxu0 0.0
      %8544 = vmatpush1.msra.mxu0 0.0
      %8545 = vmatprep.subr.mxu0 0.0
      %8546 = vmatpush1.msra.mxu0 0.0
      %8547 = vmatprep.subr.mxu0 0.0
      %8548 = vmatpush1.msra.mxu0 0.0
      %8549 = vmatprep.subr.mxu0 0.0
      %8550 = vmatpush1.msra.mxu0 0.0
      %8551 = vmatprep.subr.mxu0 0.0
      %8552 = vmatpush1.msra.mxu0 0.0
      %8553 = vmatprep.subr.mxu0 0.0
      %8554 = vmatpush1.msra.mxu0 0.0
      %8555 = vmatprep.mubr.f32.mxu0 0.0
      %v8556 = vand.u32 %v6309, 4294901760
      %v8557 = vsub.f32 %v6309, %v8556
      %v8558 = vand.u32 %v8557, 4294901760
      %v8559 = vsub.f32 %v8557, %v8558
      %v8560 = vand.u32 %v8559, 4294901760
      %8561 = vmatmul.mubr.f32.gmra.mrb[0].mxu0 %v8560
      %v8562 = vpop.f32.mrb[0].mxu0
      %v8563 = vadd.f32 %v6305, %v8562
      %v8564 = vpop.f32.mrb[0].mxu0
      %v8565 = vadd.f32 %v6305, %v8564
      %8566 = vdwg.mxu0
      %v8567 = vand.u32 %v6247, 4294901760
      %v8568 = vsub.f32 %v6247, %v8567
      %v8569 = vand.u32 %v8568, 4294901760
      %v8570 = vsub.f32 %v8568, %v8569
      %v8571 = vand.u32 %v8570, 4294901760
      %8572 = vmatprep.subr.mxu0 %v8571
      %v8573 = vand.u32 %v6246, 4294901760
      %v8574 = vsub.f32 %v6246, %v8573
      %v8575 = vand.u32 %v8574, 4294901760
      %v8576 = vsub.f32 %v8574, %v8575
      %v8577 = vand.u32 %v8576, 4294901760
      %8578 = vmatpush1.msra.mxu0 %v8577
      %v8579 = vand.u32 %v6263, 4294901760
      %v8580 = vsub.f32 %v6263, %v8579
      %v8581 = vand.u32 %v8580, 4294901760
      %v8582 = vsub.f32 %v8580, %v8581
      %v8583 = vand.u32 %v8582, 4294901760
      %8584 = vmatprep.subr.mxu0 %v8583
      %v8585 = vand.u32 %v6262, 4294901760
      %v8586 = vsub.f32 %v6262, %v8585
      %v8587 = vand.u32 %v8586, 4294901760
      %v8588 = vsub.f32 %v8586, %v8587
      %v8589 = vand.u32 %v8588, 4294901760
      %8590 = vmatpush1.msra.mxu0 %v8589
      %v8591 = vand.u32 %v6279, 4294901760
      %v8592 = vsub.f32 %v6279, %v8591
      %v8593 = vand.u32 %v8592, 4294901760
      %v8594 = vsub.f32 %v8592, %v8593
      %v8595 = vand.u32 %v8594, 4294901760
      %8596 = vmatprep.subr.mxu0 %v8595
      %v8597 = vand.u32 %v6278, 4294901760
      %v8598 = vsub.f32 %v6278, %v8597
      %v8599 = vand.u32 %v8598, 4294901760
      %v8600 = vsub.f32 %v8598, %v8599
      %v8601 = vand.u32 %v8600, 4294901760
      %8602 = vmatpush1.msra.mxu0 %v8601
      %v8603 = vand.u32 %v6295, 4294901760
      %v8604 = vsub.f32 %v6295, %v8603
      %v8605 = vand.u32 %v8604, 4294901760
      %v8606 = vsub.f32 %v8604, %v8605
      %v8607 = vand.u32 %v8606, 4294901760
      %8608 = vmatprep.subr.mxu0 %v8607
      %v8609 = vand.u32 %v6294, 4294901760
      %v8610 = vsub.f32 %v6294, %v8609
      %v8611 = vand.u32 %v8610, 4294901760
      %v8612 = vsub.f32 %v8610, %v8611
      %v8613 = vand.u32 %v8612, 4294901760
      %8614 = vmatpush1.msra.mxu0 %v8613
      %8615 = vmatprep.subr.mxu0 0.0
      %8616 = vmatpush1.msra.mxu0 0.0
      %8617 = vmatprep.subr.mxu0 0.0
      %8618 = vmatpush1.msra.mxu0 0.0
      %8619 = vmatprep.subr.mxu0 0.0
      %8620 = vmatpush1.msra.mxu0 0.0
      %8621 = vmatprep.subr.mxu0 0.0
      %8622 = vmatpush1.msra.mxu0 0.0
      %8623 = vmatprep.subr.mxu0 0.0
      %8624 = vmatpush1.msra.mxu0 0.0
      %8625 = vmatprep.subr.mxu0 0.0
      %8626 = vmatpush1.msra.mxu0 0.0
      %8627 = vmatprep.subr.mxu0 0.0
      %8628 = vmatpush1.msra.mxu0 0.0
      %8629 = vmatprep.subr.mxu0 0.0
      %8630 = vmatpush1.msra.mxu0 0.0
      %8631 = vmatprep.subr.mxu0 0.0
      %8632 = vmatpush1.msra.mxu0 0.0
      %8633 = vmatprep.subr.mxu0 0.0
      %8634 = vmatpush1.msra.mxu0 0.0
      %8635 = vmatprep.subr.mxu0 0.0
      %8636 = vmatpush1.msra.mxu0 0.0
      %8637 = vmatprep.subr.mxu0 0.0
      %8638 = vmatpush1.msra.mxu0 0.0
      %8639 = vmatprep.subr.mxu0 0.0
      %8640 = vmatpush1.msra.mxu0 0.0
      %8641 = vmatprep.subr.mxu0 0.0
      %8642 = vmatpush1.msra.mxu0 0.0
      %8643 = vmatprep.subr.mxu0 0.0
      %8644 = vmatpush1.msra.mxu0 0.0
      %8645 = vmatprep.subr.mxu0 0.0
      %8646 = vmatpush1.msra.mxu0 0.0
      %8647 = vmatprep.subr.mxu0 0.0
      %8648 = vmatpush1.msra.mxu0 0.0
      %8649 = vmatprep.subr.mxu0 0.0
      %8650 = vmatpush1.msra.mxu0 0.0
      %8651 = vmatprep.subr.mxu0 0.0
      %8652 = vmatpush1.msra.mxu0 0.0
      %8653 = vmatprep.subr.mxu0 0.0
      %8654 = vmatpush1.msra.mxu0 0.0
      %8655 = vmatprep.subr.mxu0 0.0
      %8656 = vmatpush1.msra.mxu0 0.0
      %8657 = vmatprep.subr.mxu0 0.0
      %8658 = vmatpush1.msra.mxu0 0.0
      %8659 = vmatprep.subr.mxu0 0.0
      %8660 = vmatpush1.msra.mxu0 0.0
      %8661 = vmatprep.subr.mxu0 0.0
      %8662 = vmatpush1.msra.mxu0 0.0
      %8663 = vmatprep.subr.mxu0 0.0
      %8664 = vmatpush1.msra.mxu0 0.0
      %8665 = vmatprep.subr.mxu0 0.0
      %8666 = vmatpush1.msra.mxu0 0.0
      %8667 = vmatprep.subr.mxu0 0.0
      %8668 = vmatpush1.msra.mxu0 0.0
      %8669 = vmatprep.subr.mxu0 0.0
      %8670 = vmatpush1.msra.mxu0 0.0
      %8671 = vmatprep.mubr.f32.mxu0 0.0
      %v8672 = vand.u32 %v6309, 4294901760
      %8673 = vmatmul.mubr.f32.gmra.mrb[0].mxu0 %v8672
      %v8674 = vpop.f32.mrb[0].mxu0
      %v8675 = vadd.f32 %v8563, %v8674
      %v8676 = vpop.f32.mrb[0].mxu0
      %v8677 = vadd.f32 %v8565, %v8676
      %8678 = vdwg.mxu0
      %v8679 = vand.u32 %v6247, 4294901760
      %v8680 = vsub.f32 %v6247, %v8679
      %8681 = vmatprep.subr.mxu0 %v8680
      %v8682 = vand.u32 %v6246, 4294901760
      %v8683 = vsub.f32 %v6246, %v8682
      %8684 = vmatpush1.msra.mxu0 %v8683
      %v8685 = vand.u32 %v6263, 4294901760
      %v8686 = vsub.f32 %v6263, %v8685
      %8687 = vmatprep.subr.mxu0 %v8686
      %v8688 = vand.u32 %v6262, 4294901760
      %v8689 = vsub.f32 %v6262, %v8688
      %8690 = vmatpush1.msra.mxu0 %v8689
      %v8691 = vand.u32 %v6279, 4294901760
      %v8692 = vsub.f32 %v6279, %v8691
      %8693 = vmatprep.subr.mxu0 %v8692
      %v8694 = vand.u32 %v6278, 4294901760
      %v8695 = vsub.f32 %v6278, %v8694
      %8696 = vmatpush1.msra.mxu0 %v8695
      %v8697 = vand.u32 %v6295, 4294901760
      %v8698 = vsub.f32 %v6295, %v8697
      %8699 = vmatprep.subr.mxu0 %v8698
      %v8700 = vand.u32 %v6294, 4294901760
      %v8701 = vsub.f32 %v6294, %v8700
      %8702 = vmatpush1.msra.mxu0 %v8701
      %8703 = vmatprep.subr.mxu0 0.0
      %8704 = vmatpush1.msra.mxu0 0.0
      %8705 = vmatprep.subr.mxu0 0.0
      %8706 = vmatpush1.msra.mxu0 0.0
      %8707 = vmatprep.subr.mxu0 0.0
      %8708 = vmatpush1.msra.mxu0 0.0
      %8709 = vmatprep.subr.mxu0 0.0
      %8710 = vmatpush1.msra.mxu0 0.0
      %8711 = vmatprep.subr.mxu0 0.0
      %8712 = vmatpush1.msra.mxu0 0.0
      %8713 = vmatprep.subr.mxu0 0.0
      %8714 = vmatpush1.msra.mxu0 0.0
      %8715 = vmatprep.subr.mxu0 0.0
      %8716 = vmatpush1.msra.mxu0 0.0
      %8717 = vmatprep.subr.mxu0 0.0
      %8718 = vmatpush1.msra.mxu0 0.0
      %8719 = vmatprep.subr.mxu0 0.0
      %8720 = vmatpush1.msra.mxu0 0.0
      %8721 = vmatprep.subr.mxu0 0.0
      %8722 = vmatpush1.msra.mxu0 0.0
      %8723 = vmatprep.subr.mxu0 0.0
      %8724 = vmatpush1.msra.mxu0 0.0
      %8725 = vmatprep.subr.mxu0 0.0
      %8726 = vmatpush1.msra.mxu0 0.0
      %8727 = vmatprep.subr.mxu0 0.0
      %8728 = vmatpush1.msra.mxu0 0.0
      %8729 = vmatprep.subr.mxu0 0.0
      %8730 = vmatpush1.msra.mxu0 0.0
      %8731 = vmatprep.subr.mxu0 0.0
      %8732 = vmatpush1.msra.mxu0 0.0
      %8733 = vmatprep.subr.mxu0 0.0
      %8734 = vmatpush1.msra.mxu0 0.0
      %8735 = vmatprep.subr.mxu0 0.0
      %8736 = vmatpush1.msra.mxu0 0.0
      %8737 = vmatprep.subr.mxu0 0.0
      %8738 = vmatpush1.msra.mxu0 0.0
      %8739 = vmatprep.subr.mxu0 0.0
      %8740 = vmatpush1.msra.mxu0 0.0
      %8741 = vmatprep.subr.mxu0 0.0
      %8742 = vmatpush1.msra.mxu0 0.0
      %8743 = vmatprep.subr.mxu0 0.0
      %8744 = vmatpush1.msra.mxu0 0.0
      %8745 = vmatprep.subr.mxu0 0.0
      %8746 = vmatpush1.msra.mxu0 0.0
      %8747 = vmatprep.subr.mxu0 0.0
      %8748 = vmatpush1.msra.mxu0 0.0
      %8749 = vmatprep.subr.mxu0 0.0
      %8750 = vmatpush1.msra.mxu0 0.0
      %8751 = vmatprep.subr.mxu0 0.0
      %8752 = vmatpush1.msra.mxu0 0.0
      %8753 = vmatprep.subr.mxu0 0.0
      %8754 = vmatpush1.msra.mxu0 0.0
      %8755 = vmatprep.subr.mxu0 0.0
      %8756 = vmatpush1.msra.mxu0 0.0
      %8757 = vmatprep.subr.mxu0 0.0
      %8758 = vmatpush1.msra.mxu0 0.0
      %8759 = vmatprep.mubr.f32.mxu0 0.0
      %v8760 = vand.u32 %v6309, 4294901760
      %v8761 = vsub.f32 %v6309, %v8760
      %8762 = vmatmul.mubr.f32.gmra.mrb[0].mxu0 %v8761
      %v8763 = vpop.f32.mrb[0].mxu0
      %v8764 = vadd.f32 %v8675, %v8763
      %v8765 = vpop.f32.mrb[0].mxu0
      %v8766 = vadd.f32 %v8677, %v8765
      %8767 = vdwg.mxu0
      %v8768 = vand.u32 %v6247, 4294901760
      %8769 = vmatprep.subr.mxu0 %v8768
      %v8770 = vand.u32 %v6246, 4294901760
      %8771 = vmatpush1.msra.mxu0 %v8770
      %v8772 = vand.u32 %v6263, 4294901760
      %8773 = vmatprep.subr.mxu0 %v8772
      %v8774 = vand.u32 %v6262, 4294901760
      %8775 = vmatpush1.msra.mxu0 %v8774
      %v8776 = vand.u32 %v6279, 4294901760
      %8777 = vmatprep.subr.mxu0 %v8776
      %v8778 = vand.u32 %v6278, 4294901760
      %8779 = vmatpush1.msra.mxu0 %v8778
      %v8780 = vand.u32 %v6295, 4294901760
      %8781 = vmatprep.subr.mxu0 %v8780
      %v8782 = vand.u32 %v6294, 4294901760
      %8783 = vmatpush1.msra.mxu0 %v8782
      %8784 = vmatprep.subr.mxu0 0.0
      %8785 = vmatpush1.msra.mxu0 0.0
      %8786 = vmatprep.subr.mxu0 0.0
      %8787 = vmatpush1.msra.mxu0 0.0
      %8788 = vmatprep.subr.mxu0 0.0
      %8789 = vmatpush1.msra.mxu0 0.0
      %8790 = vmatprep.subr.mxu0 0.0
      %8791 = vmatpush1.msra.mxu0 0.0
      %8792 = vmatprep.subr.mxu0 0.0
      %8793 = vmatpush1.msra.mxu0 0.0
      %8794 = vmatprep.subr.mxu0 0.0
      %8795 = vmatpush1.msra.mxu0 0.0
      %8796 = vmatprep.subr.mxu0 0.0
      %8797 = vmatpush1.msra.mxu0 0.0
      %8798 = vmatprep.subr.mxu0 0.0
      %8799 = vmatpush1.msra.mxu0 0.0
      %8800 = vmatprep.subr.mxu0 0.0
      %8801 = vmatpush1.msra.mxu0 0.0
      %8802 = vmatprep.subr.mxu0 0.0
      %8803 = vmatpush1.msra.mxu0 0.0
      %8804 = vmatprep.subr.mxu0 0.0
      %8805 = vmatpush1.msra.mxu0 0.0
      %8806 = vmatprep.subr.mxu0 0.0
      %8807 = vmatpush1.msra.mxu0 0.0
      %8808 = vmatprep.subr.mxu0 0.0
      %8809 = vmatpush1.msra.mxu0 0.0
      %8810 = vmatprep.subr.mxu0 0.0
      %8811 = vmatpush1.msra.mxu0 0.0
      %8812 = vmatprep.subr.mxu0 0.0
      %8813 = vmatpush1.msra.mxu0 0.0
      %8814 = vmatprep.subr.mxu0 0.0
      %8815 = vmatpush1.msra.mxu0 0.0
      %8816 = vmatprep.subr.mxu0 0.0
      %8817 = vmatpush1.msra.mxu0 0.0
      %8818 = vmatprep.subr.mxu0 0.0
      %8819 = vmatpush1.msra.mxu0 0.0
      %8820 = vmatprep.subr.mxu0 0.0
      %8821 = vmatpush1.msra.mxu0 0.0
      %8822 = vmatprep.subr.mxu0 0.0
      %8823 = vmatpush1.msra.mxu0 0.0
      %8824 = vmatprep.subr.mxu0 0.0
      %8825 = vmatpush1.msra.mxu0 0.0
      %8826 = vmatprep.subr.mxu0 0.0
      %8827 = vmatpush1.msra.mxu0 0.0
      %8828 = vmatprep.subr.mxu0 0.0
      %8829 = vmatpush1.msra.mxu0 0.0
      %8830 = vmatprep.subr.mxu0 0.0
      %8831 = vmatpush1.msra.mxu0 0.0
      %8832 = vmatprep.subr.mxu0 0.0
      %8833 = vmatpush1.msra.mxu0 0.0
      %8834 = vmatprep.subr.mxu0 0.0
      %8835 = vmatpush1.msra.mxu0 0.0
      %8836 = vmatprep.subr.mxu0 0.0
      %8837 = vmatpush1.msra.mxu0 0.0
      %8838 = vmatprep.subr.mxu0 0.0
      %8839 = vmatpush1.msra.mxu0 0.0
      %8840 = vmatprep.mubr.f32.mxu0 0.0
      %v8841 = vand.u32 %v6309, 4294901760
      %v8842 = vsub.f32 %v6309, %v8841
      %v8843 = vand.u32 %v8842, 4294901760
      %8844 = vmatmul.mubr.f32.gmra.mrb[0].mxu0 %v8843
      %v8845 = vpop.f32.mrb[0].mxu0
      %v8846 = vadd.f32 %v8764, %v8845
      %v8847 = vpop.f32.mrb[0].mxu0
      %v8848 = vadd.f32 %v8766, %v8847
      %8849 = vdwg.mxu0
      %v8850 = vand.u32 %v6247, 4294901760
      %v8851 = vsub.f32 %v6247, %v8850
      %v8852 = vand.u32 %v8851, 4294901760
      %8853 = vmatprep.subr.mxu0 %v8852
      %v8854 = vand.u32 %v6246, 4294901760
      %v8855 = vsub.f32 %v6246, %v8854
      %v8856 = vand.u32 %v8855, 4294901760
      %8857 = vmatpush1.msra.mxu0 %v8856
      %v8858 = vand.u32 %v6263, 4294901760
      %v8859 = vsub.f32 %v6263, %v8858
      %v8860 = vand.u32 %v8859, 4294901760
      %8861 = vmatprep.subr.mxu0 %v8860
      %v8862 = vand.u32 %v6262, 4294901760
      %v8863 = vsub.f32 %v6262, %v8862
      %v8864 = vand.u32 %v8863, 4294901760
      %8865 = vmatpush1.msra.mxu0 %v8864
      %v8866 = vand.u32 %v6279, 4294901760
      %v8867 = vsub.f32 %v6279, %v8866
      %v8868 = vand.u32 %v8867, 4294901760
      %8869 = vmatprep.subr.mxu0 %v8868
      %v8870 = vand.u32 %v6278, 4294901760
      %v8871 = vsub.f32 %v6278, %v8870
      %v8872 = vand.u32 %v8871, 4294901760
      %8873 = vmatpush1.msra.mxu0 %v8872
      %v8874 = vand.u32 %v6295, 4294901760
      %v8875 = vsub.f32 %v6295, %v8874
      %v8876 = vand.u32 %v8875, 4294901760
      %8877 = vmatprep.subr.mxu0 %v8876
      %v8878 = vand.u32 %v6294, 4294901760
      %v8879 = vsub.f32 %v6294, %v8878
      %v8880 = vand.u32 %v8879, 4294901760
      %8881 = vmatpush1.msra.mxu0 %v8880
      %8882 = vmatprep.subr.mxu0 0.0
      %8883 = vmatpush1.msra.mxu0 0.0
      %8884 = vmatprep.subr.mxu0 0.0
      %8885 = vmatpush1.msra.mxu0 0.0
      %8886 = vmatprep.subr.mxu0 0.0
      %8887 = vmatpush1.msra.mxu0 0.0
      %8888 = vmatprep.subr.mxu0 0.0
      %8889 = vmatpush1.msra.mxu0 0.0
      %8890 = vmatprep.subr.mxu0 0.0
      %8891 = vmatpush1.msra.mxu0 0.0
      %8892 = vmatprep.subr.mxu0 0.0
      %8893 = vmatpush1.msra.mxu0 0.0
      %8894 = vmatprep.subr.mxu0 0.0
      %8895 = vmatpush1.msra.mxu0 0.0
      %8896 = vmatprep.subr.mxu0 0.0
      %8897 = vmatpush1.msra.mxu0 0.0
      %8898 = vmatprep.subr.mxu0 0.0
      %8899 = vmatpush1.msra.mxu0 0.0
      %8900 = vmatprep.subr.mxu0 0.0
      %8901 = vmatpush1.msra.mxu0 0.0
      %8902 = vmatprep.subr.mxu0 0.0
      %8903 = vmatpush1.msra.mxu0 0.0
      %8904 = vmatprep.subr.mxu0 0.0
      %8905 = vmatpush1.msra.mxu0 0.0
      %8906 = vmatprep.subr.mxu0 0.0
      %8907 = vmatpush1.msra.mxu0 0.0
      %8908 = vmatprep.subr.mxu0 0.0
      %8909 = vmatpush1.msra.mxu0 0.0
      %8910 = vmatprep.subr.mxu0 0.0
      %8911 = vmatpush1.msra.mxu0 0.0
      %8912 = vmatprep.subr.mxu0 0.0
      %8913 = vmatpush1.msra.mxu0 0.0
      %8914 = vmatprep.subr.mxu0 0.0
      %8915 = vmatpush1.msra.mxu0 0.0
      %8916 = vmatprep.subr.mxu0 0.0
      %8917 = vmatpush1.msra.mxu0 0.0
      %8918 = vmatprep.subr.mxu0 0.0
      %8919 = vmatpush1.msra.mxu0 0.0
      %8920 = vmatprep.subr.mxu0 0.0
      %8921 = vmatpush1.msra.mxu0 0.0
      %8922 = vmatprep.subr.mxu0 0.0
      %8923 = vmatpush1.msra.mxu0 0.0
      %8924 = vmatprep.subr.mxu0 0.0
      %8925 = vmatpush1.msra.mxu0 0.0
      %8926 = vmatprep.subr.mxu0 0.0
      %8927 = vmatpush1.msra.mxu0 0.0
      %8928 = vmatprep.subr.mxu0 0.0
      %8929 = vmatpush1.msra.mxu0 0.0
      %8930 = vmatprep.subr.mxu0 0.0
      %8931 = vmatpush1.msra.mxu0 0.0
      %8932 = vmatprep.subr.mxu0 0.0
      %8933 = vmatpush1.msra.mxu0 0.0
      %8934 = vmatprep.subr.mxu0 0.0
      %8935 = vmatpush1.msra.mxu0 0.0
      %8936 = vmatprep.subr.mxu0 0.0
      %8937 = vmatpush1.msra.mxu0 0.0
      %8938 = vmatprep.mubr.f32.mxu0 0.0
      %v8939 = vand.u32 %v6309, 4294901760
      %8940 = vmatmul.mubr.f32.gmra.mrb[0].mxu0 %v8939
      %v8941 = vpop.f32.mrb[0].mxu0
      %v8942 = vadd.f32 %v8846, %v8941
      %v8943 = vpop.f32.mrb[0].mxu0
      %v8944 = vadd.f32 %v8848, %v8943
      %8945 = vdwg.mxu0
      %v8946 = vand.u32 %v6247, 4294901760
      %8947 = vmatprep.subr.mxu0 %v8946
      %v8948 = vand.u32 %v6246, 4294901760
      %8949 = vmatpush1.msra.mxu0 %v8948
      %v8950 = vand.u32 %v6263, 4294901760
      %8951 = vmatprep.subr.mxu0 %v8950
      %v8952 = vand.u32 %v6262, 4294901760
      %8953 = vmatpush1.msra.mxu0 %v8952
      %v8954 = vand.u32 %v6279, 4294901760
      %8955 = vmatprep.subr.mxu0 %v8954
      %v8956 = vand.u32 %v6278, 4294901760
      %8957 = vmatpush1.msra.mxu0 %v8956
      %v8958 = vand.u32 %v6295, 4294901760
      %8959 = vmatprep.subr.mxu0 %v8958
      %v8960 = vand.u32 %v6294, 4294901760
      %8961 = vmatpush1.msra.mxu0 %v8960
      %8962 = vmatprep.subr.mxu0 0.0
      %8963 = vmatpush1.msra.mxu0 0.0
      %8964 = vmatprep.subr.mxu0 0.0
      %8965 = vmatpush1.msra.mxu0 0.0
      %8966 = vmatprep.subr.mxu0 0.0
      %8967 = vmatpush1.msra.mxu0 0.0
      %8968 = vmatprep.subr.mxu0 0.0
      %8969 = vmatpush1.msra.mxu0 0.0
      %8970 = vmatprep.subr.mxu0 0.0
      %8971 = vmatpush1.msra.mxu0 0.0
      %8972 = vmatprep.subr.mxu0 0.0
      %8973 = vmatpush1.msra.mxu0 0.0
      %8974 = vmatprep.subr.mxu0 0.0
      %8975 = vmatpush1.msra.mxu0 0.0
      %8976 = vmatprep.subr.mxu0 0.0
      %8977 = vmatpush1.msra.mxu0 0.0
      %8978 = vmatprep.subr.mxu0 0.0
      %8979 = vmatpush1.msra.mxu0 0.0
      %8980 = vmatprep.subr.mxu0 0.0
      %8981 = vmatpush1.msra.mxu0 0.0
      %8982 = vmatprep.subr.mxu0 0.0
      %8983 = vmatpush1.msra.mxu0 0.0
      %8984 = vmatprep.subr.mxu0 0.0
      %8985 = vmatpush1.msra.mxu0 0.0
      %8986 = vmatprep.subr.mxu0 0.0
      %8987 = vmatpush1.msra.mxu0 0.0
      %8988 = vmatprep.subr.mxu0 0.0
      %8989 = vmatpush1.msra.mxu0 0.0
      %8990 = vmatprep.subr.mxu0 0.0
      %8991 = vmatpush1.msra.mxu0 0.0
      %8992 = vmatprep.subr.mxu0 0.0
      %8993 = vmatpush1.msra.mxu0 0.0
      %8994 = vmatprep.subr.mxu0 0.0
      %8995 = vmatpush1.msra.mxu0 0.0
      %8996 = vmatprep.subr.mxu0 0.0
      %8997 = vmatpush1.msra.mxu0 0.0
      %8998 = vmatprep.subr.mxu0 0.0
      %8999 = vmatpush1.msra.mxu0 0.0
      %9000 = vmatprep.subr.mxu0 0.0
      %9001 = vmatpush1.msra.mxu0 0.0
      %9002 = vmatprep.subr.mxu0 0.0
      %9003 = vmatpush1.msra.mxu0 0.0
      %9004 = vmatprep.subr.mxu0 0.0
      %9005 = vmatpush1.msra.mxu0 0.0
      %9006 = vmatprep.subr.mxu0 0.0
      %9007 = vmatpush1.msra.mxu0 0.0
      %9008 = vmatprep.subr.mxu0 0.0
      %9009 = vmatpush1.msra.mxu0 0.0
      %9010 = vmatprep.subr.mxu0 0.0
      %9011 = vmatpush1.msra.mxu0 0.0
      %9012 = vmatprep.subr.mxu0 0.0
      %9013 = vmatpush1.msra.mxu0 0.0
      %9014 = vmatprep.subr.mxu0 0.0
      %9015 = vmatpush1.msra.mxu0 0.0
      %9016 = vmatprep.subr.mxu0 0.0
      %9017 = vmatpush1.msra.mxu0 0.0
      %9018 = vmatprep.mubr.f32.mxu0 0.0
      %v9019 = vand.u32 %v6309, 4294901760
      %9020 = vmatmul.mubr.f32.gmra.mrb[0].mxu0 %v9019
      %v9021 = vpop.f32.mrb[0].mxu0
      %v9022 = vadd.f32 %v8942, %v9021
      %v9023 = vpop.f32.mrb[0].mxu0
      %v9024 = vadd.f32 %v8944, %v9023
      %9025 = vdwg.mxu0
      %v9026 = vand.u32 %v6249, 4294901760
      %9027 = vmatprep.subr.mxu0 %v9026
      %v9028 = vand.u32 %v6248, 4294901760
      %9029 = vmatpush1.msra.mxu0 %v9028
      %v9030 = vand.u32 %v6265, 4294901760
      %9031 = vmatprep.subr.mxu0 %v9030
      %v9032 = vand.u32 %v6264, 4294901760
      %9033 = vmatpush1.msra.mxu0 %v9032
      %v9034 = vand.u32 %v6281, 4294901760
      %9035 = vmatprep.subr.mxu0 %v9034
      %v9036 = vand.u32 %v6280, 4294901760
      %9037 = vmatpush1.msra.mxu0 %v9036
      %v9038 = vand.u32 %v6297, 4294901760
      %9039 = vmatprep.subr.mxu0 %v9038
      %v9040 = vand.u32 %v6296, 4294901760
      %9041 = vmatpush1.msra.mxu0 %v9040
      %9042 = vmatprep.subr.mxu0 0.0
      %9043 = vmatpush1.msra.mxu0 0.0
      %9044 = vmatprep.subr.mxu0 0.0
      %9045 = vmatpush1.msra.mxu0 0.0
      %9046 = vmatprep.subr.mxu0 0.0
      %9047 = vmatpush1.msra.mxu0 0.0
      %9048 = vmatprep.subr.mxu0 0.0
      %9049 = vmatpush1.msra.mxu0 0.0
      %9050 = vmatprep.subr.mxu0 0.0
      %9051 = vmatpush1.msra.mxu0 0.0
      %9052 = vmatprep.subr.mxu0 0.0
      %9053 = vmatpush1.msra.mxu0 0.0
      %9054 = vmatprep.subr.mxu0 0.0
      %9055 = vmatpush1.msra.mxu0 0.0
      %9056 = vmatprep.subr.mxu0 0.0
      %9057 = vmatpush1.msra.mxu0 0.0
      %9058 = vmatprep.subr.mxu0 0.0
      %9059 = vmatpush1.msra.mxu0 0.0
      %9060 = vmatprep.subr.mxu0 0.0
      %9061 = vmatpush1.msra.mxu0 0.0
      %9062 = vmatprep.subr.mxu0 0.0
      %9063 = vmatpush1.msra.mxu0 0.0
      %9064 = vmatprep.subr.mxu0 0.0
      %9065 = vmatpush1.msra.mxu0 0.0
      %9066 = vmatprep.subr.mxu0 0.0
      %9067 = vmatpush1.msra.mxu0 0.0
      %9068 = vmatprep.subr.mxu0 0.0
      %9069 = vmatpush1.msra.mxu0 0.0
      %9070 = vmatprep.subr.mxu0 0.0
      %9071 = vmatpush1.msra.mxu0 0.0
      %9072 = vmatprep.subr.mxu0 0.0
      %9073 = vmatpush1.msra.mxu0 0.0
      %9074 = vmatprep.subr.mxu0 0.0
      %9075 = vmatpush1.msra.mxu0 0.0
      %9076 = vmatprep.subr.mxu0 0.0
      %9077 = vmatpush1.msra.mxu0 0.0
      %9078 = vmatprep.subr.mxu0 0.0
      %9079 = vmatpush1.msra.mxu0 0.0
      %9080 = vmatprep.subr.mxu0 0.0
      %9081 = vmatpush1.msra.mxu0 0.0
      %9082 = vmatprep.subr.mxu0 0.0
      %9083 = vmatpush1.msra.mxu0 0.0
      %9084 = vmatprep.subr.mxu0 0.0
      %9085 = vmatpush1.msra.mxu0 0.0
      %9086 = vmatprep.subr.mxu0 0.0
      %9087 = vmatpush1.msra.mxu0 0.0
      %9088 = vmatprep.subr.mxu0 0.0
      %9089 = vmatpush1.msra.mxu0 0.0
      %9090 = vmatprep.subr.mxu0 0.0
      %9091 = vmatpush1.msra.mxu0 0.0
      %9092 = vmatprep.subr.mxu0 0.0
      %9093 = vmatpush1.msra.mxu0 0.0
      %9094 = vmatprep.subr.mxu0 0.0
      %9095 = vmatpush1.msra.mxu0 0.0
      %9096 = vmatprep.subr.mxu0 0.0
      %9097 = vmatpush1.msra.mxu0 0.0
      %9098 = vmatprep.mubr.f32.mxu0 0.0
      %v9099 = vand.u32 %v6309, 4294901760
      %v9100 = vsub.f32 %v6309, %v9099
      %v9101 = vand.u32 %v9100, 4294901760
      %v9102 = vsub.f32 %v9100, %v9101
      %v9103 = vand.u32 %v9102, 4294901760
      %9104 = vmatmul.mubr.f32.gmra.mrb[0].mxu0 %v9103
      %v9105 = vpop.f32.mrb[0].mxu0
      %v9106 = vadd.f32 %v6305, %v9105
      %v9107 = vpop.f32.mrb[0].mxu0
      %v9108 = vadd.f32 %v6305, %v9107
      %9109 = vdwg.mxu0
      %v9110 = vand.u32 %v6249, 4294901760
      %v9111 = vsub.f32 %v6249, %v9110
      %v9112 = vand.u32 %v9111, 4294901760
      %v9113 = vsub.f32 %v9111, %v9112
      %v9114 = vand.u32 %v9113, 4294901760
      %9115 = vmatprep.subr.mxu0 %v9114
      %v9116 = vand.u32 %v6248, 4294901760
      %v9117 = vsub.f32 %v6248, %v9116
      %v9118 = vand.u32 %v9117, 4294901760
      %v9119 = vsub.f32 %v9117, %v9118
      %v9120 = vand.u32 %v9119, 4294901760
      %9121 = vmatpush1.msra.mxu0 %v9120
      %v9122 = vand.u32 %v6265, 4294901760
      %v9123 = vsub.f32 %v6265, %v9122
      %v9124 = vand.u32 %v9123, 4294901760
      %v9125 = vsub.f32 %v9123, %v9124
      %v9126 = vand.u32 %v9125, 4294901760
      %9127 = vmatprep.subr.mxu0 %v9126
      %v9128 = vand.u32 %v6264, 4294901760
      %v9129 = vsub.f32 %v6264, %v9128
      %v9130 = vand.u32 %v9129, 4294901760
      %v9131 = vsub.f32 %v9129, %v9130
      %v9132 = vand.u32 %v9131, 4294901760
      %9133 = vmatpush1.msra.mxu0 %v9132
      %v9134 = vand.u32 %v6281, 4294901760
      %v9135 = vsub.f32 %v6281, %v9134
      %v9136 = vand.u32 %v9135, 4294901760
      %v9137 = vsub.f32 %v9135, %v9136
      %v9138 = vand.u32 %v9137, 4294901760
      %9139 = vmatprep.subr.mxu0 %v9138
      %v9140 = vand.u32 %v6280, 4294901760
      %v9141 = vsub.f32 %v6280, %v9140
      %v9142 = vand.u32 %v9141, 4294901760
      %v9143 = vsub.f32 %v9141, %v9142
      %v9144 = vand.u32 %v9143, 4294901760
      %9145 = vmatpush1.msra.mxu0 %v9144
      %v9146 = vand.u32 %v6297, 4294901760
      %v9147 = vsub.f32 %v6297, %v9146
      %v9148 = vand.u32 %v9147, 4294901760
      %v9149 = vsub.f32 %v9147, %v9148
      %v9150 = vand.u32 %v9149, 4294901760
      %9151 = vmatprep.subr.mxu0 %v9150
      %v9152 = vand.u32 %v6296, 4294901760
      %v9153 = vsub.f32 %v6296, %v9152
      %v9154 = vand.u32 %v9153, 4294901760
      %v9155 = vsub.f32 %v9153, %v9154
      %v9156 = vand.u32 %v9155, 4294901760
      %9157 = vmatpush1.msra.mxu0 %v9156
      %9158 = vmatprep.subr.mxu0 0.0
      %9159 = vmatpush1.msra.mxu0 0.0
      %9160 = vmatprep.subr.mxu0 0.0
      %9161 = vmatpush1.msra.mxu0 0.0
      %9162 = vmatprep.subr.mxu0 0.0
      %9163 = vmatpush1.msra.mxu0 0.0
      %9164 = vmatprep.subr.mxu0 0.0
      %9165 = vmatpush1.msra.mxu0 0.0
      %9166 = vmatprep.subr.mxu0 0.0
      %9167 = vmatpush1.msra.mxu0 0.0
      %9168 = vmatprep.subr.mxu0 0.0
      %9169 = vmatpush1.msra.mxu0 0.0
      %9170 = vmatprep.subr.mxu0 0.0
      %9171 = vmatpush1.msra.mxu0 0.0
      %9172 = vmatprep.subr.mxu0 0.0
      %9173 = vmatpush1.msra.mxu0 0.0
      %9174 = vmatprep.subr.mxu0 0.0
      %9175 = vmatpush1.msra.mxu0 0.0
      %9176 = vmatprep.subr.mxu0 0.0
      %9177 = vmatpush1.msra.mxu0 0.0
      %9178 = vmatprep.subr.mxu0 0.0
      %9179 = vmatpush1.msra.mxu0 0.0
      %9180 = vmatprep.subr.mxu0 0.0
      %9181 = vmatpush1.msra.mxu0 0.0
      %9182 = vmatprep.subr.mxu0 0.0
      %9183 = vmatpush1.msra.mxu0 0.0
      %9184 = vmatprep.subr.mxu0 0.0
      %9185 = vmatpush1.msra.mxu0 0.0
      %9186 = vmatprep.subr.mxu0 0.0
      %9187 = vmatpush1.msra.mxu0 0.0
      %9188 = vmatprep.subr.mxu0 0.0
      %9189 = vmatpush1.msra.mxu0 0.0
      %9190 = vmatprep.subr.mxu0 0.0
      %9191 = vmatpush1.msra.mxu0 0.0
      %9192 = vmatprep.subr.mxu0 0.0
      %9193 = vmatpush1.msra.mxu0 0.0
      %9194 = vmatprep.subr.mxu0 0.0
      %9195 = vmatpush1.msra.mxu0 0.0
      %9196 = vmatprep.subr.mxu0 0.0
      %9197 = vmatpush1.msra.mxu0 0.0
      %9198 = vmatprep.subr.mxu0 0.0
      %9199 = vmatpush1.msra.mxu0 0.0
      %9200 = vmatprep.subr.mxu0 0.0
      %9201 = vmatpush1.msra.mxu0 0.0
      %9202 = vmatprep.subr.mxu0 0.0
      %9203 = vmatpush1.msra.mxu0 0.0
      %9204 = vmatprep.subr.mxu0 0.0
      %9205 = vmatpush1.msra.mxu0 0.0
      %9206 = vmatprep.subr.mxu0 0.0
      %9207 = vmatpush1.msra.mxu0 0.0
      %9208 = vmatprep.subr.mxu0 0.0
      %9209 = vmatpush1.msra.mxu0 0.0
      %9210 = vmatprep.subr.mxu0 0.0
      %9211 = vmatpush1.msra.mxu0 0.0
      %9212 = vmatprep.subr.mxu0 0.0
      %9213 = vmatpush1.msra.mxu0 0.0
      %9214 = vmatprep.mubr.f32.mxu0 0.0
      %v9215 = vand.u32 %v6309, 4294901760
      %9216 = vmatmul.mubr.f32.gmra.mrb[0].mxu0 %v9215
      %v9217 = vpop.f32.mrb[0].mxu0
      %v9218 = vadd.f32 %v9106, %v9217
      %v9219 = vpop.f32.mrb[0].mxu0
      %v9220 = vadd.f32 %v9108, %v9219
      %9221 = vdwg.mxu0
      %v9222 = vand.u32 %v6249, 4294901760
      %v9223 = vsub.f32 %v6249, %v9222
      %9224 = vmatprep.subr.mxu0 %v9223
      %v9225 = vand.u32 %v6248, 4294901760
      %v9226 = vsub.f32 %v6248, %v9225
      %9227 = vmatpush1.msra.mxu0 %v9226
      %v9228 = vand.u32 %v6265, 4294901760
      %v9229 = vsub.f32 %v6265, %v9228
      %9230 = vmatprep.subr.mxu0 %v9229
      %v9231 = vand.u32 %v6264, 4294901760
      %v9232 = vsub.f32 %v6264, %v9231
      %9233 = vmatpush1.msra.mxu0 %v9232
      %v9234 = vand.u32 %v6281, 4294901760
      %v9235 = vsub.f32 %v6281, %v9234
      %9236 = vmatprep.subr.mxu0 %v9235
      %v9237 = vand.u32 %v6280, 4294901760
      %v9238 = vsub.f32 %v6280, %v9237
      %9239 = vmatpush1.msra.mxu0 %v9238
      %v9240 = vand.u32 %v6297, 4294901760
      %v9241 = vsub.f32 %v6297, %v9240
      %9242 = vmatprep.subr.mxu0 %v9241
      %v9243 = vand.u32 %v6296, 4294901760
      %v9244 = vsub.f32 %v6296, %v9243
      %9245 = vmatpush1.msra.mxu0 %v9244
      %9246 = vmatprep.subr.mxu0 0.0
      %9247 = vmatpush1.msra.mxu0 0.0
      %9248 = vmatprep.subr.mxu0 0.0
      %9249 = vmatpush1.msra.mxu0 0.0
      %9250 = vmatprep.subr.mxu0 0.0
      %9251 = vmatpush1.msra.mxu0 0.0
      %9252 = vmatprep.subr.mxu0 0.0
      %9253 = vmatpush1.msra.mxu0 0.0
      %9254 = vmatprep.subr.mxu0 0.0
      %9255 = vmatpush1.msra.mxu0 0.0
      %9256 = vmatprep.subr.mxu0 0.0
      %9257 = vmatpush1.msra.mxu0 0.0
      %9258 = vmatprep.subr.mxu0 0.0
      %9259 = vmatpush1.msra.mxu0 0.0
      %9260 = vmatprep.subr.mxu0 0.0
      %9261 = vmatpush1.msra.mxu0 0.0
      %9262 = vmatprep.subr.mxu0 0.0
      %9263 = vmatpush1.msra.mxu0 0.0
      %9264 = vmatprep.subr.mxu0 0.0
      %9265 = vmatpush1.msra.mxu0 0.0
      %9266 = vmatprep.subr.mxu0 0.0
      %9267 = vmatpush1.msra.mxu0 0.0
      %9268 = vmatprep.subr.mxu0 0.0
      %9269 = vmatpush1.msra.mxu0 0.0
      %9270 = vmatprep.subr.mxu0 0.0
      %9271 = vmatpush1.msra.mxu0 0.0
      %9272 = vmatprep.subr.mxu0 0.0
      %9273 = vmatpush1.msra.mxu0 0.0
      %9274 = vmatprep.subr.mxu0 0.0
      %9275 = vmatpush1.msra.mxu0 0.0
      %9276 = vmatprep.subr.mxu0 0.0
      %9277 = vmatpush1.msra.mxu0 0.0
      %9278 = vmatprep.subr.mxu0 0.0
      %9279 = vmatpush1.msra.mxu0 0.0
      %9280 = vmatprep.subr.mxu0 0.0
      %9281 = vmatpush1.msra.mxu0 0.0
      %9282 = vmatprep.subr.mxu0 0.0
      %9283 = vmatpush1.msra.mxu0 0.0
      %9284 = vmatprep.subr.mxu0 0.0
      %9285 = vmatpush1.msra.mxu0 0.0
      %9286 = vmatprep.subr.mxu0 0.0
      %9287 = vmatpush1.msra.mxu0 0.0
      %9288 = vmatprep.subr.mxu0 0.0
      %9289 = vmatpush1.msra.mxu0 0.0
      %9290 = vmatprep.subr.mxu0 0.0
      %9291 = vmatpush1.msra.mxu0 0.0
      %9292 = vmatprep.subr.mxu0 0.0
      %9293 = vmatpush1.msra.mxu0 0.0
      %9294 = vmatprep.subr.mxu0 0.0
      %9295 = vmatpush1.msra.mxu0 0.0
      %9296 = vmatprep.subr.mxu0 0.0
      %9297 = vmatpush1.msra.mxu0 0.0
      %9298 = vmatprep.subr.mxu0 0.0
      %9299 = vmatpush1.msra.mxu0 0.0
      %9300 = vmatprep.subr.mxu0 0.0
      %9301 = vmatpush1.msra.mxu0 0.0
      %9302 = vmatprep.mubr.f32.mxu0 0.0
      %v9303 = vand.u32 %v6309, 4294901760
      %v9304 = vsub.f32 %v6309, %v9303
      %9305 = vmatmul.mubr.f32.gmra.mrb[0].mxu0 %v9304
      %v9306 = vpop.f32.mrb[0].mxu0
      %v9307 = vadd.f32 %v9218, %v9306
      %v9308 = vpop.f32.mrb[0].mxu0
      %v9309 = vadd.f32 %v9220, %v9308
      %9310 = vdwg.mxu0
      %v9311 = vand.u32 %v6249, 4294901760
      %9312 = vmatprep.subr.mxu0 %v9311
      %v9313 = vand.u32 %v6248, 4294901760
      %9314 = vmatpush1.msra.mxu0 %v9313
      %v9315 = vand.u32 %v6265, 4294901760
      %9316 = vmatprep.subr.mxu0 %v9315
      %v9317 = vand.u32 %v6264, 4294901760
      %9318 = vmatpush1.msra.mxu0 %v9317
      %v9319 = vand.u32 %v6281, 4294901760
      %9320 = vmatprep.subr.mxu0 %v9319
      %v9321 = vand.u32 %v6280, 4294901760
      %9322 = vmatpush1.msra.mxu0 %v9321
      %v9323 = vand.u32 %v6297, 4294901760
      %9324 = vmatprep.subr.mxu0 %v9323
      %v9325 = vand.u32 %v6296, 4294901760
      %9326 = vmatpush1.msra.mxu0 %v9325
      %9327 = vmatprep.subr.mxu0 0.0
      %9328 = vmatpush1.msra.mxu0 0.0
      %9329 = vmatprep.subr.mxu0 0.0
      %9330 = vmatpush1.msra.mxu0 0.0
      %9331 = vmatprep.subr.mxu0 0.0
      %9332 = vmatpush1.msra.mxu0 0.0
      %9333 = vmatprep.subr.mxu0 0.0
      %9334 = vmatpush1.msra.mxu0 0.0
      %9335 = vmatprep.subr.mxu0 0.0
      %9336 = vmatpush1.msra.mxu0 0.0
      %9337 = vmatprep.subr.mxu0 0.0
      %9338 = vmatpush1.msra.mxu0 0.0
      %9339 = vmatprep.subr.mxu0 0.0
      %9340 = vmatpush1.msra.mxu0 0.0
      %9341 = vmatprep.subr.mxu0 0.0
      %9342 = vmatpush1.msra.mxu0 0.0
      %9343 = vmatprep.subr.mxu0 0.0
      %9344 = vmatpush1.msra.mxu0 0.0
      %9345 = vmatprep.subr.mxu0 0.0
      %9346 = vmatpush1.msra.mxu0 0.0
      %9347 = vmatprep.subr.mxu0 0.0
      %9348 = vmatpush1.msra.mxu0 0.0
      %9349 = vmatprep.subr.mxu0 0.0
      %9350 = vmatpush1.msra.mxu0 0.0
      %9351 = vmatprep.subr.mxu0 0.0
      %9352 = vmatpush1.msra.mxu0 0.0
      %9353 = vmatprep.subr.mxu0 0.0
      %9354 = vmatpush1.msra.mxu0 0.0
      %9355 = vmatprep.subr.mxu0 0.0
      %9356 = vmatpush1.msra.mxu0 0.0
      %9357 = vmatprep.subr.mxu0 0.0
      %9358 = vmatpush1.msra.mxu0 0.0
      %9359 = vmatprep.subr.mxu0 0.0
      %9360 = vmatpush1.msra.mxu0 0.0
      %9361 = vmatprep.subr.mxu0 0.0
      %9362 = vmatpush1.msra.mxu0 0.0
      %9363 = vmatprep.subr.mxu0 0.0
      %9364 = vmatpush1.msra.mxu0 0.0
      %9365 = vmatprep.subr.mxu0 0.0
      %9366 = vmatpush1.msra.mxu0 0.0
      %9367 = vmatprep.subr.mxu0 0.0
      %9368 = vmatpush1.msra.mxu0 0.0
      %9369 = vmatprep.subr.mxu0 0.0
      %9370 = vmatpush1.msra.mxu0 0.0
      %9371 = vmatprep.subr.mxu0 0.0
      %9372 = vmatpush1.msra.mxu0 0.0
      %9373 = vmatprep.subr.mxu0 0.0
      %9374 = vmatpush1.msra.mxu0 0.0
      %9375 = vmatprep.subr.mxu0 0.0
      %9376 = vmatpush1.msra.mxu0 0.0
      %9377 = vmatprep.subr.mxu0 0.0
      %9378 = vmatpush1.msra.mxu0 0.0
      %9379 = vmatprep.subr.mxu0 0.0
      %9380 = vmatpush1.msra.mxu0 0.0
      %9381 = vmatprep.subr.mxu0 0.0
      %9382 = vmatpush1.msra.mxu0 0.0
      %9383 = vmatprep.mubr.f32.mxu0 0.0
      %v9384 = vand.u32 %v6309, 4294901760
      %v9385 = vsub.f32 %v6309, %v9384
      %v9386 = vand.u32 %v9385, 4294901760
      %9387 = vmatmul.mubr.f32.gmra.mrb[0].mxu0 %v9386
      %v9388 = vpop.f32.mrb[0].mxu0
      %v9389 = vadd.f32 %v9307, %v9388
      %v9390 = vpop.f32.mrb[0].mxu0
      %v9391 = vadd.f32 %v9309, %v9390
      %9392 = vdwg.mxu0
      %v9393 = vand.u32 %v6249, 4294901760
      %v9394 = vsub.f32 %v6249, %v9393
      %v9395 = vand.u32 %v9394, 4294901760
      %9396 = vmatprep.subr.mxu0 %v9395
      %v9397 = vand.u32 %v6248, 4294901760
      %v9398 = vsub.f32 %v6248, %v9397
      %v9399 = vand.u32 %v9398, 4294901760
      %9400 = vmatpush1.msra.mxu0 %v9399
      %v9401 = vand.u32 %v6265, 4294901760
      %v9402 = vsub.f32 %v6265, %v9401
      %v9403 = vand.u32 %v9402, 4294901760
      %9404 = vmatprep.subr.mxu0 %v9403
      %v9405 = vand.u32 %v6264, 4294901760
      %v9406 = vsub.f32 %v6264, %v9405
      %v9407 = vand.u32 %v9406, 4294901760
      %9408 = vmatpush1.msra.mxu0 %v9407
      %v9409 = vand.u32 %v6281, 4294901760
      %v9410 = vsub.f32 %v6281, %v9409
      %v9411 = vand.u32 %v9410, 4294901760
      %9412 = vmatprep.subr.mxu0 %v9411
      %v9413 = vand.u32 %v6280, 4294901760
      %v9414 = vsub.f32 %v6280, %v9413
      %v9415 = vand.u32 %v9414, 4294901760
      %9416 = vmatpush1.msra.mxu0 %v9415
      %v9417 = vand.u32 %v6297, 4294901760
      %v9418 = vsub.f32 %v6297, %v9417
      %v9419 = vand.u32 %v9418, 4294901760
      %9420 = vmatprep.subr.mxu0 %v9419
      %v9421 = vand.u32 %v6296, 4294901760
      %v9422 = vsub.f32 %v6296, %v9421
      %v9423 = vand.u32 %v9422, 4294901760
      %9424 = vmatpush1.msra.mxu0 %v9423
      %9425 = vmatprep.subr.mxu0 0.0
      %9426 = vmatpush1.msra.mxu0 0.0
      %9427 = vmatprep.subr.mxu0 0.0
      %9428 = vmatpush1.msra.mxu0 0.0
      %9429 = vmatprep.subr.mxu0 0.0
      %9430 = vmatpush1.msra.mxu0 0.0
      %9431 = vmatprep.subr.mxu0 0.0
      %9432 = vmatpush1.msra.mxu0 0.0
      %9433 = vmatprep.subr.mxu0 0.0
      %9434 = vmatpush1.msra.mxu0 0.0
      %9435 = vmatprep.subr.mxu0 0.0
      %9436 = vmatpush1.msra.mxu0 0.0
      %9437 = vmatprep.subr.mxu0 0.0
      %9438 = vmatpush1.msra.mxu0 0.0
      %9439 = vmatprep.subr.mxu0 0.0
      %9440 = vmatpush1.msra.mxu0 0.0
      %9441 = vmatprep.subr.mxu0 0.0
      %9442 = vmatpush1.msra.mxu0 0.0
      %9443 = vmatprep.subr.mxu0 0.0
      %9444 = vmatpush1.msra.mxu0 0.0
      %9445 = vmatprep.subr.mxu0 0.0
      %9446 = vmatpush1.msra.mxu0 0.0
      %9447 = vmatprep.subr.mxu0 0.0
      %9448 = vmatpush1.msra.mxu0 0.0
      %9449 = vmatprep.subr.mxu0 0.0
      %9450 = vmatpush1.msra.mxu0 0.0
      %9451 = vmatprep.subr.mxu0 0.0
      %9452 = vmatpush1.msra.mxu0 0.0
      %9453 = vmatprep.subr.mxu0 0.0
      %9454 = vmatpush1.msra.mxu0 0.0
      %9455 = vmatprep.subr.mxu0 0.0
      %9456 = vmatpush1.msra.mxu0 0.0
      %9457 = vmatprep.subr.mxu0 0.0
      %9458 = vmatpush1.msra.mxu0 0.0
      %9459 = vmatprep.subr.mxu0 0.0
      %9460 = vmatpush1.msra.mxu0 0.0
      %9461 = vmatprep.subr.mxu0 0.0
      %9462 = vmatpush1.msra.mxu0 0.0
      %9463 = vmatprep.subr.mxu0 0.0
      %9464 = vmatpush1.msra.mxu0 0.0
      %9465 = vmatprep.subr.mxu0 0.0
      %9466 = vmatpush1.msra.mxu0 0.0
      %9467 = vmatprep.subr.mxu0 0.0
      %9468 = vmatpush1.msra.mxu0 0.0
      %9469 = vmatprep.subr.mxu0 0.0
      %9470 = vmatpush1.msra.mxu0 0.0
      %9471 = vmatprep.subr.mxu0 0.0
      %9472 = vmatpush1.msra.mxu0 0.0
      %9473 = vmatprep.subr.mxu0 0.0
      %9474 = vmatpush1.msra.mxu0 0.0
      %9475 = vmatprep.subr.mxu0 0.0
      %9476 = vmatpush1.msra.mxu0 0.0
      %9477 = vmatprep.subr.mxu0 0.0
      %9478 = vmatpush1.msra.mxu0 0.0
      %9479 = vmatprep.subr.mxu0 0.0
      %9480 = vmatpush1.msra.mxu0 0.0
      %9481 = vmatprep.mubr.f32.mxu0 0.0
      %v9482 = vand.u32 %v6309, 4294901760
      %9483 = vmatmul.mubr.f32.gmra.mrb[0].mxu0 %v9482
      %v9484 = vpop.f32.mrb[0].mxu0
      %v9485 = vadd.f32 %v9389, %v9484
      %v9486 = vpop.f32.mrb[0].mxu0
      %v9487 = vadd.f32 %v9391, %v9486
      %9488 = vdwg.mxu0
      %v9489 = vand.u32 %v6249, 4294901760
      %9490 = vmatprep.subr.mxu0 %v9489
      %v9491 = vand.u32 %v6248, 4294901760
      %9492 = vmatpush1.msra.mxu0 %v9491
      %v9493 = vand.u32 %v6265, 4294901760
      %9494 = vmatprep.subr.mxu0 %v9493
      %v9495 = vand.u32 %v6264, 4294901760
      %9496 = vmatpush1.msra.mxu0 %v9495
      %v9497 = vand.u32 %v6281, 4294901760
      %9498 = vmatprep.subr.mxu0 %v9497
      %v9499 = vand.u32 %v6280, 4294901760
      %9500 = vmatpush1.msra.mxu0 %v9499
      %v9501 = vand.u32 %v6297, 4294901760
      %9502 = vmatprep.subr.mxu0 %v9501
      %v9503 = vand.u32 %v6296, 4294901760
      %9504 = vmatpush1.msra.mxu0 %v9503
      %9505 = vmatprep.subr.mxu0 0.0
      %9506 = vmatpush1.msra.mxu0 0.0
      %9507 = vmatprep.subr.mxu0 0.0
      %9508 = vmatpush1.msra.mxu0 0.0
      %9509 = vmatprep.subr.mxu0 0.0
      %9510 = vmatpush1.msra.mxu0 0.0
      %9511 = vmatprep.subr.mxu0 0.0
      %9512 = vmatpush1.msra.mxu0 0.0
      %9513 = vmatprep.subr.mxu0 0.0
      %9514 = vmatpush1.msra.mxu0 0.0
      %9515 = vmatprep.subr.mxu0 0.0
      %9516 = vmatpush1.msra.mxu0 0.0
      %9517 = vmatprep.subr.mxu0 0.0
      %9518 = vmatpush1.msra.mxu0 0.0
      %9519 = vmatprep.subr.mxu0 0.0
      %9520 = vmatpush1.msra.mxu0 0.0
      %9521 = vmatprep.subr.mxu0 0.0
      %9522 = vmatpush1.msra.mxu0 0.0
      %9523 = vmatprep.subr.mxu0 0.0
      %9524 = vmatpush1.msra.mxu0 0.0
      %9525 = vmatprep.subr.mxu0 0.0
      %9526 = vmatpush1.msra.mxu0 0.0
      %9527 = vmatprep.subr.mxu0 0.0
      %9528 = vmatpush1.msra.mxu0 0.0
      %9529 = vmatprep.subr.mxu0 0.0
      %9530 = vmatpush1.msra.mxu0 0.0
      %9531 = vmatprep.subr.mxu0 0.0
      %9532 = vmatpush1.msra.mxu0 0.0
      %9533 = vmatprep.subr.mxu0 0.0
      %9534 = vmatpush1.msra.mxu0 0.0
      %9535 = vmatprep.subr.mxu0 0.0
      %9536 = vmatpush1.msra.mxu0 0.0
      %9537 = vmatprep.subr.mxu0 0.0
      %9538 = vmatpush1.msra.mxu0 0.0
      %9539 = vmatprep.subr.mxu0 0.0
      %9540 = vmatpush1.msra.mxu0 0.0
      %9541 = vmatprep.subr.mxu0 0.0
      %9542 = vmatpush1.msra.mxu0 0.0
      %9543 = vmatprep.subr.mxu0 0.0
      %9544 = vmatpush1.msra.mxu0 0.0
      %9545 = vmatprep.subr.mxu0 0.0
      %9546 = vmatpush1.msra.mxu0 0.0
      %9547 = vmatprep.subr.mxu0 0.0
      %9548 = vmatpush1.msra.mxu0 0.0
      %9549 = vmatprep.subr.mxu0 0.0
      %9550 = vmatpush1.msra.mxu0 0.0
      %9551 = vmatprep.subr.mxu0 0.0
      %9552 = vmatpush1.msra.mxu0 0.0
      %9553 = vmatprep.subr.mxu0 0.0
      %9554 = vmatpush1.msra.mxu0 0.0
      %9555 = vmatprep.subr.mxu0 0.0
      %9556 = vmatpush1.msra.mxu0 0.0
      %9557 = vmatprep.subr.mxu0 0.0
      %9558 = vmatpush1.msra.mxu0 0.0
      %9559 = vmatprep.subr.mxu0 0.0
      %9560 = vmatpush1.msra.mxu0 0.0
      %9561 = vmatprep.mubr.f32.mxu0 0.0
      %v9562 = vand.u32 %v6309, 4294901760
      %9563 = vmatmul.mubr.f32.gmra.mrb[0].mxu0 %v9562
      %v9564 = vpop.f32.mrb[0].mxu0
      %v9565 = vadd.f32 %v9485, %v9564
      %v9566 = vpop.f32.mrb[0].mxu0
      %v9567 = vadd.f32 %v9487, %v9566
      %9568 = vdwg.mxu0
      %v9569 = vand.u32 %v6251, 4294901760
      %9570 = vmatprep.subr.mxu0 %v9569
      %v9571 = vand.u32 %v6250, 4294901760
      %9572 = vmatpush1.msra.mxu0 %v9571
      %v9573 = vand.u32 %v6267, 4294901760
      %9574 = vmatprep.subr.mxu0 %v9573
      %v9575 = vand.u32 %v6266, 4294901760
      %9576 = vmatpush1.msra.mxu0 %v9575
      %v9577 = vand.u32 %v6283, 4294901760
      %9578 = vmatprep.subr.mxu0 %v9577
      %v9579 = vand.u32 %v6282, 4294901760
      %9580 = vmatpush1.msra.mxu0 %v9579
      %v9581 = vand.u32 %v6299, 4294901760
      %9582 = vmatprep.subr.mxu0 %v9581
      %v9583 = vand.u32 %v6298, 4294901760
      %9584 = vmatpush1.msra.mxu0 %v9583
      %9585 = vmatprep.subr.mxu0 0.0
      %9586 = vmatpush1.msra.mxu0 0.0
      %9587 = vmatprep.subr.mxu0 0.0
      %9588 = vmatpush1.msra.mxu0 0.0
      %9589 = vmatprep.subr.mxu0 0.0
      %9590 = vmatpush1.msra.mxu0 0.0
      %9591 = vmatprep.subr.mxu0 0.0
      %9592 = vmatpush1.msra.mxu0 0.0
      %9593 = vmatprep.subr.mxu0 0.0
      %9594 = vmatpush1.msra.mxu0 0.0
      %9595 = vmatprep.subr.mxu0 0.0
      %9596 = vmatpush1.msra.mxu0 0.0
      %9597 = vmatprep.subr.mxu0 0.0
      %9598 = vmatpush1.msra.mxu0 0.0
      %9599 = vmatprep.subr.mxu0 0.0
      %9600 = vmatpush1.msra.mxu0 0.0
      %9601 = vmatprep.subr.mxu0 0.0
      %9602 = vmatpush1.msra.mxu0 0.0
      %9603 = vmatprep.subr.mxu0 0.0
      %9604 = vmatpush1.msra.mxu0 0.0
      %9605 = vmatprep.subr.mxu0 0.0
      %9606 = vmatpush1.msra.mxu0 0.0
      %9607 = vmatprep.subr.mxu0 0.0
      %9608 = vmatpush1.msra.mxu0 0.0
      %9609 = vmatprep.subr.mxu0 0.0
      %9610 = vmatpush1.msra.mxu0 0.0
      %9611 = vmatprep.subr.mxu0 0.0
      %9612 = vmatpush1.msra.mxu0 0.0
      %9613 = vmatprep.subr.mxu0 0.0
      %9614 = vmatpush1.msra.mxu0 0.0
      %9615 = vmatprep.subr.mxu0 0.0
      %9616 = vmatpush1.msra.mxu0 0.0
      %9617 = vmatprep.subr.mxu0 0.0
      %9618 = vmatpush1.msra.mxu0 0.0
      %9619 = vmatprep.subr.mxu0 0.0
      %9620 = vmatpush1.msra.mxu0 0.0
      %9621 = vmatprep.subr.mxu0 0.0
      %9622 = vmatpush1.msra.mxu0 0.0
      %9623 = vmatprep.subr.mxu0 0.0
      %9624 = vmatpush1.msra.mxu0 0.0
      %9625 = vmatprep.subr.mxu0 0.0
      %9626 = vmatpush1.msra.mxu0 0.0
      %9627 = vmatprep.subr.mxu0 0.0
      %9628 = vmatpush1.msra.mxu0 0.0
      %9629 = vmatprep.subr.mxu0 0.0
      %9630 = vmatpush1.msra.mxu0 0.0
      %9631 = vmatprep.subr.mxu0 0.0
      %9632 = vmatpush1.msra.mxu0 0.0
      %9633 = vmatprep.subr.mxu0 0.0
      %9634 = vmatpush1.msra.mxu0 0.0
      %9635 = vmatprep.subr.mxu0 0.0
      %9636 = vmatpush1.msra.mxu0 0.0
      %9637 = vmatprep.subr.mxu0 0.0
      %9638 = vmatpush1.msra.mxu0 0.0
      %9639 = vmatprep.subr.mxu0 0.0
      %9640 = vmatpush1.msra.mxu0 0.0
      %9641 = vmatprep.mubr.f32.mxu0 0.0
      %v9642 = vand.u32 %v6309, 4294901760
      %v9643 = vsub.f32 %v6309, %v9642
      %v9644 = vand.u32 %v9643, 4294901760
      %v9645 = vsub.f32 %v9643, %v9644
      %v9646 = vand.u32 %v9645, 4294901760
      %9647 = vmatmul.mubr.f32.gmra.mrb[0].mxu0 %v9646
      %v9648 = vpop.f32.mrb[0].mxu0
      %v9649 = vadd.f32 %v6305, %v9648
      %v9650 = vpop.f32.mrb[0].mxu0
      %v9651 = vadd.f32 %v6305, %v9650
      %9652 = vdwg.mxu0
      %v9653 = vand.u32 %v6251, 4294901760
      %v9654 = vsub.f32 %v6251, %v9653
      %v9655 = vand.u32 %v9654, 4294901760
      %v9656 = vsub.f32 %v9654, %v9655
      %v9657 = vand.u32 %v9656, 4294901760
      %9658 = vmatprep.subr.mxu0 %v9657
      %v9659 = vand.u32 %v6250, 4294901760
      %v9660 = vsub.f32 %v6250, %v9659
      %v9661 = vand.u32 %v9660, 4294901760
      %v9662 = vsub.f32 %v9660, %v9661
      %v9663 = vand.u32 %v9662, 4294901760
      %9664 = vmatpush1.msra.mxu0 %v9663
      %v9665 = vand.u32 %v6267, 4294901760
      %v9666 = vsub.f32 %v6267, %v9665
      %v9667 = vand.u32 %v9666, 4294901760
      %v9668 = vsub.f32 %v9666, %v9667
      %v9669 = vand.u32 %v9668, 4294901760
      %9670 = vmatprep.subr.mxu0 %v9669
      %v9671 = vand.u32 %v6266, 4294901760
      %v9672 = vsub.f32 %v6266, %v9671
      %v9673 = vand.u32 %v9672, 4294901760
      %v9674 = vsub.f32 %v9672, %v9673
      %v9675 = vand.u32 %v9674, 4294901760
      %9676 = vmatpush1.msra.mxu0 %v9675
      %v9677 = vand.u32 %v6283, 4294901760
      %v9678 = vsub.f32 %v6283, %v9677
      %v9679 = vand.u32 %v9678, 4294901760
      %v9680 = vsub.f32 %v9678, %v9679
      %v9681 = vand.u32 %v9680, 4294901760
      %9682 = vmatprep.subr.mxu0 %v9681
      %v9683 = vand.u32 %v6282, 4294901760
      %v9684 = vsub.f32 %v6282, %v9683
      %v9685 = vand.u32 %v9684, 4294901760
      %v9686 = vsub.f32 %v9684, %v9685
      %v9687 = vand.u32 %v9686, 4294901760
      %9688 = vmatpush1.msra.mxu0 %v9687
      %v9689 = vand.u32 %v6299, 4294901760
      %v9690 = vsub.f32 %v6299, %v9689
      %v9691 = vand.u32 %v9690, 4294901760
      %v9692 = vsub.f32 %v9690, %v9691
      %v9693 = vand.u32 %v9692, 4294901760
      %9694 = vmatprep.subr.mxu0 %v9693
      %v9695 = vand.u32 %v6298, 4294901760
      %v9696 = vsub.f32 %v6298, %v9695
      %v9697 = vand.u32 %v9696, 4294901760
      %v9698 = vsub.f32 %v9696, %v9697
      %v9699 = vand.u32 %v9698, 4294901760
      %9700 = vmatpush1.msra.mxu0 %v9699
      %9701 = vmatprep.subr.mxu0 0.0
      %9702 = vmatpush1.msra.mxu0 0.0
      %9703 = vmatprep.subr.mxu0 0.0
      %9704 = vmatpush1.msra.mxu0 0.0
      %9705 = vmatprep.subr.mxu0 0.0
      %9706 = vmatpush1.msra.mxu0 0.0
      %9707 = vmatprep.subr.mxu0 0.0
      %9708 = vmatpush1.msra.mxu0 0.0
      %9709 = vmatprep.subr.mxu0 0.0
      %9710 = vmatpush1.msra.mxu0 0.0
      %9711 = vmatprep.subr.mxu0 0.0
      %9712 = vmatpush1.msra.mxu0 0.0
      %9713 = vmatprep.subr.mxu0 0.0
      %9714 = vmatpush1.msra.mxu0 0.0
      %9715 = vmatprep.subr.mxu0 0.0
      %9716 = vmatpush1.msra.mxu0 0.0
      %9717 = vmatprep.subr.mxu0 0.0
      %9718 = vmatpush1.msra.mxu0 0.0
      %9719 = vmatprep.subr.mxu0 0.0
      %9720 = vmatpush1.msra.mxu0 0.0
      %9721 = vmatprep.subr.mxu0 0.0
      %9722 = vmatpush1.msra.mxu0 0.0
      %9723 = vmatprep.subr.mxu0 0.0
      %9724 = vmatpush1.msra.mxu0 0.0
      %9725 = vmatprep.subr.mxu0 0.0
      %9726 = vmatpush1.msra.mxu0 0.0
      %9727 = vmatprep.subr.mxu0 0.0
      %9728 = vmatpush1.msra.mxu0 0.0
      %9729 = vmatprep.subr.mxu0 0.0
      %9730 = vmatpush1.msra.mxu0 0.0
      %9731 = vmatprep.subr.mxu0 0.0
      %9732 = vmatpush1.msra.mxu0 0.0
      %9733 = vmatprep.subr.mxu0 0.0
      %9734 = vmatpush1.msra.mxu0 0.0
      %9735 = vmatprep.subr.mxu0 0.0
      %9736 = vmatpush1.msra.mxu0 0.0
      %9737 = vmatprep.subr.mxu0 0.0
      %9738 = vmatpush1.msra.mxu0 0.0
      %9739 = vmatprep.subr.mxu0 0.0
      %9740 = vmatpush1.msra.mxu0 0.0
      %9741 = vmatprep.subr.mxu0 0.0
      %9742 = vmatpush1.msra.mxu0 0.0
      %9743 = vmatprep.subr.mxu0 0.0
      %9744 = vmatpush1.msra.mxu0 0.0
      %9745 = vmatprep.subr.mxu0 0.0
      %9746 = vmatpush1.msra.mxu0 0.0
      %9747 = vmatprep.subr.mxu0 0.0
      %9748 = vmatpush1.msra.mxu0 0.0
      %9749 = vmatprep.subr.mxu0 0.0
      %9750 = vmatpush1.msra.mxu0 0.0
      %9751 = vmatprep.subr.mxu0 0.0
      %9752 = vmatpush1.msra.mxu0 0.0
      %9753 = vmatprep.subr.mxu0 0.0
      %9754 = vmatpush1.msra.mxu0 0.0
      %9755 = vmatprep.subr.mxu0 0.0
      %9756 = vmatpush1.msra.mxu0 0.0
      %9757 = vmatprep.mubr.f32.mxu0 0.0
      %v9758 = vand.u32 %v6309, 4294901760
      %9759 = vmatmul.mubr.f32.gmra.mrb[0].mxu0 %v9758
      %v9760 = vpop.f32.mrb[0].mxu0
      %v9761 = vadd.f32 %v9649, %v9760
      %v9762 = vpop.f32.mrb[0].mxu0
      %v9763 = vadd.f32 %v9651, %v9762
      %9764 = vdwg.mxu0
      %v9765 = vand.u32 %v6251, 4294901760
      %v9766 = vsub.f32 %v6251, %v9765
      %9767 = vmatprep.subr.mxu0 %v9766
      %v9768 = vand.u32 %v6250, 4294901760
      %v9769 = vsub.f32 %v6250, %v9768
      %9770 = vmatpush1.msra.mxu0 %v9769
      %v9771 = vand.u32 %v6267, 4294901760
      %v9772 = vsub.f32 %v6267, %v9771
      %9773 = vmatprep.subr.mxu0 %v9772
      %v9774 = vand.u32 %v6266, 4294901760
      %v9775 = vsub.f32 %v6266, %v9774
      %9776 = vmatpush1.msra.mxu0 %v9775
      %v9777 = vand.u32 %v6283, 4294901760
      %v9778 = vsub.f32 %v6283, %v9777
      %9779 = vmatprep.subr.mxu0 %v9778
      %v9780 = vand.u32 %v6282, 4294901760
      %v9781 = vsub.f32 %v6282, %v9780
      %9782 = vmatpush1.msra.mxu0 %v9781
      %v9783 = vand.u32 %v6299, 4294901760
      %v9784 = vsub.f32 %v6299, %v9783
      %9785 = vmatprep.subr.mxu0 %v9784
      %v9786 = vand.u32 %v6298, 4294901760
      %v9787 = vsub.f32 %v6298, %v9786
      %9788 = vmatpush1.msra.mxu0 %v9787
      %9789 = vmatprep.subr.mxu0 0.0
      %9790 = vmatpush1.msra.mxu0 0.0
      %9791 = vmatprep.subr.mxu0 0.0
      %9792 = vmatpush1.msra.mxu0 0.0
      %9793 = vmatprep.subr.mxu0 0.0
      %9794 = vmatpush1.msra.mxu0 0.0
      %9795 = vmatprep.subr.mxu0 0.0
      %9796 = vmatpush1.msra.mxu0 0.0
      %9797 = vmatprep.subr.mxu0 0.0
      %9798 = vmatpush1.msra.mxu0 0.0
      %9799 = vmatprep.subr.mxu0 0.0
      %9800 = vmatpush1.msra.mxu0 0.0
      %9801 = vmatprep.subr.mxu0 0.0
      %9802 = vmatpush1.msra.mxu0 0.0
      %9803 = vmatprep.subr.mxu0 0.0
      %9804 = vmatpush1.msra.mxu0 0.0
      %9805 = vmatprep.subr.mxu0 0.0
      %9806 = vmatpush1.msra.mxu0 0.0
      %9807 = vmatprep.subr.mxu0 0.0
      %9808 = vmatpush1.msra.mxu0 0.0
      %9809 = vmatprep.subr.mxu0 0.0
      %9810 = vmatpush1.msra.mxu0 0.0
      %9811 = vmatprep.subr.mxu0 0.0
      %9812 = vmatpush1.msra.mxu0 0.0
      %9813 = vmatprep.subr.mxu0 0.0
      %9814 = vmatpush1.msra.mxu0 0.0
      %9815 = vmatprep.subr.mxu0 0.0
      %9816 = vmatpush1.msra.mxu0 0.0
      %9817 = vmatprep.subr.mxu0 0.0
      %9818 = vmatpush1.msra.mxu0 0.0
      %9819 = vmatprep.subr.mxu0 0.0
      %9820 = vmatpush1.msra.mxu0 0.0
      %9821 = vmatprep.subr.mxu0 0.0
      %9822 = vmatpush1.msra.mxu0 0.0
      %9823 = vmatprep.subr.mxu0 0.0
      %9824 = vmatpush1.msra.mxu0 0.0
      %9825 = vmatprep.subr.mxu0 0.0
      %9826 = vmatpush1.msra.mxu0 0.0
      %9827 = vmatprep.subr.mxu0 0.0
      %9828 = vmatpush1.msra.mxu0 0.0
      %9829 = vmatprep.subr.mxu0 0.0
      %9830 = vmatpush1.msra.mxu0 0.0
      %9831 = vmatprep.subr.mxu0 0.0
      %9832 = vmatpush1.msra.mxu0 0.0
      %9833 = vmatprep.subr.mxu0 0.0
      %9834 = vmatpush1.msra.mxu0 0.0
      %9835 = vmatprep.subr.mxu0 0.0
      %9836 = vmatpush1.msra.mxu0 0.0
      %9837 = vmatprep.subr.mxu0 0.0
      %9838 = vmatpush1.msra.mxu0 0.0
      %9839 = vmatprep.subr.mxu0 0.0
      %9840 = vmatpush1.msra.mxu0 0.0
      %9841 = vmatprep.subr.mxu0 0.0
      %9842 = vmatpush1.msra.mxu0 0.0
      %9843 = vmatprep.subr.mxu0 0.0
      %9844 = vmatpush1.msra.mxu0 0.0
      %9845 = vmatprep.mubr.f32.mxu0 0.0
      %v9846 = vand.u32 %v6309, 4294901760
      %v9847 = vsub.f32 %v6309, %v9846
      %9848 = vmatmul.mubr.f32.gmra.mrb[0].mxu0 %v9847
      %v9849 = vpop.f32.mrb[0].mxu0
      %v9850 = vadd.f32 %v9761, %v9849
      %v9851 = vpop.f32.mrb[0].mxu0
      %v9852 = vadd.f32 %v9763, %v9851
      %9853 = vdwg.mxu0
      %v9854 = vand.u32 %v6251, 4294901760
      %9855 = vmatprep.subr.mxu0 %v9854
      %v9856 = vand.u32 %v6250, 4294901760
      %9857 = vmatpush1.msra.mxu0 %v9856
      %v9858 = vand.u32 %v6267, 4294901760
      %9859 = vmatprep.subr.mxu0 %v9858
      %v9860 = vand.u32 %v6266, 4294901760
      %9861 = vmatpush1.msra.mxu0 %v9860
      %v9862 = vand.u32 %v6283, 4294901760
      %9863 = vmatprep.subr.mxu0 %v9862
      %v9864 = vand.u32 %v6282, 4294901760
      %9865 = vmatpush1.msra.mxu0 %v9864
      %v9866 = vand.u32 %v6299, 4294901760
      %9867 = vmatprep.subr.mxu0 %v9866
      %v9868 = vand.u32 %v6298, 4294901760
      %9869 = vmatpush1.msra.mxu0 %v9868
      %9870 = vmatprep.subr.mxu0 0.0
      %9871 = vmatpush1.msra.mxu0 0.0
      %9872 = vmatprep.subr.mxu0 0.0
      %9873 = vmatpush1.msra.mxu0 0.0
      %9874 = vmatprep.subr.mxu0 0.0
      %9875 = vmatpush1.msra.mxu0 0.0
      %9876 = vmatprep.subr.mxu0 0.0
      %9877 = vmatpush1.msra.mxu0 0.0
      %9878 = vmatprep.subr.mxu0 0.0
      %9879 = vmatpush1.msra.mxu0 0.0
      %9880 = vmatprep.subr.mxu0 0.0
      %9881 = vmatpush1.msra.mxu0 0.0
      %9882 = vmatprep.subr.mxu0 0.0
      %9883 = vmatpush1.msra.mxu0 0.0
      %9884 = vmatprep.subr.mxu0 0.0
      %9885 = vmatpush1.msra.mxu0 0.0
      %9886 = vmatprep.subr.mxu0 0.0
      %9887 = vmatpush1.msra.mxu0 0.0
      %9888 = vmatprep.subr.mxu0 0.0
      %9889 = vmatpush1.msra.mxu0 0.0
      %9890 = vmatprep.subr.mxu0 0.0
      %9891 = vmatpush1.msra.mxu0 0.0
      %9892 = vmatprep.subr.mxu0 0.0
      %9893 = vmatpush1.msra.mxu0 0.0
      %9894 = vmatprep.subr.mxu0 0.0
      %9895 = vmatpush1.msra.mxu0 0.0
      %9896 = vmatprep.subr.mxu0 0.0
      %9897 = vmatpush1.msra.mxu0 0.0
      %9898 = vmatprep.subr.mxu0 0.0
      %9899 = vmatpush1.msra.mxu0 0.0
      %9900 = vmatprep.subr.mxu0 0.0
      %9901 = vmatpush1.msra.mxu0 0.0
      %9902 = vmatprep.subr.mxu0 0.0
      %9903 = vmatpush1.msra.mxu0 0.0
      %9904 = vmatprep.subr.mxu0 0.0
      %9905 = vmatpush1.msra.mxu0 0.0
      %9906 = vmatprep.subr.mxu0 0.0
      %9907 = vmatpush1.msra.mxu0 0.0
      %9908 = vmatprep.subr.mxu0 0.0
      %9909 = vmatpush1.msra.mxu0 0.0
      %9910 = vmatprep.subr.mxu0 0.0
      %9911 = vmatpush1.msra.mxu0 0.0
      %9912 = vmatprep.subr.mxu0 0.0
      %9913 = vmatpush1.msra.mxu0 0.0
      %9914 = vmatprep.subr.mxu0 0.0
      %9915 = vmatpush1.msra.mxu0 0.0
      %9916 = vmatprep.subr.mxu0 0.0
      %9917 = vmatpush1.msra.mxu0 0.0
      %9918 = vmatprep.subr.mxu0 0.0
      %9919 = vmatpush1.msra.mxu0 0.0
      %9920 = vmatprep.subr.mxu0 0.0
      %9921 = vmatpush1.msra.mxu0 0.0
      %9922 = vmatprep.subr.mxu0 0.0
      %9923 = vmatpush1.msra.mxu0 0.0
      %9924 = vmatprep.subr.mxu0 0.0
      %9925 = vmatpush1.msra.mxu0 0.0
      %9926 = vmatprep.mubr.f32.mxu0 0.0
      %v9927 = vand.u32 %v6309, 4294901760
      %v9928 = vsub.f32 %v6309, %v9927
      %v9929 = vand.u32 %v9928, 4294901760
      %9930 = vmatmul.mubr.f32.gmra.mrb[0].mxu0 %v9929
      %v9931 = vpop.f32.mrb[0].mxu0
      %v9932 = vadd.f32 %v9850, %v9931
      %v9933 = vpop.f32.mrb[0].mxu0
      %v9934 = vadd.f32 %v9852, %v9933
      %9935 = vdwg.mxu0
      %v9936 = vand.u32 %v6251, 4294901760
      %v9937 = vsub.f32 %v6251, %v9936
      %v9938 = vand.u32 %v9937, 4294901760
      %9939 = vmatprep.subr.mxu0 %v9938
      %v9940 = vand.u32 %v6250, 4294901760
      %v9941 = vsub.f32 %v6250, %v9940
      %v9942 = vand.u32 %v9941, 4294901760
      %9943 = vmatpush1.msra.mxu0 %v9942
      %v9944 = vand.u32 %v6267, 4294901760
      %v9945 = vsub.f32 %v6267, %v9944
      %v9946 = vand.u32 %v9945, 4294901760
      %9947 = vmatprep.subr.mxu0 %v9946
      %v9948 = vand.u32 %v6266, 4294901760
      %v9949 = vsub.f32 %v6266, %v9948
      %v9950 = vand.u32 %v9949, 4294901760
      %9951 = vmatpush1.msra.mxu0 %v9950
      %v9952 = vand.u32 %v6283, 4294901760
      %v9953 = vsub.f32 %v6283, %v9952
      %v9954 = vand.u32 %v9953, 4294901760
      %9955 = vmatprep.subr.mxu0 %v9954
      %v9956 = vand.u32 %v6282, 4294901760
      %v9957 = vsub.f32 %v6282, %v9956
      %v9958 = vand.u32 %v9957, 4294901760
      %9959 = vmatpush1.msra.mxu0 %v9958
      %v9960 = vand.u32 %v6299, 4294901760
      %v9961 = vsub.f32 %v6299, %v9960
      %v9962 = vand.u32 %v9961, 4294901760
      %9963 = vmatprep.subr.mxu0 %v9962
      %v9964 = vand.u32 %v6298, 4294901760
      %v9965 = vsub.f32 %v6298, %v9964
      %v9966 = vand.u32 %v9965, 4294901760
      %9967 = vmatpush1.msra.mxu0 %v9966
      %9968 = vmatprep.subr.mxu0 0.0
      %9969 = vmatpush1.msra.mxu0 0.0
      %9970 = vmatprep.subr.mxu0 0.0
      %9971 = vmatpush1.msra.mxu0 0.0
      %9972 = vmatprep.subr.mxu0 0.0
      %9973 = vmatpush1.msra.mxu0 0.0
      %9974 = vmatprep.subr.mxu0 0.0
      %9975 = vmatpush1.msra.mxu0 0.0
      %9976 = vmatprep.subr.mxu0 0.0
      %9977 = vmatpush1.msra.mxu0 0.0
      %9978 = vmatprep.subr.mxu0 0.0
      %9979 = vmatpush1.msra.mxu0 0.0
      %9980 = vmatprep.subr.mxu0 0.0
      %9981 = vmatpush1.msra.mxu0 0.0
      %9982 = vmatprep.subr.mxu0 0.0
      %9983 = vmatpush1.msra.mxu0 0.0
      %9984 = vmatprep.subr.mxu0 0.0
      %9985 = vmatpush1.msra.mxu0 0.0
      %9986 = vmatprep.subr.mxu0 0.0
      %9987 = vmatpush1.msra.mxu0 0.0
      %9988 = vmatprep.subr.mxu0 0.0
      %9989 = vmatpush1.msra.mxu0 0.0
      %9990 = vmatprep.subr.mxu0 0.0
      %9991 = vmatpush1.msra.mxu0 0.0
      %9992 = vmatprep.subr.mxu0 0.0
      %9993 = vmatpush1.msra.mxu0 0.0
      %9994 = vmatprep.subr.mxu0 0.0
      %9995 = vmatpush1.msra.mxu0 0.0
      %9996 = vmatprep.subr.mxu0 0.0
      %9997 = vmatpush1.msra.mxu0 0.0
      %9998 = vmatprep.subr.mxu0 0.0
      %9999 = vmatpush1.msra.mxu0 0.0
      %10000 = vmatprep.subr.mxu0 0.0
      %10001 = vmatpush1.msra.mxu0 0.0
      %10002 = vmatprep.subr.mxu0 0.0
      %10003 = vmatpush1.msra.mxu0 0.0
      %10004 = vmatprep.subr.mxu0 0.0
      %10005 = vmatpush1.msra.mxu0 0.0
      %10006 = vmatprep.subr.mxu0 0.0
      %10007 = vmatpush1.msra.mxu0 0.0
      %10008 = vmatprep.subr.mxu0 0.0
      %10009 = vmatpush1.msra.mxu0 0.0
      %10010 = vmatprep.subr.mxu0 0.0
      %10011 = vmatpush1.msra.mxu0 0.0
      %10012 = vmatprep.subr.mxu0 0.0
      %10013 = vmatpush1.msra.mxu0 0.0
      %10014 = vmatprep.subr.mxu0 0.0
      %10015 = vmatpush1.msra.mxu0 0.0
      %10016 = vmatprep.subr.mxu0 0.0
      %10017 = vmatpush1.msra.mxu0 0.0
      %10018 = vmatprep.subr.mxu0 0.0
      %10019 = vmatpush1.msra.mxu0 0.0
      %10020 = vmatprep.subr.mxu0 0.0
      %10021 = vmatpush1.msra.mxu0 0.0
      %10022 = vmatprep.subr.mxu0 0.0
      %10023 = vmatpush1.msra.mxu0 0.0
      %10024 = vmatprep.mubr.f32.mxu0 0.0
      %v10025 = vand.u32 %v6309, 4294901760
      %10026 = vmatmul.mubr.f32.gmra.mrb[0].mxu0 %v10025
      %v10027 = vpop.f32.mrb[0].mxu0
      %v10028 = vadd.f32 %v9932, %v10027
      %v10029 = vpop.f32.mrb[0].mxu0
      %v10030 = vadd.f32 %v9934, %v10029
      %10031 = vdwg.mxu0
      %v10032 = vand.u32 %v6251, 4294901760
      %10033 = vmatprep.subr.mxu0 %v10032
      %v10034 = vand.u32 %v6250, 4294901760
      %10035 = vmatpush1.msra.mxu0 %v10034
      %v10036 = vand.u32 %v6267, 4294901760
      %10037 = vmatprep.subr.mxu0 %v10036
      %v10038 = vand.u32 %v6266, 4294901760
      %10039 = vmatpush1.msra.mxu0 %v10038
      %v10040 = vand.u32 %v6283, 4294901760
      %10041 = vmatprep.subr.mxu0 %v10040
      %v10042 = vand.u32 %v6282, 4294901760
      %10043 = vmatpush1.msra.mxu0 %v10042
      %v10044 = vand.u32 %v6299, 4294901760
      %10045 = vmatprep.subr.mxu0 %v10044
      %v10046 = vand.u32 %v6298, 4294901760
      %10047 = vmatpush1.msra.mxu0 %v10046
      %10048 = vmatprep.subr.mxu0 0.0
      %10049 = vmatpush1.msra.mxu0 0.0
      %10050 = vmatprep.subr.mxu0 0.0
      %10051 = vmatpush1.msra.mxu0 0.0
      %10052 = vmatprep.subr.mxu0 0.0
      %10053 = vmatpush1.msra.mxu0 0.0
      %10054 = vmatprep.subr.mxu0 0.0
      %10055 = vmatpush1.msra.mxu0 0.0
      %10056 = vmatprep.subr.mxu0 0.0
      %10057 = vmatpush1.msra.mxu0 0.0
      %10058 = vmatprep.subr.mxu0 0.0
      %10059 = vmatpush1.msra.mxu0 0.0
      %10060 = vmatprep.subr.mxu0 0.0
      %10061 = vmatpush1.msra.mxu0 0.0
      %10062 = vmatprep.subr.mxu0 0.0
      %10063 = vmatpush1.msra.mxu0 0.0
      %10064 = vmatprep.subr.mxu0 0.0
      %10065 = vmatpush1.msra.mxu0 0.0
      %10066 = vmatprep.subr.mxu0 0.0
      %10067 = vmatpush1.msra.mxu0 0.0
      %10068 = vmatprep.subr.mxu0 0.0
      %10069 = vmatpush1.msra.mxu0 0.0
      %10070 = vmatprep.subr.mxu0 0.0
      %10071 = vmatpush1.msra.mxu0 0.0
      %10072 = vmatprep.subr.mxu0 0.0
      %10073 = vmatpush1.msra.mxu0 0.0
      %10074 = vmatprep.subr.mxu0 0.0
      %10075 = vmatpush1.msra.mxu0 0.0
      %10076 = vmatprep.subr.mxu0 0.0
      %10077 = vmatpush1.msra.mxu0 0.0
      %10078 = vmatprep.subr.mxu0 0.0
      %10079 = vmatpush1.msra.mxu0 0.0
      %10080 = vmatprep.subr.mxu0 0.0
      %10081 = vmatpush1.msra.mxu0 0.0
      %10082 = vmatprep.subr.mxu0 0.0
      %10083 = vmatpush1.msra.mxu0 0.0
      %10084 = vmatprep.subr.mxu0 0.0
      %10085 = vmatpush1.msra.mxu0 0.0
      %10086 = vmatprep.subr.mxu0 0.0
      %10087 = vmatpush1.msra.mxu0 0.0
      %10088 = vmatprep.subr.mxu0 0.0
      %10089 = vmatpush1.msra.mxu0 0.0
      %10090 = vmatprep.subr.mxu0 0.0
      %10091 = vmatpush1.msra.mxu0 0.0
      %10092 = vmatprep.subr.mxu0 0.0
      %10093 = vmatpush1.msra.mxu0 0.0
      %10094 = vmatprep.subr.mxu0 0.0
      %10095 = vmatpush1.msra.mxu0 0.0
      %10096 = vmatprep.subr.mxu0 0.0
      %10097 = vmatpush1.msra.mxu0 0.0
      %10098 = vmatprep.subr.mxu0 0.0
      %10099 = vmatpush1.msra.mxu0 0.0
      %10100 = vmatprep.subr.mxu0 0.0
      %10101 = vmatpush1.msra.mxu0 0.0
      %10102 = vmatprep.subr.mxu0 0.0
      %10103 = vmatpush1.msra.mxu0 0.0
      %10104 = vmatprep.mubr.f32.mxu0 0.0
      %v10105 = vand.u32 %v6309, 4294901760
      %10106 = vmatmul.mubr.f32.gmra.mrb[0].mxu0 %v10105
      %v10107 = vpop.f32.mrb[0].mxu0
      %v10108 = vadd.f32 %v10028, %v10107
      %v10109 = vpop.f32.mrb[0].mxu0
      %v10110 = vadd.f32 %v10030, %v10109
      %10111 = vdwg.mxu0
      %v10112 = vand.u32 %v6253, 4294901760
      %10113 = vmatprep.subr.mxu0 %v10112
      %v10114 = vand.u32 %v6252, 4294901760
      %10115 = vmatpush1.msra.mxu0 %v10114
      %v10116 = vand.u32 %v6269, 4294901760
      %10117 = vmatprep.subr.mxu0 %v10116
      %v10118 = vand.u32 %v6268, 4294901760
      %10119 = vmatpush1.msra.mxu0 %v10118
      %v10120 = vand.u32 %v6285, 4294901760
      %10121 = vmatprep.subr.mxu0 %v10120
      %v10122 = vand.u32 %v6284, 4294901760
      %10123 = vmatpush1.msra.mxu0 %v10122
      %v10124 = vand.u32 %v6301, 4294901760
      %10125 = vmatprep.subr.mxu0 %v10124
      %v10126 = vand.u32 %v6300, 4294901760
      %10127 = vmatpush1.msra.mxu0 %v10126
      %10128 = vmatprep.subr.mxu0 0.0
      %10129 = vmatpush1.msra.mxu0 0.0
      %10130 = vmatprep.subr.mxu0 0.0
      %10131 = vmatpush1.msra.mxu0 0.0
      %10132 = vmatprep.subr.mxu0 0.0
      %10133 = vmatpush1.msra.mxu0 0.0
      %10134 = vmatprep.subr.mxu0 0.0
      %10135 = vmatpush1.msra.mxu0 0.0
      %10136 = vmatprep.subr.mxu0 0.0
      %10137 = vmatpush1.msra.mxu0 0.0
      %10138 = vmatprep.subr.mxu0 0.0
      %10139 = vmatpush1.msra.mxu0 0.0
      %10140 = vmatprep.subr.mxu0 0.0
      %10141 = vmatpush1.msra.mxu0 0.0
      %10142 = vmatprep.subr.mxu0 0.0
      %10143 = vmatpush1.msra.mxu0 0.0
      %10144 = vmatprep.subr.mxu0 0.0
      %10145 = vmatpush1.msra.mxu0 0.0
      %10146 = vmatprep.subr.mxu0 0.0
      %10147 = vmatpush1.msra.mxu0 0.0
      %10148 = vmatprep.subr.mxu0 0.0
      %10149 = vmatpush1.msra.mxu0 0.0
      %10150 = vmatprep.subr.mxu0 0.0
      %10151 = vmatpush1.msra.mxu0 0.0
      %10152 = vmatprep.subr.mxu0 0.0
      %10153 = vmatpush1.msra.mxu0 0.0
      %10154 = vmatprep.subr.mxu0 0.0
      %10155 = vmatpush1.msra.mxu0 0.0
      %10156 = vmatprep.subr.mxu0 0.0
      %10157 = vmatpush1.msra.mxu0 0.0
      %10158 = vmatprep.subr.mxu0 0.0
      %10159 = vmatpush1.msra.mxu0 0.0
      %10160 = vmatprep.subr.mxu0 0.0
      %10161 = vmatpush1.msra.mxu0 0.0
      %10162 = vmatprep.subr.mxu0 0.0
      %10163 = vmatpush1.msra.mxu0 0.0
      %10164 = vmatprep.subr.mxu0 0.0
      %10165 = vmatpush1.msra.mxu0 0.0
      %10166 = vmatprep.subr.mxu0 0.0
      %10167 = vmatpush1.msra.mxu0 0.0
      %10168 = vmatprep.subr.mxu0 0.0
      %10169 = vmatpush1.msra.mxu0 0.0
      %10170 = vmatprep.subr.mxu0 0.0
      %10171 = vmatpush1.msra.mxu0 0.0
      %10172 = vmatprep.subr.mxu0 0.0
      %10173 = vmatpush1.msra.mxu0 0.0
      %10174 = vmatprep.subr.mxu0 0.0
      %10175 = vmatpush1.msra.mxu0 0.0
      %10176 = vmatprep.subr.mxu0 0.0
      %10177 = vmatpush1.msra.mxu0 0.0
      %10178 = vmatprep.subr.mxu0 0.0
      %10179 = vmatpush1.msra.mxu0 0.0
      %10180 = vmatprep.subr.mxu0 0.0
      %10181 = vmatpush1.msra.mxu0 0.0
      %10182 = vmatprep.subr.mxu0 0.0
      %10183 = vmatpush1.msra.mxu0 0.0
      %10184 = vmatprep.mubr.f32.mxu0 0.0
      %v10185 = vand.u32 %v6309, 4294901760
      %v10186 = vsub.f32 %v6309, %v10185
      %v10187 = vand.u32 %v10186, 4294901760
      %v10188 = vsub.f32 %v10186, %v10187
      %v10189 = vand.u32 %v10188, 4294901760
      %10190 = vmatmul.mubr.f32.gmra.mrb[0].mxu0 %v10189
      %v10191 = vpop.f32.mrb[0].mxu0
      %v10192 = vadd.f32 %v6305, %v10191
      %v10193 = vpop.f32.mrb[0].mxu0
      %v10194 = vadd.f32 %v6305, %v10193
      %10195 = vdwg.mxu0
      %v10196 = vand.u32 %v6253, 4294901760
      %v10197 = vsub.f32 %v6253, %v10196
      %v10198 = vand.u32 %v10197, 4294901760
      %v10199 = vsub.f32 %v10197, %v10198
      %v10200 = vand.u32 %v10199, 4294901760
      %10201 = vmatprep.subr.mxu0 %v10200
      %v10202 = vand.u32 %v6252, 4294901760
      %v10203 = vsub.f32 %v6252, %v10202
      %v10204 = vand.u32 %v10203, 4294901760
      %v10205 = vsub.f32 %v10203, %v10204
      %v10206 = vand.u32 %v10205, 4294901760
      %10207 = vmatpush1.msra.mxu0 %v10206
      %v10208 = vand.u32 %v6269, 4294901760
      %v10209 = vsub.f32 %v6269, %v10208
      %v10210 = vand.u32 %v10209, 4294901760
      %v10211 = vsub.f32 %v10209, %v10210
      %v10212 = vand.u32 %v10211, 4294901760
      %10213 = vmatprep.subr.mxu0 %v10212
      %v10214 = vand.u32 %v6268, 4294901760
      %v10215 = vsub.f32 %v6268, %v10214
      %v10216 = vand.u32 %v10215, 4294901760
      %v10217 = vsub.f32 %v10215, %v10216
      %v10218 = vand.u32 %v10217, 4294901760
      %10219 = vmatpush1.msra.mxu0 %v10218
      %v10220 = vand.u32 %v6285, 4294901760
      %v10221 = vsub.f32 %v6285, %v10220
      %v10222 = vand.u32 %v10221, 4294901760
      %v10223 = vsub.f32 %v10221, %v10222
      %v10224 = vand.u32 %v10223, 4294901760
      %10225 = vmatprep.subr.mxu0 %v10224
      %v10226 = vand.u32 %v6284, 4294901760
      %v10227 = vsub.f32 %v6284, %v10226
      %v10228 = vand.u32 %v10227, 4294901760
      %v10229 = vsub.f32 %v10227, %v10228
      %v10230 = vand.u32 %v10229, 4294901760
      %10231 = vmatpush1.msra.mxu0 %v10230
      %v10232 = vand.u32 %v6301, 4294901760
      %v10233 = vsub.f32 %v6301, %v10232
      %v10234 = vand.u32 %v10233, 4294901760
      %v10235 = vsub.f32 %v10233, %v10234
      %v10236 = vand.u32 %v10235, 4294901760
      %10237 = vmatprep.subr.mxu0 %v10236
      %v10238 = vand.u32 %v6300, 4294901760
      %v10239 = vsub.f32 %v6300, %v10238
      %v10240 = vand.u32 %v10239, 4294901760
      %v10241 = vsub.f32 %v10239, %v10240
      %v10242 = vand.u32 %v10241, 4294901760
      %10243 = vmatpush1.msra.mxu0 %v10242
      %10244 = vmatprep.subr.mxu0 0.0
      %10245 = vmatpush1.msra.mxu0 0.0
      %10246 = vmatprep.subr.mxu0 0.0
      %10247 = vmatpush1.msra.mxu0 0.0
      %10248 = vmatprep.subr.mxu0 0.0
      %10249 = vmatpush1.msra.mxu0 0.0
      %10250 = vmatprep.subr.mxu0 0.0
      %10251 = vmatpush1.msra.mxu0 0.0
      %10252 = vmatprep.subr.mxu0 0.0
      %10253 = vmatpush1.msra.mxu0 0.0
      %10254 = vmatprep.subr.mxu0 0.0
      %10255 = vmatpush1.msra.mxu0 0.0
      %10256 = vmatprep.subr.mxu0 0.0
      %10257 = vmatpush1.msra.mxu0 0.0
      %10258 = vmatprep.subr.mxu0 0.0
      %10259 = vmatpush1.msra.mxu0 0.0
      %10260 = vmatprep.subr.mxu0 0.0
      %10261 = vmatpush1.msra.mxu0 0.0
      %10262 = vmatprep.subr.mxu0 0.0
      %10263 = vmatpush1.msra.mxu0 0.0
      %10264 = vmatprep.subr.mxu0 0.0
      %10265 = vmatpush1.msra.mxu0 0.0
      %10266 = vmatprep.subr.mxu0 0.0
      %10267 = vmatpush1.msra.mxu0 0.0
      %10268 = vmatprep.subr.mxu0 0.0
      %10269 = vmatpush1.msra.mxu0 0.0
      %10270 = vmatprep.subr.mxu0 0.0
      %10271 = vmatpush1.msra.mxu0 0.0
      %10272 = vmatprep.subr.mxu0 0.0
      %10273 = vmatpush1.msra.mxu0 0.0
      %10274 = vmatprep.subr.mxu0 0.0
      %10275 = vmatpush1.msra.mxu0 0.0
      %10276 = vmatprep.subr.mxu0 0.0
      %10277 = vmatpush1.msra.mxu0 0.0
      %10278 = vmatprep.subr.mxu0 0.0
      %10279 = vmatpush1.msra.mxu0 0.0
      %10280 = vmatprep.subr.mxu0 0.0
      %10281 = vmatpush1.msra.mxu0 0.0
      %10282 = vmatprep.subr.mxu0 0.0
      %10283 = vmatpush1.msra.mxu0 0.0
      %10284 = vmatprep.subr.mxu0 0.0
      %10285 = vmatpush1.msra.mxu0 0.0
      %10286 = vmatprep.subr.mxu0 0.0
      %10287 = vmatpush1.msra.mxu0 0.0
      %10288 = vmatprep.subr.mxu0 0.0
      %10289 = vmatpush1.msra.mxu0 0.0
      %10290 = vmatprep.subr.mxu0 0.0
      %10291 = vmatpush1.msra.mxu0 0.0
      %10292 = vmatprep.subr.mxu0 0.0
      %10293 = vmatpush1.msra.mxu0 0.0
      %10294 = vmatprep.subr.mxu0 0.0
      %10295 = vmatpush1.msra.mxu0 0.0
      %10296 = vmatprep.subr.mxu0 0.0
      %10297 = vmatpush1.msra.mxu0 0.0
      %10298 = vmatprep.subr.mxu0 0.0
      %10299 = vmatpush1.msra.mxu0 0.0
      %10300 = vmatprep.mubr.f32.mxu0 0.0
      %v10301 = vand.u32 %v6309, 4294901760
      %10302 = vmatmul.mubr.f32.gmra.mrb[0].mxu0 %v10301
      %v10303 = vpop.f32.mrb[0].mxu0
      %v10304 = vadd.f32 %v10192, %v10303
      %v10305 = vpop.f32.mrb[0].mxu0
      %v10306 = vadd.f32 %v10194, %v10305
      %10307 = vdwg.mxu0
      %v10308 = vand.u32 %v6253, 4294901760
      %v10309 = vsub.f32 %v6253, %v10308
      %10310 = vmatprep.subr.mxu0 %v10309
      %v10311 = vand.u32 %v6252, 4294901760
      %v10312 = vsub.f32 %v6252, %v10311
      %10313 = vmatpush1.msra.mxu0 %v10312
      %v10314 = vand.u32 %v6269, 4294901760
      %v10315 = vsub.f32 %v6269, %v10314
      %10316 = vmatprep.subr.mxu0 %v10315
      %v10317 = vand.u32 %v6268, 4294901760
      %v10318 = vsub.f32 %v6268, %v10317
      %10319 = vmatpush1.msra.mxu0 %v10318
      %v10320 = vand.u32 %v6285, 4294901760
      %v10321 = vsub.f32 %v6285, %v10320
      %10322 = vmatprep.subr.mxu0 %v10321
      %v10323 = vand.u32 %v6284, 4294901760
      %v10324 = vsub.f32 %v6284, %v10323
      %10325 = vmatpush1.msra.mxu0 %v10324
      %v10326 = vand.u32 %v6301, 4294901760
      %v10327 = vsub.f32 %v6301, %v10326
      %10328 = vmatprep.subr.mxu0 %v10327
      %v10329 = vand.u32 %v6300, 4294901760
      %v10330 = vsub.f32 %v6300, %v10329
      %10331 = vmatpush1.msra.mxu0 %v10330
      %10332 = vmatprep.subr.mxu0 0.0
      %10333 = vmatpush1.msra.mxu0 0.0
      %10334 = vmatprep.subr.mxu0 0.0
      %10335 = vmatpush1.msra.mxu0 0.0
      %10336 = vmatprep.subr.mxu0 0.0
      %10337 = vmatpush1.msra.mxu0 0.0
      %10338 = vmatprep.subr.mxu0 0.0
      %10339 = vmatpush1.msra.mxu0 0.0
      %10340 = vmatprep.subr.mxu0 0.0
      %10341 = vmatpush1.msra.mxu0 0.0
      %10342 = vmatprep.subr.mxu0 0.0
      %10343 = vmatpush1.msra.mxu0 0.0
      %10344 = vmatprep.subr.mxu0 0.0
      %10345 = vmatpush1.msra.mxu0 0.0
      %10346 = vmatprep.subr.mxu0 0.0
      %10347 = vmatpush1.msra.mxu0 0.0
      %10348 = vmatprep.subr.mxu0 0.0
      %10349 = vmatpush1.msra.mxu0 0.0
      %10350 = vmatprep.subr.mxu0 0.0
      %10351 = vmatpush1.msra.mxu0 0.0
      %10352 = vmatprep.subr.mxu0 0.0
      %10353 = vmatpush1.msra.mxu0 0.0
      %10354 = vmatprep.subr.mxu0 0.0
      %10355 = vmatpush1.msra.mxu0 0.0
      %10356 = vmatprep.subr.mxu0 0.0
      %10357 = vmatpush1.msra.mxu0 0.0
      %10358 = vmatprep.subr.mxu0 0.0
      %10359 = vmatpush1.msra.mxu0 0.0
      %10360 = vmatprep.subr.mxu0 0.0
      %10361 = vmatpush1.msra.mxu0 0.0
      %10362 = vmatprep.subr.mxu0 0.0
      %10363 = vmatpush1.msra.mxu0 0.0
      %10364 = vmatprep.subr.mxu0 0.0
      %10365 = vmatpush1.msra.mxu0 0.0
      %10366 = vmatprep.subr.mxu0 0.0
      %10367 = vmatpush1.msra.mxu0 0.0
      %10368 = vmatprep.subr.mxu0 0.0
      %10369 = vmatpush1.msra.mxu0 0.0
      %10370 = vmatprep.subr.mxu0 0.0
      %10371 = vmatpush1.msra.mxu0 0.0
      %10372 = vmatprep.subr.mxu0 0.0
      %10373 = vmatpush1.msra.mxu0 0.0
      %10374 = vmatprep.subr.mxu0 0.0
      %10375 = vmatpush1.msra.mxu0 0.0
      %10376 = vmatprep.subr.mxu0 0.0
      %10377 = vmatpush1.msra.mxu0 0.0
      %10378 = vmatprep.subr.mxu0 0.0
      %10379 = vmatpush1.msra.mxu0 0.0
      %10380 = vmatprep.subr.mxu0 0.0
      %10381 = vmatpush1.msra.mxu0 0.0
      %10382 = vmatprep.subr.mxu0 0.0
      %10383 = vmatpush1.msra.mxu0 0.0
      %10384 = vmatprep.subr.mxu0 0.0
      %10385 = vmatpush1.msra.mxu0 0.0
      %10386 = vmatprep.subr.mxu0 0.0
      %10387 = vmatpush1.msra.mxu0 0.0
      %10388 = vmatprep.mubr.f32.mxu0 0.0
      %v10389 = vand.u32 %v6309, 4294901760
      %v10390 = vsub.f32 %v6309, %v10389
      %10391 = vmatmul.mubr.f32.gmra.mrb[0].mxu0 %v10390
      %v10392 = vpop.f32.mrb[0].mxu0
      %v10393 = vadd.f32 %v10304, %v10392
      %v10394 = vpop.f32.mrb[0].mxu0
      %v10395 = vadd.f32 %v10306, %v10394
      %10396 = vdwg.mxu0
      %v10397 = vand.u32 %v6253, 4294901760
      %10398 = vmatprep.subr.mxu0 %v10397
      %v10399 = vand.u32 %v6252, 4294901760
      %10400 = vmatpush1.msra.mxu0 %v10399
      %v10401 = vand.u32 %v6269, 4294901760
      %10402 = vmatprep.subr.mxu0 %v10401
      %v10403 = vand.u32 %v6268, 4294901760
      %10404 = vmatpush1.msra.mxu0 %v10403
      %v10405 = vand.u32 %v6285, 4294901760
      %10406 = vmatprep.subr.mxu0 %v10405
      %v10407 = vand.u32 %v6284, 4294901760
      %10408 = vmatpush1.msra.mxu0 %v10407
      %v10409 = vand.u32 %v6301, 4294901760
      %10410 = vmatprep.subr.mxu0 %v10409
      %v10411 = vand.u32 %v6300, 4294901760
      %10412 = vmatpush1.msra.mxu0 %v10411
      %10413 = vmatprep.subr.mxu0 0.0
      %10414 = vmatpush1.msra.mxu0 0.0
      %10415 = vmatprep.subr.mxu0 0.0
      %10416 = vmatpush1.msra.mxu0 0.0
      %10417 = vmatprep.subr.mxu0 0.0
      %10418 = vmatpush1.msra.mxu0 0.0
      %10419 = vmatprep.subr.mxu0 0.0
      %10420 = vmatpush1.msra.mxu0 0.0
      %10421 = vmatprep.subr.mxu0 0.0
      %10422 = vmatpush1.msra.mxu0 0.0
      %10423 = vmatprep.subr.mxu0 0.0
      %10424 = vmatpush1.msra.mxu0 0.0
      %10425 = vmatprep.subr.mxu0 0.0
      %10426 = vmatpush1.msra.mxu0 0.0
      %10427 = vmatprep.subr.mxu0 0.0
      %10428 = vmatpush1.msra.mxu0 0.0
      %10429 = vmatprep.subr.mxu0 0.0
      %10430 = vmatpush1.msra.mxu0 0.0
      %10431 = vmatprep.subr.mxu0 0.0
      %10432 = vmatpush1.msra.mxu0 0.0
      %10433 = vmatprep.subr.mxu0 0.0
      %10434 = vmatpush1.msra.mxu0 0.0
      %10435 = vmatprep.subr.mxu0 0.0
      %10436 = vmatpush1.msra.mxu0 0.0
      %10437 = vmatprep.subr.mxu0 0.0
      %10438 = vmatpush1.msra.mxu0 0.0
      %10439 = vmatprep.subr.mxu0 0.0
      %10440 = vmatpush1.msra.mxu0 0.0
      %10441 = vmatprep.subr.mxu0 0.0
      %10442 = vmatpush1.msra.mxu0 0.0
      %10443 = vmatprep.subr.mxu0 0.0
      %10444 = vmatpush1.msra.mxu0 0.0
      %10445 = vmatprep.subr.mxu0 0.0
      %10446 = vmatpush1.msra.mxu0 0.0
      %10447 = vmatprep.subr.mxu0 0.0
      %10448 = vmatpush1.msra.mxu0 0.0
      %10449 = vmatprep.subr.mxu0 0.0
      %10450 = vmatpush1.msra.mxu0 0.0
      %10451 = vmatprep.subr.mxu0 0.0
      %10452 = vmatpush1.msra.mxu0 0.0
      %10453 = vmatprep.subr.mxu0 0.0
      %10454 = vmatpush1.msra.mxu0 0.0
      %10455 = vmatprep.subr.mxu0 0.0
      %10456 = vmatpush1.msra.mxu0 0.0
      %10457 = vmatprep.subr.mxu0 0.0
      %10458 = vmatpush1.msra.mxu0 0.0
      %10459 = vmatprep.subr.mxu0 0.0
      %10460 = vmatpush1.msra.mxu0 0.0
      %10461 = vmatprep.subr.mxu0 0.0
      %10462 = vmatpush1.msra.mxu0 0.0
      %10463 = vmatprep.subr.mxu0 0.0
      %10464 = vmatpush1.msra.mxu0 0.0
      %10465 = vmatprep.subr.mxu0 0.0
      %10466 = vmatpush1.msra.mxu0 0.0
      %10467 = vmatprep.subr.mxu0 0.0
      %10468 = vmatpush1.msra.mxu0 0.0
      %10469 = vmatprep.mubr.f32.mxu0 0.0
      %v10470 = vand.u32 %v6309, 4294901760
      %v10471 = vsub.f32 %v6309, %v10470
      %v10472 = vand.u32 %v10471, 4294901760
      %10473 = vmatmul.mubr.f32.gmra.mrb[0].mxu0 %v10472
      %v10474 = vpop.f32.mrb[0].mxu0
      %v10475 = vadd.f32 %v10393, %v10474
      %v10476 = vpop.f32.mrb[0].mxu0
      %v10477 = vadd.f32 %v10395, %v10476
      %10478 = vdwg.mxu0
      %v10479 = vand.u32 %v6253, 4294901760
      %v10480 = vsub.f32 %v6253, %v10479
      %v10481 = vand.u32 %v10480, 4294901760
      %10482 = vmatprep.subr.mxu0 %v10481
      %v10483 = vand.u32 %v6252, 4294901760
      %v10484 = vsub.f32 %v6252, %v10483
      %v10485 = vand.u32 %v10484, 4294901760
      %10486 = vmatpush1.msra.mxu0 %v10485
      %v10487 = vand.u32 %v6269, 4294901760
      %v10488 = vsub.f32 %v6269, %v10487
      %v10489 = vand.u32 %v10488, 4294901760
      %10490 = vmatprep.subr.mxu0 %v10489
      %v10491 = vand.u32 %v6268, 4294901760
      %v10492 = vsub.f32 %v6268, %v10491
      %v10493 = vand.u32 %v10492, 4294901760
      %10494 = vmatpush1.msra.mxu0 %v10493
      %v10495 = vand.u32 %v6285, 4294901760
      %v10496 = vsub.f32 %v6285, %v10495
      %v10497 = vand.u32 %v10496, 4294901760
      %10498 = vmatprep.subr.mxu0 %v10497
      %v10499 = vand.u32 %v6284, 4294901760
      %v10500 = vsub.f32 %v6284, %v10499
      %v10501 = vand.u32 %v10500, 4294901760
      %10502 = vmatpush1.msra.mxu0 %v10501
      %v10503 = vand.u32 %v6301, 4294901760
      %v10504 = vsub.f32 %v6301, %v10503
      %v10505 = vand.u32 %v10504, 4294901760
      %10506 = vmatprep.subr.mxu0 %v10505
      %v10507 = vand.u32 %v6300, 4294901760
      %v10508 = vsub.f32 %v6300, %v10507
      %v10509 = vand.u32 %v10508, 4294901760
      %10510 = vmatpush1.msra.mxu0 %v10509
      %10511 = vmatprep.subr.mxu0 0.0
      %10512 = vmatpush1.msra.mxu0 0.0
      %10513 = vmatprep.subr.mxu0 0.0
      %10514 = vmatpush1.msra.mxu0 0.0
      %10515 = vmatprep.subr.mxu0 0.0
      %10516 = vmatpush1.msra.mxu0 0.0
      %10517 = vmatprep.subr.mxu0 0.0
      %10518 = vmatpush1.msra.mxu0 0.0
      %10519 = vmatprep.subr.mxu0 0.0
      %10520 = vmatpush1.msra.mxu0 0.0
      %10521 = vmatprep.subr.mxu0 0.0
      %10522 = vmatpush1.msra.mxu0 0.0
      %10523 = vmatprep.subr.mxu0 0.0
      %10524 = vmatpush1.msra.mxu0 0.0
      %10525 = vmatprep.subr.mxu0 0.0
      %10526 = vmatpush1.msra.mxu0 0.0
      %10527 = vmatprep.subr.mxu0 0.0
      %10528 = vmatpush1.msra.mxu0 0.0
      %10529 = vmatprep.subr.mxu0 0.0
      %10530 = vmatpush1.msra.mxu0 0.0
      %10531 = vmatprep.subr.mxu0 0.0
      %10532 = vmatpush1.msra.mxu0 0.0
      %10533 = vmatprep.subr.mxu0 0.0
      %10534 = vmatpush1.msra.mxu0 0.0
      %10535 = vmatprep.subr.mxu0 0.0
      %10536 = vmatpush1.msra.mxu0 0.0
      %10537 = vmatprep.subr.mxu0 0.0
      %10538 = vmatpush1.msra.mxu0 0.0
      %10539 = vmatprep.subr.mxu0 0.0
      %10540 = vmatpush1.msra.mxu0 0.0
      %10541 = vmatprep.subr.mxu0 0.0
      %10542 = vmatpush1.msra.mxu0 0.0
      %10543 = vmatprep.subr.mxu0 0.0
      %10544 = vmatpush1.msra.mxu0 0.0
      %10545 = vmatprep.subr.mxu0 0.0
      %10546 = vmatpush1.msra.mxu0 0.0
      %10547 = vmatprep.subr.mxu0 0.0
      %10548 = vmatpush1.msra.mxu0 0.0
      %10549 = vmatprep.subr.mxu0 0.0
      %10550 = vmatpush1.msra.mxu0 0.0
      %10551 = vmatprep.subr.mxu0 0.0
      %10552 = vmatpush1.msra.mxu0 0.0
      %10553 = vmatprep.subr.mxu0 0.0
      %10554 = vmatpush1.msra.mxu0 0.0
      %10555 = vmatprep.subr.mxu0 0.0
      %10556 = vmatpush1.msra.mxu0 0.0
      %10557 = vmatprep.subr.mxu0 0.0
      %10558 = vmatpush1.msra.mxu0 0.0
      %10559 = vmatprep.subr.mxu0 0.0
      %10560 = vmatpush1.msra.mxu0 0.0
      %10561 = vmatprep.subr.mxu0 0.0
      %10562 = vmatpush1.msra.mxu0 0.0
      %10563 = vmatprep.subr.mxu0 0.0
      %10564 = vmatpush1.msra.mxu0 0.0
      %10565 = vmatprep.subr.mxu0 0.0
      %10566 = vmatpush1.msra.mxu0 0.0
      %10567 = vmatprep.mubr.f32.mxu0 0.0
      %v10568 = vand.u32 %v6309, 4294901760
      %10569 = vmatmul.mubr.f32.gmra.mrb[0].mxu0 %v10568
      %v10570 = vpop.f32.mrb[0].mxu0
      %v10571 = vadd.f32 %v10475, %v10570
      %v10572 = vpop.f32.mrb[0].mxu0
      %v10573 = vadd.f32 %v10477, %v10572
      %10574 = vdwg.mxu0
      %v10575 = vand.u32 %v6253, 4294901760
      %10576 = vmatprep.subr.mxu0 %v10575
      %v10577 = vand.u32 %v6252, 4294901760
      %10578 = vmatpush1.msra.mxu0 %v10577
      %v10579 = vand.u32 %v6269, 4294901760
      %10580 = vmatprep.subr.mxu0 %v10579
      %v10581 = vand.u32 %v6268, 4294901760
      %10582 = vmatpush1.msra.mxu0 %v10581
      %v10583 = vand.u32 %v6285, 4294901760
      %10584 = vmatprep.subr.mxu0 %v10583
      %v10585 = vand.u32 %v6284, 4294901760
      %10586 = vmatpush1.msra.mxu0 %v10585
      %v10587 = vand.u32 %v6301, 4294901760
      %10588 = vmatprep.subr.mxu0 %v10587
      %v10589 = vand.u32 %v6300, 4294901760
      %10590 = vmatpush1.msra.mxu0 %v10589
      %10591 = vmatprep.subr.mxu0 0.0
      %10592 = vmatpush1.msra.mxu0 0.0
      %10593 = vmatprep.subr.mxu0 0.0
      %10594 = vmatpush1.msra.mxu0 0.0
      %10595 = vmatprep.subr.mxu0 0.0
      %10596 = vmatpush1.msra.mxu0 0.0
      %10597 = vmatprep.subr.mxu0 0.0
      %10598 = vmatpush1.msra.mxu0 0.0
      %10599 = vmatprep.subr.mxu0 0.0
      %10600 = vmatpush1.msra.mxu0 0.0
      %10601 = vmatprep.subr.mxu0 0.0
      %10602 = vmatpush1.msra.mxu0 0.0
      %10603 = vmatprep.subr.mxu0 0.0
      %10604 = vmatpush1.msra.mxu0 0.0
      %10605 = vmatprep.subr.mxu0 0.0
      %10606 = vmatpush1.msra.mxu0 0.0
      %10607 = vmatprep.subr.mxu0 0.0
      %10608 = vmatpush1.msra.mxu0 0.0
      %10609 = vmatprep.subr.mxu0 0.0
      %10610 = vmatpush1.msra.mxu0 0.0
      %10611 = vmatprep.subr.mxu0 0.0
      %10612 = vmatpush1.msra.mxu0 0.0
      %10613 = vmatprep.subr.mxu0 0.0
      %10614 = vmatpush1.msra.mxu0 0.0
      %10615 = vmatprep.subr.mxu0 0.0
      %10616 = vmatpush1.msra.mxu0 0.0
      %10617 = vmatprep.subr.mxu0 0.0
      %10618 = vmatpush1.msra.mxu0 0.0
      %10619 = vmatprep.subr.mxu0 0.0
      %10620 = vmatpush1.msra.mxu0 0.0
      %10621 = vmatprep.subr.mxu0 0.0
      %10622 = vmatpush1.msra.mxu0 0.0
      %10623 = vmatprep.subr.mxu0 0.0
      %10624 = vmatpush1.msra.mxu0 0.0
      %10625 = vmatprep.subr.mxu0 0.0
      %10626 = vmatpush1.msra.mxu0 0.0
      %10627 = vmatprep.subr.mxu0 0.0
      %10628 = vmatpush1.msra.mxu0 0.0
      %10629 = vmatprep.subr.mxu0 0.0
      %10630 = vmatpush1.msra.mxu0 0.0
      %10631 = vmatprep.subr.mxu0 0.0
      %10632 = vmatpush1.msra.mxu0 0.0
      %10633 = vmatprep.subr.mxu0 0.0
      %10634 = vmatpush1.msra.mxu0 0.0
      %10635 = vmatprep.subr.mxu0 0.0
      %10636 = vmatpush1.msra.mxu0 0.0
      %10637 = vmatprep.subr.mxu0 0.0
      %10638 = vmatpush1.msra.mxu0 0.0
      %10639 = vmatprep.subr.mxu0 0.0
      %10640 = vmatpush1.msra.mxu0 0.0
      %10641 = vmatprep.subr.mxu0 0.0
      %10642 = vmatpush1.msra.mxu0 0.0
      %10643 = vmatprep.subr.mxu0 0.0
      %10644 = vmatpush1.msra.mxu0 0.0
      %10645 = vmatprep.subr.mxu0 0.0
      %10646 = vmatpush1.msra.mxu0 0.0
      %10647 = vmatprep.mubr.f32.mxu0 0.0
      %v10648 = vand.u32 %v6309, 4294901760
      %10649 = vmatmul.mubr.f32.gmra.mrb[0].mxu0 %v10648
      %v10650 = vpop.f32.mrb[0].mxu0
      %v10651 = vadd.f32 %v10571, %v10650
      %v10652 = vpop.f32.mrb[0].mxu0
      %v10653 = vadd.f32 %v10573, %v10652
      %10654 = vdwg.mxu0
      %v10671 = vcombine.low %v6850, %v6852
      %v10672 = vcombine.low %v7393, %v7395
      %v10673 = vcombine.low %v7936, %v7938
      %v10674 = vcombine.low %v8479, %v8481
      %v10676 = vunpack.c.l.s4 1966171168
      %v10677 = vunpack.c.0.s8 %v10676
      %v10678 = vlaneseq
      %v10679 = vshrl.u32 %v10678, 7
      %v10680 = vsub.s32 %v10677, %v10679
      %v10681 = vrot.slane %v10671, %v10680
      %v10683 = vunpack.c.l.s4 1966171168
      %v10684 = vunpack.c.0.s8 %v10683
      %v10685 = vlaneseq
      %v10686 = vshrl.u32 %v10685, 7
      %v10687 = vsub.s32 %v10684, %v10686
      %v10688 = vrot.slane %v10672, %v10687
      %v10690 = vunpack.c.l.s4 1966171168
      %v10691 = vunpack.c.0.s8 %v10690
      %v10692 = vlaneseq
      %v10693 = vshrl.u32 %v10692, 7
      %v10694 = vsub.s32 %v10691, %v10693
      %v10695 = vrot.slane %v10673, %v10694
      %v10697 = vunpack.c.l.s4 1966171168
      %v10698 = vunpack.c.0.s8 %v10697
      %v10699 = vlaneseq
      %v10700 = vshrl.u32 %v10699, 7
      %v10701 = vsub.s32 %v10698, %v10700
      %v10702 = vrot.slane %v10674, %v10701
      %v10703 = vcombine.low %v10681, %v10688
      %v10704 = vcombine.low %v10695, %v10702
      %v10706 = vunpack.c.l.s4 1966171168
      %v10707 = vunpack.c.0.s8 %v10706
      %v10708 = vlaneseq
      %v10709 = vshrl.u32 %v10708, 7
      %v10710 = vsub.s32 %v10707, %v10709
      %v10711 = vrot.slane %v10703, %v10710
      %v10713 = vunpack.c.l.s4 1966171168
      %v10714 = vunpack.c.0.s8 %v10713
      %v10715 = vlaneseq
      %v10716 = vshrl.u32 %v10715, 7
      %v10717 = vsub.s32 %v10714, %v10716
      %v10718 = vrot.slane %v10704, %v10717
      %v10719 = vcombine.low %v10711, %v10718
      %v10720 = vcombine.low %v9022, %v9024
      %v10721 = vcombine.low %v9565, %v9567
      %v10722 = vcombine.low %v10108, %v10110
      %v10723 = vcombine.low %v10651, %v10653
      %v10725 = vunpack.c.l.s4 1966171168
      %v10726 = vunpack.c.0.s8 %v10725
      %v10727 = vlaneseq
      %v10728 = vshrl.u32 %v10727, 7
      %v10729 = vsub.s32 %v10726, %v10728
      %v10730 = vrot.slane %v10720, %v10729
      %v10732 = vunpack.c.l.s4 1966171168
      %v10733 = vunpack.c.0.s8 %v10732
      %v10734 = vlaneseq
      %v10735 = vshrl.u32 %v10734, 7
      %v10736 = vsub.s32 %v10733, %v10735
      %v10737 = vrot.slane %v10721, %v10736
      %v10739 = vunpack.c.l.s4 1966171168
      %v10740 = vunpack.c.0.s8 %v10739
      %v10741 = vlaneseq
      %v10742 = vshrl.u32 %v10741, 7
      %v10743 = vsub.s32 %v10740, %v10742
      %v10744 = vrot.slane %v10722, %v10743
      %v10746 = vunpack.c.l.s4 1966171168
      %v10747 = vunpack.c.0.s8 %v10746
      %v10748 = vlaneseq
      %v10749 = vshrl.u32 %v10748, 7
      %v10750 = vsub.s32 %v10747, %v10749
      %v10751 = vrot.slane %v10723, %v10750
      %v10752 = vcombine.low %v10730, %v10737
      %v10753 = vcombine.low %v10744, %v10751
      %v10755 = vunpack.c.l.s4 1966171168
      %v10756 = vunpack.c.0.s8 %v10755
      %v10757 = vlaneseq
      %v10758 = vshrl.u32 %v10757, 7
      %v10759 = vsub.s32 %v10756, %v10758
      %v10760 = vrot.slane %v10752, %v10759
      %v10762 = vunpack.c.l.s4 1966171168
      %v10763 = vunpack.c.0.s8 %v10762
      %v10764 = vlaneseq
      %v10765 = vshrl.u32 %v10764, 7
      %v10766 = vsub.s32 %v10763, %v10765
      %v10767 = vrot.slane %v10753, %v10766
      %v10768 = vcombine.low %v10760, %v10767
      %10771 = vst [vmem:[%s143] sm:$0xff] %v10719
      %10772 = vst [vmem:[%s143 + $0x8] sm:$0xff] %v10768
      %s10773 = smul.u32 16, %s13
      %p10774 = scmp.lt.s32.totalorder %s10773, 31
      %s10775 = scalar_select %p10774, %s10773, 31
      %s10776 = scalar_lea.vmem %s2, %s10775
      // Predicated region
      $region29: #{pinn_forward.1} parent=27 // pred_check
        %p10777 = pneg %p78
      $region30: #{pinn_forward.1} parent=27 // pred_check_branch
        %10779 = sbr.rel (%p10777) target = $region32
      $region31: #{pinn_forward.1} parent=27 // pred_region
        %s10780 = smul.u32 16, %s13
      $region32: #{pinn_forward.1} parent=27 // pred_fallthru
        _
    $region28: #{pinn_forward.1} parent=5 // pred_fallthru
      _
    %p10781 = scmp.le.s32.totalorder 2, %s8
    // Predicated region
    $region33: #{pinn_forward.1} parent=5 // pred_check
      %p10782 = pneg %p10781
    $region34: #{pinn_forward.1} parent=5 // pred_check_branch
      %10784 = sbr.rel (%p10782) target = $region36
    $region35: #{pinn_forward.1} parent=5 // pred_region
      %s10785 = ssub.s32 %s8, 2
      // Predicated region
      $region37: #{pinn_forward.1} parent=35 // pred_check
        %p10786 = pneg %p84
      $region38: #{pinn_forward.1} parent=35 // pred_check_branch
        %10788 = sbr.rel (%p10786) target = $region40
      $region39: #{pinn_forward.1} parent=35 // pred_region
        %s10789 = smul.u32 16, %s14
        %p10790 = scmp.lt.s32.totalorder %s10789, 31
        %s10791 = scalar_select %p10790, %s10789, 31
        %s10792 = scalar_lea.vmem %s2, %s10791
      $region40: #{pinn_forward.1} parent=35 // pred_fallthru
        _
    $region36: #{pinn_forward.1} parent=5 // pred_fallthru
      _
  $region6: #{pinn_forward.1} parent=0 // loop_footer
    %s12 = sadd.s32 1, %s8
  $region7: #{pinn_forward.1} parent=0 // loop_footer_branch
    %7 = sbr.rel target = $region3
  $region8: #{pinn_forward.1} parent=0 // loop_exit
    _

</llo_original>
